<compile_context>
chip_gen: v7x
topology: tpu7x:2x2x1
jax: 0.10.0
libtpu: 0.0.40
codegen_flags: <defaults>
</compile_context>

<pallas_src>
import functools
import math

import jax
import jax.numpy as jnp
from jax.experimental import pallas as pl
from jax.experimental.pallas import tpu as pltpu


_N_PACKED = 29  # packed per-layer weight arrays (see pack_params)


# ---------------------------- fused Pallas kernel ----------------------------

def _fused_temporal_decoder_kernel(hs_in_ref, tgt_in_ref, *refs, n_heads, batch):
    w = refs[:_N_PACKED]
    hs_ref, tgt_ref = refs[_N_PACKED], refs[_N_PACKED + 1]

    # All of these stay Refs; each is loaded at its use site (keeps live ranges short).
    (sa_wq, sa_wkT, sa_wv, sa_wo, sa_bq, sa_bk, sa_bv, sa_bo,
     dsa_wq, dsa_wkT, dsa_wv, dsa_wo, dsa_bq, dsa_bk, dsa_bv, dsa_bo,
     dca_wq, dca_wkT, dca_wv, dca_wo, dca_bq, dca_bk, dca_bv, dca_bo,
     l1_w, l1_b, l2_w, l2_b, norms) = w

    # Initialize the VMEM-resident carry (output blocks) from the inputs at layer 0.
    @pl.when(pl.program_id(0) == 0)
    def _():
        hs_ref[...] = hs_in_ref[...]
        tgt_ref[...] = tgt_in_ref[...]

    N, E = hs_ref.shape

    # Same-batch attention mask, built in-kernel (no dense (N,N) HBM input).
    # Tokens are flattened seq-first, so token i belongs to batch i % batch.
    rb = jax.lax.broadcasted_iota(jnp.int32, (N, N), 0) % batch
    cb = jax.lax.broadcasted_iota(jnp.int32, (N, N), 1) % batch
    same_batch = rb == cb

    def ln(x, idx, eps=1e-5):
        g = norms[2 * idx]          # (1, E) f32, loaded at use
        b = norms[2 * idx + 1]
        mu = jnp.mean(x, axis=-1, keepdims=True)
        var = jnp.mean(jnp.square(x - mu), axis=-1, keepdims=True)
        return (x - mu) * jax.lax.rsqrt(var + eps) * g + b

    def mha(x_q, x_kv, wq, wkT, wv, wo, bq, bk, bv, bo):
        # One XLU transpose of the KV input per MHA (instead of one per head):
        # k^T_h is then produced directly as Wk_h @ x^T.
        xT = x_kv.T                                                        # (E, N)
        out = None
        for h in range(n_heads):       # static unroll; head is a leading ref axis
            q_h = jnp.dot(x_q, wq[h], preferred_element_type=jnp.float32) + bq[h]     # (N, dh)
            kT_h = jnp.dot(wkT[h], xT, preferred_element_type=jnp.float32) + bk[h]    # (dh, N)
            s = jnp.dot(q_h, kT_h, preferred_element_type=jnp.float32)                # (N, N)
            s = jnp.where(same_batch, s, -1e30)
            s = s - jnp.max(s, axis=-1, keepdims=True)
            p = jnp.exp(s)
            p = p * pl.reciprocal(jnp.sum(p, axis=-1, keepdims=True), approx=True)
            v_h = jnp.dot(x_kv, wv[h], preferred_element_type=jnp.float32) + bv[h]    # (N, dh)
            c = jnp.dot(jnp.dot(p, v_h, preferred_element_type=jnp.float32), wo[h],
                        preferred_element_type=jnp.float32)                           # (N, E)
            out = c if out is None else out + c   # tight dot-accumulate chain
        return out + bo[...]

    hs = hs_ref[...]
    tgt = tgt_ref[...]

    # --- TemporalBlock: hs = norm(hs + self_attn(hs, hs, hs)) ---
    hs = ln(hs + mha(hs, hs, sa_wq, sa_wkT, sa_wv, sa_wo, sa_bq, sa_bk, sa_bv, sa_bo), 0)

    # --- nn.TransformerDecoderLayer (post-norm, relu, eval) on (tgt, memory=hs) ---
    x = ln(tgt + mha(tgt, tgt, dsa_wq, dsa_wkT, dsa_wv, dsa_wo,
                     dsa_bq, dsa_bk, dsa_bv, dsa_bo), 1)
    x = ln(x + mha(x, hs, dca_wq, dca_wkT, dca_wv, dca_wo,
                   dca_bq, dca_bk, dca_bv, dca_bo), 2)
    h1 = jnp.maximum(jnp.dot(x, l1_w[...], preferred_element_type=jnp.float32) + l1_b[...], 0.0)
    ff = jnp.dot(h1, l2_w[...], preferred_element_type=jnp.float32) + l2_b[...]
    tgt = ln(x + ff, 3)

    # --- outer per-layer norm: hs = norm_i(hs + tgt) ---
    hs = ln(hs + tgt, 4)

    hs_ref[...] = hs.astype(hs_ref.dtype)
    tgt_ref[...] = tgt.astype(tgt_ref.dtype)


def temporal_decoder_pallas(hs, tgt, packed_params, n_heads):
    """hs, tgt: (L, B, E) seq-first (PyTorch layout). Returns final hs, (L, B, E)."""
    L, B, E = hs.shape
    n_layer = packed_params[0].shape[0]
    N = L * B

    hs2 = hs.reshape(N, E)
    tgt2 = tgt.reshape(N, E)

    act_spec = pl.BlockSpec((N, E), lambda l: (0, 0))
    weight_specs = [
        pl.BlockSpec((None,) + p.shape[1:],
                     lambda l, nd=p.ndim: (l,) + (0,) * (nd - 1))
        for p in packed_params
    ]

    kern = functools.partial(_fused_temporal_decoder_kernel, n_heads=n_heads, batch=B)
    hs_out, _tgt_out = pl.pallas_call(
        kern,
        out_shape=(jax.ShapeDtypeStruct((N, E), hs.dtype),
                   jax.ShapeDtypeStruct((N, E), tgt.dtype)),
        grid=(n_layer,),
        in_specs=[act_spec, act_spec] + weight_specs,
        out_specs=(act_spec, act_spec),
        compiler_params=pltpu.CompilerParams(dimension_semantics=("arbitrary",)),
    )(hs2, tgt2, *packed_params)
    return hs_out.reshape(L, B, E)


# -------------------- parameter init (PyTorch layout) --------------------

def init_mha(key, E):
    k = jax.random.split(key, 4)
    return dict(
        in_w=0.05 * jax.random.normal(k[0], (3 * E, E), jnp.float32),
        in_b=0.05 * jax.random.normal(k[1], (3 * E,), jnp.float32),
        out_w=0.05 * jax.random.normal(k[2], (E, E), jnp.float32),
        out_b=0.05 * jax.random.normal(k[3], (E,), jnp.float32),
    )


def init_decoder_layer(key, E, d_ff):
    k = jax.random.split(key, 6)
    ones, zeros = jnp.ones((E,), jnp.float32), jnp.zeros((E,), jnp.float32)
    return dict(
        self_attn=init_mha(k[0], E),
        cross_attn=init_mha(k[1], E),
        lin1_w=0.05 * jax.random.normal(k[2], (d_ff, E), jnp.float32),
        lin1_b=0.05 * jax.random.normal(k[3], (d_ff,), jnp.float32),
        lin2_w=0.05 * jax.random.normal(k[4], (E, d_ff), jnp.float32),
        lin2_b=0.05 * jax.random.normal(k[5], (E,), jnp.float32),
        norm1_g=ones, norm1_b=zeros,
        norm2_g=ones, norm2_b=zeros,
        norm3_g=ones, norm3_b=zeros,
    )


def init_temporal_block(key, E, d_ff):
    k = jax.random.split(key, 2)
    return dict(
        self_attn=init_mha(k[0], E),
        norm_g=jnp.ones((E,), jnp.float32),
        norm_b=jnp.zeros((E,), jnp.float32),
        decoder=init_decoder_layer(k[1], E, d_ff),
    )


def init_temporal_decoder(key, E, n_layer, d_ff):
    keys = jax.random.split(key, n_layer)
    return dict(
        layers=[init_temporal_block(keys[i], E, d_ff) for i in range(n_layer)],
        norms=[dict(g=jnp.ones((E,), jnp.float32), b=jnp.zeros((E,), jnp.float32))
               for _ in range(n_layer)],
    )


# --------- bf16 rounding of the heavy matmul weights (shared with the reference) ---------

def _bf16_round(x):
    return x.astype(jnp.bfloat16).astype(jnp.float32)


def quantize_matmul_weights(params):
    def q_mha(p):
        return dict(p, in_w=_bf16_round(p["in_w"]), out_w=_bf16_round(p["out_w"]))
    layers = []
    for lp in params["layers"]:
        dec = lp["decoder"]
        dec = dict(dec,
                   self_attn=q_mha(dec["self_attn"]),
                   cross_attn=q_mha(dec["cross_attn"]),
                   lin1_w=_bf16_round(dec["lin1_w"]),
                   lin2_w=_bf16_round(dec["lin2_w"]))
        layers.append(dict(lp, self_attn=q_mha(lp["self_attn"]), decoder=dec))
    return dict(params, layers=layers)


# ------------- host-side packing: per-head layout / fold scale / stack layers -------------

def pack_params(params, n_heads):
    """Per-layer weight slabs, stacked on a leading layer axis.

    Per MHA (head on the leading axis, heavy weights in bf16):
      wq  (nh, E, dh)  bf16   (1/sqrt(dh) folded in)     bq (nh, 1, dh)  f32
      wkT (nh, dh, E)  bf16   (k^T_h = wkT[h] @ x^T)     bk (nh, dh, 1)  f32
      wv  (nh, E, dh)  bf16                              bv (nh, 1, dh)  f32
      wo  (nh, dh, E)  bf16                              bo (1, E)       f32
    """
    E = params["layers"][0]["self_attn"]["out_w"].shape[0]
    dh = E // n_heads
    scale = 1.0 / math.sqrt(dh)

    def prep_mha(p):
        in_w, in_b = p["in_w"], p["in_b"]
        wq = (scale * in_w[:E]).reshape(n_heads, dh, E).transpose(0, 2, 1)
        wkT = in_w[E:2 * E].reshape(n_heads, dh, E)
        wv = in_w[2 * E:].reshape(n_heads, dh, E).transpose(0, 2, 1)
        wo = p["out_w"].T.reshape(n_heads, dh, E)
        bq = (scale * in_b[:E]).reshape(n_heads, 1, dh)
        bk = in_b[E:2 * E].reshape(n_heads, dh, 1)
        bv = in_b[2 * E:].reshape(n_heads, 1, dh)
        bo = p["out_b"].reshape(1, E)
        return [wq.astype(jnp.bfloat16), wkT.astype(jnp.bfloat16),
                wv.astype(jnp.bfloat16), wo.astype(jnp.bfloat16),
                bq, bk, bv, bo]

    per_layer = []
    for lp, np_ in zip(params["layers"], params["norms"]):
        dec = lp["decoder"]
        arrs = []
        arrs += prep_mha(lp["self_attn"])        # TemporalBlock self-attn
        arrs += prep_mha(dec["self_attn"])       # decoder self-attn
        arrs += prep_mha(dec["cross_attn"])      # decoder cross-attn
        arrs += [dec["lin1_w"].T.astype(jnp.bfloat16), dec["lin1_b"].reshape(1, -1),
                 dec["lin2_w"].T.astype(jnp.bfloat16), dec["lin2_b"].reshape(1, -1)]
        norms = jnp.stack([lp["norm_g"], lp["norm_b"],
                           dec["norm1_g"], dec["norm1_b"],
                           dec["norm2_g"], dec["norm2_b"],
                           dec["norm3_g"], dec["norm3_b"],
                           np_["g"], np_["b"]], axis=0)[:, None, :]   # (10, 1, E) f32
        arrs += [norms]
        assert len(arrs) == _N_PACKED
        per_layer.append(arrs)

    return [jnp.stack([layer[i] for layer in per_layer], axis=0)
            for i in range(_N_PACKED)]


# --------------------------- pure-JAX reference ---------------------------

def _ref_mha(query, key_, value, p, n_heads):
    Lq, B, E = query.shape
    Lk = key_.shape[0]
    Dh = E // n_heads
    w_q, w_k, w_v = p["in_w"][:E], p["in_w"][E:2 * E], p["in_w"][2 * E:]
    b_q, b_k, b_v = p["in_b"][:E], p["in_b"][E:2 * E], p["in_b"][2 * E:]
    q = query.reshape(Lq * B, E) @ w_q.T + b_q
    k = key_.reshape(Lk * B, E) @ w_k.T + b_k
    v = value.reshape(Lk * B, E) @ w_v.T + b_v
    q = q.reshape(Lq, B * n_heads, Dh).transpose(1, 0, 2)
    k = k.reshape(Lk, B * n_heads, Dh).transpose(1, 0, 2)
    v = v.reshape(Lk, B * n_heads, Dh).transpose(1, 0, 2)
    s = jnp.einsum("bld,bmd->blm", q * (1.0 / math.sqrt(Dh)), k)
    a = jax.nn.softmax(s, axis=-1)
    o = jnp.einsum("blm,bmd->bld", a, v)
    o = o.transpose(1, 0, 2).reshape(Lq * B, E)
    return (o @ p["out_w"].T + p["out_b"]).reshape(Lq, B, E)


def _ref_ln(x, g, b, eps=1e-5):
    mu = jnp.mean(x, -1, keepdims=True)
    var = jnp.mean(jnp.square(x - mu), -1, keepdims=True)
    return (x - mu) * jax.lax.rsqrt(var + eps) * g + b


def _ref_decoder_layer(tgt, memory, p, n_heads):
    x = tgt
    x = _ref_ln(x + _ref_mha(x, x, x, p["self_attn"], n_heads), p["norm1_g"], p["norm1_b"])
    x = _ref_ln(x + _ref_mha(x, memory, memory, p["cross_attn"], n_heads),
                p["norm2_g"], p["norm2_b"])
    h = jnp.maximum(x @ p["lin1_w"].T + p["lin1_b"], 0.0)
    ff = h @ p["lin2_w"].T + p["lin2_b"]
    return _ref_ln(x + ff, p["norm3_g"], p["norm3_b"])


def temporal_decoder_ref(hs, tgt, params, n_heads):
    for lp, np_ in zip(params["layers"], params["norms"]):
        hs = _ref_ln(hs + _ref_mha(hs, hs, hs, lp["self_attn"], n_heads),
                     lp["norm_g"], lp["norm_b"])
        tgt = _ref_decoder_layer(tgt, hs, lp["decoder"], n_heads)
        hs = _ref_ln(hs + tgt, np_["g"], np_["b"])
    return hs


# ------------------------------------ main ------------------------------------

if __name__ == "__main__":
    D_MODEL, N_HEADS, N_LAYER = 32, 4, 2   # dropout -> identity (eval semantics)
    D_FF = 2048                            # nn.TransformerDecoderLayer default dim_feedforward
    L, B = 8, 2                            # (seq, batch), seq-first like PyTorch

    key = jax.random.PRNGKey(0)
    kp, kh, kt = jax.random.split(key, 3)
    params = init_temporal_decoder(kp, D_MODEL, N_LAYER, D_FF)
    hs = jax.random.normal(kh, (L, B, D_MODEL), jnp.float32)
    tgt = jax.random.normal(kt, (L, B, D_MODEL), jnp.float32)

    # Heavy matmul weights are rounded through bf16 once; both the kernel (which stores
    # them as bf16) and the f32 reference use the same rounded values.
    qparams = quantize_matmul_weights(params)
    packed = pack_params(qparams, N_HEADS)

    out = temporal_decoder_pallas(hs, tgt, packed, N_HEADS)
    out = jax.block_until_ready(out)

    ref = temporal_decoder_ref(hs, tgt, qparams, N_HEADS)
    assert out.shape == (L, B, D_MODEL)
    err = float(jnp.max(jnp.abs(out - ref)))
    assert jnp.allclose(out, ref, atol=5e-3, rtol=5e-3), f"max abs err {err}"

    print("KERNEL_OK")
</pallas_src>

<mosaic_0001>
module attributes {stable_mosaic.version = 11 : i64} {
  func.func @_fused_temporal_decoder_kernel(%arg0: i32, %arg1: memref<16x32xf32, #tpu.memory_space<vmem>>, %arg2: memref<16x32xf32, #tpu.memory_space<vmem>>, %arg3: memref<1x4x32x8xbf16, #tpu.memory_space<vmem>>, %arg4: memref<1x4x8x32xbf16, #tpu.memory_space<vmem>>, %arg5: memref<1x4x32x8xbf16, #tpu.memory_space<vmem>>, %arg6: memref<1x4x8x32xbf16, #tpu.memory_space<vmem>>, %arg7: memref<1x4x1x8xf32, #tpu.memory_space<vmem>>, %arg8: memref<1x4x8x1xf32, #tpu.memory_space<vmem>>, %arg9: memref<1x4x1x8xf32, #tpu.memory_space<vmem>>, %arg10: memref<1x1x32xf32, #tpu.memory_space<vmem>>, %arg11: memref<1x4x32x8xbf16, #tpu.memory_space<vmem>>, %arg12: memref<1x4x8x32xbf16, #tpu.memory_space<vmem>>, %arg13: memref<1x4x32x8xbf16, #tpu.memory_space<vmem>>, %arg14: memref<1x4x8x32xbf16, #tpu.memory_space<vmem>>, %arg15: memref<1x4x1x8xf32, #tpu.memory_space<vmem>>, %arg16: memref<1x4x8x1xf32, #tpu.memory_space<vmem>>, %arg17: memref<1x4x1x8xf32, #tpu.memory_space<vmem>>, %arg18: memref<1x1x32xf32, #tpu.memory_space<vmem>>, %arg19: memref<1x4x32x8xbf16, #tpu.memory_space<vmem>>, %arg20: memref<1x4x8x32xbf16, #tpu.memory_space<vmem>>, %arg21: memref<1x4x32x8xbf16, #tpu.memory_space<vmem>>, %arg22: memref<1x4x8x32xbf16, #tpu.memory_space<vmem>>, %arg23: memref<1x4x1x8xf32, #tpu.memory_space<vmem>>, %arg24: memref<1x4x8x1xf32, #tpu.memory_space<vmem>>, %arg25: memref<1x4x1x8xf32, #tpu.memory_space<vmem>>, %arg26: memref<1x1x32xf32, #tpu.memory_space<vmem>>, %arg27: memref<1x32x2048xbf16, #tpu.memory_space<vmem>>, %arg28: memref<1x1x2048xf32, #tpu.memory_space<vmem>>, %arg29: memref<1x2048x32xbf16, #tpu.memory_space<vmem>>, %arg30: memref<1x1x32xf32, #tpu.memory_space<vmem>>, %arg31: memref<1x10x1x32xf32, #tpu.memory_space<vmem>>, %arg32: memref<16x32xf32, #tpu.memory_space<vmem>>, %arg33: memref<16x32xf32, #tpu.memory_space<vmem>>) attributes {dimension_semantics = [#tpu.dimension_semantics<arbitrary>], iteration_bounds = array<i64: 2>, scalar_prefetch = 0 : i64, scratch_operands = 0 : i64, tpu.core_type = #tpu.core_type<tc>, window_params = [{pipeline_mode = #tpu.pipeline_mode<synchronous>, transform_indices = @transform_0, window_bounds = array<i64: 16, 32>}, {pipeline_mode = #tpu.pipeline_mode<synchronous>, transform_indices = @transform_1, window_bounds = array<i64: 16, 32>}, {transform_indices = @transform_2, window_bounds = array<i64: 1, 4, 32, 8>}, {transform_indices = @transform_3, window_bounds = array<i64: 1, 4, 8, 32>}, {transform_indices = @transform_4, window_bounds = array<i64: 1, 4, 32, 8>}, {transform_indices = @transform_5, window_bounds = array<i64: 1, 4, 8, 32>}, {transform_indices = @transform_6, window_bounds = array<i64: 1, 4, 1, 8>}, {transform_indices = @transform_7, window_bounds = array<i64: 1, 4, 8, 1>}, {transform_indices = @transform_8, window_bounds = array<i64: 1, 4, 1, 8>}, {transform_indices = @transform_9, window_bounds = array<i64: 1, 1, 32>}, {transform_indices = @transform_10, window_bounds = array<i64: 1, 4, 32, 8>}, {transform_indices = @transform_11, window_bounds = array<i64: 1, 4, 8, 32>}, {transform_indices = @transform_12, window_bounds = array<i64: 1, 4, 32, 8>}, {transform_indices = @transform_13, window_bounds = array<i64: 1, 4, 8, 32>}, {transform_indices = @transform_14, window_bounds = array<i64: 1, 4, 1, 8>}, {transform_indices = @transform_15, window_bounds = array<i64: 1, 4, 8, 1>}, {transform_indices = @transform_16, window_bounds = array<i64: 1, 4, 1, 8>}, {transform_indices = @transform_17, window_bounds = array<i64: 1, 1, 32>}, {transform_indices = @transform_18, window_bounds = array<i64: 1, 4, 32, 8>}, {transform_indices = @transform_19, window_bounds = array<i64: 1, 4, 8, 32>}, {transform_indices = @transform_20, window_bounds = array<i64: 1, 4, 32, 8>}, {transform_indices = @transform_21, window_bounds = array<i64: 1, 4, 8, 32>}, {transform_indices = @transform_22, window_bounds = array<i64: 1, 4, 1, 8>}, {transform_indices = @transform_23, window_bounds = array<i64: 1, 4, 8, 1>}, {transform_indices = @transform_24, window_bounds = array<i64: 1, 4, 1, 8>}, {transform_indices = @transform_25, window_bounds = array<i64: 1, 1, 32>}, {transform_indices = @transform_26, window_bounds = array<i64: 1, 32, 2048>}, {transform_indices = @transform_27, window_bounds = array<i64: 1, 1, 2048>}, {transform_indices = @transform_28, window_bounds = array<i64: 1, 2048, 32>}, {transform_indices = @transform_29, window_bounds = array<i64: 1, 1, 32>}, {transform_indices = @transform_30, window_bounds = array<i64: 1, 10, 1, 32>}, {pipeline_mode = #tpu.pipeline_mode<synchronous>, transform_indices = @transform_31, window_bounds = array<i64: 16, 32>}, {pipeline_mode = #tpu.pipeline_mode<synchronous>, transform_indices = @transform_32, window_bounds = array<i64: 16, 32>}]} {
    %c0_i32 = arith.constant 0 : i32
    %0 = arith.cmpi eq, %arg0, %c0_i32 : i32
    %1 = arith.extui %0 : i1 to i32
    %c0_i32_0 = arith.constant 0 : i32
    %2 = arith.cmpi ne, %1, %c0_i32_0 : i32
    scf.if %2 {
      %c0_541 = arith.constant 0 : index
      %c0_542 = arith.constant 0 : index
      %673 = vector.load %arg1[%c0_541, %c0_542] : memref<16x32xf32, #tpu.memory_space<vmem>>, vector<16x32xf32>
      %c0_543 = arith.constant 0 : index
      %c0_544 = arith.constant 0 : index
      %674 = vector.load %arg32[%c0_543, %c0_544] : memref<16x32xf32, #tpu.memory_space<vmem>>, vector<16x32xf32>
      tpu.vector_store %arg32[%c0_543, %c0_544], %673 {strides = array<i32>} : memref<16x32xf32, #tpu.memory_space<vmem>>, vector<16x32xf32>,
      %c0_545 = arith.constant 0 : index
      %c0_546 = arith.constant 0 : index
      %675 = vector.load %arg2[%c0_545, %c0_546] : memref<16x32xf32, #tpu.memory_space<vmem>>, vector<16x32xf32>
      %c0_547 = arith.constant 0 : index
      %c0_548 = arith.constant 0 : index
      %676 = vector.load %arg33[%c0_547, %c0_548] : memref<16x32xf32, #tpu.memory_space<vmem>>, vector<16x32xf32>
      tpu.vector_store %arg33[%c0_547, %c0_548], %675 {strides = array<i32>} : memref<16x32xf32, #tpu.memory_space<vmem>>, vector<16x32xf32>,
    } else {
    }
    %3 = tpu.iota {dimensions = array<i32: 0>} : vector<16x16xi32>
    %c2_i32 = arith.constant 2 : i32
    %c0_i32_1 = arith.constant 0 : i32
    %4 = arith.cmpi eq, %c2_i32, %c0_i32_1 : i32
    %c1_i32 = arith.constant 1 : i32
    %5 = arith.select %4, %c1_i32, %c2_i32 : i32
    %6 = vector.broadcast %5 : i32 to vector<16x16xi32>
    %7 = arith.remsi %3, %6 : vector<16x16xi32>
    %c0_i32_2 = arith.constant 0 : i32
    %8 = vector.broadcast %c0_i32_2 : i32 to vector<16x16xi32>
    %9 = arith.cmpi ne, %7, %8 : vector<16x16xi32>
    %c0_i32_3 = arith.constant 0 : i32
    %10 = vector.broadcast %c0_i32_3 : i32 to vector<16x16xi32>
    %11 = arith.cmpi slt, %7, %10 : vector<16x16xi32>
    %c0_i32_4 = arith.constant 0 : i32
    %12 = arith.cmpi slt, %5, %c0_i32_4 : i32
    %13 = vector.broadcast %12 : i1 to vector<16x16xi1>
    %14 = vector.broadcast %13 : vector<16x16xi1> to vector<16x16xi1>
    %15 = arith.xori %11, %14 : vector<16x16xi1>
    %16 = arith.andi %15, %9 : vector<16x16xi1>
    %17 = vector.broadcast %5 : i32 to vector<16x16xi32>
    %18 = arith.addi %7, %17 : vector<16x16xi32>
    %19 = arith.select %16, %18, %7 : vector<16x16xi1>, vector<16x16xi32>
    %20 = tpu.iota {dimensions = array<i32: 1>} : vector<16x16xi32>
    %c2_i32_5 = arith.constant 2 : i32
    %c0_i32_6 = arith.constant 0 : i32
    %21 = arith.cmpi eq, %c2_i32_5, %c0_i32_6 : i32
    %c1_i32_7 = arith.constant 1 : i32
    %22 = arith.select %21, %c1_i32_7, %c2_i32_5 : i32
    %23 = vector.broadcast %22 : i32 to vector<16x16xi32>
    %24 = arith.remsi %20, %23 : vector<16x16xi32>
    %c0_i32_8 = arith.constant 0 : i32
    %25 = vector.broadcast %c0_i32_8 : i32 to vector<16x16xi32>
    %26 = arith.cmpi ne, %24, %25 : vector<16x16xi32>
    %c0_i32_9 = arith.constant 0 : i32
    %27 = vector.broadcast %c0_i32_9 : i32 to vector<16x16xi32>
    %28 = arith.cmpi slt, %24, %27 : vector<16x16xi32>
    %c0_i32_10 = arith.constant 0 : i32
    %29 = arith.cmpi slt, %22, %c0_i32_10 : i32
    %30 = vector.broadcast %29 : i1 to vector<16x16xi1>
    %31 = vector.broadcast %30 : vector<16x16xi1> to vector<16x16xi1>
    %32 = arith.xori %28, %31 : vector<16x16xi1>
    %33 = arith.andi %32, %26 : vector<16x16xi1>
    %34 = vector.broadcast %22 : i32 to vector<16x16xi32>
    %35 = arith.addi %24, %34 : vector<16x16xi32>
    %36 = arith.select %33, %35, %24 : vector<16x16xi1>, vector<16x16xi32>
    %37 = arith.cmpi eq, %19, %36 : vector<16x16xi32>
    %c0 = arith.constant 0 : index
    %c0_11 = arith.constant 0 : index
    %38 = vector.load %arg32[%c0, %c0_11] : memref<16x32xf32, #tpu.memory_space<vmem>>, vector<16x32xf32>
    %c0_12 = arith.constant 0 : index
    %c0_13 = arith.constant 0 : index
    %39 = vector.load %arg33[%c0_12, %c0_13] : memref<16x32xf32, #tpu.memory_space<vmem>>, vector<16x32xf32>
    %40 = tpu.transpose %38, [1, 0] : vector<16x32xf32> -> vector<32x16xf32>
    %c0_14 = arith.constant 0 : index
    %c0_15 = arith.constant 0 : index
    %c0_16 = arith.constant 0 : index
    %c0_17 = arith.constant 0 : index
    %41 = vector.load %arg3[%c0_14, %c0_15, %c0_16, %c0_17] : memref<1x4x32x8xbf16, #tpu.memory_space<vmem>>, vector<1x1x32x8xbf16>
    %42 = vector.shape_cast %41 : vector<1x1x32x8xbf16> to vector<32x8xbf16>
    %cst = arith.constant dense<0.000000e+00> : vector<16x8xf32>
    %43 = tpu.matmul %38, %42, %cst {dimension_numbers = #tpu.dot_dimension_numbers<[1], [0], [0], [1], [0, 0, 1, 1], [], []>} : vector<16x32xf32>, vector<32x8xbf16>, vector<16x8xf32> -> vector<16x8xf32>
    %c0_18 = arith.constant 0 : index
    %c0_19 = arith.constant 0 : index
    %c0_20 = arith.constant 0 : index
    %c0_21 = arith.constant 0 : index
    %44 = vector.load %arg7[%c0_18, %c0_19, %c0_20, %c0_21] : memref<1x4x1x8xf32, #tpu.memory_space<vmem>>, vector<1x1x1x8xf32>
    %45 = vector.shape_cast %44 : vector<1x1x1x8xf32> to vector<1x8xf32>
    %46 = vector.broadcast %45 : vector<1x8xf32> to vector<16x8xf32>
    %47 = arith.addf %43, %46 : vector<16x8xf32>
    %c0_22 = arith.constant 0 : index
    %c0_23 = arith.constant 0 : index
    %c0_24 = arith.constant 0 : index
    %c0_25 = arith.constant 0 : index
    %48 = vector.load %arg4[%c0_22, %c0_23, %c0_24, %c0_25] : memref<1x4x8x32xbf16, #tpu.memory_space<vmem>>, vector<1x1x8x32xbf16>
    %49 = vector.shape_cast %48 : vector<1x1x8x32xbf16> to vector<8x32xbf16>
    %cst_26 = arith.constant dense<0.000000e+00> : vector<8x16xf32>
    %50 = tpu.matmul %49, %40, %cst_26 {dimension_numbers = #tpu.dot_dimension_numbers<[1], [0], [0], [1], [0, 0, 1, 1], [], []>} : vector<8x32xbf16>, vector<32x16xf32>, vector<8x16xf32> -> vector<8x16xf32>
    %c0_27 = arith.constant 0 : index
    %c0_28 = arith.constant 0 : index
    %c0_29 = arith.constant 0 : index
    %c0_30 = arith.constant 0 : index
    %51 = vector.load %arg8[%c0_27, %c0_28, %c0_29, %c0_30] : memref<1x4x8x1xf32, #tpu.memory_space<vmem>>, vector<1x1x8x1xf32>
    %52 = vector.shape_cast %51 : vector<1x1x8x1xf32> to vector<8x1xf32>
    %53 = vector.broadcast %52 : vector<8x1xf32> to vector<8x16xf32>
    %54 = arith.addf %50, %53 : vector<8x16xf32>
    %cst_31 = arith.constant dense<0.000000e+00> : vector<16x16xf32>
    %55 = tpu.matmul %47, %54, %cst_31 {dimension_numbers = #tpu.dot_dimension_numbers<[1], [0], [0], [1], [0, 0, 1, 1], [], []>} : vector<16x8xf32>, vector<8x16xf32>, vector<16x16xf32> -> vector<16x16xf32>
    %cst_32 = arith.constant -1.000000e+30 : f32
    %56 = vector.broadcast %cst_32 : f32 to vector<16x16xf32>
    %57 = arith.select %37, %55, %56 : vector<16x16xi1>, vector<16x16xf32>
    %cst_33 = arith.constant dense<0xFF800000> : vector<16xf32>
    %58 = vector.multi_reduction <maximumf>, %57, %cst_33 [1] : vector<16x16xf32> to vector<16xf32>
    %59 = vector.shape_cast %58 : vector<16xf32> to vector<16x1xf32>
    %60 = vector.broadcast %59 : vector<16x1xf32> to vector<16x16xf32>
    %61 = arith.subf %57, %60 : vector<16x16xf32>
    %62 = math.exp %61 : vector<16x16xf32>
    %cst_34 = arith.constant dense<0.000000e+00> : vector<16xf32>
    %63 = vector.multi_reduction <add>, %62, %cst_34 [1] : vector<16x16xf32> to vector<16xf32>
    %64 = vector.shape_cast %63 : vector<16xf32> to vector<16x1xf32>
    %65 = tpu.reciprocal %64 {approx = true} : vector<16x1xf32> -> vector<16x1xf32>
    %66 = vector.broadcast %65 : vector<16x1xf32> to vector<16x16xf32>
    %67 = arith.mulf %62, %66 : vector<16x16xf32>
    %c0_35 = arith.constant 0 : index
    %c0_36 = arith.constant 0 : index
    %c0_37 = arith.constant 0 : index
    %c0_38 = arith.constant 0 : index
    %68 = vector.load %arg5[%c0_35, %c0_36, %c0_37, %c0_38] : memref<1x4x32x8xbf16, #tpu.memory_space<vmem>>, vector<1x1x32x8xbf16>
    %69 = vector.shape_cast %68 : vector<1x1x32x8xbf16> to vector<32x8xbf16>
    %cst_39 = arith.constant dense<0.000000e+00> : vector<16x8xf32>
    %70 = tpu.matmul %38, %69, %cst_39 {dimension_numbers = #tpu.dot_dimension_numbers<[1], [0], [0], [1], [0, 0, 1, 1], [], []>} : vector<16x32xf32>, vector<32x8xbf16>, vector<16x8xf32> -> vector<16x8xf32>
    %c0_40 = arith.constant 0 : index
    %c0_41 = arith.constant 0 : index
    %c0_42 = arith.constant 0 : index
    %c0_43 = arith.constant 0 : index
    %71 = vector.load %arg9[%c0_40, %c0_41, %c0_42, %c0_43] : memref<1x4x1x8xf32, #tpu.memory_space<vmem>>, vector<1x1x1x8xf32>
    %72 = vector.shape_cast %71 : vector<1x1x1x8xf32> to vector<1x8xf32>
    %73 = vector.broadcast %72 : vector<1x8xf32> to vector<16x8xf32>
    %74 = arith.addf %70, %73 : vector<16x8xf32>
    %cst_44 = arith.constant dense<0.000000e+00> : vector<16x8xf32>
    %75 = tpu.matmul %67, %74, %cst_44 {dimension_numbers = #tpu.dot_dimension_numbers<[1], [0], [0], [1], [0, 0, 1, 1], [], []>} : vector<16x16xf32>, vector<16x8xf32>, vector<16x8xf32> -> vector<16x8xf32>
    %c0_45 = arith.constant 0 : index
    %c0_46 = arith.constant 0 : index
    %c0_47 = arith.constant 0 : index
    %c0_48 = arith.constant 0 : index
    %76 = vector.load %arg6[%c0_45, %c0_46, %c0_47, %c0_48] : memref<1x4x8x32xbf16, #tpu.memory_space<vmem>>, vector<1x1x8x32xbf16>
    %77 = vector.shape_cast %76 : vector<1x1x8x32xbf16> to vector<8x32xbf16>
    %cst_49 = arith.constant dense<0.000000e+00> : vector<16x32xf32>
    %78 = tpu.matmul %75, %77, %cst_49 {dimension_numbers = #tpu.dot_dimension_numbers<[1], [0], [0], [1], [0, 0, 1, 1], [], []>} : vector<16x8xf32>, vector<8x32xbf16>, vector<16x32xf32> -> vector<16x32xf32>
    %c0_50 = arith.constant 0 : index
    %c1 = arith.constant 1 : index
    %c0_51 = arith.constant 0 : index
    %c0_52 = arith.constant 0 : index
    %79 = vector.load %arg3[%c0_50, %c1, %c0_51, %c0_52] : memref<1x4x32x8xbf16, #tpu.memory_space<vmem>>, vector<1x1x32x8xbf16>
    %80 = vector.shape_cast %79 : vector<1x1x32x8xbf16> to vector<32x8xbf16>
    %cst_53 = arith.constant dense<0.000000e+00> : vector<16x8xf32>
    %81 = tpu.matmul %38, %80, %cst_53 {dimension_numbers = #tpu.dot_dimension_numbers<[1], [0], [0], [1], [0, 0, 1, 1], [], []>} : vector<16x32xf32>, vector<32x8xbf16>, vector<16x8xf32> -> vector<16x8xf32>
    %c0_54 = arith.constant 0 : index
    %c1_55 = arith.constant 1 : index
    %c0_56 = arith.constant 0 : index
    %c0_57 = arith.constant 0 : index
    %82 = vector.load %arg7[%c0_54, %c1_55, %c0_56, %c0_57] : memref<1x4x1x8xf32, #tpu.memory_space<vmem>>, vector<1x1x1x8xf32>
    %83 = vector.shape_cast %82 : vector<1x1x1x8xf32> to vector<1x8xf32>
    %84 = vector.broadcast %83 : vector<1x8xf32> to vector<16x8xf32>
    %85 = arith.addf %81, %84 : vector<16x8xf32>
    %c0_58 = arith.constant 0 : index
    %c1_59 = arith.constant 1 : index
    %c0_60 = arith.constant 0 : index
    %c0_61 = arith.constant 0 : index
    %86 = vector.load %arg4[%c0_58, %c1_59, %c0_60, %c0_61] : memref<1x4x8x32xbf16, #tpu.memory_space<vmem>>, vector<1x1x8x32xbf16>
    %87 = vector.shape_cast %86 : vector<1x1x8x32xbf16> to vector<8x32xbf16>
    %cst_62 = arith.constant dense<0.000000e+00> : vector<8x16xf32>
    %88 = tpu.matmul %87, %40, %cst_62 {dimension_numbers = #tpu.dot_dimension_numbers<[1], [0], [0], [1], [0, 0, 1, 1], [], []>} : vector<8x32xbf16>, vector<32x16xf32>, vector<8x16xf32> -> vector<8x16xf32>
    %c0_63 = arith.constant 0 : index
    %c1_64 = arith.constant 1 : index
    %c0_65 = arith.constant 0 : index
    %c0_66 = arith.constant 0 : index
    %89 = vector.load %arg8[%c0_63, %c1_64, %c0_65, %c0_66] : memref<1x4x8x1xf32, #tpu.memory_space<vmem>>, vector<1x1x8x1xf32>
    %90 = vector.shape_cast %89 : vector<1x1x8x1xf32> to vector<8x1xf32>
    %91 = vector.broadcast %90 : vector<8x1xf32> to vector<8x16xf32>
    %92 = arith.addf %88, %91 : vector<8x16xf32>
    %cst_67 = arith.constant dense<0.000000e+00> : vector<16x16xf32>
    %93 = tpu.matmul %85, %92, %cst_67 {dimension_numbers = #tpu.dot_dimension_numbers<[1], [0], [0], [1], [0, 0, 1, 1], [], []>} : vector<16x8xf32>, vector<8x16xf32>, vector<16x16xf32> -> vector<16x16xf32>
    %cst_68 = arith.constant -1.000000e+30 : f32
    %94 = vector.broadcast %cst_68 : f32 to vector<16x16xf32>
    %95 = arith.select %37, %93, %94 : vector<16x16xi1>, vector<16x16xf32>
    %cst_69 = arith.constant dense<0xFF800000> : vector<16xf32>
    %96 = vector.multi_reduction <maximumf>, %95, %cst_69 [1] : vector<16x16xf32> to vector<16xf32>
    %97 = vector.shape_cast %96 : vector<16xf32> to vector<16x1xf32>
    %98 = vector.broadcast %97 : vector<16x1xf32> to vector<16x16xf32>
    %99 = arith.subf %95, %98 : vector<16x16xf32>
    %100 = math.exp %99 : vector<16x16xf32>
    %cst_70 = arith.constant dense<0.000000e+00> : vector<16xf32>
    %101 = vector.multi_reduction <add>, %100, %cst_70 [1] : vector<16x16xf32> to vector<16xf32>
    %102 = vector.shape_cast %101 : vector<16xf32> to vector<16x1xf32>
    %103 = tpu.reciprocal %102 {approx = true} : vector<16x1xf32> -> vector<16x1xf32>
    %104 = vector.broadcast %103 : vector<16x1xf32> to vector<16x16xf32>
    %105 = arith.mulf %100, %104 : vector<16x16xf32>
    %c0_71 = arith.constant 0 : index
    %c1_72 = arith.constant 1 : index
    %c0_73 = arith.constant 0 : index
    %c0_74 = arith.constant 0 : index
    %106 = vector.load %arg5[%c0_71, %c1_72, %c0_73, %c0_74] : memref<1x4x32x8xbf16, #tpu.memory_space<vmem>>, vector<1x1x32x8xbf16>
    %107 = vector.shape_cast %106 : vector<1x1x32x8xbf16> to vector<32x8xbf16>
    %cst_75 = arith.constant dense<0.000000e+00> : vector<16x8xf32>
    %108 = tpu.matmul %38, %107, %cst_75 {dimension_numbers = #tpu.dot_dimension_numbers<[1], [0], [0], [1], [0, 0, 1, 1], [], []>} : vector<16x32xf32>, vector<32x8xbf16>, vector<16x8xf32> -> vector<16x8xf32>
    %c0_76 = arith.constant 0 : index
    %c1_77 = arith.constant 1 : index
    %c0_78 = arith.constant 0 : index
    %c0_79 = arith.constant 0 : index
    %109 = vector.load %arg9[%c0_76, %c1_77, %c0_78, %c0_79] : memref<1x4x1x8xf32, #tpu.memory_space<vmem>>, vector<1x1x1x8xf32>
    %110 = vector.shape_cast %109 : vector<1x1x1x8xf32> to vector<1x8xf32>
    %111 = vector.broadcast %110 : vector<1x8xf32> to vector<16x8xf32>
    %112 = arith.addf %108, %111 : vector<16x8xf32>
    %cst_80 = arith.constant dense<0.000000e+00> : vector<16x8xf32>
    %113 = tpu.matmul %105, %112, %cst_80 {dimension_numbers = #tpu.dot_dimension_numbers<[1], [0], [0], [1], [0, 0, 1, 1], [], []>} : vector<16x16xf32>, vector<16x8xf32>, vector<16x8xf32> -> vector<16x8xf32>
    %c0_81 = arith.constant 0 : index
    %c1_82 = arith.constant 1 : index
    %c0_83 = arith.constant 0 : index
    %c0_84 = arith.constant 0 : index
    %114 = vector.load %arg6[%c0_81, %c1_82, %c0_83, %c0_84] : memref<1x4x8x32xbf16, #tpu.memory_space<vmem>>, vector<1x1x8x32xbf16>
    %115 = vector.shape_cast %114 : vector<1x1x8x32xbf16> to vector<8x32xbf16>
    %cst_85 = arith.constant dense<0.000000e+00> : vector<16x32xf32>
    %116 = tpu.matmul %113, %115, %cst_85 {dimension_numbers = #tpu.dot_dimension_numbers<[1], [0], [0], [1], [0, 0, 1, 1], [], []>} : vector<16x8xf32>, vector<8x32xbf16>, vector<16x32xf32> -> vector<16x32xf32>
    %117 = arith.addf %78, %116 : vector<16x32xf32>
    %c0_86 = arith.constant 0 : index
    %c2 = arith.constant 2 : index
    %c0_87 = arith.constant 0 : index
    %c0_88 = arith.constant 0 : index
    %118 = vector.load %arg3[%c0_86, %c2, %c0_87, %c0_88] : memref<1x4x32x8xbf16, #tpu.memory_space<vmem>>, vector<1x1x32x8xbf16>
    %119 = vector.shape_cast %118 : vector<1x1x32x8xbf16> to vector<32x8xbf16>
    %cst_89 = arith.constant dense<0.000000e+00> : vector<16x8xf32>
    %120 = tpu.matmul %38, %119, %cst_89 {dimension_numbers = #tpu.dot_dimension_numbers<[1], [0], [0], [1], [0, 0, 1, 1], [], []>} : vector<16x32xf32>, vector<32x8xbf16>, vector<16x8xf32> -> vector<16x8xf32>
    %c0_90 = arith.constant 0 : index
    %c2_91 = arith.constant 2 : index
    %c0_92 = arith.constant 0 : index
    %c0_93 = arith.constant 0 : index
    %121 = vector.load %arg7[%c0_90, %c2_91, %c0_92, %c0_93] : memref<1x4x1x8xf32, #tpu.memory_space<vmem>>, vector<1x1x1x8xf32>
    %122 = vector.shape_cast %121 : vector<1x1x1x8xf32> to vector<1x8xf32>
    %123 = vector.broadcast %122 : vector<1x8xf32> to vector<16x8xf32>
    %124 = arith.addf %120, %123 : vector<16x8xf32>
    %c0_94 = arith.constant 0 : index
    %c2_95 = arith.constant 2 : index
    %c0_96 = arith.constant 0 : index
    %c0_97 = arith.constant 0 : index
    %125 = vector.load %arg4[%c0_94, %c2_95, %c0_96, %c0_97] : memref<1x4x8x32xbf16, #tpu.memory_space<vmem>>, vector<1x1x8x32xbf16>
    %126 = vector.shape_cast %125 : vector<1x1x8x32xbf16> to vector<8x32xbf16>
    %cst_98 = arith.constant dense<0.000000e+00> : vector<8x16xf32>
    %127 = tpu.matmul %126, %40, %cst_98 {dimension_numbers = #tpu.dot_dimension_numbers<[1], [0], [0], [1], [0, 0, 1, 1], [], []>} : vector<8x32xbf16>, vector<32x16xf32>, vector<8x16xf32> -> vector<8x16xf32>
    %c0_99 = arith.constant 0 : index
    %c2_100 = arith.constant 2 : index
    %c0_101 = arith.constant 0 : index
    %c0_102 = arith.constant 0 : index
    %128 = vector.load %arg8[%c0_99, %c2_100, %c0_101, %c0_102] : memref<1x4x8x1xf32, #tpu.memory_space<vmem>>, vector<1x1x8x1xf32>
    %129 = vector.shape_cast %128 : vector<1x1x8x1xf32> to vector<8x1xf32>
    %130 = vector.broadcast %129 : vector<8x1xf32> to vector<8x16xf32>
    %131 = arith.addf %127, %130 : vector<8x16xf32>
    %cst_103 = arith.constant dense<0.000000e+00> : vector<16x16xf32>
    %132 = tpu.matmul %124, %131, %cst_103 {dimension_numbers = #tpu.dot_dimension_numbers<[1], [0], [0], [1], [0, 0, 1, 1], [], []>} : vector<16x8xf32>, vector<8x16xf32>, vector<16x16xf32> -> vector<16x16xf32>
    %cst_104 = arith.constant -1.000000e+30 : f32
    %133 = vector.broadcast %cst_104 : f32 to vector<16x16xf32>
    %134 = arith.select %37, %132, %133 : vector<16x16xi1>, vector<16x16xf32>
    %cst_105 = arith.constant dense<0xFF800000> : vector<16xf32>
    %135 = vector.multi_reduction <maximumf>, %134, %cst_105 [1] : vector<16x16xf32> to vector<16xf32>
    %136 = vector.shape_cast %135 : vector<16xf32> to vector<16x1xf32>
    %137 = vector.broadcast %136 : vector<16x1xf32> to vector<16x16xf32>
    %138 = arith.subf %134, %137 : vector<16x16xf32>
    %139 = math.exp %138 : vector<16x16xf32>
    %cst_106 = arith.constant dense<0.000000e+00> : vector<16xf32>
    %140 = vector.multi_reduction <add>, %139, %cst_106 [1] : vector<16x16xf32> to vector<16xf32>
    %141 = vector.shape_cast %140 : vector<16xf32> to vector<16x1xf32>
    %142 = tpu.reciprocal %141 {approx = true} : vector<16x1xf32> -> vector<16x1xf32>
    %143 = vector.broadcast %142 : vector<16x1xf32> to vector<16x16xf32>
    %144 = arith.mulf %139, %143 : vector<16x16xf32>
    %c0_107 = arith.constant 0 : index
    %c2_108 = arith.constant 2 : index
    %c0_109 = arith.constant 0 : index
    %c0_110 = arith.constant 0 : index
    %145 = vector.load %arg5[%c0_107, %c2_108, %c0_109, %c0_110] : memref<1x4x32x8xbf16, #tpu.memory_space<vmem>>, vector<1x1x32x8xbf16>
    %146 = vector.shape_cast %145 : vector<1x1x32x8xbf16> to vector<32x8xbf16>
    %cst_111 = arith.constant dense<0.000000e+00> : vector<16x8xf32>
    %147 = tpu.matmul %38, %146, %cst_111 {dimension_numbers = #tpu.dot_dimension_numbers<[1], [0], [0], [1], [0, 0, 1, 1], [], []>} : vector<16x32xf32>, vector<32x8xbf16>, vector<16x8xf32> -> vector<16x8xf32>
    %c0_112 = arith.constant 0 : index
    %c2_113 = arith.constant 2 : index
    %c0_114 = arith.constant 0 : index
    %c0_115 = arith.constant 0 : index
    %148 = vector.load %arg9[%c0_112, %c2_113, %c0_114, %c0_115] : memref<1x4x1x8xf32, #tpu.memory_space<vmem>>, vector<1x1x1x8xf32>
    %149 = vector.shape_cast %148 : vector<1x1x1x8xf32> to vector<1x8xf32>
    %150 = vector.broadcast %149 : vector<1x8xf32> to vector<16x8xf32>
    %151 = arith.addf %147, %150 : vector<16x8xf32>
    %cst_116 = arith.constant dense<0.000000e+00> : vector<16x8xf32>
    %152 = tpu.matmul %144, %151, %cst_116 {dimension_numbers = #tpu.dot_dimension_numbers<[1], [0], [0], [1], [0, 0, 1, 1], [], []>} : vector<16x16xf32>, vector<16x8xf32>, vector<16x8xf32> -> vector<16x8xf32>
    %c0_117 = arith.constant 0 : index
    %c2_118 = arith.constant 2 : index
    %c0_119 = arith.constant 0 : index
    %c0_120 = arith.constant 0 : index
    %153 = vector.load %arg6[%c0_117, %c2_118, %c0_119, %c0_120] : memref<1x4x8x32xbf16, #tpu.memory_space<vmem>>, vector<1x1x8x32xbf16>
    %154 = vector.shape_cast %153 : vector<1x1x8x32xbf16> to vector<8x32xbf16>
    %cst_121 = arith.constant dense<0.000000e+00> : vector<16x32xf32>
    %155 = tpu.matmul %152, %154, %cst_121 {dimension_numbers = #tpu.dot_dimension_numbers<[1], [0], [0], [1], [0, 0, 1, 1], [], []>} : vector<16x8xf32>, vector<8x32xbf16>, vector<16x32xf32> -> vector<16x32xf32>
    %156 = arith.addf %117, %155 : vector<16x32xf32>
    %c0_122 = arith.constant 0 : index
    %c3 = arith.constant 3 : index
    %c0_123 = arith.constant 0 : index
    %c0_124 = arith.constant 0 : index
    %157 = vector.load %arg3[%c0_122, %c3, %c0_123, %c0_124] : memref<1x4x32x8xbf16, #tpu.memory_space<vmem>>, vector<1x1x32x8xbf16>
    %158 = vector.shape_cast %157 : vector<1x1x32x8xbf16> to vector<32x8xbf16>
    %cst_125 = arith.constant dense<0.000000e+00> : vector<16x8xf32>
    %159 = tpu.matmul %38, %158, %cst_125 {dimension_numbers = #tpu.dot_dimension_numbers<[1], [0], [0], [1], [0, 0, 1, 1], [], []>} : vector<16x32xf32>, vector<32x8xbf16>, vector<16x8xf32> -> vector<16x8xf32>
    %c0_126 = arith.constant 0 : index
    %c3_127 = arith.constant 3 : index
    %c0_128 = arith.constant 0 : index
    %c0_129 = arith.constant 0 : index
    %160 = vector.load %arg7[%c0_126, %c3_127, %c0_128, %c0_129] : memref<1x4x1x8xf32, #tpu.memory_space<vmem>>, vector<1x1x1x8xf32>
    %161 = vector.shape_cast %160 : vector<1x1x1x8xf32> to vector<1x8xf32>
    %162 = vector.broadcast %161 : vector<1x8xf32> to vector<16x8xf32>
    %163 = arith.addf %159, %162 : vector<16x8xf32>
    %c0_130 = arith.constant 0 : index
    %c3_131 = arith.constant 3 : index
    %c0_132 = arith.constant 0 : index
    %c0_133 = arith.constant 0 : index
    %164 = vector.load %arg4[%c0_130, %c3_131, %c0_132, %c0_133] : memref<1x4x8x32xbf16, #tpu.memory_space<vmem>>, vector<1x1x8x32xbf16>
    %165 = vector.shape_cast %164 : vector<1x1x8x32xbf16> to vector<8x32xbf16>
    %cst_134 = arith.constant dense<0.000000e+00> : vector<8x16xf32>
    %166 = tpu.matmul %165, %40, %cst_134 {dimension_numbers = #tpu.dot_dimension_numbers<[1], [0], [0], [1], [0, 0, 1, 1], [], []>} : vector<8x32xbf16>, vector<32x16xf32>, vector<8x16xf32> -> vector<8x16xf32>
    %c0_135 = arith.constant 0 : index
    %c3_136 = arith.constant 3 : index
    %c0_137 = arith.constant 0 : index
    %c0_138 = arith.constant 0 : index
    %167 = vector.load %arg8[%c0_135, %c3_136, %c0_137, %c0_138] : memref<1x4x8x1xf32, #tpu.memory_space<vmem>>, vector<1x1x8x1xf32>
    %168 = vector.shape_cast %167 : vector<1x1x8x1xf32> to vector<8x1xf32>
    %169 = vector.broadcast %168 : vector<8x1xf32> to vector<8x16xf32>
    %170 = arith.addf %166, %169 : vector<8x16xf32>
    %cst_139 = arith.constant dense<0.000000e+00> : vector<16x16xf32>
    %171 = tpu.matmul %163, %170, %cst_139 {dimension_numbers = #tpu.dot_dimension_numbers<[1], [0], [0], [1], [0, 0, 1, 1], [], []>} : vector<16x8xf32>, vector<8x16xf32>, vector<16x16xf32> -> vector<16x16xf32>
    %cst_140 = arith.constant -1.000000e+30 : f32
    %172 = vector.broadcast %cst_140 : f32 to vector<16x16xf32>
    %173 = arith.select %37, %171, %172 : vector<16x16xi1>, vector<16x16xf32>
    %cst_141 = arith.constant dense<0xFF800000> : vector<16xf32>
    %174 = vector.multi_reduction <maximumf>, %173, %cst_141 [1] : vector<16x16xf32> to vector<16xf32>
    %175 = vector.shape_cast %174 : vector<16xf32> to vector<16x1xf32>
    %176 = vector.broadcast %175 : vector<16x1xf32> to vector<16x16xf32>
    %177 = arith.subf %173, %176 : vector<16x16xf32>
    %178 = math.exp %177 : vector<16x16xf32>
    %cst_142 = arith.constant dense<0.000000e+00> : vector<16xf32>
    %179 = vector.multi_reduction <add>, %178, %cst_142 [1] : vector<16x16xf32> to vector<16xf32>
    %180 = vector.shape_cast %179 : vector<16xf32> to vector<16x1xf32>
    %181 = tpu.reciprocal %180 {approx = true} : vector<16x1xf32> -> vector<16x1xf32>
    %182 = vector.broadcast %181 : vector<16x1xf32> to vector<16x16xf32>
    %183 = arith.mulf %178, %182 : vector<16x16xf32>
    %c0_143 = arith.constant 0 : index
    %c3_144 = arith.constant 3 : index
    %c0_145 = arith.constant 0 : index
    %c0_146 = arith.constant 0 : index
    %184 = vector.load %arg5[%c0_143, %c3_144, %c0_145, %c0_146] : memref<1x4x32x8xbf16, #tpu.memory_space<vmem>>, vector<1x1x32x8xbf16>
    %185 = vector.shape_cast %184 : vector<1x1x32x8xbf16> to vector<32x8xbf16>
    %cst_147 = arith.constant dense<0.000000e+00> : vector<16x8xf32>
    %186 = tpu.matmul %38, %185, %cst_147 {dimension_numbers = #tpu.dot_dimension_numbers<[1], [0], [0], [1], [0, 0, 1, 1], [], []>} : vector<16x32xf32>, vector<32x8xbf16>, vector<16x8xf32> -> vector<16x8xf32>
    %c0_148 = arith.constant 0 : index
    %c3_149 = arith.constant 3 : index
    %c0_150 = arith.constant 0 : index
    %c0_151 = arith.constant 0 : index
    %187 = vector.load %arg9[%c0_148, %c3_149, %c0_150, %c0_151] : memref<1x4x1x8xf32, #tpu.memory_space<vmem>>, vector<1x1x1x8xf32>
    %188 = vector.shape_cast %187 : vector<1x1x1x8xf32> to vector<1x8xf32>
    %189 = vector.broadcast %188 : vector<1x8xf32> to vector<16x8xf32>
    %190 = arith.addf %186, %189 : vector<16x8xf32>
    %cst_152 = arith.constant dense<0.000000e+00> : vector<16x8xf32>
    %191 = tpu.matmul %183, %190, %cst_152 {dimension_numbers = #tpu.dot_dimension_numbers<[1], [0], [0], [1], [0, 0, 1, 1], [], []>} : vector<16x16xf32>, vector<16x8xf32>, vector<16x8xf32> -> vector<16x8xf32>
    %c0_153 = arith.constant 0 : index
    %c3_154 = arith.constant 3 : index
    %c0_155 = arith.constant 0 : index
    %c0_156 = arith.constant 0 : index
    %192 = vector.load %arg6[%c0_153, %c3_154, %c0_155, %c0_156] : memref<1x4x8x32xbf16, #tpu.memory_space<vmem>>, vector<1x1x8x32xbf16>
    %193 = vector.shape_cast %192 : vector<1x1x8x32xbf16> to vector<8x32xbf16>
    %cst_157 = arith.constant dense<0.000000e+00> : vector<16x32xf32>
    %194 = tpu.matmul %191, %193, %cst_157 {dimension_numbers = #tpu.dot_dimension_numbers<[1], [0], [0], [1], [0, 0, 1, 1], [], []>} : vector<16x8xf32>, vector<8x32xbf16>, vector<16x32xf32> -> vector<16x32xf32>
    %195 = arith.addf %156, %194 : vector<16x32xf32>
    %c0_158 = arith.constant 0 : index
    %c0_159 = arith.constant 0 : index
    %c0_160 = arith.constant 0 : index
    %196 = vector.load %arg10[%c0_158, %c0_159, %c0_160] : memref<1x1x32xf32, #tpu.memory_space<vmem>>, vector<1x1x32xf32>
    %197 = vector.shape_cast %196 : vector<1x1x32xf32> to vector<1x32xf32>
    %198 = vector.broadcast %197 : vector<1x32xf32> to vector<16x32xf32>
    %199 = arith.addf %195, %198 : vector<16x32xf32>
    %200 = arith.addf %38, %199 : vector<16x32xf32>
    %c0_161 = arith.constant 0 : index
    %c0_162 = arith.constant 0 : index
    %c0_163 = arith.constant 0 : index
    %c0_164 = arith.constant 0 : index
    %201 = vector.load %arg31[%c0_161, %c0_162, %c0_163, %c0_164] : memref<1x10x1x32xf32, #tpu.memory_space<vmem>>, vector<1x1x1x32xf32>
    %202 = vector.shape_cast %201 : vector<1x1x1x32xf32> to vector<1x32xf32>
    %c0_165 = arith.constant 0 : index
    %c1_166 = arith.constant 1 : index
    %c0_167 = arith.constant 0 : index
    %c0_168 = arith.constant 0 : index
    %203 = vector.load %arg31[%c0_165, %c1_166, %c0_167, %c0_168] : memref<1x10x1x32xf32, #tpu.memory_space<vmem>>, vector<1x1x1x32xf32>
    %204 = vector.shape_cast %203 : vector<1x1x1x32xf32> to vector<1x32xf32>
    %cst_169 = arith.constant dense<0.000000e+00> : vector<16xf32>
    %205 = vector.multi_reduction <add>, %200, %cst_169 [1] : vector<16x32xf32> to vector<16xf32>
    %206 = vector.shape_cast %205 : vector<16xf32> to vector<16x1xf32>
    %cst_170 = arith.constant 3.200000e+01 : f32
    %207 = vector.broadcast %cst_170 : f32 to vector<16x1xf32>
    %208 = arith.divf %206, %207 : vector<16x1xf32>
    %209 = vector.broadcast %208 : vector<16x1xf32> to vector<16x32xf32>
    %210 = arith.subf %200, %209 : vector<16x32xf32>
    %211 = arith.mulf %210, %210 : vector<16x32xf32>
    %cst_171 = arith.constant dense<0.000000e+00> : vector<16xf32>
    %212 = vector.multi_reduction <add>, %211, %cst_171 [1] : vector<16x32xf32> to vector<16xf32>
    %213 = vector.shape_cast %212 : vector<16xf32> to vector<16x1xf32>
    %cst_172 = arith.constant 3.200000e+01 : f32
    %214 = vector.broadcast %cst_172 : f32 to vector<16x1xf32>
    %215 = arith.divf %213, %214 : vector<16x1xf32>
    %216 = vector.broadcast %208 : vector<16x1xf32> to vector<16x32xf32>
    %217 = arith.subf %200, %216 : vector<16x32xf32>
    %cst_173 = arith.constant 9.99999974E-6 : f32
    %218 = vector.broadcast %cst_173 : f32 to vector<16x1xf32>
    %219 = arith.addf %215, %218 : vector<16x1xf32>
    %220 = math.rsqrt %219 : vector<16x1xf32>
    %221 = vector.broadcast %220 : vector<16x1xf32> to vector<16x32xf32>
    %222 = arith.mulf %217, %221 : vector<16x32xf32>
    %223 = vector.broadcast %202 : vector<1x32xf32> to vector<16x32xf32>
    %224 = arith.mulf %222, %223 : vector<16x32xf32>
    %225 = vector.broadcast %204 : vector<1x32xf32> to vector<16x32xf32>
    %226 = arith.addf %224, %225 : vector<16x32xf32>
    %227 = tpu.transpose %39, [1, 0] : vector<16x32xf32> -> vector<32x16xf32>
    %c0_174 = arith.constant 0 : index
    %c0_175 = arith.constant 0 : index
    %c0_176 = arith.constant 0 : index
    %c0_177 = arith.constant 0 : index
    %228 = vector.load %arg11[%c0_174, %c0_175, %c0_176, %c0_177] : memref<1x4x32x8xbf16, #tpu.memory_space<vmem>>, vector<1x1x32x8xbf16>
    %229 = vector.shape_cast %228 : vector<1x1x32x8xbf16> to vector<32x8xbf16>
    %cst_178 = arith.constant dense<0.000000e+00> : vector<16x8xf32>
    %230 = tpu.matmul %39, %229, %cst_178 {dimension_numbers = #tpu.dot_dimension_numbers<[1], [0], [0], [1], [0, 0, 1, 1], [], []>} : vector<16x32xf32>, vector<32x8xbf16>, vector<16x8xf32> -> vector<16x8xf32>
    %c0_179 = arith.constant 0 : index
    %c0_180 = arith.constant 0 : index
    %c0_181 = arith.constant 0 : index
    %c0_182 = arith.constant 0 : index
    %231 = vector.load %arg15[%c0_179, %c0_180, %c0_181, %c0_182] : memref<1x4x1x8xf32, #tpu.memory_space<vmem>>, vector<1x1x1x8xf32>
    %232 = vector.shape_cast %231 : vector<1x1x1x8xf32> to vector<1x8xf32>
    %233 = vector.broadcast %232 : vector<1x8xf32> to vector<16x8xf32>
    %234 = arith.addf %230, %233 : vector<16x8xf32>
    %c0_183 = arith.constant 0 : index
    %c0_184 = arith.constant 0 : index
    %c0_185 = arith.constant 0 : index
    %c0_186 = arith.constant 0 : index
    %235 = vector.load %arg12[%c0_183, %c0_184, %c0_185, %c0_186] : memref<1x4x8x32xbf16, #tpu.memory_space<vmem>>, vector<1x1x8x32xbf16>
    %236 = vector.shape_cast %235 : vector<1x1x8x32xbf16> to vector<8x32xbf16>
    %cst_187 = arith.constant dense<0.000000e+00> : vector<8x16xf32>
    %237 = tpu.matmul %236, %227, %cst_187 {dimension_numbers = #tpu.dot_dimension_numbers<[1], [0], [0], [1], [0, 0, 1, 1], [], []>} : vector<8x32xbf16>, vector<32x16xf32>, vector<8x16xf32> -> vector<8x16xf32>
    %c0_188 = arith.constant 0 : index
    %c0_189 = arith.constant 0 : index
    %c0_190 = arith.constant 0 : index
    %c0_191 = arith.constant 0 : index
    %238 = vector.load %arg16[%c0_188, %c0_189, %c0_190, %c0_191] : memref<1x4x8x1xf32, #tpu.memory_space<vmem>>, vector<1x1x8x1xf32>
    %239 = vector.shape_cast %238 : vector<1x1x8x1xf32> to vector<8x1xf32>
    %240 = vector.broadcast %239 : vector<8x1xf32> to vector<8x16xf32>
    %241 = arith.addf %237, %240 : vector<8x16xf32>
    %cst_192 = arith.constant dense<0.000000e+00> : vector<16x16xf32>
    %242 = tpu.matmul %234, %241, %cst_192 {dimension_numbers = #tpu.dot_dimension_numbers<[1], [0], [0], [1], [0, 0, 1, 1], [], []>} : vector<16x8xf32>, vector<8x16xf32>, vector<16x16xf32> -> vector<16x16xf32>
    %cst_193 = arith.constant -1.000000e+30 : f32
    %243 = vector.broadcast %cst_193 : f32 to vector<16x16xf32>
    %244 = arith.select %37, %242, %243 : vector<16x16xi1>, vector<16x16xf32>
    %cst_194 = arith.constant dense<0xFF800000> : vector<16xf32>
    %245 = vector.multi_reduction <maximumf>, %244, %cst_194 [1] : vector<16x16xf32> to vector<16xf32>
    %246 = vector.shape_cast %245 : vector<16xf32> to vector<16x1xf32>
    %247 = vector.broadcast %246 : vector<16x1xf32> to vector<16x16xf32>
    %248 = arith.subf %244, %247 : vector<16x16xf32>
    %249 = math.exp %248 : vector<16x16xf32>
    %cst_195 = arith.constant dense<0.000000e+00> : vector<16xf32>
    %250 = vector.multi_reduction <add>, %249, %cst_195 [1] : vector<16x16xf32> to vector<16xf32>
    %251 = vector.shape_cast %250 : vector<16xf32> to vector<16x1xf32>
    %252 = tpu.reciprocal %251 {approx = true} : vector<16x1xf32> -> vector<16x1xf32>
    %253 = vector.broadcast %252 : vector<16x1xf32> to vector<16x16xf32>
    %254 = arith.mulf %249, %253 : vector<16x16xf32>
    %c0_196 = arith.constant 0 : index
    %c0_197 = arith.constant 0 : index
    %c0_198 = arith.constant 0 : index
    %c0_199 = arith.constant 0 : index
    %255 = vector.load %arg13[%c0_196, %c0_197, %c0_198, %c0_199] : memref<1x4x32x8xbf16, #tpu.memory_space<vmem>>, vector<1x1x32x8xbf16>
    %256 = vector.shape_cast %255 : vector<1x1x32x8xbf16> to vector<32x8xbf16>
    %cst_200 = arith.constant dense<0.000000e+00> : vector<16x8xf32>
    %257 = tpu.matmul %39, %256, %cst_200 {dimension_numbers = #tpu.dot_dimension_numbers<[1], [0], [0], [1], [0, 0, 1, 1], [], []>} : vector<16x32xf32>, vector<32x8xbf16>, vector<16x8xf32> -> vector<16x8xf32>
    %c0_201 = arith.constant 0 : index
    %c0_202 = arith.constant 0 : index
    %c0_203 = arith.constant 0 : index
    %c0_204 = arith.constant 0 : index
    %258 = vector.load %arg17[%c0_201, %c0_202, %c0_203, %c0_204] : memref<1x4x1x8xf32, #tpu.memory_space<vmem>>, vector<1x1x1x8xf32>
    %259 = vector.shape_cast %258 : vector<1x1x1x8xf32> to vector<1x8xf32>
    %260 = vector.broadcast %259 : vector<1x8xf32> to vector<16x8xf32>
    %261 = arith.addf %257, %260 : vector<16x8xf32>
    %cst_205 = arith.constant dense<0.000000e+00> : vector<16x8xf32>
    %262 = tpu.matmul %254, %261, %cst_205 {dimension_numbers = #tpu.dot_dimension_numbers<[1], [0], [0], [1], [0, 0, 1, 1], [], []>} : vector<16x16xf32>, vector<16x8xf32>, vector<16x8xf32> -> vector<16x8xf32>
    %c0_206 = arith.constant 0 : index
    %c0_207 = arith.constant 0 : index
    %c0_208 = arith.constant 0 : index
    %c0_209 = arith.constant 0 : index
    %263 = vector.load %arg14[%c0_206, %c0_207, %c0_208, %c0_209] : memref<1x4x8x32xbf16, #tpu.memory_space<vmem>>, vector<1x1x8x32xbf16>
    %264 = vector.shape_cast %263 : vector<1x1x8x32xbf16> to vector<8x32xbf16>
    %cst_210 = arith.constant dense<0.000000e+00> : vector<16x32xf32>
    %265 = tpu.matmul %262, %264, %cst_210 {dimension_numbers = #tpu.dot_dimension_numbers<[1], [0], [0], [1], [0, 0, 1, 1], [], []>} : vector<16x8xf32>, vector<8x32xbf16>, vector<16x32xf32> -> vector<16x32xf32>
    %c0_211 = arith.constant 0 : index
    %c1_212 = arith.constant 1 : index
    %c0_213 = arith.constant 0 : index
    %c0_214 = arith.constant 0 : index
    %266 = vector.load %arg11[%c0_211, %c1_212, %c0_213, %c0_214] : memref<1x4x32x8xbf16, #tpu.memory_space<vmem>>, vector<1x1x32x8xbf16>
    %267 = vector.shape_cast %266 : vector<1x1x32x8xbf16> to vector<32x8xbf16>
    %cst_215 = arith.constant dense<0.000000e+00> : vector<16x8xf32>
    %268 = tpu.matmul %39, %267, %cst_215 {dimension_numbers = #tpu.dot_dimension_numbers<[1], [0], [0], [1], [0, 0, 1, 1], [], []>} : vector<16x32xf32>, vector<32x8xbf16>, vector<16x8xf32> -> vector<16x8xf32>
    %c0_216 = arith.constant 0 : index
    %c1_217 = arith.constant 1 : index
    %c0_218 = arith.constant 0 : index
    %c0_219 = arith.constant 0 : index
    %269 = vector.load %arg15[%c0_216, %c1_217, %c0_218, %c0_219] : memref<1x4x1x8xf32, #tpu.memory_space<vmem>>, vector<1x1x1x8xf32>
    %270 = vector.shape_cast %269 : vector<1x1x1x8xf32> to vector<1x8xf32>
    %271 = vector.broadcast %270 : vector<1x8xf32> to vector<16x8xf32>
    %272 = arith.addf %268, %271 : vector<16x8xf32>
    %c0_220 = arith.constant 0 : index
    %c1_221 = arith.constant 1 : index
    %c0_222 = arith.constant 0 : index
    %c0_223 = arith.constant 0 : index
    %273 = vector.load %arg12[%c0_220, %c1_221, %c0_222, %c0_223] : memref<1x4x8x32xbf16, #tpu.memory_space<vmem>>, vector<1x1x8x32xbf16>
    %274 = vector.shape_cast %273 : vector<1x1x8x32xbf16> to vector<8x32xbf16>
    %cst_224 = arith.constant dense<0.000000e+00> : vector<8x16xf32>
    %275 = tpu.matmul %274, %227, %cst_224 {dimension_numbers = #tpu.dot_dimension_numbers<[1], [0], [0], [1], [0, 0, 1, 1], [], []>} : vector<8x32xbf16>, vector<32x16xf32>, vector<8x16xf32> -> vector<8x16xf32>
    %c0_225 = arith.constant 0 : index
    %c1_226 = arith.constant 1 : index
    %c0_227 = arith.constant 0 : index
    %c0_228 = arith.constant 0 : index
    %276 = vector.load %arg16[%c0_225, %c1_226, %c0_227, %c0_228] : memref<1x4x8x1xf32, #tpu.memory_space<vmem>>, vector<1x1x8x1xf32>
    %277 = vector.shape_cast %276 : vector<1x1x8x1xf32> to vector<8x1xf32>
    %278 = vector.broadcast %277 : vector<8x1xf32> to vector<8x16xf32>
    %279 = arith.addf %275, %278 : vector<8x16xf32>
    %cst_229 = arith.constant dense<0.000000e+00> : vector<16x16xf32>
    %280 = tpu.matmul %272, %279, %cst_229 {dimension_numbers = #tpu.dot_dimension_numbers<[1], [0], [0], [1], [0, 0, 1, 1], [], []>} : vector<16x8xf32>, vector<8x16xf32>, vector<16x16xf32> -> vector<16x16xf32>
    %cst_230 = arith.constant -1.000000e+30 : f32
    %281 = vector.broadcast %cst_230 : f32 to vector<16x16xf32>
    %282 = arith.select %37, %280, %281 : vector<16x16xi1>, vector<16x16xf32>
    %cst_231 = arith.constant dense<0xFF800000> : vector<16xf32>
    %283 = vector.multi_reduction <maximumf>, %282, %cst_231 [1] : vector<16x16xf32> to vector<16xf32>
    %284 = vector.shape_cast %283 : vector<16xf32> to vector<16x1xf32>
    %285 = vector.broadcast %284 : vector<16x1xf32> to vector<16x16xf32>
    %286 = arith.subf %282, %285 : vector<16x16xf32>
    %287 = math.exp %286 : vector<16x16xf32>
    %cst_232 = arith.constant dense<0.000000e+00> : vector<16xf32>
    %288 = vector.multi_reduction <add>, %287, %cst_232 [1] : vector<16x16xf32> to vector<16xf32>
    %289 = vector.shape_cast %288 : vector<16xf32> to vector<16x1xf32>
    %290 = tpu.reciprocal %289 {approx = true} : vector<16x1xf32> -> vector<16x1xf32>
    %291 = vector.broadcast %290 : vector<16x1xf32> to vector<16x16xf32>
    %292 = arith.mulf %287, %291 : vector<16x16xf32>
    %c0_233 = arith.constant 0 : index
    %c1_234 = arith.constant 1 : index
    %c0_235 = arith.constant 0 : index
    %c0_236 = arith.constant 0 : index
    %293 = vector.load %arg13[%c0_233, %c1_234, %c0_235, %c0_236] : memref<1x4x32x8xbf16, #tpu.memory_space<vmem>>, vector<1x1x32x8xbf16>
    %294 = vector.shape_cast %293 : vector<1x1x32x8xbf16> to vector<32x8xbf16>
    %cst_237 = arith.constant dense<0.000000e+00> : vector<16x8xf32>
    %295 = tpu.matmul %39, %294, %cst_237 {dimension_numbers = #tpu.dot_dimension_numbers<[1], [0], [0], [1], [0, 0, 1, 1], [], []>} : vector<16x32xf32>, vector<32x8xbf16>, vector<16x8xf32> -> vector<16x8xf32>
    %c0_238 = arith.constant 0 : index
    %c1_239 = arith.constant 1 : index
    %c0_240 = arith.constant 0 : index
    %c0_241 = arith.constant 0 : index
    %296 = vector.load %arg17[%c0_238, %c1_239, %c0_240, %c0_241] : memref<1x4x1x8xf32, #tpu.memory_space<vmem>>, vector<1x1x1x8xf32>
    %297 = vector.shape_cast %296 : vector<1x1x1x8xf32> to vector<1x8xf32>
    %298 = vector.broadcast %297 : vector<1x8xf32> to vector<16x8xf32>
    %299 = arith.addf %295, %298 : vector<16x8xf32>
    %cst_242 = arith.constant dense<0.000000e+00> : vector<16x8xf32>
    %300 = tpu.matmul %292, %299, %cst_242 {dimension_numbers = #tpu.dot_dimension_numbers<[1], [0], [0], [1], [0, 0, 1, 1], [], []>} : vector<16x16xf32>, vector<16x8xf32>, vector<16x8xf32> -> vector<16x8xf32>
    %c0_243 = arith.constant 0 : index
    %c1_244 = arith.constant 1 : index
    %c0_245 = arith.constant 0 : index
    %c0_246 = arith.constant 0 : index
    %301 = vector.load %arg14[%c0_243, %c1_244, %c0_245, %c0_246] : memref<1x4x8x32xbf16, #tpu.memory_space<vmem>>, vector<1x1x8x32xbf16>
    %302 = vector.shape_cast %301 : vector<1x1x8x32xbf16> to vector<8x32xbf16>
    %cst_247 = arith.constant dense<0.000000e+00> : vector<16x32xf32>
    %303 = tpu.matmul %300, %302, %cst_247 {dimension_numbers = #tpu.dot_dimension_numbers<[1], [0], [0], [1], [0, 0, 1, 1], [], []>} : vector<16x8xf32>, vector<8x32xbf16>, vector<16x32xf32> -> vector<16x32xf32>
    %304 = arith.addf %265, %303 : vector<16x32xf32>
    %c0_248 = arith.constant 0 : index
    %c2_249 = arith.constant 2 : index
    %c0_250 = arith.constant 0 : index
    %c0_251 = arith.constant 0 : index
    %305 = vector.load %arg11[%c0_248, %c2_249, %c0_250, %c0_251] : memref<1x4x32x8xbf16, #tpu.memory_space<vmem>>, vector<1x1x32x8xbf16>
    %306 = vector.shape_cast %305 : vector<1x1x32x8xbf16> to vector<32x8xbf16>
    %cst_252 = arith.constant dense<0.000000e+00> : vector<16x8xf32>
    %307 = tpu.matmul %39, %306, %cst_252 {dimension_numbers = #tpu.dot_dimension_numbers<[1], [0], [0], [1], [0, 0, 1, 1], [], []>} : vector<16x32xf32>, vector<32x8xbf16>, vector<16x8xf32> -> vector<16x8xf32>
    %c0_253 = arith.constant 0 : index
    %c2_254 = arith.constant 2 : index
    %c0_255 = arith.constant 0 : index
    %c0_256 = arith.constant 0 : index
    %308 = vector.load %arg15[%c0_253, %c2_254, %c0_255, %c0_256] : memref<1x4x1x8xf32, #tpu.memory_space<vmem>>, vector<1x1x1x8xf32>
    %309 = vector.shape_cast %308 : vector<1x1x1x8xf32> to vector<1x8xf32>
    %310 = vector.broadcast %309 : vector<1x8xf32> to vector<16x8xf32>
    %311 = arith.addf %307, %310 : vector<16x8xf32>
    %c0_257 = arith.constant 0 : index
    %c2_258 = arith.constant 2 : index
    %c0_259 = arith.constant 0 : index
    %c0_260 = arith.constant 0 : index
    %312 = vector.load %arg12[%c0_257, %c2_258, %c0_259, %c0_260] : memref<1x4x8x32xbf16, #tpu.memory_space<vmem>>, vector<1x1x8x32xbf16>
    %313 = vector.shape_cast %312 : vector<1x1x8x32xbf16> to vector<8x32xbf16>
    %cst_261 = arith.constant dense<0.000000e+00> : vector<8x16xf32>
    %314 = tpu.matmul %313, %227, %cst_261 {dimension_numbers = #tpu.dot_dimension_numbers<[1], [0], [0], [1], [0, 0, 1, 1], [], []>} : vector<8x32xbf16>, vector<32x16xf32>, vector<8x16xf32> -> vector<8x16xf32>
    %c0_262 = arith.constant 0 : index
    %c2_263 = arith.constant 2 : index
    %c0_264 = arith.constant 0 : index
    %c0_265 = arith.constant 0 : index
    %315 = vector.load %arg16[%c0_262, %c2_263, %c0_264, %c0_265] : memref<1x4x8x1xf32, #tpu.memory_space<vmem>>, vector<1x1x8x1xf32>
    %316 = vector.shape_cast %315 : vector<1x1x8x1xf32> to vector<8x1xf32>
    %317 = vector.broadcast %316 : vector<8x1xf32> to vector<8x16xf32>
    %318 = arith.addf %314, %317 : vector<8x16xf32>
    %cst_266 = arith.constant dense<0.000000e+00> : vector<16x16xf32>
    %319 = tpu.matmul %311, %318, %cst_266 {dimension_numbers = #tpu.dot_dimension_numbers<[1], [0], [0], [1], [0, 0, 1, 1], [], []>} : vector<16x8xf32>, vector<8x16xf32>, vector<16x16xf32> -> vector<16x16xf32>
    %cst_267 = arith.constant -1.000000e+30 : f32
    %320 = vector.broadcast %cst_267 : f32 to vector<16x16xf32>
    %321 = arith.select %37, %319, %320 : vector<16x16xi1>, vector<16x16xf32>
    %cst_268 = arith.constant dense<0xFF800000> : vector<16xf32>
    %322 = vector.multi_reduction <maximumf>, %321, %cst_268 [1] : vector<16x16xf32> to vector<16xf32>
    %323 = vector.shape_cast %322 : vector<16xf32> to vector<16x1xf32>
    %324 = vector.broadcast %323 : vector<16x1xf32> to vector<16x16xf32>
    %325 = arith.subf %321, %324 : vector<16x16xf32>
    %326 = math.exp %325 : vector<16x16xf32>
    %cst_269 = arith.constant dense<0.000000e+00> : vector<16xf32>
    %327 = vector.multi_reduction <add>, %326, %cst_269 [1] : vector<16x16xf32> to vector<16xf32>
    %328 = vector.shape_cast %327 : vector<16xf32> to vector<16x1xf32>
    %329 = tpu.reciprocal %328 {approx = true} : vector<16x1xf32> -> vector<16x1xf32>
    %330 = vector.broadcast %329 : vector<16x1xf32> to vector<16x16xf32>
    %331 = arith.mulf %326, %330 : vector<16x16xf32>
    %c0_270 = arith.constant 0 : index
    %c2_271 = arith.constant 2 : index
    %c0_272 = arith.constant 0 : index
    %c0_273 = arith.constant 0 : index
    %332 = vector.load %arg13[%c0_270, %c2_271, %c0_272, %c0_273] : memref<1x4x32x8xbf16, #tpu.memory_space<vmem>>, vector<1x1x32x8xbf16>
    %333 = vector.shape_cast %332 : vector<1x1x32x8xbf16> to vector<32x8xbf16>
    %cst_274 = arith.constant dense<0.000000e+00> : vector<16x8xf32>
    %334 = tpu.matmul %39, %333, %cst_274 {dimension_numbers = #tpu.dot_dimension_numbers<[1], [0], [0], [1], [0, 0, 1, 1], [], []>} : vector<16x32xf32>, vector<32x8xbf16>, vector<16x8xf32> -> vector<16x8xf32>
    %c0_275 = arith.constant 0 : index
    %c2_276 = arith.constant 2 : index
    %c0_277 = arith.constant 0 : index
    %c0_278 = arith.constant 0 : index
    %335 = vector.load %arg17[%c0_275, %c2_276, %c0_277, %c0_278] : memref<1x4x1x8xf32, #tpu.memory_space<vmem>>, vector<1x1x1x8xf32>
    %336 = vector.shape_cast %335 : vector<1x1x1x8xf32> to vector<1x8xf32>
    %337 = vector.broadcast %336 : vector<1x8xf32> to vector<16x8xf32>
    %338 = arith.addf %334, %337 : vector<16x8xf32>
    %cst_279 = arith.constant dense<0.000000e+00> : vector<16x8xf32>
    %339 = tpu.matmul %331, %338, %cst_279 {dimension_numbers = #tpu.dot_dimension_numbers<[1], [0], [0], [1], [0, 0, 1, 1], [], []>} : vector<16x16xf32>, vector<16x8xf32>, vector<16x8xf32> -> vector<16x8xf32>
    %c0_280 = arith.constant 0 : index
    %c2_281 = arith.constant 2 : index
    %c0_282 = arith.constant 0 : index
    %c0_283 = arith.constant 0 : index
    %340 = vector.load %arg14[%c0_280, %c2_281, %c0_282, %c0_283] : memref<1x4x8x32xbf16, #tpu.memory_space<vmem>>, vector<1x1x8x32xbf16>
    %341 = vector.shape_cast %340 : vector<1x1x8x32xbf16> to vector<8x32xbf16>
    %cst_284 = arith.constant dense<0.000000e+00> : vector<16x32xf32>
    %342 = tpu.matmul %339, %341, %cst_284 {dimension_numbers = #tpu.dot_dimension_numbers<[1], [0], [0], [1], [0, 0, 1, 1], [], []>} : vector<16x8xf32>, vector<8x32xbf16>, vector<16x32xf32> -> vector<16x32xf32>
    %343 = arith.addf %304, %342 : vector<16x32xf32>
    %c0_285 = arith.constant 0 : index
    %c3_286 = arith.constant 3 : index
    %c0_287 = arith.constant 0 : index
    %c0_288 = arith.constant 0 : index
    %344 = vector.load %arg11[%c0_285, %c3_286, %c0_287, %c0_288] : memref<1x4x32x8xbf16, #tpu.memory_space<vmem>>, vector<1x1x32x8xbf16>
    %345 = vector.shape_cast %344 : vector<1x1x32x8xbf16> to vector<32x8xbf16>
    %cst_289 = arith.constant dense<0.000000e+00> : vector<16x8xf32>
    %346 = tpu.matmul %39, %345, %cst_289 {dimension_numbers = #tpu.dot_dimension_numbers<[1], [0], [0], [1], [0, 0, 1, 1], [], []>} : vector<16x32xf32>, vector<32x8xbf16>, vector<16x8xf32> -> vector<16x8xf32>
    %c0_290 = arith.constant 0 : index
    %c3_291 = arith.constant 3 : index
    %c0_292 = arith.constant 0 : index
    %c0_293 = arith.constant 0 : index
    %347 = vector.load %arg15[%c0_290, %c3_291, %c0_292, %c0_293] : memref<1x4x1x8xf32, #tpu.memory_space<vmem>>, vector<1x1x1x8xf32>
    %348 = vector.shape_cast %347 : vector<1x1x1x8xf32> to vector<1x8xf32>
    %349 = vector.broadcast %348 : vector<1x8xf32> to vector<16x8xf32>
    %350 = arith.addf %346, %349 : vector<16x8xf32>
    %c0_294 = arith.constant 0 : index
    %c3_295 = arith.constant 3 : index
    %c0_296 = arith.constant 0 : index
    %c0_297 = arith.constant 0 : index
    %351 = vector.load %arg12[%c0_294, %c3_295, %c0_296, %c0_297] : memref<1x4x8x32xbf16, #tpu.memory_space<vmem>>, vector<1x1x8x32xbf16>
    %352 = vector.shape_cast %351 : vector<1x1x8x32xbf16> to vector<8x32xbf16>
    %cst_298 = arith.constant dense<0.000000e+00> : vector<8x16xf32>
    %353 = tpu.matmul %352, %227, %cst_298 {dimension_numbers = #tpu.dot_dimension_numbers<[1], [0], [0], [1], [0, 0, 1, 1], [], []>} : vector<8x32xbf16>, vector<32x16xf32>, vector<8x16xf32> -> vector<8x16xf32>
    %c0_299 = arith.constant 0 : index
    %c3_300 = arith.constant 3 : index
    %c0_301 = arith.constant 0 : index
    %c0_302 = arith.constant 0 : index
    %354 = vector.load %arg16[%c0_299, %c3_300, %c0_301, %c0_302] : memref<1x4x8x1xf32, #tpu.memory_space<vmem>>, vector<1x1x8x1xf32>
    %355 = vector.shape_cast %354 : vector<1x1x8x1xf32> to vector<8x1xf32>
    %356 = vector.broadcast %355 : vector<8x1xf32> to vector<8x16xf32>
    %357 = arith.addf %353, %356 : vector<8x16xf32>
    %cst_303 = arith.constant dense<0.000000e+00> : vector<16x16xf32>
    %358 = tpu.matmul %350, %357, %cst_303 {dimension_numbers = #tpu.dot_dimension_numbers<[1], [0], [0], [1], [0, 0, 1, 1], [], []>} : vector<16x8xf32>, vector<8x16xf32>, vector<16x16xf32> -> vector<16x16xf32>
    %cst_304 = arith.constant -1.000000e+30 : f32
    %359 = vector.broadcast %cst_304 : f32 to vector<16x16xf32>
    %360 = arith.select %37, %358, %359 : vector<16x16xi1>, vector<16x16xf32>
    %cst_305 = arith.constant dense<0xFF800000> : vector<16xf32>
    %361 = vector.multi_reduction <maximumf>, %360, %cst_305 [1] : vector<16x16xf32> to vector<16xf32>
    %362 = vector.shape_cast %361 : vector<16xf32> to vector<16x1xf32>
    %363 = vector.broadcast %362 : vector<16x1xf32> to vector<16x16xf32>
    %364 = arith.subf %360, %363 : vector<16x16xf32>
    %365 = math.exp %364 : vector<16x16xf32>
    %cst_306 = arith.constant dense<0.000000e+00> : vector<16xf32>
    %366 = vector.multi_reduction <add>, %365, %cst_306 [1] : vector<16x16xf32> to vector<16xf32>
    %367 = vector.shape_cast %366 : vector<16xf32> to vector<16x1xf32>
    %368 = tpu.reciprocal %367 {approx = true} : vector<16x1xf32> -> vector<16x1xf32>
    %369 = vector.broadcast %368 : vector<16x1xf32> to vector<16x16xf32>
    %370 = arith.mulf %365, %369 : vector<16x16xf32>
    %c0_307 = arith.constant 0 : index
    %c3_308 = arith.constant 3 : index
    %c0_309 = arith.constant 0 : index
    %c0_310 = arith.constant 0 : index
    %371 = vector.load %arg13[%c0_307, %c3_308, %c0_309, %c0_310] : memref<1x4x32x8xbf16, #tpu.memory_space<vmem>>, vector<1x1x32x8xbf16>
    %372 = vector.shape_cast %371 : vector<1x1x32x8xbf16> to vector<32x8xbf16>
    %cst_311 = arith.constant dense<0.000000e+00> : vector<16x8xf32>
    %373 = tpu.matmul %39, %372, %cst_311 {dimension_numbers = #tpu.dot_dimension_numbers<[1], [0], [0], [1], [0, 0, 1, 1], [], []>} : vector<16x32xf32>, vector<32x8xbf16>, vector<16x8xf32> -> vector<16x8xf32>
    %c0_312 = arith.constant 0 : index
    %c3_313 = arith.constant 3 : index
    %c0_314 = arith.constant 0 : index
    %c0_315 = arith.constant 0 : index
    %374 = vector.load %arg17[%c0_312, %c3_313, %c0_314, %c0_315] : memref<1x4x1x8xf32, #tpu.memory_space<vmem>>, vector<1x1x1x8xf32>
    %375 = vector.shape_cast %374 : vector<1x1x1x8xf32> to vector<1x8xf32>
    %376 = vector.broadcast %375 : vector<1x8xf32> to vector<16x8xf32>
    %377 = arith.addf %373, %376 : vector<16x8xf32>
    %cst_316 = arith.constant dense<0.000000e+00> : vector<16x8xf32>
    %378 = tpu.matmul %370, %377, %cst_316 {dimension_numbers = #tpu.dot_dimension_numbers<[1], [0], [0], [1], [0, 0, 1, 1], [], []>} : vector<16x16xf32>, vector<16x8xf32>, vector<16x8xf32> -> vector<16x8xf32>
    %c0_317 = arith.constant 0 : index
    %c3_318 = arith.constant 3 : index
    %c0_319 = arith.constant 0 : index
    %c0_320 = arith.constant 0 : index
    %379 = vector.load %arg14[%c0_317, %c3_318, %c0_319, %c0_320] : memref<1x4x8x32xbf16, #tpu.memory_space<vmem>>, vector<1x1x8x32xbf16>
    %380 = vector.shape_cast %379 : vector<1x1x8x32xbf16> to vector<8x32xbf16>
    %cst_321 = arith.constant dense<0.000000e+00> : vector<16x32xf32>
    %381 = tpu.matmul %378, %380, %cst_321 {dimension_numbers = #tpu.dot_dimension_numbers<[1], [0], [0], [1], [0, 0, 1, 1], [], []>} : vector<16x8xf32>, vector<8x32xbf16>, vector<16x32xf32> -> vector<16x32xf32>
    %382 = arith.addf %343, %381 : vector<16x32xf32>
    %c0_322 = arith.constant 0 : index
    %c0_323 = arith.constant 0 : index
    %c0_324 = arith.constant 0 : index
    %383 = vector.load %arg18[%c0_322, %c0_323, %c0_324] : memref<1x1x32xf32, #tpu.memory_space<vmem>>, vector<1x1x32xf32>
    %384 = vector.shape_cast %383 : vector<1x1x32xf32> to vector<1x32xf32>
    %385 = vector.broadcast %384 : vector<1x32xf32> to vector<16x32xf32>
    %386 = arith.addf %382, %385 : vector<16x32xf32>
    %387 = arith.addf %39, %386 : vector<16x32xf32>
    %c0_325 = arith.constant 0 : index
    %c2_326 = arith.constant 2 : index
    %c0_327 = arith.constant 0 : index
    %c0_328 = arith.constant 0 : index
    %388 = vector.load %arg31[%c0_325, %c2_326, %c0_327, %c0_328] : memref<1x10x1x32xf32, #tpu.memory_space<vmem>>, vector<1x1x1x32xf32>
    %389 = vector.shape_cast %388 : vector<1x1x1x32xf32> to vector<1x32xf32>
    %c0_329 = arith.constant 0 : index
    %c3_330 = arith.constant 3 : index
    %c0_331 = arith.constant 0 : index
    %c0_332 = arith.constant 0 : index
    %390 = vector.load %arg31[%c0_329, %c3_330, %c0_331, %c0_332] : memref<1x10x1x32xf32, #tpu.memory_space<vmem>>, vector<1x1x1x32xf32>
    %391 = vector.shape_cast %390 : vector<1x1x1x32xf32> to vector<1x32xf32>
    %cst_333 = arith.constant dense<0.000000e+00> : vector<16xf32>
    %392 = vector.multi_reduction <add>, %387, %cst_333 [1] : vector<16x32xf32> to vector<16xf32>
    %393 = vector.shape_cast %392 : vector<16xf32> to vector<16x1xf32>
    %cst_334 = arith.constant 3.200000e+01 : f32
    %394 = vector.broadcast %cst_334 : f32 to vector<16x1xf32>
    %395 = arith.divf %393, %394 : vector<16x1xf32>
    %396 = vector.broadcast %395 : vector<16x1xf32> to vector<16x32xf32>
    %397 = arith.subf %387, %396 : vector<16x32xf32>
    %398 = arith.mulf %397, %397 : vector<16x32xf32>
    %cst_335 = arith.constant dense<0.000000e+00> : vector<16xf32>
    %399 = vector.multi_reduction <add>, %398, %cst_335 [1] : vector<16x32xf32> to vector<16xf32>
    %400 = vector.shape_cast %399 : vector<16xf32> to vector<16x1xf32>
    %cst_336 = arith.constant 3.200000e+01 : f32
    %401 = vector.broadcast %cst_336 : f32 to vector<16x1xf32>
    %402 = arith.divf %400, %401 : vector<16x1xf32>
    %403 = vector.broadcast %395 : vector<16x1xf32> to vector<16x32xf32>
    %404 = arith.subf %387, %403 : vector<16x32xf32>
    %cst_337 = arith.constant 9.99999974E-6 : f32
    %405 = vector.broadcast %cst_337 : f32 to vector<16x1xf32>
    %406 = arith.addf %402, %405 : vector<16x1xf32>
    %407 = math.rsqrt %406 : vector<16x1xf32>
    %408 = vector.broadcast %407 : vector<16x1xf32> to vector<16x32xf32>
    %409 = arith.mulf %404, %408 : vector<16x32xf32>
    %410 = vector.broadcast %389 : vector<1x32xf32> to vector<16x32xf32>
    %411 = arith.mulf %409, %410 : vector<16x32xf32>
    %412 = vector.broadcast %391 : vector<1x32xf32> to vector<16x32xf32>
    %413 = arith.addf %411, %412 : vector<16x32xf32>
    %414 = tpu.transpose %226, [1, 0] : vector<16x32xf32> -> vector<32x16xf32>
    %c0_338 = arith.constant 0 : index
    %c0_339 = arith.constant 0 : index
    %c0_340 = arith.constant 0 : index
    %c0_341 = arith.constant 0 : index
    %415 = vector.load %arg19[%c0_338, %c0_339, %c0_340, %c0_341] : memref<1x4x32x8xbf16, #tpu.memory_space<vmem>>, vector<1x1x32x8xbf16>
    %416 = vector.shape_cast %415 : vector<1x1x32x8xbf16> to vector<32x8xbf16>
    %cst_342 = arith.constant dense<0.000000e+00> : vector<16x8xf32>
    %417 = tpu.matmul %413, %416, %cst_342 {dimension_numbers = #tpu.dot_dimension_numbers<[1], [0], [0], [1], [0, 0, 1, 1], [], []>} : vector<16x32xf32>, vector<32x8xbf16>, vector<16x8xf32> -> vector<16x8xf32>
    %c0_343 = arith.constant 0 : index
    %c0_344 = arith.constant 0 : index
    %c0_345 = arith.constant 0 : index
    %c0_346 = arith.constant 0 : index
    %418 = vector.load %arg23[%c0_343, %c0_344, %c0_345, %c0_346] : memref<1x4x1x8xf32, #tpu.memory_space<vmem>>, vector<1x1x1x8xf32>
    %419 = vector.shape_cast %418 : vector<1x1x1x8xf32> to vector<1x8xf32>
    %420 = vector.broadcast %419 : vector<1x8xf32> to vector<16x8xf32>
    %421 = arith.addf %417, %420 : vector<16x8xf32>
    %c0_347 = arith.constant 0 : index
    %c0_348 = arith.constant 0 : index
    %c0_349 = arith.constant 0 : index
    %c0_350 = arith.constant 0 : index
    %422 = vector.load %arg20[%c0_347, %c0_348, %c0_349, %c0_350] : memref<1x4x8x32xbf16, #tpu.memory_space<vmem>>, vector<1x1x8x32xbf16>
    %423 = vector.shape_cast %422 : vector<1x1x8x32xbf16> to vector<8x32xbf16>
    %cst_351 = arith.constant dense<0.000000e+00> : vector<8x16xf32>
    %424 = tpu.matmul %423, %414, %cst_351 {dimension_numbers = #tpu.dot_dimension_numbers<[1], [0], [0], [1], [0, 0, 1, 1], [], []>} : vector<8x32xbf16>, vector<32x16xf32>, vector<8x16xf32> -> vector<8x16xf32>
    %c0_352 = arith.constant 0 : index
    %c0_353 = arith.constant 0 : index
    %c0_354 = arith.constant 0 : index
    %c0_355 = arith.constant 0 : index
    %425 = vector.load %arg24[%c0_352, %c0_353, %c0_354, %c0_355] : memref<1x4x8x1xf32, #tpu.memory_space<vmem>>, vector<1x1x8x1xf32>
    %426 = vector.shape_cast %425 : vector<1x1x8x1xf32> to vector<8x1xf32>
    %427 = vector.broadcast %426 : vector<8x1xf32> to vector<8x16xf32>
    %428 = arith.addf %424, %427 : vector<8x16xf32>
    %cst_356 = arith.constant dense<0.000000e+00> : vector<16x16xf32>
    %429 = tpu.matmul %421, %428, %cst_356 {dimension_numbers = #tpu.dot_dimension_numbers<[1], [0], [0], [1], [0, 0, 1, 1], [], []>} : vector<16x8xf32>, vector<8x16xf32>, vector<16x16xf32> -> vector<16x16xf32>
    %cst_357 = arith.constant -1.000000e+30 : f32
    %430 = vector.broadcast %cst_357 : f32 to vector<16x16xf32>
    %431 = arith.select %37, %429, %430 : vector<16x16xi1>, vector<16x16xf32>
    %cst_358 = arith.constant dense<0xFF800000> : vector<16xf32>
    %432 = vector.multi_reduction <maximumf>, %431, %cst_358 [1] : vector<16x16xf32> to vector<16xf32>
    %433 = vector.shape_cast %432 : vector<16xf32> to vector<16x1xf32>
    %434 = vector.broadcast %433 : vector<16x1xf32> to vector<16x16xf32>
    %435 = arith.subf %431, %434 : vector<16x16xf32>
    %436 = math.exp %435 : vector<16x16xf32>
    %cst_359 = arith.constant dense<0.000000e+00> : vector<16xf32>
    %437 = vector.multi_reduction <add>, %436, %cst_359 [1] : vector<16x16xf32> to vector<16xf32>
    %438 = vector.shape_cast %437 : vector<16xf32> to vector<16x1xf32>
    %439 = tpu.reciprocal %438 {approx = true} : vector<16x1xf32> -> vector<16x1xf32>
    %440 = vector.broadcast %439 : vector<16x1xf32> to vector<16x16xf32>
    %441 = arith.mulf %436, %440 : vector<16x16xf32>
    %c0_360 = arith.constant 0 : index
    %c0_361 = arith.constant 0 : index
    %c0_362 = arith.constant 0 : index
    %c0_363 = arith.constant 0 : index
    %442 = vector.load %arg21[%c0_360, %c0_361, %c0_362, %c0_363] : memref<1x4x32x8xbf16, #tpu.memory_space<vmem>>, vector<1x1x32x8xbf16>
    %443 = vector.shape_cast %442 : vector<1x1x32x8xbf16> to vector<32x8xbf16>
    %cst_364 = arith.constant dense<0.000000e+00> : vector<16x8xf32>
    %444 = tpu.matmul %226, %443, %cst_364 {dimension_numbers = #tpu.dot_dimension_numbers<[1], [0], [0], [1], [0, 0, 1, 1], [], []>} : vector<16x32xf32>, vector<32x8xbf16>, vector<16x8xf32> -> vector<16x8xf32>
    %c0_365 = arith.constant 0 : index
    %c0_366 = arith.constant 0 : index
    %c0_367 = arith.constant 0 : index
    %c0_368 = arith.constant 0 : index
    %445 = vector.load %arg25[%c0_365, %c0_366, %c0_367, %c0_368] : memref<1x4x1x8xf32, #tpu.memory_space<vmem>>, vector<1x1x1x8xf32>
    %446 = vector.shape_cast %445 : vector<1x1x1x8xf32> to vector<1x8xf32>
    %447 = vector.broadcast %446 : vector<1x8xf32> to vector<16x8xf32>
    %448 = arith.addf %444, %447 : vector<16x8xf32>
    %cst_369 = arith.constant dense<0.000000e+00> : vector<16x8xf32>
    %449 = tpu.matmul %441, %448, %cst_369 {dimension_numbers = #tpu.dot_dimension_numbers<[1], [0], [0], [1], [0, 0, 1, 1], [], []>} : vector<16x16xf32>, vector<16x8xf32>, vector<16x8xf32> -> vector<16x8xf32>
    %c0_370 = arith.constant 0 : index
    %c0_371 = arith.constant 0 : index
    %c0_372 = arith.constant 0 : index
    %c0_373 = arith.constant 0 : index
    %450 = vector.load %arg22[%c0_370, %c0_371, %c0_372, %c0_373] : memref<1x4x8x32xbf16, #tpu.memory_space<vmem>>, vector<1x1x8x32xbf16>
    %451 = vector.shape_cast %450 : vector<1x1x8x32xbf16> to vector<8x32xbf16>
    %cst_374 = arith.constant dense<0.000000e+00> : vector<16x32xf32>
    %452 = tpu.matmul %449, %451, %cst_374 {dimension_numbers = #tpu.dot_dimension_numbers<[1], [0], [0], [1], [0, 0, 1, 1], [], []>} : vector<16x8xf32>, vector<8x32xbf16>, vector<16x32xf32> -> vector<16x32xf32>
    %c0_375 = arith.constant 0 : index
    %c1_376 = arith.constant 1 : index
    %c0_377 = arith.constant 0 : index
    %c0_378 = arith.constant 0 : index
    %453 = vector.load %arg19[%c0_375, %c1_376, %c0_377, %c0_378] : memref<1x4x32x8xbf16, #tpu.memory_space<vmem>>, vector<1x1x32x8xbf16>
    %454 = vector.shape_cast %453 : vector<1x1x32x8xbf16> to vector<32x8xbf16>
    %cst_379 = arith.constant dense<0.000000e+00> : vector<16x8xf32>
    %455 = tpu.matmul %413, %454, %cst_379 {dimension_numbers = #tpu.dot_dimension_numbers<[1], [0], [0], [1], [0, 0, 1, 1], [], []>} : vector<16x32xf32>, vector<32x8xbf16>, vector<16x8xf32> -> vector<16x8xf32>
    %c0_380 = arith.constant 0 : index
    %c1_381 = arith.constant 1 : index
    %c0_382 = arith.constant 0 : index
    %c0_383 = arith.constant 0 : index
    %456 = vector.load %arg23[%c0_380, %c1_381, %c0_382, %c0_383] : memref<1x4x1x8xf32, #tpu.memory_space<vmem>>, vector<1x1x1x8xf32>
    %457 = vector.shape_cast %456 : vector<1x1x1x8xf32> to vector<1x8xf32>
    %458 = vector.broadcast %457 : vector<1x8xf32> to vector<16x8xf32>
    %459 = arith.addf %455, %458 : vector<16x8xf32>
    %c0_384 = arith.constant 0 : index
    %c1_385 = arith.constant 1 : index
    %c0_386 = arith.constant 0 : index
    %c0_387 = arith.constant 0 : index
    %460 = vector.load %arg20[%c0_384, %c1_385, %c0_386, %c0_387] : memref<1x4x8x32xbf16, #tpu.memory_space<vmem>>, vector<1x1x8x32xbf16>
    %461 = vector.shape_cast %460 : vector<1x1x8x32xbf16> to vector<8x32xbf16>
    %cst_388 = arith.constant dense<0.000000e+00> : vector<8x16xf32>
    %462 = tpu.matmul %461, %414, %cst_388 {dimension_numbers = #tpu.dot_dimension_numbers<[1], [0], [0], [1], [0, 0, 1, 1], [], []>} : vector<8x32xbf16>, vector<32x16xf32>, vector<8x16xf32> -> vector<8x16xf32>
    %c0_389 = arith.constant 0 : index
    %c1_390 = arith.constant 1 : index
    %c0_391 = arith.constant 0 : index
    %c0_392 = arith.constant 0 : index
    %463 = vector.load %arg24[%c0_389, %c1_390, %c0_391, %c0_392] : memref<1x4x8x1xf32, #tpu.memory_space<vmem>>, vector<1x1x8x1xf32>
    %464 = vector.shape_cast %463 : vector<1x1x8x1xf32> to vector<8x1xf32>
    %465 = vector.broadcast %464 : vector<8x1xf32> to vector<8x16xf32>
    %466 = arith.addf %462, %465 : vector<8x16xf32>
    %cst_393 = arith.constant dense<0.000000e+00> : vector<16x16xf32>
    %467 = tpu.matmul %459, %466, %cst_393 {dimension_numbers = #tpu.dot_dimension_numbers<[1], [0], [0], [1], [0, 0, 1, 1], [], []>} : vector<16x8xf32>, vector<8x16xf32>, vector<16x16xf32> -> vector<16x16xf32>
    %cst_394 = arith.constant -1.000000e+30 : f32
    %468 = vector.broadcast %cst_394 : f32 to vector<16x16xf32>
    %469 = arith.select %37, %467, %468 : vector<16x16xi1>, vector<16x16xf32>
    %cst_395 = arith.constant dense<0xFF800000> : vector<16xf32>
    %470 = vector.multi_reduction <maximumf>, %469, %cst_395 [1] : vector<16x16xf32> to vector<16xf32>
    %471 = vector.shape_cast %470 : vector<16xf32> to vector<16x1xf32>
    %472 = vector.broadcast %471 : vector<16x1xf32> to vector<16x16xf32>
    %473 = arith.subf %469, %472 : vector<16x16xf32>
    %474 = math.exp %473 : vector<16x16xf32>
    %cst_396 = arith.constant dense<0.000000e+00> : vector<16xf32>
    %475 = vector.multi_reduction <add>, %474, %cst_396 [1] : vector<16x16xf32> to vector<16xf32>
    %476 = vector.shape_cast %475 : vector<16xf32> to vector<16x1xf32>
    %477 = tpu.reciprocal %476 {approx = true} : vector<16x1xf32> -> vector<16x1xf32>
    %478 = vector.broadcast %477 : vector<16x1xf32> to vector<16x16xf32>
    %479 = arith.mulf %474, %478 : vector<16x16xf32>
    %c0_397 = arith.constant 0 : index
    %c1_398 = arith.constant 1 : index
    %c0_399 = arith.constant 0 : index
    %c0_400 = arith.constant 0 : index
    %480 = vector.load %arg21[%c0_397, %c1_398, %c0_399, %c0_400] : memref<1x4x32x8xbf16, #tpu.memory_space<vmem>>, vector<1x1x32x8xbf16>
    %481 = vector.shape_cast %480 : vector<1x1x32x8xbf16> to vector<32x8xbf16>
    %cst_401 = arith.constant dense<0.000000e+00> : vector<16x8xf32>
    %482 = tpu.matmul %226, %481, %cst_401 {dimension_numbers = #tpu.dot_dimension_numbers<[1], [0], [0], [1], [0, 0, 1, 1], [], []>} : vector<16x32xf32>, vector<32x8xbf16>, vector<16x8xf32> -> vector<16x8xf32>
    %c0_402 = arith.constant 0 : index
    %c1_403 = arith.constant 1 : index
    %c0_404 = arith.constant 0 : index
    %c0_405 = arith.constant 0 : index
    %483 = vector.load %arg25[%c0_402, %c1_403, %c0_404, %c0_405] : memref<1x4x1x8xf32, #tpu.memory_space<vmem>>, vector<1x1x1x8xf32>
    %484 = vector.shape_cast %483 : vector<1x1x1x8xf32> to vector<1x8xf32>
    %485 = vector.broadcast %484 : vector<1x8xf32> to vector<16x8xf32>
    %486 = arith.addf %482, %485 : vector<16x8xf32>
    %cst_406 = arith.constant dense<0.000000e+00> : vector<16x8xf32>
    %487 = tpu.matmul %479, %486, %cst_406 {dimension_numbers = #tpu.dot_dimension_numbers<[1], [0], [0], [1], [0, 0, 1, 1], [], []>} : vector<16x16xf32>, vector<16x8xf32>, vector<16x8xf32> -> vector<16x8xf32>
    %c0_407 = arith.constant 0 : index
    %c1_408 = arith.constant 1 : index
    %c0_409 = arith.constant 0 : index
    %c0_410 = arith.constant 0 : index
    %488 = vector.load %arg22[%c0_407, %c1_408, %c0_409, %c0_410] : memref<1x4x8x32xbf16, #tpu.memory_space<vmem>>, vector<1x1x8x32xbf16>
    %489 = vector.shape_cast %488 : vector<1x1x8x32xbf16> to vector<8x32xbf16>
    %cst_411 = arith.constant dense<0.000000e+00> : vector<16x32xf32>
    %490 = tpu.matmul %487, %489, %cst_411 {dimension_numbers = #tpu.dot_dimension_numbers<[1], [0], [0], [1], [0, 0, 1, 1], [], []>} : vector<16x8xf32>, vector<8x32xbf16>, vector<16x32xf32> -> vector<16x32xf32>
    %491 = arith.addf %452, %490 : vector<16x32xf32>
    %c0_412 = arith.constant 0 : index
    %c2_413 = arith.constant 2 : index
    %c0_414 = arith.constant 0 : index
    %c0_415 = arith.constant 0 : index
    %492 = vector.load %arg19[%c0_412, %c2_413, %c0_414, %c0_415] : memref<1x4x32x8xbf16, #tpu.memory_space<vmem>>, vector<1x1x32x8xbf16>
    %493 = vector.shape_cast %492 : vector<1x1x32x8xbf16> to vector<32x8xbf16>
    %cst_416 = arith.constant dense<0.000000e+00> : vector<16x8xf32>
    %494 = tpu.matmul %413, %493, %cst_416 {dimension_numbers = #tpu.dot_dimension_numbers<[1], [0], [0], [1], [0, 0, 1, 1], [], []>} : vector<16x32xf32>, vector<32x8xbf16>, vector<16x8xf32> -> vector<16x8xf32>
    %c0_417 = arith.constant 0 : index
    %c2_418 = arith.constant 2 : index
    %c0_419 = arith.constant 0 : index
    %c0_420 = arith.constant 0 : index
    %495 = vector.load %arg23[%c0_417, %c2_418, %c0_419, %c0_420] : memref<1x4x1x8xf32, #tpu.memory_space<vmem>>, vector<1x1x1x8xf32>
    %496 = vector.shape_cast %495 : vector<1x1x1x8xf32> to vector<1x8xf32>
    %497 = vector.broadcast %496 : vector<1x8xf32> to vector<16x8xf32>
    %498 = arith.addf %494, %497 : vector<16x8xf32>
    %c0_421 = arith.constant 0 : index
    %c2_422 = arith.constant 2 : index
    %c0_423 = arith.constant 0 : index
    %c0_424 = arith.constant 0 : index
    %499 = vector.load %arg20[%c0_421, %c2_422, %c0_423, %c0_424] : memref<1x4x8x32xbf16, #tpu.memory_space<vmem>>, vector<1x1x8x32xbf16>
    %500 = vector.shape_cast %499 : vector<1x1x8x32xbf16> to vector<8x32xbf16>
    %cst_425 = arith.constant dense<0.000000e+00> : vector<8x16xf32>
    %501 = tpu.matmul %500, %414, %cst_425 {dimension_numbers = #tpu.dot_dimension_numbers<[1], [0], [0], [1], [0, 0, 1, 1], [], []>} : vector<8x32xbf16>, vector<32x16xf32>, vector<8x16xf32> -> vector<8x16xf32>
    %c0_426 = arith.constant 0 : index
    %c2_427 = arith.constant 2 : index
    %c0_428 = arith.constant 0 : index
    %c0_429 = arith.constant 0 : index
    %502 = vector.load %arg24[%c0_426, %c2_427, %c0_428, %c0_429] : memref<1x4x8x1xf32, #tpu.memory_space<vmem>>, vector<1x1x8x1xf32>
    %503 = vector.shape_cast %502 : vector<1x1x8x1xf32> to vector<8x1xf32>
    %504 = vector.broadcast %503 : vector<8x1xf32> to vector<8x16xf32>
    %505 = arith.addf %501, %504 : vector<8x16xf32>
    %cst_430 = arith.constant dense<0.000000e+00> : vector<16x16xf32>
    %506 = tpu.matmul %498, %505, %cst_430 {dimension_numbers = #tpu.dot_dimension_numbers<[1], [0], [0], [1], [0, 0, 1, 1], [], []>} : vector<16x8xf32>, vector<8x16xf32>, vector<16x16xf32> -> vector<16x16xf32>
    %cst_431 = arith.constant -1.000000e+30 : f32
    %507 = vector.broadcast %cst_431 : f32 to vector<16x16xf32>
    %508 = arith.select %37, %506, %507 : vector<16x16xi1>, vector<16x16xf32>
    %cst_432 = arith.constant dense<0xFF800000> : vector<16xf32>
    %509 = vector.multi_reduction <maximumf>, %508, %cst_432 [1] : vector<16x16xf32> to vector<16xf32>
    %510 = vector.shape_cast %509 : vector<16xf32> to vector<16x1xf32>
    %511 = vector.broadcast %510 : vector<16x1xf32> to vector<16x16xf32>
    %512 = arith.subf %508, %511 : vector<16x16xf32>
    %513 = math.exp %512 : vector<16x16xf32>
    %cst_433 = arith.constant dense<0.000000e+00> : vector<16xf32>
    %514 = vector.multi_reduction <add>, %513, %cst_433 [1] : vector<16x16xf32> to vector<16xf32>
    %515 = vector.shape_cast %514 : vector<16xf32> to vector<16x1xf32>
    %516 = tpu.reciprocal %515 {approx = true} : vector<16x1xf32> -> vector<16x1xf32>
    %517 = vector.broadcast %516 : vector<16x1xf32> to vector<16x16xf32>
    %518 = arith.mulf %513, %517 : vector<16x16xf32>
    %c0_434 = arith.constant 0 : index
    %c2_435 = arith.constant 2 : index
    %c0_436 = arith.constant 0 : index
    %c0_437 = arith.constant 0 : index
    %519 = vector.load %arg21[%c0_434, %c2_435, %c0_436, %c0_437] : memref<1x4x32x8xbf16, #tpu.memory_space<vmem>>, vector<1x1x32x8xbf16>
    %520 = vector.shape_cast %519 : vector<1x1x32x8xbf16> to vector<32x8xbf16>
    %cst_438 = arith.constant dense<0.000000e+00> : vector<16x8xf32>
    %521 = tpu.matmul %226, %520, %cst_438 {dimension_numbers = #tpu.dot_dimension_numbers<[1], [0], [0], [1], [0, 0, 1, 1], [], []>} : vector<16x32xf32>, vector<32x8xbf16>, vector<16x8xf32> -> vector<16x8xf32>
    %c0_439 = arith.constant 0 : index
    %c2_440 = arith.constant 2 : index
    %c0_441 = arith.constant 0 : index
    %c0_442 = arith.constant 0 : index
    %522 = vector.load %arg25[%c0_439, %c2_440, %c0_441, %c0_442] : memref<1x4x1x8xf32, #tpu.memory_space<vmem>>, vector<1x1x1x8xf32>
    %523 = vector.shape_cast %522 : vector<1x1x1x8xf32> to vector<1x8xf32>
    %524 = vector.broadcast %523 : vector<1x8xf32> to vector<16x8xf32>
    %525 = arith.addf %521, %524 : vector<16x8xf32>
    %cst_443 = arith.constant dense<0.000000e+00> : vector<16x8xf32>
    %526 = tpu.matmul %518, %525, %cst_443 {dimension_numbers = #tpu.dot_dimension_numbers<[1], [0], [0], [1], [0, 0, 1, 1], [], []>} : vector<16x16xf32>, vector<16x8xf32>, vector<16x8xf32> -> vector<16x8xf32>
    %c0_444 = arith.constant 0 : index
    %c2_445 = arith.constant 2 : index
    %c0_446 = arith.constant 0 : index
    %c0_447 = arith.constant 0 : index
    %527 = vector.load %arg22[%c0_444, %c2_445, %c0_446, %c0_447] : memref<1x4x8x32xbf16, #tpu.memory_space<vmem>>, vector<1x1x8x32xbf16>
    %528 = vector.shape_cast %527 : vector<1x1x8x32xbf16> to vector<8x32xbf16>
    %cst_448 = arith.constant dense<0.000000e+00> : vector<16x32xf32>
    %529 = tpu.matmul %526, %528, %cst_448 {dimension_numbers = #tpu.dot_dimension_numbers<[1], [0], [0], [1], [0, 0, 1, 1], [], []>} : vector<16x8xf32>, vector<8x32xbf16>, vector<16x32xf32> -> vector<16x32xf32>
    %530 = arith.addf %491, %529 : vector<16x32xf32>
    %c0_449 = arith.constant 0 : index
    %c3_450 = arith.constant 3 : index
    %c0_451 = arith.constant 0 : index
    %c0_452 = arith.constant 0 : index
    %531 = vector.load %arg19[%c0_449, %c3_450, %c0_451, %c0_452] : memref<1x4x32x8xbf16, #tpu.memory_space<vmem>>, vector<1x1x32x8xbf16>
    %532 = vector.shape_cast %531 : vector<1x1x32x8xbf16> to vector<32x8xbf16>
    %cst_453 = arith.constant dense<0.000000e+00> : vector<16x8xf32>
    %533 = tpu.matmul %413, %532, %cst_453 {dimension_numbers = #tpu.dot_dimension_numbers<[1], [0], [0], [1], [0, 0, 1, 1], [], []>} : vector<16x32xf32>, vector<32x8xbf16>, vector<16x8xf32> -> vector<16x8xf32>
    %c0_454 = arith.constant 0 : index
    %c3_455 = arith.constant 3 : index
    %c0_456 = arith.constant 0 : index
    %c0_457 = arith.constant 0 : index
    %534 = vector.load %arg23[%c0_454, %c3_455, %c0_456, %c0_457] : memref<1x4x1x8xf32, #tpu.memory_space<vmem>>, vector<1x1x1x8xf32>
    %535 = vector.shape_cast %534 : vector<1x1x1x8xf32> to vector<1x8xf32>
    %536 = vector.broadcast %535 : vector<1x8xf32> to vector<16x8xf32>
    %537 = arith.addf %533, %536 : vector<16x8xf32>
    %c0_458 = arith.constant 0 : index
    %c3_459 = arith.constant 3 : index
    %c0_460 = arith.constant 0 : index
    %c0_461 = arith.constant 0 : index
    %538 = vector.load %arg20[%c0_458, %c3_459, %c0_460, %c0_461] : memref<1x4x8x32xbf16, #tpu.memory_space<vmem>>, vector<1x1x8x32xbf16>
    %539 = vector.shape_cast %538 : vector<1x1x8x32xbf16> to vector<8x32xbf16>
    %cst_462 = arith.constant dense<0.000000e+00> : vector<8x16xf32>
    %540 = tpu.matmul %539, %414, %cst_462 {dimension_numbers = #tpu.dot_dimension_numbers<[1], [0], [0], [1], [0, 0, 1, 1], [], []>} : vector<8x32xbf16>, vector<32x16xf32>, vector<8x16xf32> -> vector<8x16xf32>
    %c0_463 = arith.constant 0 : index
    %c3_464 = arith.constant 3 : index
    %c0_465 = arith.constant 0 : index
    %c0_466 = arith.constant 0 : index
    %541 = vector.load %arg24[%c0_463, %c3_464, %c0_465, %c0_466] : memref<1x4x8x1xf32, #tpu.memory_space<vmem>>, vector<1x1x8x1xf32>
    %542 = vector.shape_cast %541 : vector<1x1x8x1xf32> to vector<8x1xf32>
    %543 = vector.broadcast %542 : vector<8x1xf32> to vector<8x16xf32>
    %544 = arith.addf %540, %543 : vector<8x16xf32>
    %cst_467 = arith.constant dense<0.000000e+00> : vector<16x16xf32>
    %545 = tpu.matmul %537, %544, %cst_467 {dimension_numbers = #tpu.dot_dimension_numbers<[1], [0], [0], [1], [0, 0, 1, 1], [], []>} : vector<16x8xf32>, vector<8x16xf32>, vector<16x16xf32> -> vector<16x16xf32>
    %cst_468 = arith.constant -1.000000e+30 : f32
    %546 = vector.broadcast %cst_468 : f32 to vector<16x16xf32>
    %547 = arith.select %37, %545, %546 : vector<16x16xi1>, vector<16x16xf32>
    %cst_469 = arith.constant dense<0xFF800000> : vector<16xf32>
    %548 = vector.multi_reduction <maximumf>, %547, %cst_469 [1] : vector<16x16xf32> to vector<16xf32>
    %549 = vector.shape_cast %548 : vector<16xf32> to vector<16x1xf32>
    %550 = vector.broadcast %549 : vector<16x1xf32> to vector<16x16xf32>
    %551 = arith.subf %547, %550 : vector<16x16xf32>
    %552 = math.exp %551 : vector<16x16xf32>
    %cst_470 = arith.constant dense<0.000000e+00> : vector<16xf32>
    %553 = vector.multi_reduction <add>, %552, %cst_470 [1] : vector<16x16xf32> to vector<16xf32>
    %554 = vector.shape_cast %553 : vector<16xf32> to vector<16x1xf32>
    %555 = tpu.reciprocal %554 {approx = true} : vector<16x1xf32> -> vector<16x1xf32>
    %556 = vector.broadcast %555 : vector<16x1xf32> to vector<16x16xf32>
    %557 = arith.mulf %552, %556 : vector<16x16xf32>
    %c0_471 = arith.constant 0 : index
    %c3_472 = arith.constant 3 : index
    %c0_473 = arith.constant 0 : index
    %c0_474 = arith.constant 0 : index
    %558 = vector.load %arg21[%c0_471, %c3_472, %c0_473, %c0_474] : memref<1x4x32x8xbf16, #tpu.memory_space<vmem>>, vector<1x1x32x8xbf16>
    %559 = vector.shape_cast %558 : vector<1x1x32x8xbf16> to vector<32x8xbf16>
    %cst_475 = arith.constant dense<0.000000e+00> : vector<16x8xf32>
    %560 = tpu.matmul %226, %559, %cst_475 {dimension_numbers = #tpu.dot_dimension_numbers<[1], [0], [0], [1], [0, 0, 1, 1], [], []>} : vector<16x32xf32>, vector<32x8xbf16>, vector<16x8xf32> -> vector<16x8xf32>
    %c0_476 = arith.constant 0 : index
    %c3_477 = arith.constant 3 : index
    %c0_478 = arith.constant 0 : index
    %c0_479 = arith.constant 0 : index
    %561 = vector.load %arg25[%c0_476, %c3_477, %c0_478, %c0_479] : memref<1x4x1x8xf32, #tpu.memory_space<vmem>>, vector<1x1x1x8xf32>
    %562 = vector.shape_cast %561 : vector<1x1x1x8xf32> to vector<1x8xf32>
    %563 = vector.broadcast %562 : vector<1x8xf32> to vector<16x8xf32>
    %564 = arith.addf %560, %563 : vector<16x8xf32>
    %cst_480 = arith.constant dense<0.000000e+00> : vector<16x8xf32>
    %565 = tpu.matmul %557, %564, %cst_480 {dimension_numbers = #tpu.dot_dimension_numbers<[1], [0], [0], [1], [0, 0, 1, 1], [], []>} : vector<16x16xf32>, vector<16x8xf32>, vector<16x8xf32> -> vector<16x8xf32>
    %c0_481 = arith.constant 0 : index
    %c3_482 = arith.constant 3 : index
    %c0_483 = arith.constant 0 : index
    %c0_484 = arith.constant 0 : index
    %566 = vector.load %arg22[%c0_481, %c3_482, %c0_483, %c0_484] : memref<1x4x8x32xbf16, #tpu.memory_space<vmem>>, vector<1x1x8x32xbf16>
    %567 = vector.shape_cast %566 : vector<1x1x8x32xbf16> to vector<8x32xbf16>
    %cst_485 = arith.constant dense<0.000000e+00> : vector<16x32xf32>
    %568 = tpu.matmul %565, %567, %cst_485 {dimension_numbers = #tpu.dot_dimension_numbers<[1], [0], [0], [1], [0, 0, 1, 1], [], []>} : vector<16x8xf32>, vector<8x32xbf16>, vector<16x32xf32> -> vector<16x32xf32>
    %569 = arith.addf %530, %568 : vector<16x32xf32>
    %c0_486 = arith.constant 0 : index
    %c0_487 = arith.constant 0 : index
    %c0_488 = arith.constant 0 : index
    %570 = vector.load %arg26[%c0_486, %c0_487, %c0_488] : memref<1x1x32xf32, #tpu.memory_space<vmem>>, vector<1x1x32xf32>
    %571 = vector.shape_cast %570 : vector<1x1x32xf32> to vector<1x32xf32>
    %572 = vector.broadcast %571 : vector<1x32xf32> to vector<16x32xf32>
    %573 = arith.addf %569, %572 : vector<16x32xf32>
    %574 = arith.addf %413, %573 : vector<16x32xf32>
    %c0_489 = arith.constant 0 : index
    %c4 = arith.constant 4 : index
    %c0_490 = arith.constant 0 : index
    %c0_491 = arith.constant 0 : index
    %575 = vector.load %arg31[%c0_489, %c4, %c0_490, %c0_491] : memref<1x10x1x32xf32, #tpu.memory_space<vmem>>, vector<1x1x1x32xf32>
    %576 = vector.shape_cast %575 : vector<1x1x1x32xf32> to vector<1x32xf32>
    %c0_492 = arith.constant 0 : index
    %c5 = arith.constant 5 : index
    %c0_493 = arith.constant 0 : index
    %c0_494 = arith.constant 0 : index
    %577 = vector.load %arg31[%c0_492, %c5, %c0_493, %c0_494] : memref<1x10x1x32xf32, #tpu.memory_space<vmem>>, vector<1x1x1x32xf32>
    %578 = vector.shape_cast %577 : vector<1x1x1x32xf32> to vector<1x32xf32>
    %cst_495 = arith.constant dense<0.000000e+00> : vector<16xf32>
    %579 = vector.multi_reduction <add>, %574, %cst_495 [1] : vector<16x32xf32> to vector<16xf32>
    %580 = vector.shape_cast %579 : vector<16xf32> to vector<16x1xf32>
    %cst_496 = arith.constant 3.200000e+01 : f32
    %581 = vector.broadcast %cst_496 : f32 to vector<16x1xf32>
    %582 = arith.divf %580, %581 : vector<16x1xf32>
    %583 = vector.broadcast %582 : vector<16x1xf32> to vector<16x32xf32>
    %584 = arith.subf %574, %583 : vector<16x32xf32>
    %585 = arith.mulf %584, %584 : vector<16x32xf32>
    %cst_497 = arith.constant dense<0.000000e+00> : vector<16xf32>
    %586 = vector.multi_reduction <add>, %585, %cst_497 [1] : vector<16x32xf32> to vector<16xf32>
    %587 = vector.shape_cast %586 : vector<16xf32> to vector<16x1xf32>
    %cst_498 = arith.constant 3.200000e+01 : f32
    %588 = vector.broadcast %cst_498 : f32 to vector<16x1xf32>
    %589 = arith.divf %587, %588 : vector<16x1xf32>
    %590 = vector.broadcast %582 : vector<16x1xf32> to vector<16x32xf32>
    %591 = arith.subf %574, %590 : vector<16x32xf32>
    %cst_499 = arith.constant 9.99999974E-6 : f32
    %592 = vector.broadcast %cst_499 : f32 to vector<16x1xf32>
    %593 = arith.addf %589, %592 : vector<16x1xf32>
    %594 = math.rsqrt %593 : vector<16x1xf32>
    %595 = vector.broadcast %594 : vector<16x1xf32> to vector<16x32xf32>
    %596 = arith.mulf %591, %595 : vector<16x32xf32>
    %597 = vector.broadcast %576 : vector<1x32xf32> to vector<16x32xf32>
    %598 = arith.mulf %596, %597 : vector<16x32xf32>
    %599 = vector.broadcast %578 : vector<1x32xf32> to vector<16x32xf32>
    %600 = arith.addf %598, %599 : vector<16x32xf32>
    %c0_500 = arith.constant 0 : index
    %c0_501 = arith.constant 0 : index
    %c0_502 = arith.constant 0 : index
    %601 = vector.load %arg27[%c0_500, %c0_501, %c0_502] : memref<1x32x2048xbf16, #tpu.memory_space<vmem>>, vector<1x32x2048xbf16>
    %602 = vector.shape_cast %601 : vector<1x32x2048xbf16> to vector<32x2048xbf16>
    %cst_503 = arith.constant dense<0.000000e+00> : vector<16x2048xf32>
    %603 = tpu.matmul %600, %602, %cst_503 {dimension_numbers = #tpu.dot_dimension_numbers<[1], [0], [0], [1], [0, 0, 1, 1], [], []>} : vector<16x32xf32>, vector<32x2048xbf16>, vector<16x2048xf32> -> vector<16x2048xf32>
    %c0_504 = arith.constant 0 : index
    %c0_505 = arith.constant 0 : index
    %c0_506 = arith.constant 0 : index
    %604 = vector.load %arg28[%c0_504, %c0_505, %c0_506] : memref<1x1x2048xf32, #tpu.memory_space<vmem>>, vector<1x1x2048xf32>
    %605 = vector.shape_cast %604 : vector<1x1x2048xf32> to vector<1x2048xf32>
    %606 = vector.broadcast %605 : vector<1x2048xf32> to vector<16x2048xf32>
    %607 = arith.addf %603, %606 : vector<16x2048xf32>
    %cst_507 = arith.constant 0.000000e+00 : f32
    %608 = vector.broadcast %cst_507 : f32 to vector<16x2048xf32>
    %609 = arith.maximumf %607, %608 : vector<16x2048xf32>
    %c0_508 = arith.constant 0 : index
    %c0_509 = arith.constant 0 : index
    %c0_510 = arith.constant 0 : index
    %610 = vector.load %arg29[%c0_508, %c0_509, %c0_510] : memref<1x2048x32xbf16, #tpu.memory_space<vmem>>, vector<1x2048x32xbf16>
    %611 = vector.shape_cast %610 : vector<1x2048x32xbf16> to vector<2048x32xbf16>
    %cst_511 = arith.constant dense<0.000000e+00> : vector<16x32xf32>
    %612 = tpu.matmul %609, %611, %cst_511 {dimension_numbers = #tpu.dot_dimension_numbers<[1], [0], [0], [1], [0, 0, 1, 1], [], []>} : vector<16x2048xf32>, vector<2048x32xbf16>, vector<16x32xf32> -> vector<16x32xf32>
    %c0_512 = arith.constant 0 : index
    %c0_513 = arith.constant 0 : index
    %c0_514 = arith.constant 0 : index
    %613 = vector.load %arg30[%c0_512, %c0_513, %c0_514] : memref<1x1x32xf32, #tpu.memory_space<vmem>>, vector<1x1x32xf32>
    %614 = vector.shape_cast %613 : vector<1x1x32xf32> to vector<1x32xf32>
    %615 = vector.broadcast %614 : vector<1x32xf32> to vector<16x32xf32>
    %616 = arith.addf %612, %615 : vector<16x32xf32>
    %617 = arith.addf %600, %616 : vector<16x32xf32>
    %c0_515 = arith.constant 0 : index
    %c6 = arith.constant 6 : index
    %c0_516 = arith.constant 0 : index
    %c0_517 = arith.constant 0 : index
    %618 = vector.load %arg31[%c0_515, %c6, %c0_516, %c0_517] : memref<1x10x1x32xf32, #tpu.memory_space<vmem>>, vector<1x1x1x32xf32>
    %619 = vector.shape_cast %618 : vector<1x1x1x32xf32> to vector<1x32xf32>
    %c0_518 = arith.constant 0 : index
    %c7 = arith.constant 7 : index
    %c0_519 = arith.constant 0 : index
    %c0_520 = arith.constant 0 : index
    %620 = vector.load %arg31[%c0_518, %c7, %c0_519, %c0_520] : memref<1x10x1x32xf32, #tpu.memory_space<vmem>>, vector<1x1x1x32xf32>
    %621 = vector.shape_cast %620 : vector<1x1x1x32xf32> to vector<1x32xf32>
    %cst_521 = arith.constant dense<0.000000e+00> : vector<16xf32>
    %622 = vector.multi_reduction <add>, %617, %cst_521 [1] : vector<16x32xf32> to vector<16xf32>
    %623 = vector.shape_cast %622 : vector<16xf32> to vector<16x1xf32>
    %cst_522 = arith.constant 3.200000e+01 : f32
    %624 = vector.broadcast %cst_522 : f32 to vector<16x1xf32>
    %625 = arith.divf %623, %624 : vector<16x1xf32>
    %626 = vector.broadcast %625 : vector<16x1xf32> to vector<16x32xf32>
    %627 = arith.subf %617, %626 : vector<16x32xf32>
    %628 = arith.mulf %627, %627 : vector<16x32xf32>
    %cst_523 = arith.constant dense<0.000000e+00> : vector<16xf32>
    %629 = vector.multi_reduction <add>, %628, %cst_523 [1] : vector<16x32xf32> to vector<16xf32>
    %630 = vector.shape_cast %629 : vector<16xf32> to vector<16x1xf32>
    %cst_524 = arith.constant 3.200000e+01 : f32
    %631 = vector.broadcast %cst_524 : f32 to vector<16x1xf32>
    %632 = arith.divf %630, %631 : vector<16x1xf32>
    %633 = vector.broadcast %625 : vector<16x1xf32> to vector<16x32xf32>
    %634 = arith.subf %617, %633 : vector<16x32xf32>
    %cst_525 = arith.constant 9.99999974E-6 : f32
    %635 = vector.broadcast %cst_525 : f32 to vector<16x1xf32>
    %636 = arith.addf %632, %635 : vector<16x1xf32>
    %637 = math.rsqrt %636 : vector<16x1xf32>
    %638 = vector.broadcast %637 : vector<16x1xf32> to vector<16x32xf32>
    %639 = arith.mulf %634, %638 : vector<16x32xf32>
    %640 = vector.broadcast %619 : vector<1x32xf32> to vector<16x32xf32>
    %641 = arith.mulf %639, %640 : vector<16x32xf32>
    %642 = vector.broadcast %621 : vector<1x32xf32> to vector<16x32xf32>
    %643 = arith.addf %641, %642 : vector<16x32xf32>
    %644 = arith.addf %226, %643 : vector<16x32xf32>
    %c0_526 = arith.constant 0 : index
    %c8 = arith.constant 8 : index
    %c0_527 = arith.constant 0 : index
    %c0_528 = arith.constant 0 : index
    %645 = vector.load %arg31[%c0_526, %c8, %c0_527, %c0_528] : memref<1x10x1x32xf32, #tpu.memory_space<vmem>>, vector<1x1x1x32xf32>
    %646 = vector.shape_cast %645 : vector<1x1x1x32xf32> to vector<1x32xf32>
    %c0_529 = arith.constant 0 : index
    %c9 = arith.constant 9 : index
    %c0_530 = arith.constant 0 : index
    %c0_531 = arith.constant 0 : index
    %647 = vector.load %arg31[%c0_529, %c9, %c0_530, %c0_531] : memref<1x10x1x32xf32, #tpu.memory_space<vmem>>, vector<1x1x1x32xf32>
    %648 = vector.shape_cast %647 : vector<1x1x1x32xf32> to vector<1x32xf32>
    %cst_532 = arith.constant dense<0.000000e+00> : vector<16xf32>
    %649 = vector.multi_reduction <add>, %644, %cst_532 [1] : vector<16x32xf32> to vector<16xf32>
    %650 = vector.shape_cast %649 : vector<16xf32> to vector<16x1xf32>
    %cst_533 = arith.constant 3.200000e+01 : f32
    %651 = vector.broadcast %cst_533 : f32 to vector<16x1xf32>
    %652 = arith.divf %650, %651 : vector<16x1xf32>
    %653 = vector.broadcast %652 : vector<16x1xf32> to vector<16x32xf32>
    %654 = arith.subf %644, %653 : vector<16x32xf32>
    %655 = arith.mulf %654, %654 : vector<16x32xf32>
    %cst_534 = arith.constant dense<0.000000e+00> : vector<16xf32>
    %656 = vector.multi_reduction <add>, %655, %cst_534 [1] : vector<16x32xf32> to vector<16xf32>
    %657 = vector.shape_cast %656 : vector<16xf32> to vector<16x1xf32>
    %cst_535 = arith.constant 3.200000e+01 : f32
    %658 = vector.broadcast %cst_535 : f32 to vector<16x1xf32>
    %659 = arith.divf %657, %658 : vector<16x1xf32>
    %660 = vector.broadcast %652 : vector<16x1xf32> to vector<16x32xf32>
    %661 = arith.subf %644, %660 : vector<16x32xf32>
    %cst_536 = arith.constant 9.99999974E-6 : f32
    %662 = vector.broadcast %cst_536 : f32 to vector<16x1xf32>
    %663 = arith.addf %659, %662 : vector<16x1xf32>
    %664 = math.rsqrt %663 : vector<16x1xf32>
    %665 = vector.broadcast %664 : vector<16x1xf32> to vector<16x32xf32>
    %666 = arith.mulf %661, %665 : vector<16x32xf32>
    %667 = vector.broadcast %646 : vector<1x32xf32> to vector<16x32xf32>
    %668 = arith.mulf %666, %667 : vector<16x32xf32>
    %669 = vector.broadcast %648 : vector<1x32xf32> to vector<16x32xf32>
    %670 = arith.addf %668, %669 : vector<16x32xf32>
    %c0_537 = arith.constant 0 : index
    %c0_538 = arith.constant 0 : index
    %671 = vector.load %arg32[%c0_537, %c0_538] : memref<16x32xf32, #tpu.memory_space<vmem>>, vector<16x32xf32>
    tpu.vector_store %arg32[%c0_537, %c0_538], %670 {strides = array<i32>} : memref<16x32xf32, #tpu.memory_space<vmem>>, vector<16x32xf32>,
    %c0_539 = arith.constant 0 : index
    %c0_540 = arith.constant 0 : index
    %672 = vector.load %arg33[%c0_539, %c0_540] : memref<16x32xf32, #tpu.memory_space<vmem>>, vector<16x32xf32>
    tpu.vector_store %arg33[%c0_539, %c0_540], %643 {strides = array<i32>} : memref<16x32xf32, #tpu.memory_space<vmem>>, vector<16x32xf32>,
    return
  }
  func.func @transform_0(%arg0: i32) -> (i32, i32) {
    %c0_i32 = arith.constant 0 : i32
    %c0_i32_0 = arith.constant 0 : i32
    %c0_i32_1 = arith.constant 0 : i32
    return %c0_i32, %c0_i32_0 : i32, i32
  }
  func.func @transform_1(%arg0: i32) -> (i32, i32) {
    %c0_i32 = arith.constant 0 : i32
    %c0_i32_0 = arith.constant 0 : i32
    %c0_i32_1 = arith.constant 0 : i32
    return %c0_i32, %c0_i32_0 : i32, i32
  }
  func.func @transform_2(%arg0: i32) -> (i32, i32, i32, i32) {
    %c0_i32 = arith.constant 0 : i32
    %c0_i32_0 = arith.constant 0 : i32
    %c0_i32_1 = arith.constant 0 : i32
    %c0_i32_2 = arith.constant 0 : i32
    return %arg0, %c0_i32, %c0_i32_0, %c0_i32_1 : i32, i32, i32, i32
  }
  func.func @transform_3(%arg0: i32) -> (i32, i32, i32, i32) {
    %c0_i32 = arith.constant 0 : i32
    %c0_i32_0 = arith.constant 0 : i32
    %c0_i32_1 = arith.constant 0 : i32
    %c0_i32_2 = arith.constant 0 : i32
    return %arg0, %c0_i32, %c0_i32_0, %c0_i32_1 : i32, i32, i32, i32
  }
  func.func @transform_4(%arg0: i32) -> (i32, i32, i32, i32) {
    %c0_i32 = arith.constant 0 : i32
    %c0_i32_0 = arith.constant 0 : i32
    %c0_i32_1 = arith.constant 0 : i32
    %c0_i32_2 = arith.constant 0 : i32
    return %arg0, %c0_i32, %c0_i32_0, %c0_i32_1 : i32, i32, i32, i32
  }
  func.func @transform_5(%arg0: i32) -> (i32, i32, i32, i32) {
    %c0_i32 = arith.constant 0 : i32
    %c0_i32_0 = arith.constant 0 : i32
    %c0_i32_1 = arith.constant 0 : i32
    %c0_i32_2 = arith.constant 0 : i32
    return %arg0, %c0_i32, %c0_i32_0, %c0_i32_1 : i32, i32, i32, i32
  }
  func.func @transform_6(%arg0: i32) -> (i32, i32, i32, i32) {
    %c0_i32 = arith.constant 0 : i32
    %c0_i32_0 = arith.constant 0 : i32
    %c0_i32_1 = arith.constant 0 : i32
    %c0_i32_2 = arith.constant 0 : i32
    return %arg0, %c0_i32, %c0_i32_0, %c0_i32_1 : i32, i32, i32, i32
  }
  func.func @transform_7(%arg0: i32) -> (i32, i32, i32, i32) {
    %c0_i32 = arith.constant 0 : i32
    %c0_i32_0 = arith.constant 0 : i32
    %c0_i32_1 = arith.constant 0 : i32
    %c0_i32_2 = arith.constant 0 : i32
    return %arg0, %c0_i32, %c0_i32_0, %c0_i32_1 : i32, i32, i32, i32
  }
  func.func @transform_8(%arg0: i32) -> (i32, i32, i32, i32) {
    %c0_i32 = arith.constant 0 : i32
    %c0_i32_0 = arith.constant 0 : i32
    %c0_i32_1 = arith.constant 0 : i32
    %c0_i32_2 = arith.constant 0 : i32
    return %arg0, %c0_i32, %c0_i32_0, %c0_i32_1 : i32, i32, i32, i32
  }
  func.func @transform_9(%arg0: i32) -> (i32, i32, i32) {
    %c0_i32 = arith.constant 0 : i32
    %c0_i32_0 = arith.constant 0 : i32
    %c0_i32_1 = arith.constant 0 : i32
    return %arg0, %c0_i32, %c0_i32_0 : i32, i32, i32
  }
  func.func @transform_10(%arg0: i32) -> (i32, i32, i32, i32) {
    %c0_i32 = arith.constant 0 : i32
    %c0_i32_0 = arith.constant 0 : i32
    %c0_i32_1 = arith.constant 0 : i32
    %c0_i32_2 = arith.constant 0 : i32
    return %arg0, %c0_i32, %c0_i32_0, %c0_i32_1 : i32, i32, i32, i32
  }
  func.func @transform_11(%arg0: i32) -> (i32, i32, i32, i32) {
    %c0_i32 = arith.constant 0 : i32
    %c0_i32_0 = arith.constant 0 : i32
    %c0_i32_1 = arith.constant 0 : i32
    %c0_i32_2 = arith.constant 0 : i32
    return %arg0, %c0_i32, %c0_i32_0, %c0_i32_1 : i32, i32, i32, i32
  }
  func.func @transform_12(%arg0: i32) -> (i32, i32, i32, i32) {
    %c0_i32 = arith.constant 0 : i32
    %c0_i32_0 = arith.constant 0 : i32
    %c0_i32_1 = arith.constant 0 : i32
    %c0_i32_2 = arith.constant 0 : i32
    return %arg0, %c0_i32, %c0_i32_0, %c0_i32_1 : i32, i32, i32, i32
  }
  func.func @transform_13(%arg0: i32) -> (i32, i32, i32, i32) {
    %c0_i32 = arith.constant 0 : i32
    %c0_i32_0 = arith.constant 0 : i32
    %c0_i32_1 = arith.constant 0 : i32
    %c0_i32_2 = arith.constant 0 : i32
    return %arg0, %c0_i32, %c0_i32_0, %c0_i32_1 : i32, i32, i32, i32
  }
  func.func @transform_14(%arg0: i32) -> (i32, i32, i32, i32) {
    %c0_i32 = arith.constant 0 : i32
    %c0_i32_0 = arith.constant 0 : i32
    %c0_i32_1 = arith.constant 0 : i32
    %c0_i32_2 = arith.constant 0 : i32
    return %arg0, %c0_i32, %c0_i32_0, %c0_i32_1 : i32, i32, i32, i32
  }
  func.func @transform_15(%arg0: i32) -> (i32, i32, i32, i32) {
    %c0_i32 = arith.constant 0 : i32
    %c0_i32_0 = arith.constant 0 : i32
    %c0_i32_1 = arith.constant 0 : i32
    %c0_i32_2 = arith.constant 0 : i32
    return %arg0, %c0_i32, %c0_i32_0, %c0_i32_1 : i32, i32, i32, i32
  }
  func.func @transform_16(%arg0: i32) -> (i32, i32, i32, i32) {
    %c0_i32 = arith.constant 0 : i32
    %c0_i32_0 = arith.constant 0 : i32
    %c0_i32_1 = arith.constant 0 : i32
    %c0_i32_2 = arith.constant 0 : i32
    return %arg0, %c0_i32, %c0_i32_0, %c0_i32_1 : i32, i32, i32, i32
  }
  func.func @transform_17(%arg0: i32) -> (i32, i32, i32) {
    %c0_i32 = arith.constant 0 : i32
    %c0_i32_0 = arith.constant 0 : i32
    %c0_i32_1 = arith.constant 0 : i32
    return %arg0, %c0_i32, %c0_i32_0 : i32, i32, i32
  }
  func.func @transform_18(%arg0: i32) -> (i32, i32, i32, i32) {
    %c0_i32 = arith.constant 0 : i32
    %c0_i32_0 = arith.constant 0 : i32
    %c0_i32_1 = arith.constant 0 : i32
    %c0_i32_2 = arith.constant 0 : i32
    return %arg0, %c0_i32, %c0_i32_0, %c0_i32_1 : i32, i32, i32, i32
  }
  func.func @transform_19(%arg0: i32) -> (i32, i32, i32, i32) {
    %c0_i32 = arith.constant 0 : i32
    %c0_i32_0 = arith.constant 0 : i32
    %c0_i32_1 = arith.constant 0 : i32
    %c0_i32_2 = arith.constant 0 : i32
    return %arg0, %c0_i32, %c0_i32_0, %c0_i32_1 : i32, i32, i32, i32
  }
  func.func @transform_20(%arg0: i32) -> (i32, i32, i32, i32) {
    %c0_i32 = arith.constant 0 : i32
    %c0_i32_0 = arith.constant 0 : i32
    %c0_i32_1 = arith.constant 0 : i32
    %c0_i32_2 = arith.constant 0 : i32
    return %arg0, %c0_i32, %c0_i32_0, %c0_i32_1 : i32, i32, i32, i32
  }
  func.func @transform_21(%arg0: i32) -> (i32, i32, i32, i32) {
    %c0_i32 = arith.constant 0 : i32
    %c0_i32_0 = arith.constant 0 : i32
    %c0_i32_1 = arith.constant 0 : i32
    %c0_i32_2 = arith.constant 0 : i32
    return %arg0, %c0_i32, %c0_i32_0, %c0_i32_1 : i32, i32, i32, i32
  }
  func.func @transform_22(%arg0: i32) -> (i32, i32, i32, i32) {
    %c0_i32 = arith.constant 0 : i32
    %c0_i32_0 = arith.constant 0 : i32
    %c0_i32_1 = arith.constant 0 : i32
    %c0_i32_2 = arith.constant 0 : i32
    return %arg0, %c0_i32, %c0_i32_0, %c0_i32_1 : i32, i32, i32, i32
  }
  func.func @transform_23(%arg0: i32) -> (i32, i32, i32, i32) {
    %c0_i32 = arith.constant 0 : i32
    %c0_i32_0 = arith.constant 0 : i32
    %c0_i32_1 = arith.constant 0 : i32
    %c0_i32_2 = arith.constant 0 : i32
    return %arg0, %c0_i32, %c0_i32_0, %c0_i32_1 : i32, i32, i32, i32
  }
  func.func @transform_24(%arg0: i32) -> (i32, i32, i32, i32) {
    %c0_i32 = arith.constant 0 : i32
    %c0_i32_0 = arith.constant 0 : i32
    %c0_i32_1 = arith.constant 0 : i32
    %c0_i32_2 = arith.constant 0 : i32
    return %arg0, %c0_i32, %c0_i32_0, %c0_i32_1 : i32, i32, i32, i32
  }
  func.func @transform_25(%arg0: i32) -> (i32, i32, i32) {
    %c0_i32 = arith.constant 0 : i32
    %c0_i32_0 = arith.constant 0 : i32
    %c0_i32_1 = arith.constant 0 : i32
    return %arg0, %c0_i32, %c0_i32_0 : i32, i32, i32
  }
  func.func @transform_26(%arg0: i32) -> (i32, i32, i32) {
    %c0_i32 = arith.constant 0 : i32
    %c0_i32_0 = arith.constant 0 : i32
    %c0_i32_1 = arith.constant 0 : i32
    return %arg0, %c0_i32, %c0_i32_0 : i32, i32, i32
  }
  func.func @transform_27(%arg0: i32) -> (i32, i32, i32) {
    %c0_i32 = arith.constant 0 : i32
    %c0_i32_0 = arith.constant 0 : i32
    %c0_i32_1 = arith.constant 0 : i32
    return %arg0, %c0_i32, %c0_i32_0 : i32, i32, i32
  }
  func.func @transform_28(%arg0: i32) -> (i32, i32, i32) {
    %c0_i32 = arith.constant 0 : i32
    %c0_i32_0 = arith.constant 0 : i32
    %c0_i32_1 = arith.constant 0 : i32
    return %arg0, %c0_i32, %c0_i32_0 : i32, i32, i32
  }
  func.func @transform_29(%arg0: i32) -> (i32, i32, i32) {
    %c0_i32 = arith.constant 0 : i32
    %c0_i32_0 = arith.constant 0 : i32
    %c0_i32_1 = arith.constant 0 : i32
    return %arg0, %c0_i32, %c0_i32_0 : i32, i32, i32
  }
  func.func @transform_30(%arg0: i32) -> (i32, i32, i32, i32) {
    %c0_i32 = arith.constant 0 : i32
    %c0_i32_0 = arith.constant 0 : i32
    %c0_i32_1 = arith.constant 0 : i32
    %c0_i32_2 = arith.constant 0 : i32
    return %arg0, %c0_i32, %c0_i32_0, %c0_i32_1 : i32, i32, i32, i32
  }
  func.func @transform_31(%arg0: i32) -> (i32, i32) {
    %c0_i32 = arith.constant 0 : i32
    %c0_i32_0 = arith.constant 0 : i32
    %c0_i32_1 = arith.constant 0 : i32
    return %c0_i32, %c0_i32_0 : i32, i32
  }
  func.func @transform_32(%arg0: i32) -> (i32, i32) {
    %c0_i32 = arith.constant 0 : i32
    %c0_i32_0 = arith.constant 0 : i32
    %c0_i32_1 = arith.constant 0 : i32
    return %c0_i32, %c0_i32_0 : i32, i32
  }
}

</mosaic_0001>

<llo_original>
// kernel: tpu_custom_call.1
$region0: #{tpu_custom_call.1}
  #allocation0 [shape = 'u32[]', space=smem, size = 0x4, offset = 0x4, fixed_abs, tag = 'smem constant byte address 0x4 - core index']
  #allocation1 [shape = 'u32[144,128]{1,0:T(1,128)}', space=vmem, size = 0x12000, scoped, tag = 'internal scratch']
  %s0 = inlined_call_operand.smem [shape: u32[33], index: -1, kind: input, shape index: {}]
  %s1 = sld [smem:[%s0]]
  %s2 = scalar_lea.smem %s0, 1
  %s3 = sld [smem:[%s2]]
  %s4 = scalar_lea.smem %s0, 2
  %s5 = sld [smem:[%s4]]
  %s6 = scalar_lea.smem %s0, 3
  %s7 = sld [smem:[%s6]]
  %s8 = scalar_lea.smem %s0, 4
  %s9 = sld [smem:[%s8]]
  %s10 = scalar_lea.smem %s0, 5
  %s11 = sld [smem:[%s10]]
  %s12 = scalar_lea.smem %s0, 6
  %s13 = sld [smem:[%s12]]
  %s14 = scalar_lea.smem %s0, 7
  %s15 = sld [smem:[%s14]]
  %s16 = scalar_lea.smem %s0, 8
  %s17 = sld [smem:[%s16]]
  %s18 = scalar_lea.smem %s0, 9
  %s19 = sld [smem:[%s18]]
  %s20 = scalar_lea.smem %s0, 10
  %s21 = sld [smem:[%s20]]
  %s22 = scalar_lea.smem %s0, 11
  %s23 = sld [smem:[%s22]]
  %s24 = scalar_lea.smem %s0, 12
  %s25 = sld [smem:[%s24]]
  %s26 = scalar_lea.smem %s0, 13
  %s27 = sld [smem:[%s26]]
  %s28 = scalar_lea.smem %s0, 14
  %s29 = sld [smem:[%s28]]
  %s30 = scalar_lea.smem %s0, 15
  %s31 = sld [smem:[%s30]]
  %s32 = scalar_lea.smem %s0, 16
  %s33 = sld [smem:[%s32]]
  %s34 = scalar_lea.smem %s0, 17
  %s35 = sld [smem:[%s34]]
  %s36 = scalar_lea.smem %s0, 18
  %s37 = sld [smem:[%s36]]
  %s38 = scalar_lea.smem %s0, 19
  %s39 = sld [smem:[%s38]]
  %s40 = scalar_lea.smem %s0, 20
  %s41 = sld [smem:[%s40]]
  %s42 = scalar_lea.smem %s0, 21
  %s43 = sld [smem:[%s42]]
  %s44 = scalar_lea.smem %s0, 22
  %s45 = sld [smem:[%s44]]
  %s46 = scalar_lea.smem %s0, 23
  %s47 = sld [smem:[%s46]]
  %s48 = scalar_lea.smem %s0, 24
  %s49 = sld [smem:[%s48]]
  %s50 = scalar_lea.smem %s0, 25
  %s51 = sld [smem:[%s50]]
  %s52 = scalar_lea.smem %s0, 26
  %s53 = sld [smem:[%s52]]
  %s54 = scalar_lea.smem %s0, 27
  %s55 = sld [smem:[%s54]]
  %s56 = scalar_lea.smem %s0, 28
  %s57 = sld [smem:[%s56]]
  %s58 = scalar_lea.smem %s0, 29
  %s59 = sld [smem:[%s58]]
  %s60 = scalar_lea.smem %s0, 30
  %s61 = sld [smem:[%s60]]
  %s62 = scalar_lea.smem %s0, 31
  %s63 = sld [smem:[%s62]]
  %s64 = scalar_lea.smem %s0, 32
  %s65 = sld [smem:[%s64]]
  %66 = xla_tuple %s63, %s65
  %s67 = sld [smem:[#allocation0]]
  $region169: #{tpu_custom_call.1} parent=0
    _
  %s69 = ssub.s32 1, %s67
  %s70 = scalar_select 0, %s69, %s67
  $region1: #{tpu_custom_call.1} parent=0
    #allocation2 [shape = 'u8[8192]{0}', space=vmem, size = 0x2000, scoped, tag = 'output window, operand 0, single buffered']
    #allocation3 [shape = 's32[2]{0}', space=sflag, size = 0x8, scoped, tag = 'scoped memory for tpu_custom_call.1']
    #allocation4 [shape = 'u8[8192]{0}', space=vmem, size = 0x2000, scoped, tag = 'output window, operand 1, single buffered']
    #allocation5 [shape = 's32[1]{0}', space=sflag, size = 0x4, scoped, tag = 'scoped memory for tpu_custom_call.1']
    %71 = vsyncpa [#allocation3], 0
    %72 = vsyncpa [#allocation5], 0
    loop: start=0, step=1, limit=4
    $region2: #{tpu_custom_call.1} parent=1 // loop_pre_header
      _
    $region3: #{tpu_custom_call.1} parent=1 // loop_header
      %s74 = sphi 0, %s78
      %p75 = scmp.ge.s32.totalorder %s74, 4
      %s82 = sphi 0, %s82
      %s84 = sphi 0, %s82
      %s85 = sphi 0, %s84
      %s99 = sphi 0, %s85
      %s103 = sphi 0, %s103
      %s105 = sphi 0, %s103
      %s106 = sphi 0, %s105
      %s120 = sphi 0, %s106
      %s126 = sphi 0, %s128
      %s129 = sphi 0, %s126
      %s130 = sphi 0, %s129
      %s146 = sphi 0, %s130
      %s152 = sphi 0, %s154
      %s155 = sphi 0, %s152
      %s156 = sphi 0, %s155
      %s172 = sphi 0, %s156
      %s178 = sphi 0, %s180
      %s181 = sphi 0, %s178
      %s182 = sphi 0, %s181
      %s198 = sphi 0, %s182
      %s204 = sphi 0, %s206
      %s207 = sphi 0, %s204
      %s208 = sphi 0, %s207
      %s224 = sphi 0, %s208
      %s230 = sphi 0, %s232
      %s233 = sphi 0, %s230
      %s234 = sphi 0, %s233
      %s250 = sphi 0, %s234
      %s256 = sphi 0, %s258
      %s259 = sphi 0, %s256
      %s260 = sphi 0, %s259
      %s276 = sphi 0, %s260
      %s282 = sphi 0, %s284
      %s285 = sphi 0, %s282
      %s286 = sphi 0, %s285
      %s302 = sphi 0, %s286
      %s308 = sphi 0, %s310
      %s311 = sphi 0, %s308
      %s312 = sphi 0, %s311
      %s328 = sphi 0, %s312
      %s334 = sphi 0, %s336
      %s337 = sphi 0, %s334
      %s338 = sphi 0, %s337
      %s354 = sphi 0, %s338
      %s360 = sphi 0, %s362
      %s363 = sphi 0, %s360
      %s364 = sphi 0, %s363
      %s380 = sphi 0, %s364
      %s386 = sphi 0, %s388
      %s389 = sphi 0, %s386
      %s390 = sphi 0, %s389
      %s406 = sphi 0, %s390
      %s412 = sphi 0, %s414
      %s415 = sphi 0, %s412
      %s416 = sphi 0, %s415
      %s432 = sphi 0, %s416
      %s438 = sphi 0, %s440
      %s441 = sphi 0, %s438
      %s442 = sphi 0, %s441
      %s458 = sphi 0, %s442
      %s464 = sphi 0, %s466
      %s467 = sphi 0, %s464
      %s468 = sphi 0, %s467
      %s484 = sphi 0, %s468
      %s490 = sphi 0, %s492
      %s493 = sphi 0, %s490
      %s494 = sphi 0, %s493
      %s510 = sphi 0, %s494
      %s516 = sphi 0, %s518
      %s519 = sphi 0, %s516
      %s520 = sphi 0, %s519
      %s536 = sphi 0, %s520
      %s542 = sphi 0, %s544
      %s545 = sphi 0, %s542
      %s546 = sphi 0, %s545
      %s562 = sphi 0, %s546
      %s568 = sphi 0, %s570
      %s571 = sphi 0, %s568
      %s572 = sphi 0, %s571
      %s588 = sphi 0, %s572
      %s594 = sphi 0, %s596
      %s597 = sphi 0, %s594
      %s598 = sphi 0, %s597
      %s614 = sphi 0, %s598
      %s620 = sphi 0, %s622
      %s623 = sphi 0, %s620
      %s624 = sphi 0, %s623
      %s640 = sphi 0, %s624
      %s646 = sphi 0, %s648
      %s649 = sphi 0, %s646
      %s650 = sphi 0, %s649
      %s666 = sphi 0, %s650
      %s672 = sphi 0, %s674
      %s675 = sphi 0, %s672
      %s676 = sphi 0, %s675
      %s692 = sphi 0, %s676
      %s698 = sphi 0, %s700
      %s701 = sphi 0, %s698
      %s702 = sphi 0, %s701
      %s718 = sphi 0, %s702
      %s724 = sphi 0, %s726
      %s727 = sphi 0, %s724
      %s728 = sphi 0, %s727
      %s744 = sphi 0, %s728
      %s750 = sphi 0, %s752
      %s753 = sphi 0, %s750
      %s754 = sphi 0, %s753
      %s770 = sphi 0, %s754
      %s776 = sphi 0, %s778
      %s779 = sphi 0, %s776
      %s780 = sphi 0, %s779
      %s796 = sphi 0, %s780
      %s802 = sphi 0, %s804
      %s805 = sphi 0, %s802
      %s806 = sphi 0, %s805
      %s822 = sphi 0, %s806
      %s828 = sphi 0, %s830
      %s831 = sphi 0, %s828
      %s832 = sphi 0, %s831
      %s848 = sphi 0, %s832
      %s854 = sphi 0, %s856
      %s857 = sphi 0, %s854
      %s858 = sphi 0, %s857
      %s874 = sphi 0, %s858
      %s878 = sphi 0, %s878
      %s880 = sphi 0, %s878
      %s881 = sphi 0, %s880
      %s895 = sphi 0, %s881
      %s899 = sphi 0, %s899
      %s901 = sphi 0, %s899
      %s902 = sphi 0, %s901
      %s916 = sphi 0, %s902
    $region4: #{tpu_custom_call.1} parent=1 // loop_header_branch
      %77 = sbr.rel (%p75) target = $region8
    $region5: #{tpu_custom_call.1} parent=1 // loop_body
      %s79 = ssub.s32 %s74, 1
      %s80 = ssub.s32 %s74, 2
      %s81 = sadd.s32 %s74, 1
      %s83 = sadd.s32 %s82, 1
      %p86 = scmp.eq.s32.totalorder %s74, 1
      %p87 = scmp.ne.s32.totalorder %s82, %s84
      %p88 = scmp.eq.s32.totalorder %s74, 0
      %p89 = por %p87, %p88
      %p90 = scmp.ne.s32.totalorder %s82, %s84
      %p91 = scmp.eq.s32.totalorder %s79, 1
      %p92 = por %p90, %p91
      %p93 = scmp.ne.s32.totalorder %s84, %s85
      %p94 = scmp.eq.s32.totalorder %s79, 0
      %p95 = por %p93, %p94
      %p96 = scmp.ne.s32.totalorder %s84, %s85
      %p97 = scmp.eq.s32.totalorder %s80, 1
      %p98 = por %p96, %p97
      %p100 = scmp.ne.s32.totalorder %s85, %s99
      %p101 = scmp.eq.s32.totalorder %s80, 0
      %p102 = por %p100, %p101
      %s104 = sadd.s32 %s103, 1
      %p107 = scmp.eq.s32.totalorder %s74, 1
      %p108 = scmp.ne.s32.totalorder %s103, %s105
      %p109 = scmp.eq.s32.totalorder %s74, 0
      %p110 = por %p108, %p109
      %p111 = scmp.ne.s32.totalorder %s103, %s105
      %p112 = scmp.eq.s32.totalorder %s79, 1
      %p113 = por %p111, %p112
      %p114 = scmp.ne.s32.totalorder %s105, %s106
      %p115 = scmp.eq.s32.totalorder %s79, 0
      %p116 = por %p114, %p115
      %p117 = scmp.ne.s32.totalorder %s105, %s106
      %p118 = scmp.eq.s32.totalorder %s80, 1
      %p119 = por %p117, %p118
      %p121 = scmp.ne.s32.totalorder %s106, %s120
      %p122 = scmp.eq.s32.totalorder %s80, 0
      %p123 = por %p121, %p122
      %s124 = ssub.s32 %s74, %s81
      %p125 = scmp.eq.s32.totalorder %s124, 0
      %s127 = sadd.s32 %s126, 1
      %s128 = scalar_select %p125, %s126, %s127
      %p131 = pneg %p125
      %p132 = scmp.eq.s32.totalorder %s74, 1
      %p133 = por %p131, %p132
      %p134 = scmp.ne.s32.totalorder %s126, %s129
      %p135 = scmp.eq.s32.totalorder %s74, 0
      %p136 = por %p134, %p135
      %p137 = scmp.ne.s32.totalorder %s126, %s129
      %p138 = scmp.eq.s32.totalorder %s79, 1
      %p139 = por %p137, %p138
      %p140 = scmp.ne.s32.totalorder %s129, %s130
      %p141 = scmp.eq.s32.totalorder %s79, 0
      %p142 = por %p140, %p141
      %p143 = scmp.ne.s32.totalorder %s129, %s130
      %p144 = scmp.eq.s32.totalorder %s80, 1
      %p145 = por %p143, %p144
      %p147 = scmp.ne.s32.totalorder %s130, %s146
      %p148 = scmp.eq.s32.totalorder %s80, 0
      %p149 = por %p147, %p148
      %s150 = ssub.s32 %s74, %s81
      %p151 = scmp.eq.s32.totalorder %s150, 0
      %s153 = sadd.s32 %s152, 1
      %s154 = scalar_select %p151, %s152, %s153
      %p157 = pneg %p151
      %p158 = scmp.eq.s32.totalorder %s74, 1
      %p159 = por %p157, %p158
      %p160 = scmp.ne.s32.totalorder %s152, %s155
      %p161 = scmp.eq.s32.totalorder %s74, 0
      %p162 = por %p160, %p161
      %p163 = scmp.ne.s32.totalorder %s152, %s155
      %p164 = scmp.eq.s32.totalorder %s79, 1
      %p165 = por %p163, %p164
      %p166 = scmp.ne.s32.totalorder %s155, %s156
      %p167 = scmp.eq.s32.totalorder %s79, 0
      %p168 = por %p166, %p167
      %p169 = scmp.ne.s32.totalorder %s155, %s156
      %p170 = scmp.eq.s32.totalorder %s80, 1
      %p171 = por %p169, %p170
      %p173 = scmp.ne.s32.totalorder %s156, %s172
      %p174 = scmp.eq.s32.totalorder %s80, 0
      %p175 = por %p173, %p174
      %s176 = ssub.s32 %s74, %s81
      %p177 = scmp.eq.s32.totalorder %s176, 0
      %s179 = sadd.s32 %s178, 1
      %s180 = scalar_select %p177, %s178, %s179
      %p183 = pneg %p177
      %p184 = scmp.eq.s32.totalorder %s74, 1
      %p185 = por %p183, %p184
      %p186 = scmp.ne.s32.totalorder %s178, %s181
      %p187 = scmp.eq.s32.totalorder %s74, 0
      %p188 = por %p186, %p187
      %p189 = scmp.ne.s32.totalorder %s178, %s181
      %p190 = scmp.eq.s32.totalorder %s79, 1
      %p191 = por %p189, %p190
      %p192 = scmp.ne.s32.totalorder %s181, %s182
      %p193 = scmp.eq.s32.totalorder %s79, 0
      %p194 = por %p192, %p193
      %p195 = scmp.ne.s32.totalorder %s181, %s182
      %p196 = scmp.eq.s32.totalorder %s80, 1
      %p197 = por %p195, %p196
      %p199 = scmp.ne.s32.totalorder %s182, %s198
      %p200 = scmp.eq.s32.totalorder %s80, 0
      %p201 = por %p199, %p200
      %s202 = ssub.s32 %s74, %s81
      %p203 = scmp.eq.s32.totalorder %s202, 0
      %s205 = sadd.s32 %s204, 1
      %s206 = scalar_select %p203, %s204, %s205
      %p209 = pneg %p203
      %p210 = scmp.eq.s32.totalorder %s74, 1
      %p211 = por %p209, %p210
      %p212 = scmp.ne.s32.totalorder %s204, %s207
      %p213 = scmp.eq.s32.totalorder %s74, 0
      %p214 = por %p212, %p213
      %p215 = scmp.ne.s32.totalorder %s204, %s207
      %p216 = scmp.eq.s32.totalorder %s79, 1
      %p217 = por %p215, %p216
      %p218 = scmp.ne.s32.totalorder %s207, %s208
      %p219 = scmp.eq.s32.totalorder %s79, 0
      %p220 = por %p218, %p219
      %p221 = scmp.ne.s32.totalorder %s207, %s208
      %p222 = scmp.eq.s32.totalorder %s80, 1
      %p223 = por %p221, %p222
      %p225 = scmp.ne.s32.totalorder %s208, %s224
      %p226 = scmp.eq.s32.totalorder %s80, 0
      %p227 = por %p225, %p226
      %s228 = ssub.s32 %s74, %s81
      %p229 = scmp.eq.s32.totalorder %s228, 0
      %s231 = sadd.s32 %s230, 1
      %s232 = scalar_select %p229, %s230, %s231
      %p235 = pneg %p229
      %p236 = scmp.eq.s32.totalorder %s74, 1
      %p237 = por %p235, %p236
      %p238 = scmp.ne.s32.totalorder %s230, %s233
      %p239 = scmp.eq.s32.totalorder %s74, 0
      %p240 = por %p238, %p239
      %p241 = scmp.ne.s32.totalorder %s230, %s233
      %p242 = scmp.eq.s32.totalorder %s79, 1
      %p243 = por %p241, %p242
      %p244 = scmp.ne.s32.totalorder %s233, %s234
      %p245 = scmp.eq.s32.totalorder %s79, 0
      %p246 = por %p244, %p245
      %p247 = scmp.ne.s32.totalorder %s233, %s234
      %p248 = scmp.eq.s32.totalorder %s80, 1
      %p249 = por %p247, %p248
      %p251 = scmp.ne.s32.totalorder %s234, %s250
      %p252 = scmp.eq.s32.totalorder %s80, 0
      %p253 = por %p251, %p252
      %s254 = ssub.s32 %s74, %s81
      %p255 = scmp.eq.s32.totalorder %s254, 0
      %s257 = sadd.s32 %s256, 1
      %s258 = scalar_select %p255, %s256, %s257
      %p261 = pneg %p255
      %p262 = scmp.eq.s32.totalorder %s74, 1
      %p263 = por %p261, %p262
      %p264 = scmp.ne.s32.totalorder %s256, %s259
      %p265 = scmp.eq.s32.totalorder %s74, 0
      %p266 = por %p264, %p265
      %p267 = scmp.ne.s32.totalorder %s256, %s259
      %p268 = scmp.eq.s32.totalorder %s79, 1
      %p269 = por %p267, %p268
      %p270 = scmp.ne.s32.totalorder %s259, %s260
      %p271 = scmp.eq.s32.totalorder %s79, 0
      %p272 = por %p270, %p271
      %p273 = scmp.ne.s32.totalorder %s259, %s260
      %p274 = scmp.eq.s32.totalorder %s80, 1
      %p275 = por %p273, %p274
      %p277 = scmp.ne.s32.totalorder %s260, %s276
      %p278 = scmp.eq.s32.totalorder %s80, 0
      %p279 = por %p277, %p278
      %s280 = ssub.s32 %s74, %s81
      %p281 = scmp.eq.s32.totalorder %s280, 0
      %s283 = sadd.s32 %s282, 1
      %s284 = scalar_select %p281, %s282, %s283
      %p287 = pneg %p281
      %p288 = scmp.eq.s32.totalorder %s74, 1
      %p289 = por %p287, %p288
      %p290 = scmp.ne.s32.totalorder %s282, %s285
      %p291 = scmp.eq.s32.totalorder %s74, 0
      %p292 = por %p290, %p291
      %p293 = scmp.ne.s32.totalorder %s282, %s285
      %p294 = scmp.eq.s32.totalorder %s79, 1
      %p295 = por %p293, %p294
      %p296 = scmp.ne.s32.totalorder %s285, %s286
      %p297 = scmp.eq.s32.totalorder %s79, 0
      %p298 = por %p296, %p297
      %p299 = scmp.ne.s32.totalorder %s285, %s286
      %p300 = scmp.eq.s32.totalorder %s80, 1
      %p301 = por %p299, %p300
      %p303 = scmp.ne.s32.totalorder %s286, %s302
      %p304 = scmp.eq.s32.totalorder %s80, 0
      %p305 = por %p303, %p304
      %s306 = ssub.s32 %s74, %s81
      %p307 = scmp.eq.s32.totalorder %s306, 0
      %s309 = sadd.s32 %s308, 1
      %s310 = scalar_select %p307, %s308, %s309
      %p313 = pneg %p307
      %p314 = scmp.eq.s32.totalorder %s74, 1
      %p315 = por %p313, %p314
      %p316 = scmp.ne.s32.totalorder %s308, %s311
      %p317 = scmp.eq.s32.totalorder %s74, 0
      %p318 = por %p316, %p317
      %p319 = scmp.ne.s32.totalorder %s308, %s311
      %p320 = scmp.eq.s32.totalorder %s79, 1
      %p321 = por %p319, %p320
      %p322 = scmp.ne.s32.totalorder %s311, %s312
      %p323 = scmp.eq.s32.totalorder %s79, 0
      %p324 = por %p322, %p323
      %p325 = scmp.ne.s32.totalorder %s311, %s312
      %p326 = scmp.eq.s32.totalorder %s80, 1
      %p327 = por %p325, %p326
      %p329 = scmp.ne.s32.totalorder %s312, %s328
      %p330 = scmp.eq.s32.totalorder %s80, 0
      %p331 = por %p329, %p330
      %s332 = ssub.s32 %s74, %s81
      %p333 = scmp.eq.s32.totalorder %s332, 0
      %s335 = sadd.s32 %s334, 1
      %s336 = scalar_select %p333, %s334, %s335
      %p339 = pneg %p333
      %p340 = scmp.eq.s32.totalorder %s74, 1
      %p341 = por %p339, %p340
      %p342 = scmp.ne.s32.totalorder %s334, %s337
      %p343 = scmp.eq.s32.totalorder %s74, 0
      %p344 = por %p342, %p343
      %p345 = scmp.ne.s32.totalorder %s334, %s337
      %p346 = scmp.eq.s32.totalorder %s79, 1
      %p347 = por %p345, %p346
      %p348 = scmp.ne.s32.totalorder %s337, %s338
      %p349 = scmp.eq.s32.totalorder %s79, 0
      %p350 = por %p348, %p349
      %p351 = scmp.ne.s32.totalorder %s337, %s338
      %p352 = scmp.eq.s32.totalorder %s80, 1
      %p353 = por %p351, %p352
      %p355 = scmp.ne.s32.totalorder %s338, %s354
      %p356 = scmp.eq.s32.totalorder %s80, 0
      %p357 = por %p355, %p356
      %s358 = ssub.s32 %s74, %s81
      %p359 = scmp.eq.s32.totalorder %s358, 0
      %s361 = sadd.s32 %s360, 1
      %s362 = scalar_select %p359, %s360, %s361
      %p365 = pneg %p359
      %p366 = scmp.eq.s32.totalorder %s74, 1
      %p367 = por %p365, %p366
      %p368 = scmp.ne.s32.totalorder %s360, %s363
      %p369 = scmp.eq.s32.totalorder %s74, 0
      %p370 = por %p368, %p369
      %p371 = scmp.ne.s32.totalorder %s360, %s363
      %p372 = scmp.eq.s32.totalorder %s79, 1
      %p373 = por %p371, %p372
      %p374 = scmp.ne.s32.totalorder %s363, %s364
      %p375 = scmp.eq.s32.totalorder %s79, 0
      %p376 = por %p374, %p375
      %p377 = scmp.ne.s32.totalorder %s363, %s364
      %p378 = scmp.eq.s32.totalorder %s80, 1
      %p379 = por %p377, %p378
      %p381 = scmp.ne.s32.totalorder %s364, %s380
      %p382 = scmp.eq.s32.totalorder %s80, 0
      %p383 = por %p381, %p382
      %s384 = ssub.s32 %s74, %s81
      %p385 = scmp.eq.s32.totalorder %s384, 0
      %s387 = sadd.s32 %s386, 1
      %s388 = scalar_select %p385, %s386, %s387
      %p391 = pneg %p385
      %p392 = scmp.eq.s32.totalorder %s74, 1
      %p393 = por %p391, %p392
      %p394 = scmp.ne.s32.totalorder %s386, %s389
      %p395 = scmp.eq.s32.totalorder %s74, 0
      %p396 = por %p394, %p395
      %p397 = scmp.ne.s32.totalorder %s386, %s389
      %p398 = scmp.eq.s32.totalorder %s79, 1
      %p399 = por %p397, %p398
      %p400 = scmp.ne.s32.totalorder %s389, %s390
      %p401 = scmp.eq.s32.totalorder %s79, 0
      %p402 = por %p400, %p401
      %p403 = scmp.ne.s32.totalorder %s389, %s390
      %p404 = scmp.eq.s32.totalorder %s80, 1
      %p405 = por %p403, %p404
      %p407 = scmp.ne.s32.totalorder %s390, %s406
      %p408 = scmp.eq.s32.totalorder %s80, 0
      %p409 = por %p407, %p408
      %s410 = ssub.s32 %s74, %s81
      %p411 = scmp.eq.s32.totalorder %s410, 0
      %s413 = sadd.s32 %s412, 1
      %s414 = scalar_select %p411, %s412, %s413
      %p417 = pneg %p411
      %p418 = scmp.eq.s32.totalorder %s74, 1
      %p419 = por %p417, %p418
      %p420 = scmp.ne.s32.totalorder %s412, %s415
      %p421 = scmp.eq.s32.totalorder %s74, 0
      %p422 = por %p420, %p421
      %p423 = scmp.ne.s32.totalorder %s412, %s415
      %p424 = scmp.eq.s32.totalorder %s79, 1
      %p425 = por %p423, %p424
      %p426 = scmp.ne.s32.totalorder %s415, %s416
      %p427 = scmp.eq.s32.totalorder %s79, 0
      %p428 = por %p426, %p427
      %p429 = scmp.ne.s32.totalorder %s415, %s416
      %p430 = scmp.eq.s32.totalorder %s80, 1
      %p431 = por %p429, %p430
      %p433 = scmp.ne.s32.totalorder %s416, %s432
      %p434 = scmp.eq.s32.totalorder %s80, 0
      %p435 = por %p433, %p434
      %s436 = ssub.s32 %s74, %s81
      %p437 = scmp.eq.s32.totalorder %s436, 0
      %s439 = sadd.s32 %s438, 1
      %s440 = scalar_select %p437, %s438, %s439
      %p443 = pneg %p437
      %p444 = scmp.eq.s32.totalorder %s74, 1
      %p445 = por %p443, %p444
      %p446 = scmp.ne.s32.totalorder %s438, %s441
      %p447 = scmp.eq.s32.totalorder %s74, 0
      %p448 = por %p446, %p447
      %p449 = scmp.ne.s32.totalorder %s438, %s441
      %p450 = scmp.eq.s32.totalorder %s79, 1
      %p451 = por %p449, %p450
      %p452 = scmp.ne.s32.totalorder %s441, %s442
      %p453 = scmp.eq.s32.totalorder %s79, 0
      %p454 = por %p452, %p453
      %p455 = scmp.ne.s32.totalorder %s441, %s442
      %p456 = scmp.eq.s32.totalorder %s80, 1
      %p457 = por %p455, %p456
      %p459 = scmp.ne.s32.totalorder %s442, %s458
      %p460 = scmp.eq.s32.totalorder %s80, 0
      %p461 = por %p459, %p460
      %s462 = ssub.s32 %s74, %s81
      %p463 = scmp.eq.s32.totalorder %s462, 0
      %s465 = sadd.s32 %s464, 1
      %s466 = scalar_select %p463, %s464, %s465
      %p469 = pneg %p463
      %p470 = scmp.eq.s32.totalorder %s74, 1
      %p471 = por %p469, %p470
      %p472 = scmp.ne.s32.totalorder %s464, %s467
      %p473 = scmp.eq.s32.totalorder %s74, 0
      %p474 = por %p472, %p473
      %p475 = scmp.ne.s32.totalorder %s464, %s467
      %p476 = scmp.eq.s32.totalorder %s79, 1
      %p477 = por %p475, %p476
      %p478 = scmp.ne.s32.totalorder %s467, %s468
      %p479 = scmp.eq.s32.totalorder %s79, 0
      %p480 = por %p478, %p479
      %p481 = scmp.ne.s32.totalorder %s467, %s468
      %p482 = scmp.eq.s32.totalorder %s80, 1
      %p483 = por %p481, %p482
      %p485 = scmp.ne.s32.totalorder %s468, %s484
      %p486 = scmp.eq.s32.totalorder %s80, 0
      %p487 = por %p485, %p486
      %s488 = ssub.s32 %s74, %s81
      %p489 = scmp.eq.s32.totalorder %s488, 0
      %s491 = sadd.s32 %s490, 1
      %s492 = scalar_select %p489, %s490, %s491
      %p495 = pneg %p489
      %p496 = scmp.eq.s32.totalorder %s74, 1
      %p497 = por %p495, %p496
      %p498 = scmp.ne.s32.totalorder %s490, %s493
      %p499 = scmp.eq.s32.totalorder %s74, 0
      %p500 = por %p498, %p499
      %p501 = scmp.ne.s32.totalorder %s490, %s493
      %p502 = scmp.eq.s32.totalorder %s79, 1
      %p503 = por %p501, %p502
      %p504 = scmp.ne.s32.totalorder %s493, %s494
      %p505 = scmp.eq.s32.totalorder %s79, 0
      %p506 = por %p504, %p505
      %p507 = scmp.ne.s32.totalorder %s493, %s494
      %p508 = scmp.eq.s32.totalorder %s80, 1
      %p509 = por %p507, %p508
      %p511 = scmp.ne.s32.totalorder %s494, %s510
      %p512 = scmp.eq.s32.totalorder %s80, 0
      %p513 = por %p511, %p512
      %s514 = ssub.s32 %s74, %s81
      %p515 = scmp.eq.s32.totalorder %s514, 0
      %s517 = sadd.s32 %s516, 1
      %s518 = scalar_select %p515, %s516, %s517
      %p521 = pneg %p515
      %p522 = scmp.eq.s32.totalorder %s74, 1
      %p523 = por %p521, %p522
      %p524 = scmp.ne.s32.totalorder %s516, %s519
      %p525 = scmp.eq.s32.totalorder %s74, 0
      %p526 = por %p524, %p525
      %p527 = scmp.ne.s32.totalorder %s516, %s519
      %p528 = scmp.eq.s32.totalorder %s79, 1
      %p529 = por %p527, %p528
      %p530 = scmp.ne.s32.totalorder %s519, %s520
      %p531 = scmp.eq.s32.totalorder %s79, 0
      %p532 = por %p530, %p531
      %p533 = scmp.ne.s32.totalorder %s519, %s520
      %p534 = scmp.eq.s32.totalorder %s80, 1
      %p535 = por %p533, %p534
      %p537 = scmp.ne.s32.totalorder %s520, %s536
      %p538 = scmp.eq.s32.totalorder %s80, 0
      %p539 = por %p537, %p538
      %s540 = ssub.s32 %s74, %s81
      %p541 = scmp.eq.s32.totalorder %s540, 0
      %s543 = sadd.s32 %s542, 1
      %s544 = scalar_select %p541, %s542, %s543
      %p547 = pneg %p541
      %p548 = scmp.eq.s32.totalorder %s74, 1
      %p549 = por %p547, %p548
      %p550 = scmp.ne.s32.totalorder %s542, %s545
      %p551 = scmp.eq.s32.totalorder %s74, 0
      %p552 = por %p550, %p551
      %p553 = scmp.ne.s32.totalorder %s542, %s545
      %p554 = scmp.eq.s32.totalorder %s79, 1
      %p555 = por %p553, %p554
      %p556 = scmp.ne.s32.totalorder %s545, %s546
      %p557 = scmp.eq.s32.totalorder %s79, 0
      %p558 = por %p556, %p557
      %p559 = scmp.ne.s32.totalorder %s545, %s546
      %p560 = scmp.eq.s32.totalorder %s80, 1
      %p561 = por %p559, %p560
      %p563 = scmp.ne.s32.totalorder %s546, %s562
      %p564 = scmp.eq.s32.totalorder %s80, 0
      %p565 = por %p563, %p564
      %s566 = ssub.s32 %s74, %s81
      %p567 = scmp.eq.s32.totalorder %s566, 0
      %s569 = sadd.s32 %s568, 1
      %s570 = scalar_select %p567, %s568, %s569
      %p573 = pneg %p567
      %p574 = scmp.eq.s32.totalorder %s74, 1
      %p575 = por %p573, %p574
      %p576 = scmp.ne.s32.totalorder %s568, %s571
      %p577 = scmp.eq.s32.totalorder %s74, 0
      %p578 = por %p576, %p577
      %p579 = scmp.ne.s32.totalorder %s568, %s571
      %p580 = scmp.eq.s32.totalorder %s79, 1
      %p581 = por %p579, %p580
      %p582 = scmp.ne.s32.totalorder %s571, %s572
      %p583 = scmp.eq.s32.totalorder %s79, 0
      %p584 = por %p582, %p583
      %p585 = scmp.ne.s32.totalorder %s571, %s572
      %p586 = scmp.eq.s32.totalorder %s80, 1
      %p587 = por %p585, %p586
      %p589 = scmp.ne.s32.totalorder %s572, %s588
      %p590 = scmp.eq.s32.totalorder %s80, 0
      %p591 = por %p589, %p590
      %s592 = ssub.s32 %s74, %s81
      %p593 = scmp.eq.s32.totalorder %s592, 0
      %s595 = sadd.s32 %s594, 1
      %s596 = scalar_select %p593, %s594, %s595
      %p599 = pneg %p593
      %p600 = scmp.eq.s32.totalorder %s74, 1
      %p601 = por %p599, %p600
      %p602 = scmp.ne.s32.totalorder %s594, %s597
      %p603 = scmp.eq.s32.totalorder %s74, 0
      %p604 = por %p602, %p603
      %p605 = scmp.ne.s32.totalorder %s594, %s597
      %p606 = scmp.eq.s32.totalorder %s79, 1
      %p607 = por %p605, %p606
      %p608 = scmp.ne.s32.totalorder %s597, %s598
      %p609 = scmp.eq.s32.totalorder %s79, 0
      %p610 = por %p608, %p609
      %p611 = scmp.ne.s32.totalorder %s597, %s598
      %p612 = scmp.eq.s32.totalorder %s80, 1
      %p613 = por %p611, %p612
      %p615 = scmp.ne.s32.totalorder %s598, %s614
      %p616 = scmp.eq.s32.totalorder %s80, 0
      %p617 = por %p615, %p616
      %s618 = ssub.s32 %s74, %s81
      %p619 = scmp.eq.s32.totalorder %s618, 0
      %s621 = sadd.s32 %s620, 1
      %s622 = scalar_select %p619, %s620, %s621
      %p625 = pneg %p619
      %p626 = scmp.eq.s32.totalorder %s74, 1
      %p627 = por %p625, %p626
      %p628 = scmp.ne.s32.totalorder %s620, %s623
      %p629 = scmp.eq.s32.totalorder %s74, 0
      %p630 = por %p628, %p629
      %p631 = scmp.ne.s32.totalorder %s620, %s623
      %p632 = scmp.eq.s32.totalorder %s79, 1
      %p633 = por %p631, %p632
      %p634 = scmp.ne.s32.totalorder %s623, %s624
      %p635 = scmp.eq.s32.totalorder %s79, 0
      %p636 = por %p634, %p635
      %p637 = scmp.ne.s32.totalorder %s623, %s624
      %p638 = scmp.eq.s32.totalorder %s80, 1
      %p639 = por %p637, %p638
      %p641 = scmp.ne.s32.totalorder %s624, %s640
      %p642 = scmp.eq.s32.totalorder %s80, 0
      %p643 = por %p641, %p642
      %s644 = ssub.s32 %s74, %s81
      %p645 = scmp.eq.s32.totalorder %s644, 0
      %s647 = sadd.s32 %s646, 1
      %s648 = scalar_select %p645, %s646, %s647
      %p651 = pneg %p645
      %p652 = scmp.eq.s32.totalorder %s74, 1
      %p653 = por %p651, %p652
      %p654 = scmp.ne.s32.totalorder %s646, %s649
      %p655 = scmp.eq.s32.totalorder %s74, 0
      %p656 = por %p654, %p655
      %p657 = scmp.ne.s32.totalorder %s646, %s649
      %p658 = scmp.eq.s32.totalorder %s79, 1
      %p659 = por %p657, %p658
      %p660 = scmp.ne.s32.totalorder %s649, %s650
      %p661 = scmp.eq.s32.totalorder %s79, 0
      %p662 = por %p660, %p661
      %p663 = scmp.ne.s32.totalorder %s649, %s650
      %p664 = scmp.eq.s32.totalorder %s80, 1
      %p665 = por %p663, %p664
      %p667 = scmp.ne.s32.totalorder %s650, %s666
      %p668 = scmp.eq.s32.totalorder %s80, 0
      %p669 = por %p667, %p668
      %s670 = ssub.s32 %s74, %s81
      %p671 = scmp.eq.s32.totalorder %s670, 0
      %s673 = sadd.s32 %s672, 1
      %s674 = scalar_select %p671, %s672, %s673
      %p677 = pneg %p671
      %p678 = scmp.eq.s32.totalorder %s74, 1
      %p679 = por %p677, %p678
      %p680 = scmp.ne.s32.totalorder %s672, %s675
      %p681 = scmp.eq.s32.totalorder %s74, 0
      %p682 = por %p680, %p681
      %p683 = scmp.ne.s32.totalorder %s672, %s675
      %p684 = scmp.eq.s32.totalorder %s79, 1
      %p685 = por %p683, %p684
      %p686 = scmp.ne.s32.totalorder %s675, %s676
      %p687 = scmp.eq.s32.totalorder %s79, 0
      %p688 = por %p686, %p687
      %p689 = scmp.ne.s32.totalorder %s675, %s676
      %p690 = scmp.eq.s32.totalorder %s80, 1
      %p691 = por %p689, %p690
      %p693 = scmp.ne.s32.totalorder %s676, %s692
      %p694 = scmp.eq.s32.totalorder %s80, 0
      %p695 = por %p693, %p694
      %s696 = ssub.s32 %s74, %s81
      %p697 = scmp.eq.s32.totalorder %s696, 0
      %s699 = sadd.s32 %s698, 1
      %s700 = scalar_select %p697, %s698, %s699
      %p703 = pneg %p697
      %p704 = scmp.eq.s32.totalorder %s74, 1
      %p705 = por %p703, %p704
      %p706 = scmp.ne.s32.totalorder %s698, %s701
      %p707 = scmp.eq.s32.totalorder %s74, 0
      %p708 = por %p706, %p707
      %p709 = scmp.ne.s32.totalorder %s698, %s701
      %p710 = scmp.eq.s32.totalorder %s79, 1
      %p711 = por %p709, %p710
      %p712 = scmp.ne.s32.totalorder %s701, %s702
      %p713 = scmp.eq.s32.totalorder %s79, 0
      %p714 = por %p712, %p713
      %p715 = scmp.ne.s32.totalorder %s701, %s702
      %p716 = scmp.eq.s32.totalorder %s80, 1
      %p717 = por %p715, %p716
      %p719 = scmp.ne.s32.totalorder %s702, %s718
      %p720 = scmp.eq.s32.totalorder %s80, 0
      %p721 = por %p719, %p720
      %s722 = ssub.s32 %s74, %s81
      %p723 = scmp.eq.s32.totalorder %s722, 0
      %s725 = sadd.s32 %s724, 1
      %s726 = scalar_select %p723, %s724, %s725
      %p729 = pneg %p723
      %p730 = scmp.eq.s32.totalorder %s74, 1
      %p731 = por %p729, %p730
      %p732 = scmp.ne.s32.totalorder %s724, %s727
      %p733 = scmp.eq.s32.totalorder %s74, 0
      %p734 = por %p732, %p733
      %p735 = scmp.ne.s32.totalorder %s724, %s727
      %p736 = scmp.eq.s32.totalorder %s79, 1
      %p737 = por %p735, %p736
      %p738 = scmp.ne.s32.totalorder %s727, %s728
      %p739 = scmp.eq.s32.totalorder %s79, 0
      %p740 = por %p738, %p739
      %p741 = scmp.ne.s32.totalorder %s727, %s728
      %p742 = scmp.eq.s32.totalorder %s80, 1
      %p743 = por %p741, %p742
      %p745 = scmp.ne.s32.totalorder %s728, %s744
      %p746 = scmp.eq.s32.totalorder %s80, 0
      %p747 = por %p745, %p746
      %s748 = ssub.s32 %s74, %s81
      %p749 = scmp.eq.s32.totalorder %s748, 0
      %s751 = sadd.s32 %s750, 1
      %s752 = scalar_select %p749, %s750, %s751
      %p755 = pneg %p749
      %p756 = scmp.eq.s32.totalorder %s74, 1
      %p757 = por %p755, %p756
      %p758 = scmp.ne.s32.totalorder %s750, %s753
      %p759 = scmp.eq.s32.totalorder %s74, 0
      %p760 = por %p758, %p759
      %p761 = scmp.ne.s32.totalorder %s750, %s753
      %p762 = scmp.eq.s32.totalorder %s79, 1
      %p763 = por %p761, %p762
      %p764 = scmp.ne.s32.totalorder %s753, %s754
      %p765 = scmp.eq.s32.totalorder %s79, 0
      %p766 = por %p764, %p765
      %p767 = scmp.ne.s32.totalorder %s753, %s754
      %p768 = scmp.eq.s32.totalorder %s80, 1
      %p769 = por %p767, %p768
      %p771 = scmp.ne.s32.totalorder %s754, %s770
      %p772 = scmp.eq.s32.totalorder %s80, 0
      %p773 = por %p771, %p772
      %s774 = ssub.s32 %s74, %s81
      %p775 = scmp.eq.s32.totalorder %s774, 0
      %s777 = sadd.s32 %s776, 1
      %s778 = scalar_select %p775, %s776, %s777
      %p781 = pneg %p775
      %p782 = scmp.eq.s32.totalorder %s74, 1
      %p783 = por %p781, %p782
      %p784 = scmp.ne.s32.totalorder %s776, %s779
      %p785 = scmp.eq.s32.totalorder %s74, 0
      %p786 = por %p784, %p785
      %p787 = scmp.ne.s32.totalorder %s776, %s779
      %p788 = scmp.eq.s32.totalorder %s79, 1
      %p789 = por %p787, %p788
      %p790 = scmp.ne.s32.totalorder %s779, %s780
      %p791 = scmp.eq.s32.totalorder %s79, 0
      %p792 = por %p790, %p791
      %p793 = scmp.ne.s32.totalorder %s779, %s780
      %p794 = scmp.eq.s32.totalorder %s80, 1
      %p795 = por %p793, %p794
      %p797 = scmp.ne.s32.totalorder %s780, %s796
      %p798 = scmp.eq.s32.totalorder %s80, 0
      %p799 = por %p797, %p798
      %s800 = ssub.s32 %s74, %s81
      %p801 = scmp.eq.s32.totalorder %s800, 0
      %s803 = sadd.s32 %s802, 1
      %s804 = scalar_select %p801, %s802, %s803
      %p807 = pneg %p801
      %p808 = scmp.eq.s32.totalorder %s74, 1
      %p809 = por %p807, %p808
      %p810 = scmp.ne.s32.totalorder %s802, %s805
      %p811 = scmp.eq.s32.totalorder %s74, 0
      %p812 = por %p810, %p811
      %p813 = scmp.ne.s32.totalorder %s802, %s805
      %p814 = scmp.eq.s32.totalorder %s79, 1
      %p815 = por %p813, %p814
      %p816 = scmp.ne.s32.totalorder %s805, %s806
      %p817 = scmp.eq.s32.totalorder %s79, 0
      %p818 = por %p816, %p817
      %p819 = scmp.ne.s32.totalorder %s805, %s806
      %p820 = scmp.eq.s32.totalorder %s80, 1
      %p821 = por %p819, %p820
      %p823 = scmp.ne.s32.totalorder %s806, %s822
      %p824 = scmp.eq.s32.totalorder %s80, 0
      %p825 = por %p823, %p824
      %s826 = ssub.s32 %s74, %s81
      %p827 = scmp.eq.s32.totalorder %s826, 0
      %s829 = sadd.s32 %s828, 1
      %s830 = scalar_select %p827, %s828, %s829
      %p833 = pneg %p827
      %p834 = scmp.eq.s32.totalorder %s74, 1
      %p835 = por %p833, %p834
      %p836 = scmp.ne.s32.totalorder %s828, %s831
      %p837 = scmp.eq.s32.totalorder %s74, 0
      %p838 = por %p836, %p837
      %p839 = scmp.ne.s32.totalorder %s828, %s831
      %p840 = scmp.eq.s32.totalorder %s79, 1
      %p841 = por %p839, %p840
      %p842 = scmp.ne.s32.totalorder %s831, %s832
      %p843 = scmp.eq.s32.totalorder %s79, 0
      %p844 = por %p842, %p843
      %p845 = scmp.ne.s32.totalorder %s831, %s832
      %p846 = scmp.eq.s32.totalorder %s80, 1
      %p847 = por %p845, %p846
      %p849 = scmp.ne.s32.totalorder %s832, %s848
      %p850 = scmp.eq.s32.totalorder %s80, 0
      %p851 = por %p849, %p850
      %s852 = ssub.s32 %s74, %s81
      %p853 = scmp.eq.s32.totalorder %s852, 0
      %s855 = sadd.s32 %s854, 1
      %s856 = scalar_select %p853, %s854, %s855
      %p859 = pneg %p853
      %p860 = scmp.eq.s32.totalorder %s74, 1
      %p861 = por %p859, %p860
      %p862 = scmp.ne.s32.totalorder %s854, %s857
      %p863 = scmp.eq.s32.totalorder %s74, 0
      %p864 = por %p862, %p863
      %p865 = scmp.ne.s32.totalorder %s854, %s857
      %p866 = scmp.eq.s32.totalorder %s79, 1
      %p867 = por %p865, %p866
      %p868 = scmp.ne.s32.totalorder %s857, %s858
      %p869 = scmp.eq.s32.totalorder %s79, 0
      %p870 = por %p868, %p869
      %p871 = scmp.ne.s32.totalorder %s857, %s858
      %p872 = scmp.eq.s32.totalorder %s80, 1
      %p873 = por %p871, %p872
      %p875 = scmp.ne.s32.totalorder %s858, %s874
      %p876 = scmp.eq.s32.totalorder %s80, 0
      %p877 = por %p875, %p876
      %s879 = sadd.s32 %s878, 1
      %p882 = scmp.eq.s32.totalorder %s74, 1
      %p883 = scmp.ne.s32.totalorder %s878, %s880
      %p884 = scmp.eq.s32.totalorder %s74, 0
      %p885 = por %p883, %p884
      %p886 = scmp.ne.s32.totalorder %s878, %s880
      %p887 = scmp.eq.s32.totalorder %s79, 1
      %p888 = por %p886, %p887
      %p889 = scmp.ne.s32.totalorder %s880, %s881
      %p890 = scmp.eq.s32.totalorder %s79, 0
      %p891 = por %p889, %p890
      %p892 = scmp.ne.s32.totalorder %s880, %s881
      %p893 = scmp.eq.s32.totalorder %s80, 1
      %p894 = por %p892, %p893
      %p896 = scmp.ne.s32.totalorder %s881, %s895
      %p897 = scmp.eq.s32.totalorder %s80, 0
      %p898 = por %p896, %p897
      %s900 = sadd.s32 %s899, 1
      %p903 = scmp.eq.s32.totalorder %s74, 1
      %p904 = scmp.ne.s32.totalorder %s899, %s901
      %p905 = scmp.eq.s32.totalorder %s74, 0
      %p906 = por %p904, %p905
      %p907 = scmp.ne.s32.totalorder %s899, %s901
      %p908 = scmp.eq.s32.totalorder %s79, 1
      %p909 = por %p907, %p908
      %p910 = scmp.ne.s32.totalorder %s901, %s902
      %p911 = scmp.eq.s32.totalorder %s79, 0
      %p912 = por %p910, %p911
      %p913 = scmp.ne.s32.totalorder %s901, %s902
      %p914 = scmp.eq.s32.totalorder %s80, 1
      %p915 = por %p913, %p914
      %p917 = scmp.ne.s32.totalorder %s902, %s916
      %p918 = scmp.eq.s32.totalorder %s80, 0
      %p919 = por %p917, %p918
      %p920 = scmp.le.s32.totalorder 1, %s74
      %p921 = scmp.lt.s32.totalorder %s74, 3
      %p922 = pnand %p920, %p921
      %p923 = pneg %p922
      // Predicated region
      $region9: #{tpu_custom_call.1} parent=5 // pred_check
        _
      $region10: #{tpu_custom_call.1} parent=5 // pred_check_branch
        %925 = sbr.rel (%p922) target = $region12
      $region11: #{tpu_custom_call.1} parent=5 // pred_region
        %s926 = ssub.s32 %s74, 1
        // Predicated region
        $region13: #{tpu_custom_call.1} parent=11 // pred_check
          %p927 = pneg %p95
        $region14: #{tpu_custom_call.1} parent=11 // pred_check_branch
          %929 = sbr.rel (%p927) target = $region16
        $region15: #{tpu_custom_call.1} parent=11 // pred_region
          _
        $region16: #{tpu_custom_call.1} parent=11 // pred_fallthru
          _
        // Predicated region
        $region17: #{tpu_custom_call.1} parent=11 // pred_check
          %p930 = pneg %p116
        $region18: #{tpu_custom_call.1} parent=11 // pred_check_branch
          %932 = sbr.rel (%p930) target = $region20
        $region19: #{tpu_custom_call.1} parent=11 // pred_region
          _
        $region20: #{tpu_custom_call.1} parent=11 // pred_fallthru
          _
      $region12: #{tpu_custom_call.1} parent=5 // pred_fallthru
        _
      %p933 = scmp.lt.s32.totalorder %s74, 2
      // Predicated region
      $region21: #{tpu_custom_call.1} parent=5 // pred_check
        %p934 = pneg %p933
      $region22: #{tpu_custom_call.1} parent=5 // pred_check_branch
        %936 = sbr.rel (%p934) target = $region24
      $region23: #{tpu_custom_call.1} parent=5 // pred_region
        // Predicated region
        $region25: #{tpu_custom_call.1} parent=23 // pred_check
          %p937 = pneg %p136
        $region26: #{tpu_custom_call.1} parent=23 // pred_check_branch
          %939 = sbr.rel (%p937) target = $region28
        $region27: #{tpu_custom_call.1} parent=23 // pred_region
          %p940 = scmp.lt.s32.totalorder %s74, 1
          %s941 = scalar_select %p940, %s74, 1
          %s942 = smul.addr %s941, 16
          %s943 = smul.addr %s942, 4
          %s944 = scalar_lea.vmem %s5, %s943
        $region28: #{tpu_custom_call.1} parent=23 // pred_fallthru
          _
        // Predicated region
        $region29: #{tpu_custom_call.1} parent=23 // pred_check
          %p945 = pneg %p162
        $region30: #{tpu_custom_call.1} parent=23 // pred_check_branch
          %947 = sbr.rel (%p945) target = $region32
        $region31: #{tpu_custom_call.1} parent=23 // pred_region
          %p948 = scmp.lt.s32.totalorder %s74, 1
          %s949 = scalar_select %p948, %s74, 1
          %s950 = smul.addr %s949, 4
          %s951 = smul.addr %s950, 4
          %s952 = scalar_lea.vmem %s7, %s951
        $region32: #{tpu_custom_call.1} parent=23 // pred_fallthru
          _
        // Predicated region
        $region33: #{tpu_custom_call.1} parent=23 // pred_check
          %p953 = pneg %p188
        $region34: #{tpu_custom_call.1} parent=23 // pred_check_branch
          %955 = sbr.rel (%p953) target = $region36
        $region35: #{tpu_custom_call.1} parent=23 // pred_region
          %p956 = scmp.lt.s32.totalorder %s74, 1
          %s957 = scalar_select %p956, %s74, 1
          %s958 = smul.addr %s957, 16
          %s959 = smul.addr %s958, 4
          %s960 = scalar_lea.vmem %s9, %s959
        $region36: #{tpu_custom_call.1} parent=23 // pred_fallthru
          _
        // Predicated region
        $region37: #{tpu_custom_call.1} parent=23 // pred_check
          %p961 = pneg %p214
        $region38: #{tpu_custom_call.1} parent=23 // pred_check_branch
          %963 = sbr.rel (%p961) target = $region40
        $region39: #{tpu_custom_call.1} parent=23 // pred_region
          %p964 = scmp.lt.s32.totalorder %s74, 1
          %s965 = scalar_select %p964, %s74, 1
          %s966 = smul.addr %s965, 4
          %s967 = smul.addr %s966, 4
          %s968 = scalar_lea.vmem %s11, %s967
        $region40: #{tpu_custom_call.1} parent=23 // pred_fallthru
          _
        // Predicated region
        $region41: #{tpu_custom_call.1} parent=23 // pred_check
          %p969 = pneg %p240
        $region42: #{tpu_custom_call.1} parent=23 // pred_check_branch
          %971 = sbr.rel (%p969) target = $region44
        $region43: #{tpu_custom_call.1} parent=23 // pred_region
          %p972 = scmp.lt.s32.totalorder %s74, 1
          %s973 = scalar_select %p972, %s74, 1
          %s974 = smul.addr %s973, 4
          %s975 = scalar_lea.vmem %s13, %s974
        $region44: #{tpu_custom_call.1} parent=23 // pred_fallthru
          _
        // Predicated region
        $region45: #{tpu_custom_call.1} parent=23 // pred_check
          %p976 = pneg %p266
        $region46: #{tpu_custom_call.1} parent=23 // pred_check_branch
          %978 = sbr.rel (%p976) target = $region48
        $region47: #{tpu_custom_call.1} parent=23 // pred_region
          %p979 = scmp.lt.s32.totalorder %s74, 1
          %s980 = scalar_select %p979, %s74, 1
          %s981 = smul.addr %s980, 4
          %s982 = smul.addr %s981, 8
          %s983 = scalar_lea.vmem %s15, %s982
        $region48: #{tpu_custom_call.1} parent=23 // pred_fallthru
          _
        // Predicated region
        $region49: #{tpu_custom_call.1} parent=23 // pred_check
          %p984 = pneg %p292
        $region50: #{tpu_custom_call.1} parent=23 // pred_check_branch
          %986 = sbr.rel (%p984) target = $region52
        $region51: #{tpu_custom_call.1} parent=23 // pred_region
          %p987 = scmp.lt.s32.totalorder %s74, 1
          %s988 = scalar_select %p987, %s74, 1
          %s989 = smul.addr %s988, 4
          %s990 = scalar_lea.vmem %s17, %s989
        $region52: #{tpu_custom_call.1} parent=23 // pred_fallthru
          _
        // Predicated region
        $region53: #{tpu_custom_call.1} parent=23 // pred_check
          %p991 = pneg %p318
        $region54: #{tpu_custom_call.1} parent=23 // pred_check_branch
          %993 = sbr.rel (%p991) target = $region56
        $region55: #{tpu_custom_call.1} parent=23 // pred_region
          %p994 = scmp.lt.s32.totalorder %s74, 1
          %s995 = scalar_select %p994, %s74, 1
          %s996 = scalar_lea.vmem %s19, %s995
        $region56: #{tpu_custom_call.1} parent=23 // pred_fallthru
          _
        // Predicated region
        $region57: #{tpu_custom_call.1} parent=23 // pred_check
          %p997 = pneg %p344
        $region58: #{tpu_custom_call.1} parent=23 // pred_check_branch
          %999 = sbr.rel (%p997) target = $region60
        $region59: #{tpu_custom_call.1} parent=23 // pred_region
          %p1000 = scmp.lt.s32.totalorder %s74, 1
          %s1001 = scalar_select %p1000, %s74, 1
          %s1002 = smul.addr %s1001, 16
          %s1003 = smul.addr %s1002, 4
          %s1004 = scalar_lea.vmem %s21, %s1003
        $region60: #{tpu_custom_call.1} parent=23 // pred_fallthru
          _
        // Predicated region
        $region61: #{tpu_custom_call.1} parent=23 // pred_check
          %p1005 = pneg %p370
        $region62: #{tpu_custom_call.1} parent=23 // pred_check_branch
          %1007 = sbr.rel (%p1005) target = $region64
        $region63: #{tpu_custom_call.1} parent=23 // pred_region
          %p1008 = scmp.lt.s32.totalorder %s74, 1
          %s1009 = scalar_select %p1008, %s74, 1
          %s1010 = smul.addr %s1009, 4
          %s1011 = smul.addr %s1010, 4
          %s1012 = scalar_lea.vmem %s23, %s1011
        $region64: #{tpu_custom_call.1} parent=23 // pred_fallthru
          _
        // Predicated region
        $region65: #{tpu_custom_call.1} parent=23 // pred_check
          %p1013 = pneg %p396
        $region66: #{tpu_custom_call.1} parent=23 // pred_check_branch
          %1015 = sbr.rel (%p1013) target = $region68
        $region67: #{tpu_custom_call.1} parent=23 // pred_region
          %p1016 = scmp.lt.s32.totalorder %s74, 1
          %s1017 = scalar_select %p1016, %s74, 1
          %s1018 = smul.addr %s1017, 16
          %s1019 = smul.addr %s1018, 4
          %s1020 = scalar_lea.vmem %s25, %s1019
        $region68: #{tpu_custom_call.1} parent=23 // pred_fallthru
          _
        // Predicated region
        $region69: #{tpu_custom_call.1} parent=23 // pred_check
          %p1021 = pneg %p422
        $region70: #{tpu_custom_call.1} parent=23 // pred_check_branch
          %1023 = sbr.rel (%p1021) target = $region72
        $region71: #{tpu_custom_call.1} parent=23 // pred_region
          %p1024 = scmp.lt.s32.totalorder %s74, 1
          %s1025 = scalar_select %p1024, %s74, 1
          %s1026 = smul.addr %s1025, 4
          %s1027 = smul.addr %s1026, 4
          %s1028 = scalar_lea.vmem %s27, %s1027
        $region72: #{tpu_custom_call.1} parent=23 // pred_fallthru
          _
        // Predicated region
        $region73: #{tpu_custom_call.1} parent=23 // pred_check
          %p1029 = pneg %p448
        $region74: #{tpu_custom_call.1} parent=23 // pred_check_branch
          %1031 = sbr.rel (%p1029) target = $region76
        $region75: #{tpu_custom_call.1} parent=23 // pred_region
          %p1032 = scmp.lt.s32.totalorder %s74, 1
          %s1033 = scalar_select %p1032, %s74, 1
          %s1034 = smul.addr %s1033, 4
          %s1035 = scalar_lea.vmem %s29, %s1034
        $region76: #{tpu_custom_call.1} parent=23 // pred_fallthru
          _
        // Predicated region
        $region77: #{tpu_custom_call.1} parent=23 // pred_check
          %p1036 = pneg %p474
        $region78: #{tpu_custom_call.1} parent=23 // pred_check_branch
          %1038 = sbr.rel (%p1036) target = $region80
        $region79: #{tpu_custom_call.1} parent=23 // pred_region
          %p1039 = scmp.lt.s32.totalorder %s74, 1
          %s1040 = scalar_select %p1039, %s74, 1
          %s1041 = smul.addr %s1040, 4
          %s1042 = smul.addr %s1041, 8
          %s1043 = scalar_lea.vmem %s31, %s1042
        $region80: #{tpu_custom_call.1} parent=23 // pred_fallthru
          _
        // Predicated region
        $region81: #{tpu_custom_call.1} parent=23 // pred_check
          %p1044 = pneg %p500
        $region82: #{tpu_custom_call.1} parent=23 // pred_check_branch
          %1046 = sbr.rel (%p1044) target = $region84
        $region83: #{tpu_custom_call.1} parent=23 // pred_region
          %p1047 = scmp.lt.s32.totalorder %s74, 1
          %s1048 = scalar_select %p1047, %s74, 1
          %s1049 = smul.addr %s1048, 4
          %s1050 = scalar_lea.vmem %s33, %s1049
        $region84: #{tpu_custom_call.1} parent=23 // pred_fallthru
          _
        // Predicated region
        $region85: #{tpu_custom_call.1} parent=23 // pred_check
          %p1051 = pneg %p526
        $region86: #{tpu_custom_call.1} parent=23 // pred_check_branch
          %1053 = sbr.rel (%p1051) target = $region88
        $region87: #{tpu_custom_call.1} parent=23 // pred_region
          %p1054 = scmp.lt.s32.totalorder %s74, 1
          %s1055 = scalar_select %p1054, %s74, 1
          %s1056 = scalar_lea.vmem %s35, %s1055
        $region88: #{tpu_custom_call.1} parent=23 // pred_fallthru
          _
        // Predicated region
        $region89: #{tpu_custom_call.1} parent=23 // pred_check
          %p1057 = pneg %p552
        $region90: #{tpu_custom_call.1} parent=23 // pred_check_branch
          %1059 = sbr.rel (%p1057) target = $region92
        $region91: #{tpu_custom_call.1} parent=23 // pred_region
          %p1060 = scmp.lt.s32.totalorder %s74, 1
          %s1061 = scalar_select %p1060, %s74, 1
          %s1062 = smul.addr %s1061, 16
          %s1063 = smul.addr %s1062, 4
          %s1064 = scalar_lea.vmem %s37, %s1063
        $region92: #{tpu_custom_call.1} parent=23 // pred_fallthru
          _
        // Predicated region
        $region93: #{tpu_custom_call.1} parent=23 // pred_check
          %p1065 = pneg %p578
        $region94: #{tpu_custom_call.1} parent=23 // pred_check_branch
          %1067 = sbr.rel (%p1065) target = $region96
        $region95: #{tpu_custom_call.1} parent=23 // pred_region
          %p1068 = scmp.lt.s32.totalorder %s74, 1
          %s1069 = scalar_select %p1068, %s74, 1
          %s1070 = smul.addr %s1069, 4
          %s1071 = smul.addr %s1070, 4
          %s1072 = scalar_lea.vmem %s39, %s1071
        $region96: #{tpu_custom_call.1} parent=23 // pred_fallthru
          _
        // Predicated region
        $region97: #{tpu_custom_call.1} parent=23 // pred_check
          %p1073 = pneg %p604
        $region98: #{tpu_custom_call.1} parent=23 // pred_check_branch
          %1075 = sbr.rel (%p1073) target = $region100
        $region99: #{tpu_custom_call.1} parent=23 // pred_region
          %p1076 = scmp.lt.s32.totalorder %s74, 1
          %s1077 = scalar_select %p1076, %s74, 1
          %s1078 = smul.addr %s1077, 16
          %s1079 = smul.addr %s1078, 4
          %s1080 = scalar_lea.vmem %s41, %s1079
        $region100: #{tpu_custom_call.1} parent=23 // pred_fallthru
          _
        // Predicated region
        $region101: #{tpu_custom_call.1} parent=23 // pred_check
          %p1081 = pneg %p630
        $region102: #{tpu_custom_call.1} parent=23 // pred_check_branch
          %1083 = sbr.rel (%p1081) target = $region104
        $region103: #{tpu_custom_call.1} parent=23 // pred_region
          %p1084 = scmp.lt.s32.totalorder %s74, 1
          %s1085 = scalar_select %p1084, %s74, 1
          %s1086 = smul.addr %s1085, 4
          %s1087 = smul.addr %s1086, 4
          %s1088 = scalar_lea.vmem %s43, %s1087
        $region104: #{tpu_custom_call.1} parent=23 // pred_fallthru
          _
        // Predicated region
        $region105: #{tpu_custom_call.1} parent=23 // pred_check
          %p1089 = pneg %p656
        $region106: #{tpu_custom_call.1} parent=23 // pred_check_branch
          %1091 = sbr.rel (%p1089) target = $region108
        $region107: #{tpu_custom_call.1} parent=23 // pred_region
          %p1092 = scmp.lt.s32.totalorder %s74, 1
          %s1093 = scalar_select %p1092, %s74, 1
          %s1094 = smul.addr %s1093, 4
          %s1095 = scalar_lea.vmem %s45, %s1094
        $region108: #{tpu_custom_call.1} parent=23 // pred_fallthru
          _
        // Predicated region
        $region109: #{tpu_custom_call.1} parent=23 // pred_check
          %p1096 = pneg %p682
        $region110: #{tpu_custom_call.1} parent=23 // pred_check_branch
          %1098 = sbr.rel (%p1096) target = $region112
        $region111: #{tpu_custom_call.1} parent=23 // pred_region
          %p1099 = scmp.lt.s32.totalorder %s74, 1
          %s1100 = scalar_select %p1099, %s74, 1
          %s1101 = smul.addr %s1100, 4
          %s1102 = smul.addr %s1101, 8
          %s1103 = scalar_lea.vmem %s47, %s1102
        $region112: #{tpu_custom_call.1} parent=23 // pred_fallthru
          _
        // Predicated region
        $region113: #{tpu_custom_call.1} parent=23 // pred_check
          %p1104 = pneg %p708
        $region114: #{tpu_custom_call.1} parent=23 // pred_check_branch
          %1106 = sbr.rel (%p1104) target = $region116
        $region115: #{tpu_custom_call.1} parent=23 // pred_region
          %p1107 = scmp.lt.s32.totalorder %s74, 1
          %s1108 = scalar_select %p1107, %s74, 1
          %s1109 = smul.addr %s1108, 4
          %s1110 = scalar_lea.vmem %s49, %s1109
        $region116: #{tpu_custom_call.1} parent=23 // pred_fallthru
          _
        // Predicated region
        $region117: #{tpu_custom_call.1} parent=23 // pred_check
          %p1111 = pneg %p734
        $region118: #{tpu_custom_call.1} parent=23 // pred_check_branch
          %1113 = sbr.rel (%p1111) target = $region120
        $region119: #{tpu_custom_call.1} parent=23 // pred_region
          %p1114 = scmp.lt.s32.totalorder %s74, 1
          %s1115 = scalar_select %p1114, %s74, 1
          %s1116 = scalar_lea.vmem %s51, %s1115
        $region120: #{tpu_custom_call.1} parent=23 // pred_fallthru
          _
        // Predicated region
        $region121: #{tpu_custom_call.1} parent=23 // pred_check
          %p1117 = pneg %p760
        $region122: #{tpu_custom_call.1} parent=23 // pred_check_branch
          %1119 = sbr.rel (%p1117) target = $region124
        $region123: #{tpu_custom_call.1} parent=23 // pred_region
          %p1120 = scmp.lt.s32.totalorder %s74, 1
          %s1121 = scalar_select %p1120, %s74, 1
          %s1122 = smul.addr %s1121, 64
          %s1123 = smul.addr %s1122, 4
          %s1124 = scalar_lea.vmem %s53, %s1123
        $region124: #{tpu_custom_call.1} parent=23 // pred_fallthru
          _
        // Predicated region
        $region125: #{tpu_custom_call.1} parent=23 // pred_check
          %p1125 = pneg %p786
        $region126: #{tpu_custom_call.1} parent=23 // pred_check_branch
          %1127 = sbr.rel (%p1125) target = $region128
        $region127: #{tpu_custom_call.1} parent=23 // pred_region
          %p1128 = scmp.lt.s32.totalorder %s74, 1
          %s1129 = scalar_select %p1128, %s74, 1
          %s1130 = smul.addr %s1129, 16
          %s1131 = scalar_lea.vmem %s55, %s1130
        $region128: #{tpu_custom_call.1} parent=23 // pred_fallthru
          _
        // Predicated region
        $region129: #{tpu_custom_call.1} parent=23 // pred_check
          %p1132 = pneg %p812
        $region130: #{tpu_custom_call.1} parent=23 // pred_check_branch
          %1134 = sbr.rel (%p1132) target = $region132
        $region131: #{tpu_custom_call.1} parent=23 // pred_region
          %p1135 = scmp.lt.s32.totalorder %s74, 1
          %s1136 = scalar_select %p1135, %s74, 1
          %s1137 = smul.addr %s1136, 256
          %s1138 = smul.addr %s1137, 4
          %s1139 = scalar_lea.vmem %s57, %s1138
        $region132: #{tpu_custom_call.1} parent=23 // pred_fallthru
          _
        // Predicated region
        $region133: #{tpu_custom_call.1} parent=23 // pred_check
          %p1140 = pneg %p838
        $region134: #{tpu_custom_call.1} parent=23 // pred_check_branch
          %1142 = sbr.rel (%p1140) target = $region136
        $region135: #{tpu_custom_call.1} parent=23 // pred_region
          %p1143 = scmp.lt.s32.totalorder %s74, 1
          %s1144 = scalar_select %p1143, %s74, 1
          %s1145 = scalar_lea.vmem %s59, %s1144
        $region136: #{tpu_custom_call.1} parent=23 // pred_fallthru
          _
        // Predicated region
        $region137: #{tpu_custom_call.1} parent=23 // pred_check
          %p1146 = pneg %p864
        $region138: #{tpu_custom_call.1} parent=23 // pred_check_branch
          %1148 = sbr.rel (%p1146) target = $region140
        $region139: #{tpu_custom_call.1} parent=23 // pred_region
          %p1149 = scmp.lt.s32.totalorder %s74, 1
          %s1150 = scalar_select %p1149, %s74, 1
          %s1151 = smul.addr %s1150, 10
          %s1152 = scalar_lea.vmem %s61, %s1151
        $region140: #{tpu_custom_call.1} parent=23 // pred_fallthru
          _
      $region24: #{tpu_custom_call.1} parent=5 // pred_fallthru
        _
      %p1153 = scmp.le.s32.totalorder 1, %s74
      %p1154 = scmp.lt.s32.totalorder %s74, 3
      %p1155 = pnand %p1153, %p1154
      %p1156 = pneg %p1155
      // Predicated region
      $region141: #{tpu_custom_call.1} parent=5 // pred_check
        _
      $region142: #{tpu_custom_call.1} parent=5 // pred_check_branch
        %1158 = sbr.rel (%p1155) target = $region144
      $region143: #{tpu_custom_call.1} parent=5 // pred_region
        %s1159 = ssub.s32 %s74, 1
        %p1160 = pneg %p95
        %p1161 = pneg %p92
        %p1162 = pneg %p116
        %p1163 = pneg %p113
        %p1164 = scmp.lt.s32.totalorder %s79, 1
        %s1165 = scalar_select %p1164, %s79, 1
        %s1166 = smul.addr %s1165, 16
        %s1167 = smul.addr %s1166, 4
        %s1168 = scalar_lea.vmem %s5, %s1167
        %p1169 = pneg %p142
        %p1170 = pneg %p139
        %p1171 = scmp.lt.s32.totalorder %s79, 1
        %s1172 = scalar_select %p1171, %s79, 1
        %s1173 = smul.addr %s1172, 4
        %s1174 = smul.addr %s1173, 4
        %s1175 = scalar_lea.vmem %s7, %s1174
        %p1176 = pneg %p168
        %p1177 = pneg %p165
        %p1178 = scmp.lt.s32.totalorder %s79, 1
        %s1179 = scalar_select %p1178, %s79, 1
        %s1180 = smul.addr %s1179, 16
        %s1181 = smul.addr %s1180, 4
        %s1182 = scalar_lea.vmem %s9, %s1181
        %p1183 = pneg %p194
        %p1184 = pneg %p191
        %p1185 = scmp.lt.s32.totalorder %s79, 1
        %s1186 = scalar_select %p1185, %s79, 1
        %s1187 = smul.addr %s1186, 4
        %s1188 = smul.addr %s1187, 4
        %s1189 = scalar_lea.vmem %s11, %s1188
        %p1190 = pneg %p220
        %p1191 = pneg %p217
        %p1192 = scmp.lt.s32.totalorder %s79, 1
        %s1193 = scalar_select %p1192, %s79, 1
        %s1194 = smul.addr %s1193, 4
        %s1195 = scalar_lea.vmem %s13, %s1194
        %p1196 = pneg %p246
        %p1197 = pneg %p243
        %p1198 = scmp.lt.s32.totalorder %s79, 1
        %s1199 = scalar_select %p1198, %s79, 1
        %s1200 = smul.addr %s1199, 4
        %s1201 = smul.addr %s1200, 8
        %s1202 = scalar_lea.vmem %s15, %s1201
        %p1203 = pneg %p272
        %p1204 = pneg %p269
        %p1205 = scmp.lt.s32.totalorder %s79, 1
        %s1206 = scalar_select %p1205, %s79, 1
        %s1207 = smul.addr %s1206, 4
        %s1208 = scalar_lea.vmem %s17, %s1207
        %p1209 = pneg %p298
        %p1210 = pneg %p295
        %p1211 = scmp.lt.s32.totalorder %s79, 1
        %s1212 = scalar_select %p1211, %s79, 1
        %s1213 = scalar_lea.vmem %s19, %s1212
        %p1214 = pneg %p324
        %p1215 = pneg %p321
        %p1216 = scmp.lt.s32.totalorder %s79, 1
        %s1217 = scalar_select %p1216, %s79, 1
        %s1218 = smul.addr %s1217, 16
        %s1219 = smul.addr %s1218, 4
        %s1220 = scalar_lea.vmem %s21, %s1219
        %p1221 = pneg %p350
        %p1222 = pneg %p347
        %p1223 = scmp.lt.s32.totalorder %s79, 1
        %s1224 = scalar_select %p1223, %s79, 1
        %s1225 = smul.addr %s1224, 4
        %s1226 = smul.addr %s1225, 4
        %s1227 = scalar_lea.vmem %s23, %s1226
        %p1228 = pneg %p376
        %p1229 = pneg %p373
        %p1230 = scmp.lt.s32.totalorder %s79, 1
        %s1231 = scalar_select %p1230, %s79, 1
        %s1232 = smul.addr %s1231, 16
        %s1233 = smul.addr %s1232, 4
        %s1234 = scalar_lea.vmem %s25, %s1233
        %p1235 = pneg %p402
        %p1236 = pneg %p399
        %p1237 = scmp.lt.s32.totalorder %s79, 1
        %s1238 = scalar_select %p1237, %s79, 1
        %s1239 = smul.addr %s1238, 4
        %s1240 = smul.addr %s1239, 4
        %s1241 = scalar_lea.vmem %s27, %s1240
        %p1242 = pneg %p428
        %p1243 = pneg %p425
        %p1244 = scmp.lt.s32.totalorder %s79, 1
        %s1245 = scalar_select %p1244, %s79, 1
        %s1246 = smul.addr %s1245, 4
        %s1247 = scalar_lea.vmem %s29, %s1246
        %p1248 = pneg %p454
        %p1249 = pneg %p451
        %p1250 = scmp.lt.s32.totalorder %s79, 1
        %s1251 = scalar_select %p1250, %s79, 1
        %s1252 = smul.addr %s1251, 4
        %s1253 = smul.addr %s1252, 8
        %s1254 = scalar_lea.vmem %s31, %s1253
        %p1255 = pneg %p480
        %p1256 = pneg %p477
        %p1257 = scmp.lt.s32.totalorder %s79, 1
        %s1258 = scalar_select %p1257, %s79, 1
        %s1259 = smul.addr %s1258, 4
        %s1260 = scalar_lea.vmem %s33, %s1259
        %p1261 = pneg %p506
        %p1262 = pneg %p503
        %p1263 = scmp.lt.s32.totalorder %s79, 1
        %s1264 = scalar_select %p1263, %s79, 1
        %s1265 = scalar_lea.vmem %s35, %s1264
        %p1266 = pneg %p532
        %p1267 = pneg %p529
        %p1268 = scmp.lt.s32.totalorder %s79, 1
        %s1269 = scalar_select %p1268, %s79, 1
        %s1270 = smul.addr %s1269, 16
        %s1271 = smul.addr %s1270, 4
        %s1272 = scalar_lea.vmem %s37, %s1271
        %p1273 = pneg %p558
        %p1274 = pneg %p555
        %p1275 = scmp.lt.s32.totalorder %s79, 1
        %s1276 = scalar_select %p1275, %s79, 1
        %s1277 = smul.addr %s1276, 4
        %s1278 = smul.addr %s1277, 4
        %s1279 = scalar_lea.vmem %s39, %s1278
        %p1280 = pneg %p584
        %p1281 = pneg %p581
        %p1282 = scmp.lt.s32.totalorder %s79, 1
        %s1283 = scalar_select %p1282, %s79, 1
        %s1284 = smul.addr %s1283, 16
        %s1285 = smul.addr %s1284, 4
        %s1286 = scalar_lea.vmem %s41, %s1285
        %p1287 = pneg %p610
        %p1288 = pneg %p607
        %p1289 = scmp.lt.s32.totalorder %s79, 1
        %s1290 = scalar_select %p1289, %s79, 1
        %s1291 = smul.addr %s1290, 4
        %s1292 = smul.addr %s1291, 4
        %s1293 = scalar_lea.vmem %s43, %s1292
        %p1294 = pneg %p636
        %p1295 = pneg %p633
        %p1296 = scmp.lt.s32.totalorder %s79, 1
        %s1297 = scalar_select %p1296, %s79, 1
        %s1298 = smul.addr %s1297, 4
        %s1299 = scalar_lea.vmem %s45, %s1298
        %p1300 = pneg %p662
        %p1301 = pneg %p659
        %p1302 = scmp.lt.s32.totalorder %s79, 1
        %s1303 = scalar_select %p1302, %s79, 1
        %s1304 = smul.addr %s1303, 4
        %s1305 = smul.addr %s1304, 8
        %s1306 = scalar_lea.vmem %s47, %s1305
        %p1307 = pneg %p688
        %p1308 = pneg %p685
        %p1309 = scmp.lt.s32.totalorder %s79, 1
        %s1310 = scalar_select %p1309, %s79, 1
        %s1311 = smul.addr %s1310, 4
        %s1312 = scalar_lea.vmem %s49, %s1311
        %p1313 = pneg %p714
        %p1314 = pneg %p711
        %p1315 = scmp.lt.s32.totalorder %s79, 1
        %s1316 = scalar_select %p1315, %s79, 1
        %s1317 = scalar_lea.vmem %s51, %s1316
        %p1318 = pneg %p740
        %p1319 = pneg %p737
        %p1320 = scmp.lt.s32.totalorder %s79, 1
        %s1321 = scalar_select %p1320, %s79, 1
        %s1322 = smul.addr %s1321, 64
        %s1323 = smul.addr %s1322, 4
        %s1324 = scalar_lea.vmem %s53, %s1323
        %p1325 = pneg %p766
        %p1326 = pneg %p763
        %p1327 = scmp.lt.s32.totalorder %s79, 1
        %s1328 = scalar_select %p1327, %s79, 1
        %s1329 = smul.addr %s1328, 16
        %s1330 = scalar_lea.vmem %s55, %s1329
        %p1331 = pneg %p792
        %p1332 = pneg %p789
        %p1333 = scmp.lt.s32.totalorder %s79, 1
        %s1334 = scalar_select %p1333, %s79, 1
        %s1335 = smul.addr %s1334, 256
        %s1336 = smul.addr %s1335, 4
        %s1337 = scalar_lea.vmem %s57, %s1336
        %p1338 = pneg %p818
        %p1339 = pneg %p815
        %p1340 = scmp.lt.s32.totalorder %s79, 1
        %s1341 = scalar_select %p1340, %s79, 1
        %s1342 = scalar_lea.vmem %s59, %s1341
        %p1343 = pneg %p844
        %p1344 = pneg %p841
        %p1345 = scmp.lt.s32.totalorder %s79, 1
        %s1346 = scalar_select %p1345, %s79, 1
        %s1347 = smul.addr %s1346, 10
        %s1348 = scalar_lea.vmem %s61, %s1347
        %p1349 = pneg %p870
        %p1350 = pneg %p867
        %p1351 = pneg %p891
        %p1352 = pneg %p888
        %p1353 = pneg %p912
        %p1354 = pneg %p909
        %p1355 = scmp.lt.s32.totalorder %s79, 1
        %s1356 = scalar_select %p1355, %s79, 1
        %s1357 = smul.addr %s1356, 16
        %s1358 = smul.addr %s1357, 4
        %s1359 = scalar_lea.vmem %s5, %s1358
        %p1360 = scmp.lt.s32.totalorder %s79, 1
        %s1361 = scalar_select %p1360, %s79, 1
        %s1362 = smul.addr %s1361, 4
        %s1363 = smul.addr %s1362, 4
        %s1364 = scalar_lea.vmem %s7, %s1363
        %p1365 = scmp.lt.s32.totalorder %s79, 1
        %s1366 = scalar_select %p1365, %s79, 1
        %s1367 = smul.addr %s1366, 16
        %s1368 = smul.addr %s1367, 4
        %s1369 = scalar_lea.vmem %s9, %s1368
        %p1370 = scmp.lt.s32.totalorder %s79, 1
        %s1371 = scalar_select %p1370, %s79, 1
        %s1372 = smul.addr %s1371, 4
        %s1373 = smul.addr %s1372, 4
        %s1374 = scalar_lea.vmem %s11, %s1373
        %p1375 = scmp.lt.s32.totalorder %s79, 1
        %s1376 = scalar_select %p1375, %s79, 1
        %s1377 = smul.addr %s1376, 4
        %s1378 = scalar_lea.vmem %s13, %s1377
        %p1379 = scmp.lt.s32.totalorder %s79, 1
        %s1380 = scalar_select %p1379, %s79, 1
        %s1381 = smul.addr %s1380, 4
        %s1382 = smul.addr %s1381, 8
        %s1383 = scalar_lea.vmem %s15, %s1382
        %p1384 = scmp.lt.s32.totalorder %s79, 1
        %s1385 = scalar_select %p1384, %s79, 1
        %s1386 = smul.addr %s1385, 4
        %s1387 = scalar_lea.vmem %s17, %s1386
        %p1388 = scmp.lt.s32.totalorder %s79, 1
        %s1389 = scalar_select %p1388, %s79, 1
        %s1390 = scalar_lea.vmem %s19, %s1389
        %p1391 = scmp.lt.s32.totalorder %s79, 1
        %s1392 = scalar_select %p1391, %s79, 1
        %s1393 = smul.addr %s1392, 16
        %s1394 = smul.addr %s1393, 4
        %s1395 = scalar_lea.vmem %s21, %s1394
        %p1396 = scmp.lt.s32.totalorder %s79, 1
        %s1397 = scalar_select %p1396, %s79, 1
        %s1398 = smul.addr %s1397, 4
        %s1399 = smul.addr %s1398, 4
        %s1400 = scalar_lea.vmem %s23, %s1399
        %p1401 = scmp.lt.s32.totalorder %s79, 1
        %s1402 = scalar_select %p1401, %s79, 1
        %s1403 = smul.addr %s1402, 16
        %s1404 = smul.addr %s1403, 4
        %s1405 = scalar_lea.vmem %s25, %s1404
        %p1406 = scmp.lt.s32.totalorder %s79, 1
        %s1407 = scalar_select %p1406, %s79, 1
        %s1408 = smul.addr %s1407, 4
        %s1409 = smul.addr %s1408, 4
        %s1410 = scalar_lea.vmem %s27, %s1409
        %p1411 = scmp.lt.s32.totalorder %s79, 1
        %s1412 = scalar_select %p1411, %s79, 1
        %s1413 = smul.addr %s1412, 4
        %s1414 = scalar_lea.vmem %s29, %s1413
        %p1415 = scmp.lt.s32.totalorder %s79, 1
        %s1416 = scalar_select %p1415, %s79, 1
        %s1417 = smul.addr %s1416, 4
        %s1418 = smul.addr %s1417, 8
        %s1419 = scalar_lea.vmem %s31, %s1418
        %p1420 = scmp.lt.s32.totalorder %s79, 1
        %s1421 = scalar_select %p1420, %s79, 1
        %s1422 = smul.addr %s1421, 4
        %s1423 = scalar_lea.vmem %s33, %s1422
        %p1424 = scmp.lt.s32.totalorder %s79, 1
        %s1425 = scalar_select %p1424, %s79, 1
        %s1426 = scalar_lea.vmem %s35, %s1425
        %p1427 = scmp.lt.s32.totalorder %s79, 1
        %s1428 = scalar_select %p1427, %s79, 1
        %s1429 = smul.addr %s1428, 16
        %s1430 = smul.addr %s1429, 4
        %s1431 = scalar_lea.vmem %s37, %s1430
        %p1432 = scmp.lt.s32.totalorder %s79, 1
        %s1433 = scalar_select %p1432, %s79, 1
        %s1434 = smul.addr %s1433, 4
        %s1435 = smul.addr %s1434, 4
        %s1436 = scalar_lea.vmem %s39, %s1435
        %p1437 = scmp.lt.s32.totalorder %s79, 1
        %s1438 = scalar_select %p1437, %s79, 1
        %s1439 = smul.addr %s1438, 16
        %s1440 = smul.addr %s1439, 4
        %s1441 = scalar_lea.vmem %s41, %s1440
        %p1442 = scmp.lt.s32.totalorder %s79, 1
        %s1443 = scalar_select %p1442, %s79, 1
        %s1444 = smul.addr %s1443, 4
        %s1445 = smul.addr %s1444, 4
        %s1446 = scalar_lea.vmem %s43, %s1445
        %p1447 = scmp.lt.s32.totalorder %s79, 1
        %s1448 = scalar_select %p1447, %s79, 1
        %s1449 = smul.addr %s1448, 4
        %s1450 = scalar_lea.vmem %s45, %s1449
        %p1451 = scmp.lt.s32.totalorder %s79, 1
        %s1452 = scalar_select %p1451, %s79, 1
        %s1453 = smul.addr %s1452, 4
        %s1454 = smul.addr %s1453, 8
        %s1455 = scalar_lea.vmem %s47, %s1454
        %p1456 = scmp.lt.s32.totalorder %s79, 1
        %s1457 = scalar_select %p1456, %s79, 1
        %s1458 = smul.addr %s1457, 4
        %s1459 = scalar_lea.vmem %s49, %s1458
        %p1460 = scmp.lt.s32.totalorder %s79, 1
        %s1461 = scalar_select %p1460, %s79, 1
        %s1462 = scalar_lea.vmem %s51, %s1461
        %p1463 = scmp.lt.s32.totalorder %s79, 1
        %s1464 = scalar_select %p1463, %s79, 1
        %s1465 = smul.addr %s1464, 64
        %s1466 = smul.addr %s1465, 4
        %s1467 = scalar_lea.vmem %s53, %s1466
        %p1468 = scmp.lt.s32.totalorder %s79, 1
        %s1469 = scalar_select %p1468, %s79, 1
        %s1470 = smul.addr %s1469, 16
        %s1471 = scalar_lea.vmem %s55, %s1470
        %p1472 = scmp.lt.s32.totalorder %s79, 1
        %s1473 = scalar_select %p1472, %s79, 1
        %s1474 = smul.addr %s1473, 256
        %s1475 = smul.addr %s1474, 4
        %s1476 = scalar_lea.vmem %s57, %s1475
        %p1477 = scmp.lt.s32.totalorder %s79, 1
        %s1478 = scalar_select %p1477, %s79, 1
        %s1479 = scalar_lea.vmem %s59, %s1478
        %p1480 = scmp.lt.s32.totalorder %s79, 1
        %s1481 = scalar_select %p1480, %s79, 1
        %s1482 = smul.addr %s1481, 10
        %s1483 = scalar_lea.vmem %s61, %s1482
        %p1485 = scmp.eq.s32.totalorder %s79, 0
        // Predicated region
        $region145: #{tpu_custom_call.1} parent=143 // pred_check
          %p1486 = pneg %p1485
        $region146: #{tpu_custom_call.1} parent=143 // pred_check_branch
          %1488 = sbr.rel (%p1486) target = $region148
        $region147: #{tpu_custom_call.1} parent=143 // pred_region
          %v1489 = vld [vmem:[%s1] sm:$0xff]
          %v1490 = vld [vmem:[%s1 + $0x8] sm:$0xff]
          %vm1491 = vcmask 261120
          %1492 = vst.msk [vmem:[#allocation2] sm:$0xff] %vm1491, %v1489
          %1493 = vst.msk [vmem:[#allocation2 + $0x8] sm:$0xff] %vm1491, %v1490
          %v1494 = vld [vmem:[%s3] sm:$0xff]
          %v1495 = vld [vmem:[%s3 + $0x8] sm:$0xff]
          %1496 = vst.msk [vmem:[#allocation4] sm:$0xff] %vm1491, %v1494
          %1497 = vst.msk [vmem:[#allocation4 + $0x8] sm:$0xff] %vm1491, %v1495
        $region148: #{tpu_custom_call.1} parent=143 // pred_fallthru
          _
        %v1498 = vlaneseq
        %v1499 = vshrl.u32 %v1498, 7
        %v1500 = vadd.s32 %v1499, 8
        %vm1501 = vcmp.lt.s32.totalorder %v1499, 0
        %v1502 = vsub.s32 0, %v1499
        %v1503 = vsel %vm1501, %v1502, %v1499
        %v1504 = vshrl.u32 %v1503, 1
        %v1505 = vand.u32 %v1503, 1
        %v1506 = vsub.s32 0, %v1505
        %v1507 = vsel %vm1501, %v1506, %v1505
        %vm1508 = vcmp.lt.s32.totalorder %v1500, 0
        %v1509 = vsub.s32 0, %v1500
        %v1510 = vsel %vm1508, %v1509, %v1500
        %v1511 = vshrl.u32 %v1510, 1
        %v1512 = vand.u32 %v1510, 1
        %v1513 = vsub.s32 0, %v1512
        %v1514 = vsel %vm1508, %v1513, %v1512
        %vm1515 = vcmp.ne.s32.totalorder %v1507, 0
        %vm1516 = vcmp.ne.s32.totalorder %v1514, 0
        %vm1517 = vcmp.lt.s32.totalorder %v1507, 0
        %vm1518 = vcmp.lt.s32.totalorder %v1514, 0
        %vm1519 = vmand %vm1517, %vm1515
        %vm1520 = vmand %vm1518, %vm1516
        %v1521 = vadd.s32 %v1507, 2
        %v1522 = vadd.s32 %v1514, 2
        %v1523 = vsel %vm1519, %v1521, %v1507
        %v1524 = vsel %vm1520, %v1522, %v1514
        %v1525 = vlaneseq
        %v1526 = vand.u32 %v1525, 127
        %vm1527 = vcmp.lt.s32.totalorder %v1526, 0
        %v1528 = vsub.s32 0, %v1526
        %v1529 = vsel %vm1527, %v1528, %v1526
        %v1530 = vshrl.u32 %v1529, 1
        %v1531 = vand.u32 %v1529, 1
        %v1532 = vsub.s32 0, %v1531
        %v1533 = vsel %vm1527, %v1532, %v1531
        %vm1534 = vcmp.ne.s32.totalorder %v1533, 0
        %vm1535 = vcmp.lt.s32.totalorder %v1533, 0
        %vm1536 = vmand %vm1535, %vm1534
        %v1537 = vadd.s32 %v1533, 2
        %v1538 = vsel %vm1536, %v1537, %v1533
        %vm1539 = vcmp.eq.s32.totalorder %v1523, %v1538
        %vm1540 = vcmp.eq.s32.totalorder %v1524, %v1538
        %v1541 = vld [vmem:[#allocation2] sm:$0xff]
        %v1542 = vld [vmem:[#allocation2 + $0x8] sm:$0xff]
        %v1543 = vld [vmem:[#allocation4] sm:$0xff]
        %v1544 = vld [vmem:[#allocation4 + $0x8] sm:$0xff]
        %v1545 = vld [vmem:[%s1359] sm:$0xf]
        %v1546 = vld [vmem:[%s1359 + $0x4] sm:$0xf]
        %v1547 = vld [vmem:[%s1359 + $0x8] sm:$0xf]
        %v1548 = vld [vmem:[%s1359 + $0xc] sm:$0xf]
        %v1549 = vld [vmem:[%s1378] sm:$0x1]
        %v1551 = vlaneseq
        %v1552 = vshrl.u32 %v1551, 7
        %v1553 = vsub.s32 0, %v1552
        %v1554 = vrot.slane %v1549, %v1553
        %v1560 = vunpack.c.l.b16 %v1545
        %v1561 = vunpack.c.l.b16 %v1546
        %v1562 = vunpack.c.l.b16 %v1547
        %v1563 = vunpack.c.l.b16 %v1548
        %v1564 = vpack.c.b16 %v1561, %v1560
        %v1565 = vpack.c.b16 %v1563, %v1562
        %vm1568 = vcmask 261120
        %v1570 = vsel %vm1568, %v1541, 0
        %v1573 = vsel %vm1568, %v1542, 0
        %1575 = vmatprep.subr.bf16.mxu0 0
        %1576 = vmatpush1.bf16.msra.mxu0 %v1564
        %1577 = vmatprep.subr.bf16.mxu0 0
        %1578 = vmatpush1.bf16.msra.mxu0 %v1565
        %1579 = vmatprep.subr.bf16.mxu0 0
        %1580 = vmatpush1.bf16.msra.mxu0 0
        %1581 = vmatprep.subr.bf16.mxu0 0
        %1582 = vmatpush1.bf16.msra.mxu0 0
        %1583 = vmatprep.subr.bf16.mxu0 0
        %1584 = vmatpush1.bf16.msra.mxu0 0
        %1585 = vmatprep.subr.bf16.mxu0 0
        %1586 = vmatpush1.bf16.msra.mxu0 0
        %1587 = vmatprep.subr.bf16.mxu0 0
        %1588 = vmatpush1.bf16.msra.mxu0 0
        %1589 = vmatprep.subr.bf16.mxu0 0
        %1590 = vmatpush1.bf16.msra.mxu0 0
        %1591 = vmatprep.subr.bf16.mxu0 0
        %1592 = vmatpush1.bf16.msra.mxu0 0
        %1593 = vmatprep.subr.bf16.mxu0 0
        %1594 = vmatpush1.bf16.msra.mxu0 0
        %1595 = vmatprep.subr.bf16.mxu0 0
        %1596 = vmatpush1.bf16.msra.mxu0 0
        %1597 = vmatprep.subr.bf16.mxu0 0
        %1598 = vmatpush1.bf16.msra.mxu0 0
        %1599 = vmatprep.subr.bf16.mxu0 0
        %1600 = vmatpush1.bf16.msra.mxu0 0
        %1601 = vmatprep.subr.bf16.mxu0 0
        %1602 = vmatpush1.bf16.msra.mxu0 0
        %1603 = vmatprep.subr.bf16.mxu0 0
        %1604 = vmatpush1.bf16.msra.mxu0 0
        %1605 = vmatprep.subr.bf16.mxu0 0
        %1606 = vmatpush1.bf16.msra.mxu0 0
        %1607 = vmatprep.mubr.f32.mxu0 0.0
        %1608 = vmatmul.mubr.f32.gmra.mrb[0].mxu0 %v1570
        %v1609 = vpop.f32.mrb[0].mxu0
        %v1610 = vadd.f32 %v1554, %v1609
        %v1611 = vpop.f32.mrb[0].mxu0
        %1612 = vmatprep.mubr.f32.mxu0 0.0
        %1613 = vmatmul.mubr.f32.gmra.mrb[0].mxu0 %v1573
        %v1614 = vpop.f32.mrb[0].mxu0
        %v1615 = vadd.f32 %v1554, %v1614
        %v1616 = vpop.f32.mrb[0].mxu0
        %1617 = vdwg.mxu0
        %v1618 = vld [vmem:[%s1364] sm:$0xf]
        %v1619 = vld [vmem:[%s1383] sm:$0xff]
        %1621 = vset.pattern.permute.xlu0 0
        %1622 = vperm.xlu0 %1621, %v1619
        %v1623 = vpop.permute.xlu0 %1622
        %v1626 = vsel %vm1568, %v1618, 0
        %1628 = vmatprep.subr.mxu0 0.0
        %1629 = vmatpush1.xpose.msra.mxu0 %v1570
        %1630 = vmatprep.subr.mxu0 0.0
        %1631 = vmatpush1.xpose.msra.mxu0 %v1573
        %1632 = vmatprep.subr.mxu0 0.0
        %1633 = vmatpush1.xpose.msra.mxu0 0.0
        %1634 = vmatprep.subr.mxu0 0.0
        %1635 = vmatpush1.xpose.msra.mxu0 0.0
        %1636 = vmatprep.subr.mxu0 0.0
        %1637 = vmatpush1.xpose.msra.mxu0 0.0
        %1638 = vmatprep.subr.mxu0 0.0
        %1639 = vmatpush1.xpose.msra.mxu0 0.0
        %1640 = vmatprep.subr.mxu0 0.0
        %1641 = vmatpush1.xpose.msra.mxu0 0.0
        %1642 = vmatprep.subr.mxu0 0.0
        %1643 = vmatpush1.xpose.msra.mxu0 0.0
        %1644 = vmatprep.subr.mxu0 0.0
        %1645 = vmatpush1.xpose.msra.mxu0 0.0
        %1646 = vmatprep.subr.mxu0 0.0
        %1647 = vmatpush1.xpose.msra.mxu0 0.0
        %1648 = vmatprep.subr.mxu0 0.0
        %1649 = vmatpush1.xpose.msra.mxu0 0.0
        %1650 = vmatprep.subr.mxu0 0.0
        %1651 = vmatpush1.xpose.msra.mxu0 0.0
        %1652 = vmatprep.subr.mxu0 0.0
        %1653 = vmatpush1.xpose.msra.mxu0 0.0
        %1654 = vmatprep.subr.mxu0 0.0
        %1655 = vmatpush1.xpose.msra.mxu0 0.0
        %1656 = vmatprep.subr.mxu0 0.0
        %1657 = vmatpush1.xpose.msra.mxu0 0.0
        %1658 = vmatprep.subr.mxu0 0.0
        %1659 = vmatpush1.xpose.msra.mxu0 0.0
        %1660 = vmatprep.subr.mxu0 0.0
        %1661 = vmatpush1.xpose.msra.mxu0 0.0
        %1662 = vmatprep.subr.mxu0 0.0
        %1663 = vmatpush1.xpose.msra.mxu0 0.0
        %1664 = vmatprep.subr.mxu0 0.0
        %1665 = vmatpush1.xpose.msra.mxu0 0.0
        %1666 = vmatprep.subr.mxu0 0.0
        %1667 = vmatpush1.xpose.msra.mxu0 0.0
        %1668 = vmatprep.subr.mxu0 0.0
        %1669 = vmatpush1.xpose.msra.mxu0 0.0
        %1670 = vmatprep.subr.mxu0 0.0
        %1671 = vmatpush1.xpose.msra.mxu0 0.0
        %1672 = vmatprep.subr.mxu0 0.0
        %1673 = vmatpush1.xpose.msra.mxu0 0.0
        %1674 = vmatprep.subr.mxu0 0.0
        %1675 = vmatpush1.xpose.msra.mxu0 0.0
        %1676 = vmatprep.subr.mxu0 0.0
        %1677 = vmatpush1.xpose.msra.mxu0 0.0
        %1678 = vmatprep.subr.mxu0 0.0
        %1679 = vmatpush1.xpose.msra.mxu0 0.0
        %1680 = vmatprep.subr.mxu0 0.0
        %1681 = vmatpush1.xpose.msra.mxu0 0.0
        %1682 = vmatprep.subr.mxu0 0.0
        %1683 = vmatpush1.xpose.msra.mxu0 0.0
        %1684 = vmatprep.subr.mxu0 0.0
        %1685 = vmatpush1.xpose.msra.mxu0 0.0
        %1686 = vmatprep.subr.mxu0 0.0
        %1687 = vmatpush1.xpose.msra.mxu0 0.0
        %1688 = vmatprep.subr.mxu0 0.0
        %1689 = vmatpush1.xpose.msra.mxu0 0.0
        %1690 = vmatprep.subr.mxu0 0.0
        %1691 = vmatpush1.xpose.msra.mxu0 0.0
        %1692 = vmatprep.mubr.bf16.mxu0 0
        %1693 = vmatmul.mubr.bf16.gmra.mrb[0].mxu0 %v1626
        %v1694 = vpop.f32.mrb[0].mxu0
        %v1695 = vadd.f32 %v1623, %v1694
        %v1696 = vpop.f32.mrb[0].mxu0
        %v1697 = vpop.f32.mrb[0].mxu0
        %v1698 = vpop.f32.mrb[0].mxu0
        %1699 = vdwg.mxu0
        %vm1700 = vcmask 64512
        %v1702 = vsel %vm1700, %v1610, 0
        %v1705 = vsel %vm1700, %v1615, 0
        %1707 = vmatprep.subr.mxu0 0.0
        %1708 = vmatpush1.msra.mxu0 %v1695
        %1709 = vmatprep.subr.mxu0 0.0
        %1710 = vmatpush1.msra.mxu0 0.0
        %1711 = vmatprep.subr.mxu0 0.0
        %1712 = vmatpush1.msra.mxu0 0.0
        %1713 = vmatprep.subr.mxu0 0.0
        %1714 = vmatpush1.msra.mxu0 0.0
        %1715 = vmatprep.subr.mxu0 0.0
        %1716 = vmatpush1.msra.mxu0 0.0
        %1717 = vmatprep.subr.mxu0 0.0
        %1718 = vmatpush1.msra.mxu0 0.0
        %1719 = vmatprep.subr.mxu0 0.0
        %1720 = vmatpush1.msra.mxu0 0.0
        %1721 = vmatprep.subr.mxu0 0.0
        %1722 = vmatpush1.msra.mxu0 0.0
        %1723 = vmatprep.subr.mxu0 0.0
        %1724 = vmatpush1.msra.mxu0 0.0
        %1725 = vmatprep.subr.mxu0 0.0
        %1726 = vmatpush1.msra.mxu0 0.0
        %1727 = vmatprep.subr.mxu0 0.0
        %1728 = vmatpush1.msra.mxu0 0.0
        %1729 = vmatprep.subr.mxu0 0.0
        %1730 = vmatpush1.msra.mxu0 0.0
        %1731 = vmatprep.subr.mxu0 0.0
        %1732 = vmatpush1.msra.mxu0 0.0
        %1733 = vmatprep.subr.mxu0 0.0
        %1734 = vmatpush1.msra.mxu0 0.0
        %1735 = vmatprep.subr.mxu0 0.0
        %1736 = vmatpush1.msra.mxu0 0.0
        %1737 = vmatprep.subr.mxu0 0.0
        %1738 = vmatpush1.msra.mxu0 0.0
        %1739 = vmatprep.subr.mxu0 0.0
        %1740 = vmatpush1.msra.mxu0 0.0
        %1741 = vmatprep.subr.mxu0 0.0
        %1742 = vmatpush1.msra.mxu0 0.0
        %1743 = vmatprep.subr.mxu0 0.0
        %1744 = vmatpush1.msra.mxu0 0.0
        %1745 = vmatprep.subr.mxu0 0.0
        %1746 = vmatpush1.msra.mxu0 0.0
        %1747 = vmatprep.subr.mxu0 0.0
        %1748 = vmatpush1.msra.mxu0 0.0
        %1749 = vmatprep.subr.mxu0 0.0
        %1750 = vmatpush1.msra.mxu0 0.0
        %1751 = vmatprep.subr.mxu0 0.0
        %1752 = vmatpush1.msra.mxu0 0.0
        %1753 = vmatprep.subr.mxu0 0.0
        %1754 = vmatpush1.msra.mxu0 0.0
        %1755 = vmatprep.subr.mxu0 0.0
        %1756 = vmatpush1.msra.mxu0 0.0
        %1757 = vmatprep.subr.mxu0 0.0
        %1758 = vmatpush1.msra.mxu0 0.0
        %1759 = vmatprep.subr.mxu0 0.0
        %1760 = vmatpush1.msra.mxu0 0.0
        %1761 = vmatprep.subr.mxu0 0.0
        %1762 = vmatpush1.msra.mxu0 0.0
        %1763 = vmatprep.subr.mxu0 0.0
        %1764 = vmatpush1.msra.mxu0 0.0
        %1765 = vmatprep.subr.mxu0 0.0
        %1766 = vmatpush1.msra.mxu0 0.0
        %1767 = vmatprep.subr.mxu0 0.0
        %1768 = vmatpush1.msra.mxu0 0.0
        %1769 = vmatprep.subr.mxu0 0.0
        %1770 = vmatpush1.msra.mxu0 0.0
        %1771 = vmatprep.mubr.f32.mxu0 0.0
        %1772 = vmatmul.mubr.f32.gmra.mrb[0].mxu0 %v1702
        %v1773 = vpop.f32.mrb[0].mxu0
        %v1774 = vadd.f32 0.0, %v1773
        %v1775 = vpop.f32.mrb[0].mxu0
        %1776 = vmatprep.mubr.f32.mxu0 0.0
        %1777 = vmatmul.mubr.f32.gmra.mrb[0].mxu0 %v1705
        %v1778 = vpop.f32.mrb[0].mxu0
        %v1779 = vadd.f32 0.0, %v1778
        %v1780 = vpop.f32.mrb[0].mxu0
        %1781 = vdwg.mxu0
        %v1782 = vsel %vm1539, %v1774, -1e+30
        %v1783 = vsel %vm1540, %v1779, -1e+30
        %vm1784 = vcmask 130048
        %v1785 = vsel %vm1784, %v1782, -inf
        %1786 = vmax.xlane.f32.xlu0 %v1785
        %v1787 = vpop.xlane.xlu0 %1786
        %v1788 = vsel %vm1784, %v1783, -inf
        %1789 = vmax.xlane.f32.xlu0 %v1788
        %v1790 = vpop.xlane.xlu0 %1789
        %v1791 = vsub.f32 %v1782, %v1787
        %v1792 = vsub.f32 %v1783, %v1790
        %v1793 = vmul.f32 %v1791, 1.442695
        %v1794 = vpow.pop %v1793
        %v1795 = vmul.f32 %v1792, 1.442695
        %v1796 = vpow.pop %v1795
        %v1797 = vsel %vm1784, %v1794, 0.0
        %1798 = vadd.xlane.f32.xlu0 %v1797
        %v1799 = vpop.xlane.xlu0 %1798
        %v1800 = vsel %vm1784, %v1796, 0.0
        %1801 = vadd.xlane.f32.xlu0 %v1800
        %v1802 = vpop.xlane.xlu0 %1801
        %v1803 = vrcp.pop %v1799
        %v1804 = vrcp.pop %v1802
        %v1805 = vmul.f32 %v1794, %v1803
        %v1806 = vmul.f32 %v1796, %v1804
        %v1807 = vld [vmem:[%s1369] sm:$0xf]
        %v1808 = vld [vmem:[%s1369 + $0x4] sm:$0xf]
        %v1809 = vld [vmem:[%s1369 + $0x8] sm:$0xf]
        %v1810 = vld [vmem:[%s1369 + $0xc] sm:$0xf]
        %v1811 = vld [vmem:[%s1387] sm:$0x1]
        %v1813 = vlaneseq
        %v1814 = vshrl.u32 %v1813, 7
        %v1815 = vsub.s32 0, %v1814
        %v1816 = vrot.slane %v1811, %v1815
        %v1822 = vunpack.c.l.b16 %v1807
        %v1823 = vunpack.c.l.b16 %v1808
        %v1824 = vunpack.c.l.b16 %v1809
        %v1825 = vunpack.c.l.b16 %v1810
        %v1826 = vpack.c.b16 %v1823, %v1822
        %v1827 = vpack.c.b16 %v1825, %v1824
        %1830 = vmatprep.subr.bf16.mxu0 0
        %1831 = vmatpush1.bf16.msra.mxu0 %v1826
        %1832 = vmatprep.subr.bf16.mxu0 0
        %1833 = vmatpush1.bf16.msra.mxu0 %v1827
        %1834 = vmatprep.subr.bf16.mxu0 0
        %1835 = vmatpush1.bf16.msra.mxu0 0
        %1836 = vmatprep.subr.bf16.mxu0 0
        %1837 = vmatpush1.bf16.msra.mxu0 0
        %1838 = vmatprep.subr.bf16.mxu0 0
        %1839 = vmatpush1.bf16.msra.mxu0 0
        %1840 = vmatprep.subr.bf16.mxu0 0
        %1841 = vmatpush1.bf16.msra.mxu0 0
        %1842 = vmatprep.subr.bf16.mxu0 0
        %1843 = vmatpush1.bf16.msra.mxu0 0
        %1844 = vmatprep.subr.bf16.mxu0 0
        %1845 = vmatpush1.bf16.msra.mxu0 0
        %1846 = vmatprep.subr.bf16.mxu0 0
        %1847 = vmatpush1.bf16.msra.mxu0 0
        %1848 = vmatprep.subr.bf16.mxu0 0
        %1849 = vmatpush1.bf16.msra.mxu0 0
        %1850 = vmatprep.subr.bf16.mxu0 0
        %1851 = vmatpush1.bf16.msra.mxu0 0
        %1852 = vmatprep.subr.bf16.mxu0 0
        %1853 = vmatpush1.bf16.msra.mxu0 0
        %1854 = vmatprep.subr.bf16.mxu0 0
        %1855 = vmatpush1.bf16.msra.mxu0 0
        %1856 = vmatprep.subr.bf16.mxu0 0
        %1857 = vmatpush1.bf16.msra.mxu0 0
        %1858 = vmatprep.subr.bf16.mxu0 0
        %1859 = vmatpush1.bf16.msra.mxu0 0
        %1860 = vmatprep.subr.bf16.mxu0 0
        %1861 = vmatpush1.bf16.msra.mxu0 0
        %1862 = vmatprep.mubr.f32.mxu0 0.0
        %1863 = vmatmul.mubr.f32.gmra.mrb[0].mxu0 %v1570
        %v1864 = vpop.f32.mrb[0].mxu0
        %v1865 = vadd.f32 %v1816, %v1864
        %v1866 = vpop.f32.mrb[0].mxu0
        %1867 = vmatprep.mubr.f32.mxu0 0.0
        %1868 = vmatmul.mubr.f32.gmra.mrb[0].mxu0 %v1573
        %v1869 = vpop.f32.mrb[0].mxu0
        %v1870 = vadd.f32 %v1816, %v1869
        %v1871 = vpop.f32.mrb[0].mxu0
        %1872 = vdwg.mxu0
        %v1874 = vsel %vm1784, %v1805, 0
        %v1877 = vsel %vm1784, %v1806, 0
        %1879 = vmatprep.subr.mxu0 0.0
        %1880 = vmatpush1.msra.mxu0 %v1865
        %1881 = vmatprep.subr.mxu0 0.0
        %1882 = vmatpush1.msra.mxu0 %v1870
        %1883 = vmatprep.subr.mxu0 0.0
        %1884 = vmatpush1.msra.mxu0 0.0
        %1885 = vmatprep.subr.mxu0 0.0
        %1886 = vmatpush1.msra.mxu0 0.0
        %1887 = vmatprep.subr.mxu0 0.0
        %1888 = vmatpush1.msra.mxu0 0.0
        %1889 = vmatprep.subr.mxu0 0.0
        %1890 = vmatpush1.msra.mxu0 0.0
        %1891 = vmatprep.subr.mxu0 0.0
        %1892 = vmatpush1.msra.mxu0 0.0
        %1893 = vmatprep.subr.mxu0 0.0
        %1894 = vmatpush1.msra.mxu0 0.0
        %1895 = vmatprep.subr.mxu0 0.0
        %1896 = vmatpush1.msra.mxu0 0.0
        %1897 = vmatprep.subr.mxu0 0.0
        %1898 = vmatpush1.msra.mxu0 0.0
        %1899 = vmatprep.subr.mxu0 0.0
        %1900 = vmatpush1.msra.mxu0 0.0
        %1901 = vmatprep.subr.mxu0 0.0
        %1902 = vmatpush1.msra.mxu0 0.0
        %1903 = vmatprep.subr.mxu0 0.0
        %1904 = vmatpush1.msra.mxu0 0.0
        %1905 = vmatprep.subr.mxu0 0.0
        %1906 = vmatpush1.msra.mxu0 0.0
        %1907 = vmatprep.subr.mxu0 0.0
        %1908 = vmatpush1.msra.mxu0 0.0
        %1909 = vmatprep.subr.mxu0 0.0
        %1910 = vmatpush1.msra.mxu0 0.0
        %1911 = vmatprep.subr.mxu0 0.0
        %1912 = vmatpush1.msra.mxu0 0.0
        %1913 = vmatprep.subr.mxu0 0.0
        %1914 = vmatpush1.msra.mxu0 0.0
        %1915 = vmatprep.subr.mxu0 0.0
        %1916 = vmatpush1.msra.mxu0 0.0
        %1917 = vmatprep.subr.mxu0 0.0
        %1918 = vmatpush1.msra.mxu0 0.0
        %1919 = vmatprep.subr.mxu0 0.0
        %1920 = vmatpush1.msra.mxu0 0.0
        %1921 = vmatprep.subr.mxu0 0.0
        %1922 = vmatpush1.msra.mxu0 0.0
        %1923 = vmatprep.subr.mxu0 0.0
        %1924 = vmatpush1.msra.mxu0 0.0
        %1925 = vmatprep.subr.mxu0 0.0
        %1926 = vmatpush1.msra.mxu0 0.0
        %1927 = vmatprep.subr.mxu0 0.0
        %1928 = vmatpush1.msra.mxu0 0.0
        %1929 = vmatprep.subr.mxu0 0.0
        %1930 = vmatpush1.msra.mxu0 0.0
        %1931 = vmatprep.subr.mxu0 0.0
        %1932 = vmatpush1.msra.mxu0 0.0
        %1933 = vmatprep.subr.mxu0 0.0
        %1934 = vmatpush1.msra.mxu0 0.0
        %1935 = vmatprep.subr.mxu0 0.0
        %1936 = vmatpush1.msra.mxu0 0.0
        %1937 = vmatprep.subr.mxu0 0.0
        %1938 = vmatpush1.msra.mxu0 0.0
        %1939 = vmatprep.subr.mxu0 0.0
        %1940 = vmatpush1.msra.mxu0 0.0
        %1941 = vmatprep.subr.mxu0 0.0
        %1942 = vmatpush1.msra.mxu0 0.0
        %1943 = vmatprep.mubr.f32.mxu0 0.0
        %1944 = vmatmul.mubr.f32.gmra.mrb[0].mxu0 %v1874
        %v1945 = vpop.f32.mrb[0].mxu0
        %v1946 = vadd.f32 0.0, %v1945
        %v1947 = vpop.f32.mrb[0].mxu0
        %1948 = vmatprep.mubr.f32.mxu0 0.0
        %1949 = vmatmul.mubr.f32.gmra.mrb[0].mxu0 %v1877
        %v1950 = vpop.f32.mrb[0].mxu0
        %v1951 = vadd.f32 0.0, %v1950
        %v1952 = vpop.f32.mrb[0].mxu0
        %1953 = vdwg.mxu0
        %v1954 = vld [vmem:[%s1374] sm:$0xf]
        %s1955 = scalar_lea.vmem %s1359, 16
        %v1956 = vld [vmem:[%s1955] sm:$0xf]
        %v1957 = vld [vmem:[%s1955 + $0x4] sm:$0xf]
        %v1958 = vld [vmem:[%s1955 + $0x8] sm:$0xf]
        %v1959 = vld [vmem:[%s1955 + $0xc] sm:$0xf]
        %s1960 = scalar_lea.vmem %s1378, 1
        %v1961 = vld [vmem:[%s1960] sm:$0x1]
        %v1963 = vlaneseq
        %v1964 = vshrl.u32 %v1963, 7
        %v1965 = vsub.s32 0, %v1964
        %v1966 = vrot.slane %v1961, %v1965
        %v1972 = vunpack.c.l.b16 %v1956
        %v1973 = vunpack.c.l.b16 %v1957
        %v1974 = vunpack.c.l.b16 %v1958
        %v1975 = vunpack.c.l.b16 %v1959
        %v1976 = vpack.c.b16 %v1973, %v1972
        %v1977 = vpack.c.b16 %v1975, %v1974
        %1980 = vmatprep.subr.bf16.mxu0 0
        %1981 = vmatpush1.bf16.msra.mxu0 %v1976
        %1982 = vmatprep.subr.bf16.mxu0 0
        %1983 = vmatpush1.bf16.msra.mxu0 %v1977
        %1984 = vmatprep.subr.bf16.mxu0 0
        %1985 = vmatpush1.bf16.msra.mxu0 0
        %1986 = vmatprep.subr.bf16.mxu0 0
        %1987 = vmatpush1.bf16.msra.mxu0 0
        %1988 = vmatprep.subr.bf16.mxu0 0
        %1989 = vmatpush1.bf16.msra.mxu0 0
        %1990 = vmatprep.subr.bf16.mxu0 0
        %1991 = vmatpush1.bf16.msra.mxu0 0
        %1992 = vmatprep.subr.bf16.mxu0 0
        %1993 = vmatpush1.bf16.msra.mxu0 0
        %1994 = vmatprep.subr.bf16.mxu0 0
        %1995 = vmatpush1.bf16.msra.mxu0 0
        %1996 = vmatprep.subr.bf16.mxu0 0
        %1997 = vmatpush1.bf16.msra.mxu0 0
        %1998 = vmatprep.subr.bf16.mxu0 0
        %1999 = vmatpush1.bf16.msra.mxu0 0
        %2000 = vmatprep.subr.bf16.mxu0 0
        %2001 = vmatpush1.bf16.msra.mxu0 0
        %2002 = vmatprep.subr.bf16.mxu0 0
        %2003 = vmatpush1.bf16.msra.mxu0 0
        %2004 = vmatprep.subr.bf16.mxu0 0
        %2005 = vmatpush1.bf16.msra.mxu0 0
        %2006 = vmatprep.subr.bf16.mxu0 0
        %2007 = vmatpush1.bf16.msra.mxu0 0
        %2008 = vmatprep.subr.bf16.mxu0 0
        %2009 = vmatpush1.bf16.msra.mxu0 0
        %2010 = vmatprep.subr.bf16.mxu0 0
        %2011 = vmatpush1.bf16.msra.mxu0 0
        %2012 = vmatprep.mubr.f32.mxu0 0.0
        %2013 = vmatmul.mubr.f32.gmra.mrb[0].mxu0 %v1570
        %v2014 = vpop.f32.mrb[0].mxu0
        %v2015 = vadd.f32 %v1966, %v2014
        %v2016 = vpop.f32.mrb[0].mxu0
        %2017 = vmatprep.mubr.f32.mxu0 0.0
        %2018 = vmatmul.mubr.f32.gmra.mrb[0].mxu0 %v1573
        %v2019 = vpop.f32.mrb[0].mxu0
        %v2020 = vadd.f32 %v1966, %v2019
        %v2021 = vpop.f32.mrb[0].mxu0
        %2022 = vdwg.mxu0
        %s2023 = scalar_lea.vmem %s1364, 4
        %v2024 = vld [vmem:[%s2023] sm:$0xf]
        %s2025 = scalar_lea.vmem %s1383, 8
        %v2026 = vld [vmem:[%s2025] sm:$0xff]
        %2028 = vset.pattern.permute.xlu0 0
        %2029 = vperm.xlu0 %2028, %v2026
        %v2030 = vpop.permute.xlu0 %2029
        %v2033 = vsel %vm1568, %v2024, 0
        %2035 = vmatprep.subr.mxu0 0.0
        %2036 = vmatpush1.xpose.msra.mxu0 %v1570
        %2037 = vmatprep.subr.mxu0 0.0
        %2038 = vmatpush1.xpose.msra.mxu0 %v1573
        %2039 = vmatprep.subr.mxu0 0.0
        %2040 = vmatpush1.xpose.msra.mxu0 0.0
        %2041 = vmatprep.subr.mxu0 0.0
        %2042 = vmatpush1.xpose.msra.mxu0 0.0
        %2043 = vmatprep.subr.mxu0 0.0
        %2044 = vmatpush1.xpose.msra.mxu0 0.0
        %2045 = vmatprep.subr.mxu0 0.0
        %2046 = vmatpush1.xpose.msra.mxu0 0.0
        %2047 = vmatprep.subr.mxu0 0.0
        %2048 = vmatpush1.xpose.msra.mxu0 0.0
        %2049 = vmatprep.subr.mxu0 0.0
        %2050 = vmatpush1.xpose.msra.mxu0 0.0
        %2051 = vmatprep.subr.mxu0 0.0
        %2052 = vmatpush1.xpose.msra.mxu0 0.0
        %2053 = vmatprep.subr.mxu0 0.0
        %2054 = vmatpush1.xpose.msra.mxu0 0.0
        %2055 = vmatprep.subr.mxu0 0.0
        %2056 = vmatpush1.xpose.msra.mxu0 0.0
        %2057 = vmatprep.subr.mxu0 0.0
        %2058 = vmatpush1.xpose.msra.mxu0 0.0
        %2059 = vmatprep.subr.mxu0 0.0
        %2060 = vmatpush1.xpose.msra.mxu0 0.0
        %2061 = vmatprep.subr.mxu0 0.0
        %2062 = vmatpush1.xpose.msra.mxu0 0.0
        %2063 = vmatprep.subr.mxu0 0.0
        %2064 = vmatpush1.xpose.msra.mxu0 0.0
        %2065 = vmatprep.subr.mxu0 0.0
        %2066 = vmatpush1.xpose.msra.mxu0 0.0
        %2067 = vmatprep.subr.mxu0 0.0
        %2068 = vmatpush1.xpose.msra.mxu0 0.0
        %2069 = vmatprep.subr.mxu0 0.0
        %2070 = vmatpush1.xpose.msra.mxu0 0.0
        %2071 = vmatprep.subr.mxu0 0.0
        %2072 = vmatpush1.xpose.msra.mxu0 0.0
        %2073 = vmatprep.subr.mxu0 0.0
        %2074 = vmatpush1.xpose.msra.mxu0 0.0
        %2075 = vmatprep.subr.mxu0 0.0
        %2076 = vmatpush1.xpose.msra.mxu0 0.0
        %2077 = vmatprep.subr.mxu0 0.0
        %2078 = vmatpush1.xpose.msra.mxu0 0.0
        %2079 = vmatprep.subr.mxu0 0.0
        %2080 = vmatpush1.xpose.msra.mxu0 0.0
        %2081 = vmatprep.subr.mxu0 0.0
        %2082 = vmatpush1.xpose.msra.mxu0 0.0
        %2083 = vmatprep.subr.mxu0 0.0
        %2084 = vmatpush1.xpose.msra.mxu0 0.0
        %2085 = vmatprep.subr.mxu0 0.0
        %2086 = vmatpush1.xpose.msra.mxu0 0.0
        %2087 = vmatprep.subr.mxu0 0.0
        %2088 = vmatpush1.xpose.msra.mxu0 0.0
        %2089 = vmatprep.subr.mxu0 0.0
        %2090 = vmatpush1.xpose.msra.mxu0 0.0
        %2091 = vmatprep.subr.mxu0 0.0
        %2092 = vmatpush1.xpose.msra.mxu0 0.0
        %2093 = vmatprep.subr.mxu0 0.0
        %2094 = vmatpush1.xpose.msra.mxu0 0.0
        %2095 = vmatprep.subr.mxu0 0.0
        %2096 = vmatpush1.xpose.msra.mxu0 0.0
        %2097 = vmatprep.subr.mxu0 0.0
        %2098 = vmatpush1.xpose.msra.mxu0 0.0
        %2099 = vmatprep.mubr.bf16.mxu0 0
        %2100 = vmatmul.mubr.bf16.gmra.mrb[0].mxu0 %v2033
        %v2101 = vpop.f32.mrb[0].mxu0
        %v2102 = vadd.f32 %v2030, %v2101
        %v2103 = vpop.f32.mrb[0].mxu0
        %v2104 = vpop.f32.mrb[0].mxu0
        %v2105 = vpop.f32.mrb[0].mxu0
        %2106 = vdwg.mxu0
        %v2108 = vsel %vm1700, %v2015, 0
        %v2111 = vsel %vm1700, %v2020, 0
        %2113 = vmatprep.subr.mxu0 0.0
        %2114 = vmatpush1.msra.mxu0 %v2102
        %2115 = vmatprep.subr.mxu0 0.0
        %2116 = vmatpush1.msra.mxu0 0.0
        %2117 = vmatprep.subr.mxu0 0.0
        %2118 = vmatpush1.msra.mxu0 0.0
        %2119 = vmatprep.subr.mxu0 0.0
        %2120 = vmatpush1.msra.mxu0 0.0
        %2121 = vmatprep.subr.mxu0 0.0
        %2122 = vmatpush1.msra.mxu0 0.0
        %2123 = vmatprep.subr.mxu0 0.0
        %2124 = vmatpush1.msra.mxu0 0.0
        %2125 = vmatprep.subr.mxu0 0.0
        %2126 = vmatpush1.msra.mxu0 0.0
        %2127 = vmatprep.subr.mxu0 0.0
        %2128 = vmatpush1.msra.mxu0 0.0
        %2129 = vmatprep.subr.mxu0 0.0
        %2130 = vmatpush1.msra.mxu0 0.0
        %2131 = vmatprep.subr.mxu0 0.0
        %2132 = vmatpush1.msra.mxu0 0.0
        %2133 = vmatprep.subr.mxu0 0.0
        %2134 = vmatpush1.msra.mxu0 0.0
        %2135 = vmatprep.subr.mxu0 0.0
        %2136 = vmatpush1.msra.mxu0 0.0
        %2137 = vmatprep.subr.mxu0 0.0
        %2138 = vmatpush1.msra.mxu0 0.0
        %2139 = vmatprep.subr.mxu0 0.0
        %2140 = vmatpush1.msra.mxu0 0.0
        %2141 = vmatprep.subr.mxu0 0.0
        %2142 = vmatpush1.msra.mxu0 0.0
        %2143 = vmatprep.subr.mxu0 0.0
        %2144 = vmatpush1.msra.mxu0 0.0
        %2145 = vmatprep.subr.mxu0 0.0
        %2146 = vmatpush1.msra.mxu0 0.0
        %2147 = vmatprep.subr.mxu0 0.0
        %2148 = vmatpush1.msra.mxu0 0.0
        %2149 = vmatprep.subr.mxu0 0.0
        %2150 = vmatpush1.msra.mxu0 0.0
        %2151 = vmatprep.subr.mxu0 0.0
        %2152 = vmatpush1.msra.mxu0 0.0
        %2153 = vmatprep.subr.mxu0 0.0
        %2154 = vmatpush1.msra.mxu0 0.0
        %2155 = vmatprep.subr.mxu0 0.0
        %2156 = vmatpush1.msra.mxu0 0.0
        %2157 = vmatprep.subr.mxu0 0.0
        %2158 = vmatpush1.msra.mxu0 0.0
        %2159 = vmatprep.subr.mxu0 0.0
        %2160 = vmatpush1.msra.mxu0 0.0
        %2161 = vmatprep.subr.mxu0 0.0
        %2162 = vmatpush1.msra.mxu0 0.0
        %2163 = vmatprep.subr.mxu0 0.0
        %2164 = vmatpush1.msra.mxu0 0.0
        %2165 = vmatprep.subr.mxu0 0.0
        %2166 = vmatpush1.msra.mxu0 0.0
        %2167 = vmatprep.subr.mxu0 0.0
        %2168 = vmatpush1.msra.mxu0 0.0
        %2169 = vmatprep.subr.mxu0 0.0
        %2170 = vmatpush1.msra.mxu0 0.0
        %2171 = vmatprep.subr.mxu0 0.0
        %2172 = vmatpush1.msra.mxu0 0.0
        %2173 = vmatprep.subr.mxu0 0.0
        %2174 = vmatpush1.msra.mxu0 0.0
        %2175 = vmatprep.subr.mxu0 0.0
        %2176 = vmatpush1.msra.mxu0 0.0
        %2177 = vmatprep.mubr.f32.mxu0 0.0
        %2178 = vmatmul.mubr.f32.gmra.mrb[0].mxu0 %v2108
        %v2179 = vpop.f32.mrb[0].mxu0
        %v2180 = vadd.f32 0.0, %v2179
        %v2181 = vpop.f32.mrb[0].mxu0
        %2182 = vmatprep.mubr.f32.mxu0 0.0
        %2183 = vmatmul.mubr.f32.gmra.mrb[0].mxu0 %v2111
        %v2184 = vpop.f32.mrb[0].mxu0
        %v2185 = vadd.f32 0.0, %v2184
        %v2186 = vpop.f32.mrb[0].mxu0
        %2187 = vdwg.mxu0
        %v2188 = vsel %vm1539, %v2180, -1e+30
        %v2189 = vsel %vm1540, %v2185, -1e+30
        %v2190 = vsel %vm1784, %v2188, -inf
        %2191 = vmax.xlane.f32.xlu0 %v2190
        %v2192 = vpop.xlane.xlu0 %2191
        %v2193 = vsel %vm1784, %v2189, -inf
        %2194 = vmax.xlane.f32.xlu0 %v2193
        %v2195 = vpop.xlane.xlu0 %2194
        %v2196 = vsub.f32 %v2188, %v2192
        %v2197 = vsub.f32 %v2189, %v2195
        %v2198 = vmul.f32 %v2196, 1.442695
        %v2199 = vpow.pop %v2198
        %v2200 = vmul.f32 %v2197, 1.442695
        %v2201 = vpow.pop %v2200
        %v2202 = vsel %vm1784, %v2199, 0.0
        %2203 = vadd.xlane.f32.xlu0 %v2202
        %v2204 = vpop.xlane.xlu0 %2203
        %v2205 = vsel %vm1784, %v2201, 0.0
        %2206 = vadd.xlane.f32.xlu0 %v2205
        %v2207 = vpop.xlane.xlu0 %2206
        %v2208 = vrcp.pop %v2204
        %v2209 = vrcp.pop %v2207
        %v2210 = vmul.f32 %v2199, %v2208
        %v2211 = vmul.f32 %v2201, %v2209
        %s2212 = scalar_lea.vmem %s1369, 16
        %v2213 = vld [vmem:[%s2212] sm:$0xf]
        %v2214 = vld [vmem:[%s2212 + $0x4] sm:$0xf]
        %v2215 = vld [vmem:[%s2212 + $0x8] sm:$0xf]
        %v2216 = vld [vmem:[%s2212 + $0xc] sm:$0xf]
        %s2217 = scalar_lea.vmem %s1387, 1
        %v2218 = vld [vmem:[%s2217] sm:$0x1]
        %v2220 = vlaneseq
        %v2221 = vshrl.u32 %v2220, 7
        %v2222 = vsub.s32 0, %v2221
        %v2223 = vrot.slane %v2218, %v2222
        %v2229 = vunpack.c.l.b16 %v2213
        %v2230 = vunpack.c.l.b16 %v2214
        %v2231 = vunpack.c.l.b16 %v2215
        %v2232 = vunpack.c.l.b16 %v2216
        %v2233 = vpack.c.b16 %v2230, %v2229
        %v2234 = vpack.c.b16 %v2232, %v2231
        %2237 = vmatprep.subr.bf16.mxu0 0
        %2238 = vmatpush1.bf16.msra.mxu0 %v2233
        %2239 = vmatprep.subr.bf16.mxu0 0
        %2240 = vmatpush1.bf16.msra.mxu0 %v2234
        %2241 = vmatprep.subr.bf16.mxu0 0
        %2242 = vmatpush1.bf16.msra.mxu0 0
        %2243 = vmatprep.subr.bf16.mxu0 0
        %2244 = vmatpush1.bf16.msra.mxu0 0
        %2245 = vmatprep.subr.bf16.mxu0 0
        %2246 = vmatpush1.bf16.msra.mxu0 0
        %2247 = vmatprep.subr.bf16.mxu0 0
        %2248 = vmatpush1.bf16.msra.mxu0 0
        %2249 = vmatprep.subr.bf16.mxu0 0
        %2250 = vmatpush1.bf16.msra.mxu0 0
        %2251 = vmatprep.subr.bf16.mxu0 0
        %2252 = vmatpush1.bf16.msra.mxu0 0
        %2253 = vmatprep.subr.bf16.mxu0 0
        %2254 = vmatpush1.bf16.msra.mxu0 0
        %2255 = vmatprep.subr.bf16.mxu0 0
        %2256 = vmatpush1.bf16.msra.mxu0 0
        %2257 = vmatprep.subr.bf16.mxu0 0
        %2258 = vmatpush1.bf16.msra.mxu0 0
        %2259 = vmatprep.subr.bf16.mxu0 0
        %2260 = vmatpush1.bf16.msra.mxu0 0
        %2261 = vmatprep.subr.bf16.mxu0 0
        %2262 = vmatpush1.bf16.msra.mxu0 0
        %2263 = vmatprep.subr.bf16.mxu0 0
        %2264 = vmatpush1.bf16.msra.mxu0 0
        %2265 = vmatprep.subr.bf16.mxu0 0
        %2266 = vmatpush1.bf16.msra.mxu0 0
        %2267 = vmatprep.subr.bf16.mxu0 0
        %2268 = vmatpush1.bf16.msra.mxu0 0
        %2269 = vmatprep.mubr.f32.mxu0 0.0
        %2270 = vmatmul.mubr.f32.gmra.mrb[0].mxu0 %v1570
        %v2271 = vpop.f32.mrb[0].mxu0
        %v2272 = vadd.f32 %v2223, %v2271
        %v2273 = vpop.f32.mrb[0].mxu0
        %2274 = vmatprep.mubr.f32.mxu0 0.0
        %2275 = vmatmul.mubr.f32.gmra.mrb[0].mxu0 %v1573
        %v2276 = vpop.f32.mrb[0].mxu0
        %v2277 = vadd.f32 %v2223, %v2276
        %v2278 = vpop.f32.mrb[0].mxu0
        %2279 = vdwg.mxu0
        %v2281 = vsel %vm1784, %v2210, 0
        %v2284 = vsel %vm1784, %v2211, 0
        %2286 = vmatprep.subr.mxu0 0.0
        %2287 = vmatpush1.msra.mxu0 %v2272
        %2288 = vmatprep.subr.mxu0 0.0
        %2289 = vmatpush1.msra.mxu0 %v2277
        %2290 = vmatprep.subr.mxu0 0.0
        %2291 = vmatpush1.msra.mxu0 0.0
        %2292 = vmatprep.subr.mxu0 0.0
        %2293 = vmatpush1.msra.mxu0 0.0
        %2294 = vmatprep.subr.mxu0 0.0
        %2295 = vmatpush1.msra.mxu0 0.0
        %2296 = vmatprep.subr.mxu0 0.0
        %2297 = vmatpush1.msra.mxu0 0.0
        %2298 = vmatprep.subr.mxu0 0.0
        %2299 = vmatpush1.msra.mxu0 0.0
        %2300 = vmatprep.subr.mxu0 0.0
        %2301 = vmatpush1.msra.mxu0 0.0
        %2302 = vmatprep.subr.mxu0 0.0
        %2303 = vmatpush1.msra.mxu0 0.0
        %2304 = vmatprep.subr.mxu0 0.0
        %2305 = vmatpush1.msra.mxu0 0.0
        %2306 = vmatprep.subr.mxu0 0.0
        %2307 = vmatpush1.msra.mxu0 0.0
        %2308 = vmatprep.subr.mxu0 0.0
        %2309 = vmatpush1.msra.mxu0 0.0
        %2310 = vmatprep.subr.mxu0 0.0
        %2311 = vmatpush1.msra.mxu0 0.0
        %2312 = vmatprep.subr.mxu0 0.0
        %2313 = vmatpush1.msra.mxu0 0.0
        %2314 = vmatprep.subr.mxu0 0.0
        %2315 = vmatpush1.msra.mxu0 0.0
        %2316 = vmatprep.subr.mxu0 0.0
        %2317 = vmatpush1.msra.mxu0 0.0
        %2318 = vmatprep.subr.mxu0 0.0
        %2319 = vmatpush1.msra.mxu0 0.0
        %2320 = vmatprep.subr.mxu0 0.0
        %2321 = vmatpush1.msra.mxu0 0.0
        %2322 = vmatprep.subr.mxu0 0.0
        %2323 = vmatpush1.msra.mxu0 0.0
        %2324 = vmatprep.subr.mxu0 0.0
        %2325 = vmatpush1.msra.mxu0 0.0
        %2326 = vmatprep.subr.mxu0 0.0
        %2327 = vmatpush1.msra.mxu0 0.0
        %2328 = vmatprep.subr.mxu0 0.0
        %2329 = vmatpush1.msra.mxu0 0.0
        %2330 = vmatprep.subr.mxu0 0.0
        %2331 = vmatpush1.msra.mxu0 0.0
        %2332 = vmatprep.subr.mxu0 0.0
        %2333 = vmatpush1.msra.mxu0 0.0
        %2334 = vmatprep.subr.mxu0 0.0
        %2335 = vmatpush1.msra.mxu0 0.0
        %2336 = vmatprep.subr.mxu0 0.0
        %2337 = vmatpush1.msra.mxu0 0.0
        %2338 = vmatprep.subr.mxu0 0.0
        %2339 = vmatpush1.msra.mxu0 0.0
        %2340 = vmatprep.subr.mxu0 0.0
        %2341 = vmatpush1.msra.mxu0 0.0
        %2342 = vmatprep.subr.mxu0 0.0
        %2343 = vmatpush1.msra.mxu0 0.0
        %2344 = vmatprep.subr.mxu0 0.0
        %2345 = vmatpush1.msra.mxu0 0.0
        %2346 = vmatprep.subr.mxu0 0.0
        %2347 = vmatpush1.msra.mxu0 0.0
        %2348 = vmatprep.subr.mxu0 0.0
        %2349 = vmatpush1.msra.mxu0 0.0
        %2350 = vmatprep.mubr.f32.mxu0 0.0
        %2351 = vmatmul.mubr.f32.gmra.mrb[0].mxu0 %v2281
        %v2352 = vpop.f32.mrb[0].mxu0
        %v2353 = vadd.f32 0.0, %v2352
        %v2354 = vpop.f32.mrb[0].mxu0
        %2355 = vmatprep.mubr.f32.mxu0 0.0
        %2356 = vmatmul.mubr.f32.gmra.mrb[0].mxu0 %v2284
        %v2357 = vpop.f32.mrb[0].mxu0
        %v2358 = vadd.f32 0.0, %v2357
        %v2359 = vpop.f32.mrb[0].mxu0
        %2360 = vdwg.mxu0
        %s2361 = scalar_lea.vmem %s1374, 4
        %v2362 = vld [vmem:[%s2361] sm:$0xf]
        %v2364 = vsel %vm1700, %v2353, 0
        %v2367 = vsel %vm1700, %v2358, 0
        %vm2369 = vcmask 1043456
        %v2371 = vsel %vm2369, %v2362, 0
        %2373 = vmatprep.subr.bf16.mxu0 0
        %2374 = vmatpush1.bf16.msra.mxu0 %v2371
        %2375 = vmatprep.subr.bf16.mxu0 0
        %2376 = vmatpush1.bf16.msra.mxu0 0
        %2377 = vmatprep.subr.bf16.mxu0 0
        %2378 = vmatpush1.bf16.msra.mxu0 0
        %2379 = vmatprep.subr.bf16.mxu0 0
        %2380 = vmatpush1.bf16.msra.mxu0 0
        %2381 = vmatprep.subr.bf16.mxu0 0
        %2382 = vmatpush1.bf16.msra.mxu0 0
        %2383 = vmatprep.subr.bf16.mxu0 0
        %2384 = vmatpush1.bf16.msra.mxu0 0
        %2385 = vmatprep.subr.bf16.mxu0 0
        %2386 = vmatpush1.bf16.msra.mxu0 0
        %2387 = vmatprep.subr.bf16.mxu0 0
        %2388 = vmatpush1.bf16.msra.mxu0 0
        %2389 = vmatprep.subr.bf16.mxu0 0
        %2390 = vmatpush1.bf16.msra.mxu0 0
        %2391 = vmatprep.subr.bf16.mxu0 0
        %2392 = vmatpush1.bf16.msra.mxu0 0
        %2393 = vmatprep.subr.bf16.mxu0 0
        %2394 = vmatpush1.bf16.msra.mxu0 0
        %2395 = vmatprep.subr.bf16.mxu0 0
        %2396 = vmatpush1.bf16.msra.mxu0 0
        %2397 = vmatprep.subr.bf16.mxu0 0
        %2398 = vmatpush1.bf16.msra.mxu0 0
        %2399 = vmatprep.subr.bf16.mxu0 0
        %2400 = vmatpush1.bf16.msra.mxu0 0
        %2401 = vmatprep.subr.bf16.mxu0 0
        %2402 = vmatpush1.bf16.msra.mxu0 0
        %2403 = vmatprep.subr.bf16.mxu0 0
        %2404 = vmatpush1.bf16.msra.mxu0 0
        %2405 = vmatprep.mubr.f32.mxu0 0.0
        %2406 = vmatmul.mubr.f32.gmra.mrb[0].mxu0 %v2364
        %v2407 = vpop.f32.mrb[0].mxu0
        %v2408 = vadd.f32 0.0, %v2407
        %v2409 = vpop.f32.mrb[0].mxu0
        %2410 = vmatprep.mubr.f32.mxu0 0.0
        %2411 = vmatmul.mubr.f32.gmra.mrb[0].mxu0 %v2367
        %v2412 = vpop.f32.mrb[0].mxu0
        %v2413 = vadd.f32 0.0, %v2412
        %v2414 = vpop.f32.mrb[0].mxu0
        %2415 = vdwg.mxu0
        %v2417 = vsel %vm1700, %v1946, 0
        %v2420 = vsel %vm1700, %v1951, 0
        %v2423 = vsel %vm2369, %v1954, 0
        %2425 = vmatprep.subr.bf16.mxu0 0
        %2426 = vmatpush1.bf16.msra.mxu0 %v2423
        %2427 = vmatprep.subr.bf16.mxu0 0
        %2428 = vmatpush1.bf16.msra.mxu0 0
        %2429 = vmatprep.subr.bf16.mxu0 0
        %2430 = vmatpush1.bf16.msra.mxu0 0
        %2431 = vmatprep.subr.bf16.mxu0 0
        %2432 = vmatpush1.bf16.msra.mxu0 0
        %2433 = vmatprep.subr.bf16.mxu0 0
        %2434 = vmatpush1.bf16.msra.mxu0 0
        %2435 = vmatprep.subr.bf16.mxu0 0
        %2436 = vmatpush1.bf16.msra.mxu0 0
        %2437 = vmatprep.subr.bf16.mxu0 0
        %2438 = vmatpush1.bf16.msra.mxu0 0
        %2439 = vmatprep.subr.bf16.mxu0 0
        %2440 = vmatpush1.bf16.msra.mxu0 0
        %2441 = vmatprep.subr.bf16.mxu0 0
        %2442 = vmatpush1.bf16.msra.mxu0 0
        %2443 = vmatprep.subr.bf16.mxu0 0
        %2444 = vmatpush1.bf16.msra.mxu0 0
        %2445 = vmatprep.subr.bf16.mxu0 0
        %2446 = vmatpush1.bf16.msra.mxu0 0
        %2447 = vmatprep.subr.bf16.mxu0 0
        %2448 = vmatpush1.bf16.msra.mxu0 0
        %2449 = vmatprep.subr.bf16.mxu0 0
        %2450 = vmatpush1.bf16.msra.mxu0 0
        %2451 = vmatprep.subr.bf16.mxu0 0
        %2452 = vmatpush1.bf16.msra.mxu0 0
        %2453 = vmatprep.subr.bf16.mxu0 0
        %2454 = vmatpush1.bf16.msra.mxu0 0
        %2455 = vmatprep.subr.bf16.mxu0 0
        %2456 = vmatpush1.bf16.msra.mxu0 0
        %2457 = vmatprep.mubr.f32.mxu0 0.0
        %2458 = vmatmul.mubr.f32.gmra.mrb[0].mxu0 %v2417
        %v2459 = vpop.f32.mrb[0].mxu0
        %v2460 = vadd.f32 %v2408, %v2459
        %v2461 = vpop.f32.mrb[0].mxu0
        %2462 = vmatprep.mubr.f32.mxu0 0.0
        %2463 = vmatmul.mubr.f32.gmra.mrb[0].mxu0 %v2420
        %v2464 = vpop.f32.mrb[0].mxu0
        %v2465 = vadd.f32 %v2413, %v2464
        %v2466 = vpop.f32.mrb[0].mxu0
        %2467 = vdwg.mxu0
        %s2468 = scalar_lea.vmem %s1359, 32
        %v2469 = vld [vmem:[%s2468] sm:$0xf]
        %v2470 = vld [vmem:[%s2468 + $0x4] sm:$0xf]
        %v2471 = vld [vmem:[%s2468 + $0x8] sm:$0xf]
        %v2472 = vld [vmem:[%s2468 + $0xc] sm:$0xf]
        %s2473 = scalar_lea.vmem %s1378, 2
        %v2474 = vld [vmem:[%s2473] sm:$0x1]
        %v2476 = vlaneseq
        %v2477 = vshrl.u32 %v2476, 7
        %v2478 = vsub.s32 0, %v2477
        %v2479 = vrot.slane %v2474, %v2478
        %v2485 = vunpack.c.l.b16 %v2469
        %v2486 = vunpack.c.l.b16 %v2470
        %v2487 = vunpack.c.l.b16 %v2471
        %v2488 = vunpack.c.l.b16 %v2472
        %v2489 = vpack.c.b16 %v2486, %v2485
        %v2490 = vpack.c.b16 %v2488, %v2487
        %2493 = vmatprep.subr.bf16.mxu0 0
        %2494 = vmatpush1.bf16.msra.mxu0 %v2489
        %2495 = vmatprep.subr.bf16.mxu0 0
        %2496 = vmatpush1.bf16.msra.mxu0 %v2490
        %2497 = vmatprep.subr.bf16.mxu0 0
        %2498 = vmatpush1.bf16.msra.mxu0 0
        %2499 = vmatprep.subr.bf16.mxu0 0
        %2500 = vmatpush1.bf16.msra.mxu0 0
        %2501 = vmatprep.subr.bf16.mxu0 0
        %2502 = vmatpush1.bf16.msra.mxu0 0
        %2503 = vmatprep.subr.bf16.mxu0 0
        %2504 = vmatpush1.bf16.msra.mxu0 0
        %2505 = vmatprep.subr.bf16.mxu0 0
        %2506 = vmatpush1.bf16.msra.mxu0 0
        %2507 = vmatprep.subr.bf16.mxu0 0
        %2508 = vmatpush1.bf16.msra.mxu0 0
        %2509 = vmatprep.subr.bf16.mxu0 0
        %2510 = vmatpush1.bf16.msra.mxu0 0
        %2511 = vmatprep.subr.bf16.mxu0 0
        %2512 = vmatpush1.bf16.msra.mxu0 0
        %2513 = vmatprep.subr.bf16.mxu0 0
        %2514 = vmatpush1.bf16.msra.mxu0 0
        %2515 = vmatprep.subr.bf16.mxu0 0
        %2516 = vmatpush1.bf16.msra.mxu0 0
        %2517 = vmatprep.subr.bf16.mxu0 0
        %2518 = vmatpush1.bf16.msra.mxu0 0
        %2519 = vmatprep.subr.bf16.mxu0 0
        %2520 = vmatpush1.bf16.msra.mxu0 0
        %2521 = vmatprep.subr.bf16.mxu0 0
        %2522 = vmatpush1.bf16.msra.mxu0 0
        %2523 = vmatprep.subr.bf16.mxu0 0
        %2524 = vmatpush1.bf16.msra.mxu0 0
        %2525 = vmatprep.mubr.f32.mxu0 0.0
        %2526 = vmatmul.mubr.f32.gmra.mrb[0].mxu0 %v1570
        %v2527 = vpop.f32.mrb[0].mxu0
        %v2528 = vadd.f32 %v2479, %v2527
        %v2529 = vpop.f32.mrb[0].mxu0
        %2530 = vmatprep.mubr.f32.mxu0 0.0
        %2531 = vmatmul.mubr.f32.gmra.mrb[0].mxu0 %v1573
        %v2532 = vpop.f32.mrb[0].mxu0
        %v2533 = vadd.f32 %v2479, %v2532
        %v2534 = vpop.f32.mrb[0].mxu0
        %2535 = vdwg.mxu0
        %s2536 = scalar_lea.vmem %s1364, 8
        %v2537 = vld [vmem:[%s2536] sm:$0xf]
        %s2538 = scalar_lea.vmem %s1383, 16
        %v2539 = vld [vmem:[%s2538] sm:$0xff]
        %2541 = vset.pattern.permute.xlu0 0
        %2542 = vperm.xlu0 %2541, %v2539
        %v2543 = vpop.permute.xlu0 %2542
        %v2546 = vsel %vm1568, %v2537, 0
        %2548 = vmatprep.subr.mxu0 0.0
        %2549 = vmatpush1.xpose.msra.mxu0 %v1570
        %2550 = vmatprep.subr.mxu0 0.0
        %2551 = vmatpush1.xpose.msra.mxu0 %v1573
        %2552 = vmatprep.subr.mxu0 0.0
        %2553 = vmatpush1.xpose.msra.mxu0 0.0
        %2554 = vmatprep.subr.mxu0 0.0
        %2555 = vmatpush1.xpose.msra.mxu0 0.0
        %2556 = vmatprep.subr.mxu0 0.0
        %2557 = vmatpush1.xpose.msra.mxu0 0.0
        %2558 = vmatprep.subr.mxu0 0.0
        %2559 = vmatpush1.xpose.msra.mxu0 0.0
        %2560 = vmatprep.subr.mxu0 0.0
        %2561 = vmatpush1.xpose.msra.mxu0 0.0
        %2562 = vmatprep.subr.mxu0 0.0
        %2563 = vmatpush1.xpose.msra.mxu0 0.0
        %2564 = vmatprep.subr.mxu0 0.0
        %2565 = vmatpush1.xpose.msra.mxu0 0.0
        %2566 = vmatprep.subr.mxu0 0.0
        %2567 = vmatpush1.xpose.msra.mxu0 0.0
        %2568 = vmatprep.subr.mxu0 0.0
        %2569 = vmatpush1.xpose.msra.mxu0 0.0
        %2570 = vmatprep.subr.mxu0 0.0
        %2571 = vmatpush1.xpose.msra.mxu0 0.0
        %2572 = vmatprep.subr.mxu0 0.0
        %2573 = vmatpush1.xpose.msra.mxu0 0.0
        %2574 = vmatprep.subr.mxu0 0.0
        %2575 = vmatpush1.xpose.msra.mxu0 0.0
        %2576 = vmatprep.subr.mxu0 0.0
        %2577 = vmatpush1.xpose.msra.mxu0 0.0
        %2578 = vmatprep.subr.mxu0 0.0
        %2579 = vmatpush1.xpose.msra.mxu0 0.0
        %2580 = vmatprep.subr.mxu0 0.0
        %2581 = vmatpush1.xpose.msra.mxu0 0.0
        %2582 = vmatprep.subr.mxu0 0.0
        %2583 = vmatpush1.xpose.msra.mxu0 0.0
        %2584 = vmatprep.subr.mxu0 0.0
        %2585 = vmatpush1.xpose.msra.mxu0 0.0
        %2586 = vmatprep.subr.mxu0 0.0
        %2587 = vmatpush1.xpose.msra.mxu0 0.0
        %2588 = vmatprep.subr.mxu0 0.0
        %2589 = vmatpush1.xpose.msra.mxu0 0.0
        %2590 = vmatprep.subr.mxu0 0.0
        %2591 = vmatpush1.xpose.msra.mxu0 0.0
        %2592 = vmatprep.subr.mxu0 0.0
        %2593 = vmatpush1.xpose.msra.mxu0 0.0
        %2594 = vmatprep.subr.mxu0 0.0
        %2595 = vmatpush1.xpose.msra.mxu0 0.0
        %2596 = vmatprep.subr.mxu0 0.0
        %2597 = vmatpush1.xpose.msra.mxu0 0.0
        %2598 = vmatprep.subr.mxu0 0.0
        %2599 = vmatpush1.xpose.msra.mxu0 0.0
        %2600 = vmatprep.subr.mxu0 0.0
        %2601 = vmatpush1.xpose.msra.mxu0 0.0
        %2602 = vmatprep.subr.mxu0 0.0
        %2603 = vmatpush1.xpose.msra.mxu0 0.0
        %2604 = vmatprep.subr.mxu0 0.0
        %2605 = vmatpush1.xpose.msra.mxu0 0.0
        %2606 = vmatprep.subr.mxu0 0.0
        %2607 = vmatpush1.xpose.msra.mxu0 0.0
        %2608 = vmatprep.subr.mxu0 0.0
        %2609 = vmatpush1.xpose.msra.mxu0 0.0
        %2610 = vmatprep.subr.mxu0 0.0
        %2611 = vmatpush1.xpose.msra.mxu0 0.0
        %2612 = vmatprep.mubr.bf16.mxu0 0
        %2613 = vmatmul.mubr.bf16.gmra.mrb[0].mxu0 %v2546
        %v2614 = vpop.f32.mrb[0].mxu0
        %v2615 = vadd.f32 %v2543, %v2614
        %v2616 = vpop.f32.mrb[0].mxu0
        %v2617 = vpop.f32.mrb[0].mxu0
        %v2618 = vpop.f32.mrb[0].mxu0
        %2619 = vdwg.mxu0
        %v2621 = vsel %vm1700, %v2528, 0
        %v2624 = vsel %vm1700, %v2533, 0
        %2626 = vmatprep.subr.mxu0 0.0
        %2627 = vmatpush1.msra.mxu0 %v2615
        %2628 = vmatprep.subr.mxu0 0.0
        %2629 = vmatpush1.msra.mxu0 0.0
        %2630 = vmatprep.subr.mxu0 0.0
        %2631 = vmatpush1.msra.mxu0 0.0
        %2632 = vmatprep.subr.mxu0 0.0
        %2633 = vmatpush1.msra.mxu0 0.0
        %2634 = vmatprep.subr.mxu0 0.0
        %2635 = vmatpush1.msra.mxu0 0.0
        %2636 = vmatprep.subr.mxu0 0.0
        %2637 = vmatpush1.msra.mxu0 0.0
        %2638 = vmatprep.subr.mxu0 0.0
        %2639 = vmatpush1.msra.mxu0 0.0
        %2640 = vmatprep.subr.mxu0 0.0
        %2641 = vmatpush1.msra.mxu0 0.0
        %2642 = vmatprep.subr.mxu0 0.0
        %2643 = vmatpush1.msra.mxu0 0.0
        %2644 = vmatprep.subr.mxu0 0.0
        %2645 = vmatpush1.msra.mxu0 0.0
        %2646 = vmatprep.subr.mxu0 0.0
        %2647 = vmatpush1.msra.mxu0 0.0
        %2648 = vmatprep.subr.mxu0 0.0
        %2649 = vmatpush1.msra.mxu0 0.0
        %2650 = vmatprep.subr.mxu0 0.0
        %2651 = vmatpush1.msra.mxu0 0.0
        %2652 = vmatprep.subr.mxu0 0.0
        %2653 = vmatpush1.msra.mxu0 0.0
        %2654 = vmatprep.subr.mxu0 0.0
        %2655 = vmatpush1.msra.mxu0 0.0
        %2656 = vmatprep.subr.mxu0 0.0
        %2657 = vmatpush1.msra.mxu0 0.0
        %2658 = vmatprep.subr.mxu0 0.0
        %2659 = vmatpush1.msra.mxu0 0.0
        %2660 = vmatprep.subr.mxu0 0.0
        %2661 = vmatpush1.msra.mxu0 0.0
        %2662 = vmatprep.subr.mxu0 0.0
        %2663 = vmatpush1.msra.mxu0 0.0
        %2664 = vmatprep.subr.mxu0 0.0
        %2665 = vmatpush1.msra.mxu0 0.0
        %2666 = vmatprep.subr.mxu0 0.0
        %2667 = vmatpush1.msra.mxu0 0.0
        %2668 = vmatprep.subr.mxu0 0.0
        %2669 = vmatpush1.msra.mxu0 0.0
        %2670 = vmatprep.subr.mxu0 0.0
        %2671 = vmatpush1.msra.mxu0 0.0
        %2672 = vmatprep.subr.mxu0 0.0
        %2673 = vmatpush1.msra.mxu0 0.0
        %2674 = vmatprep.subr.mxu0 0.0
        %2675 = vmatpush1.msra.mxu0 0.0
        %2676 = vmatprep.subr.mxu0 0.0
        %2677 = vmatpush1.msra.mxu0 0.0
        %2678 = vmatprep.subr.mxu0 0.0
        %2679 = vmatpush1.msra.mxu0 0.0
        %2680 = vmatprep.subr.mxu0 0.0
        %2681 = vmatpush1.msra.mxu0 0.0
        %2682 = vmatprep.subr.mxu0 0.0
        %2683 = vmatpush1.msra.mxu0 0.0
        %2684 = vmatprep.subr.mxu0 0.0
        %2685 = vmatpush1.msra.mxu0 0.0
        %2686 = vmatprep.subr.mxu0 0.0
        %2687 = vmatpush1.msra.mxu0 0.0
        %2688 = vmatprep.subr.mxu0 0.0
        %2689 = vmatpush1.msra.mxu0 0.0
        %2690 = vmatprep.mubr.f32.mxu0 0.0
        %2691 = vmatmul.mubr.f32.gmra.mrb[0].mxu0 %v2621
        %v2692 = vpop.f32.mrb[0].mxu0
        %v2693 = vadd.f32 0.0, %v2692
        %v2694 = vpop.f32.mrb[0].mxu0
        %2695 = vmatprep.mubr.f32.mxu0 0.0
        %2696 = vmatmul.mubr.f32.gmra.mrb[0].mxu0 %v2624
        %v2697 = vpop.f32.mrb[0].mxu0
        %v2698 = vadd.f32 0.0, %v2697
        %v2699 = vpop.f32.mrb[0].mxu0
        %2700 = vdwg.mxu0
        %v2701 = vsel %vm1539, %v2693, -1e+30
        %v2702 = vsel %vm1540, %v2698, -1e+30
        %v2703 = vsel %vm1784, %v2701, -inf
        %2704 = vmax.xlane.f32.xlu0 %v2703
        %v2705 = vpop.xlane.xlu0 %2704
        %v2706 = vsel %vm1784, %v2702, -inf
        %2707 = vmax.xlane.f32.xlu0 %v2706
        %v2708 = vpop.xlane.xlu0 %2707
        %v2709 = vsub.f32 %v2701, %v2705
        %v2710 = vsub.f32 %v2702, %v2708
        %v2711 = vmul.f32 %v2709, 1.442695
        %v2712 = vpow.pop %v2711
        %v2713 = vmul.f32 %v2710, 1.442695
        %v2714 = vpow.pop %v2713
        %v2715 = vsel %vm1784, %v2712, 0.0
        %2716 = vadd.xlane.f32.xlu0 %v2715
        %v2717 = vpop.xlane.xlu0 %2716
        %v2718 = vsel %vm1784, %v2714, 0.0
        %2719 = vadd.xlane.f32.xlu0 %v2718
        %v2720 = vpop.xlane.xlu0 %2719
        %v2721 = vrcp.pop %v2717
        %v2722 = vrcp.pop %v2720
        %v2723 = vmul.f32 %v2712, %v2721
        %v2724 = vmul.f32 %v2714, %v2722
        %s2725 = scalar_lea.vmem %s1369, 32
        %v2726 = vld [vmem:[%s2725] sm:$0xf]
        %v2727 = vld [vmem:[%s2725 + $0x4] sm:$0xf]
        %v2728 = vld [vmem:[%s2725 + $0x8] sm:$0xf]
        %v2729 = vld [vmem:[%s2725 + $0xc] sm:$0xf]
        %s2730 = scalar_lea.vmem %s1387, 2
        %v2731 = vld [vmem:[%s2730] sm:$0x1]
        %v2733 = vlaneseq
        %v2734 = vshrl.u32 %v2733, 7
        %v2735 = vsub.s32 0, %v2734
        %v2736 = vrot.slane %v2731, %v2735
        %v2742 = vunpack.c.l.b16 %v2726
        %v2743 = vunpack.c.l.b16 %v2727
        %v2744 = vunpack.c.l.b16 %v2728
        %v2745 = vunpack.c.l.b16 %v2729
        %v2746 = vpack.c.b16 %v2743, %v2742
        %v2747 = vpack.c.b16 %v2745, %v2744
        %2750 = vmatprep.subr.bf16.mxu0 0
        %2751 = vmatpush1.bf16.msra.mxu0 %v2746
        %2752 = vmatprep.subr.bf16.mxu0 0
        %2753 = vmatpush1.bf16.msra.mxu0 %v2747
        %2754 = vmatprep.subr.bf16.mxu0 0
        %2755 = vmatpush1.bf16.msra.mxu0 0
        %2756 = vmatprep.subr.bf16.mxu0 0
        %2757 = vmatpush1.bf16.msra.mxu0 0
        %2758 = vmatprep.subr.bf16.mxu0 0
        %2759 = vmatpush1.bf16.msra.mxu0 0
        %2760 = vmatprep.subr.bf16.mxu0 0
        %2761 = vmatpush1.bf16.msra.mxu0 0
        %2762 = vmatprep.subr.bf16.mxu0 0
        %2763 = vmatpush1.bf16.msra.mxu0 0
        %2764 = vmatprep.subr.bf16.mxu0 0
        %2765 = vmatpush1.bf16.msra.mxu0 0
        %2766 = vmatprep.subr.bf16.mxu0 0
        %2767 = vmatpush1.bf16.msra.mxu0 0
        %2768 = vmatprep.subr.bf16.mxu0 0
        %2769 = vmatpush1.bf16.msra.mxu0 0
        %2770 = vmatprep.subr.bf16.mxu0 0
        %2771 = vmatpush1.bf16.msra.mxu0 0
        %2772 = vmatprep.subr.bf16.mxu0 0
        %2773 = vmatpush1.bf16.msra.mxu0 0
        %2774 = vmatprep.subr.bf16.mxu0 0
        %2775 = vmatpush1.bf16.msra.mxu0 0
        %2776 = vmatprep.subr.bf16.mxu0 0
        %2777 = vmatpush1.bf16.msra.mxu0 0
        %2778 = vmatprep.subr.bf16.mxu0 0
        %2779 = vmatpush1.bf16.msra.mxu0 0
        %2780 = vmatprep.subr.bf16.mxu0 0
        %2781 = vmatpush1.bf16.msra.mxu0 0
        %2782 = vmatprep.mubr.f32.mxu0 0.0
        %2783 = vmatmul.mubr.f32.gmra.mrb[0].mxu0 %v1570
        %v2784 = vpop.f32.mrb[0].mxu0
        %v2785 = vadd.f32 %v2736, %v2784
        %v2786 = vpop.f32.mrb[0].mxu0
        %2787 = vmatprep.mubr.f32.mxu0 0.0
        %2788 = vmatmul.mubr.f32.gmra.mrb[0].mxu0 %v1573
        %v2789 = vpop.f32.mrb[0].mxu0
        %v2790 = vadd.f32 %v2736, %v2789
        %v2791 = vpop.f32.mrb[0].mxu0
        %2792 = vdwg.mxu0
        %v2794 = vsel %vm1784, %v2723, 0
        %v2797 = vsel %vm1784, %v2724, 0
        %2799 = vmatprep.subr.mxu0 0.0
        %2800 = vmatpush1.msra.mxu0 %v2785
        %2801 = vmatprep.subr.mxu0 0.0
        %2802 = vmatpush1.msra.mxu0 %v2790
        %2803 = vmatprep.subr.mxu0 0.0
        %2804 = vmatpush1.msra.mxu0 0.0
        %2805 = vmatprep.subr.mxu0 0.0
        %2806 = vmatpush1.msra.mxu0 0.0
        %2807 = vmatprep.subr.mxu0 0.0
        %2808 = vmatpush1.msra.mxu0 0.0
        %2809 = vmatprep.subr.mxu0 0.0
        %2810 = vmatpush1.msra.mxu0 0.0
        %2811 = vmatprep.subr.mxu0 0.0
        %2812 = vmatpush1.msra.mxu0 0.0
        %2813 = vmatprep.subr.mxu0 0.0
        %2814 = vmatpush1.msra.mxu0 0.0
        %2815 = vmatprep.subr.mxu0 0.0
        %2816 = vmatpush1.msra.mxu0 0.0
        %2817 = vmatprep.subr.mxu0 0.0
        %2818 = vmatpush1.msra.mxu0 0.0
        %2819 = vmatprep.subr.mxu0 0.0
        %2820 = vmatpush1.msra.mxu0 0.0
        %2821 = vmatprep.subr.mxu0 0.0
        %2822 = vmatpush1.msra.mxu0 0.0
        %2823 = vmatprep.subr.mxu0 0.0
        %2824 = vmatpush1.msra.mxu0 0.0
        %2825 = vmatprep.subr.mxu0 0.0
        %2826 = vmatpush1.msra.mxu0 0.0
        %2827 = vmatprep.subr.mxu0 0.0
        %2828 = vmatpush1.msra.mxu0 0.0
        %2829 = vmatprep.subr.mxu0 0.0
        %2830 = vmatpush1.msra.mxu0 0.0
        %2831 = vmatprep.subr.mxu0 0.0
        %2832 = vmatpush1.msra.mxu0 0.0
        %2833 = vmatprep.subr.mxu0 0.0
        %2834 = vmatpush1.msra.mxu0 0.0
        %2835 = vmatprep.subr.mxu0 0.0
        %2836 = vmatpush1.msra.mxu0 0.0
        %2837 = vmatprep.subr.mxu0 0.0
        %2838 = vmatpush1.msra.mxu0 0.0
        %2839 = vmatprep.subr.mxu0 0.0
        %2840 = vmatpush1.msra.mxu0 0.0
        %2841 = vmatprep.subr.mxu0 0.0
        %2842 = vmatpush1.msra.mxu0 0.0
        %2843 = vmatprep.subr.mxu0 0.0
        %2844 = vmatpush1.msra.mxu0 0.0
        %2845 = vmatprep.subr.mxu0 0.0
        %2846 = vmatpush1.msra.mxu0 0.0
        %2847 = vmatprep.subr.mxu0 0.0
        %2848 = vmatpush1.msra.mxu0 0.0
        %2849 = vmatprep.subr.mxu0 0.0
        %2850 = vmatpush1.msra.mxu0 0.0
        %2851 = vmatprep.subr.mxu0 0.0
        %2852 = vmatpush1.msra.mxu0 0.0
        %2853 = vmatprep.subr.mxu0 0.0
        %2854 = vmatpush1.msra.mxu0 0.0
        %2855 = vmatprep.subr.mxu0 0.0
        %2856 = vmatpush1.msra.mxu0 0.0
        %2857 = vmatprep.subr.mxu0 0.0
        %2858 = vmatpush1.msra.mxu0 0.0
        %2859 = vmatprep.subr.mxu0 0.0
        %2860 = vmatpush1.msra.mxu0 0.0
        %2861 = vmatprep.subr.mxu0 0.0
        %2862 = vmatpush1.msra.mxu0 0.0
        %2863 = vmatprep.mubr.f32.mxu0 0.0
        %2864 = vmatmul.mubr.f32.gmra.mrb[0].mxu0 %v2794
        %v2865 = vpop.f32.mrb[0].mxu0
        %v2866 = vadd.f32 0.0, %v2865
        %v2867 = vpop.f32.mrb[0].mxu0
        %2868 = vmatprep.mubr.f32.mxu0 0.0
        %2869 = vmatmul.mubr.f32.gmra.mrb[0].mxu0 %v2797
        %v2870 = vpop.f32.mrb[0].mxu0
        %v2871 = vadd.f32 0.0, %v2870
        %v2872 = vpop.f32.mrb[0].mxu0
        %2873 = vdwg.mxu0
        %s2874 = scalar_lea.vmem %s1374, 8
        %v2875 = vld [vmem:[%s2874] sm:$0xf]
        %v2877 = vsel %vm1700, %v2866, 0
        %v2880 = vsel %vm1700, %v2871, 0
        %v2883 = vsel %vm2369, %v2875, 0
        %2885 = vmatprep.subr.bf16.mxu0 0
        %2886 = vmatpush1.bf16.msra.mxu0 %v2883
        %2887 = vmatprep.subr.bf16.mxu0 0
        %2888 = vmatpush1.bf16.msra.mxu0 0
        %2889 = vmatprep.subr.bf16.mxu0 0
        %2890 = vmatpush1.bf16.msra.mxu0 0
        %2891 = vmatprep.subr.bf16.mxu0 0
        %2892 = vmatpush1.bf16.msra.mxu0 0
        %2893 = vmatprep.subr.bf16.mxu0 0
        %2894 = vmatpush1.bf16.msra.mxu0 0
        %2895 = vmatprep.subr.bf16.mxu0 0
        %2896 = vmatpush1.bf16.msra.mxu0 0
        %2897 = vmatprep.subr.bf16.mxu0 0
        %2898 = vmatpush1.bf16.msra.mxu0 0
        %2899 = vmatprep.subr.bf16.mxu0 0
        %2900 = vmatpush1.bf16.msra.mxu0 0
        %2901 = vmatprep.subr.bf16.mxu0 0
        %2902 = vmatpush1.bf16.msra.mxu0 0
        %2903 = vmatprep.subr.bf16.mxu0 0
        %2904 = vmatpush1.bf16.msra.mxu0 0
        %2905 = vmatprep.subr.bf16.mxu0 0
        %2906 = vmatpush1.bf16.msra.mxu0 0
        %2907 = vmatprep.subr.bf16.mxu0 0
        %2908 = vmatpush1.bf16.msra.mxu0 0
        %2909 = vmatprep.subr.bf16.mxu0 0
        %2910 = vmatpush1.bf16.msra.mxu0 0
        %2911 = vmatprep.subr.bf16.mxu0 0
        %2912 = vmatpush1.bf16.msra.mxu0 0
        %2913 = vmatprep.subr.bf16.mxu0 0
        %2914 = vmatpush1.bf16.msra.mxu0 0
        %2915 = vmatprep.subr.bf16.mxu0 0
        %2916 = vmatpush1.bf16.msra.mxu0 0
        %2917 = vmatprep.mubr.f32.mxu0 0.0
        %2918 = vmatmul.mubr.f32.gmra.mrb[0].mxu0 %v2877
        %v2919 = vpop.f32.mrb[0].mxu0
        %v2920 = vadd.f32 0.0, %v2919
        %v2921 = vpop.f32.mrb[0].mxu0
        %2922 = vmatprep.mubr.f32.mxu0 0.0
        %2923 = vmatmul.mubr.f32.gmra.mrb[0].mxu0 %v2880
        %v2924 = vpop.f32.mrb[0].mxu0
        %v2925 = vadd.f32 0.0, %v2924
        %v2926 = vpop.f32.mrb[0].mxu0
        %2927 = vdwg.mxu0
        %v2928 = vadd.f32 %v2460, %v2920
        %v2929 = vadd.f32 %v2465, %v2925
        %s2930 = scalar_lea.vmem %s1359, 48
        %v2931 = vld [vmem:[%s2930] sm:$0xf]
        %v2932 = vld [vmem:[%s2930 + $0x4] sm:$0xf]
        %v2933 = vld [vmem:[%s2930 + $0x8] sm:$0xf]
        %v2934 = vld [vmem:[%s2930 + $0xc] sm:$0xf]
        %s2935 = scalar_lea.vmem %s1378, 3
        %v2936 = vld [vmem:[%s2935] sm:$0x1]
        %v2938 = vlaneseq
        %v2939 = vshrl.u32 %v2938, 7
        %v2940 = vsub.s32 0, %v2939
        %v2941 = vrot.slane %v2936, %v2940
        %v2947 = vunpack.c.l.b16 %v2931
        %v2948 = vunpack.c.l.b16 %v2932
        %v2949 = vunpack.c.l.b16 %v2933
        %v2950 = vunpack.c.l.b16 %v2934
        %v2951 = vpack.c.b16 %v2948, %v2947
        %v2952 = vpack.c.b16 %v2950, %v2949
        %2955 = vmatprep.subr.bf16.mxu0 0
        %2956 = vmatpush1.bf16.msra.mxu0 %v2951
        %2957 = vmatprep.subr.bf16.mxu0 0
        %2958 = vmatpush1.bf16.msra.mxu0 %v2952
        %2959 = vmatprep.subr.bf16.mxu0 0
        %2960 = vmatpush1.bf16.msra.mxu0 0
        %2961 = vmatprep.subr.bf16.mxu0 0
        %2962 = vmatpush1.bf16.msra.mxu0 0
        %2963 = vmatprep.subr.bf16.mxu0 0
        %2964 = vmatpush1.bf16.msra.mxu0 0
        %2965 = vmatprep.subr.bf16.mxu0 0
        %2966 = vmatpush1.bf16.msra.mxu0 0
        %2967 = vmatprep.subr.bf16.mxu0 0
        %2968 = vmatpush1.bf16.msra.mxu0 0
        %2969 = vmatprep.subr.bf16.mxu0 0
        %2970 = vmatpush1.bf16.msra.mxu0 0
        %2971 = vmatprep.subr.bf16.mxu0 0
        %2972 = vmatpush1.bf16.msra.mxu0 0
        %2973 = vmatprep.subr.bf16.mxu0 0
        %2974 = vmatpush1.bf16.msra.mxu0 0
        %2975 = vmatprep.subr.bf16.mxu0 0
        %2976 = vmatpush1.bf16.msra.mxu0 0
        %2977 = vmatprep.subr.bf16.mxu0 0
        %2978 = vmatpush1.bf16.msra.mxu0 0
        %2979 = vmatprep.subr.bf16.mxu0 0
        %2980 = vmatpush1.bf16.msra.mxu0 0
        %2981 = vmatprep.subr.bf16.mxu0 0
        %2982 = vmatpush1.bf16.msra.mxu0 0
        %2983 = vmatprep.subr.bf16.mxu0 0
        %2984 = vmatpush1.bf16.msra.mxu0 0
        %2985 = vmatprep.subr.bf16.mxu0 0
        %2986 = vmatpush1.bf16.msra.mxu0 0
        %2987 = vmatprep.mubr.f32.mxu0 0.0
        %2988 = vmatmul.mubr.f32.gmra.mrb[0].mxu0 %v1570
        %v2989 = vpop.f32.mrb[0].mxu0
        %v2990 = vadd.f32 %v2941, %v2989
        %v2991 = vpop.f32.mrb[0].mxu0
        %2992 = vmatprep.mubr.f32.mxu0 0.0
        %2993 = vmatmul.mubr.f32.gmra.mrb[0].mxu0 %v1573
        %v2994 = vpop.f32.mrb[0].mxu0
        %v2995 = vadd.f32 %v2941, %v2994
        %v2996 = vpop.f32.mrb[0].mxu0
        %2997 = vdwg.mxu0
        %s2998 = scalar_lea.vmem %s1364, 12
        %v2999 = vld [vmem:[%s2998] sm:$0xf]
        %s3000 = scalar_lea.vmem %s1383, 24
        %v3001 = vld [vmem:[%s3000] sm:$0xff]
        %3003 = vset.pattern.permute.xlu0 0
        %3004 = vperm.xlu0 %3003, %v3001
        %v3005 = vpop.permute.xlu0 %3004
        %v3008 = vsel %vm1568, %v2999, 0
        %3010 = vmatprep.subr.mxu0 0.0
        %3011 = vmatpush1.xpose.msra.mxu0 %v1570
        %3012 = vmatprep.subr.mxu0 0.0
        %3013 = vmatpush1.xpose.msra.mxu0 %v1573
        %3014 = vmatprep.subr.mxu0 0.0
        %3015 = vmatpush1.xpose.msra.mxu0 0.0
        %3016 = vmatprep.subr.mxu0 0.0
        %3017 = vmatpush1.xpose.msra.mxu0 0.0
        %3018 = vmatprep.subr.mxu0 0.0
        %3019 = vmatpush1.xpose.msra.mxu0 0.0
        %3020 = vmatprep.subr.mxu0 0.0
        %3021 = vmatpush1.xpose.msra.mxu0 0.0
        %3022 = vmatprep.subr.mxu0 0.0
        %3023 = vmatpush1.xpose.msra.mxu0 0.0
        %3024 = vmatprep.subr.mxu0 0.0
        %3025 = vmatpush1.xpose.msra.mxu0 0.0
        %3026 = vmatprep.subr.mxu0 0.0
        %3027 = vmatpush1.xpose.msra.mxu0 0.0
        %3028 = vmatprep.subr.mxu0 0.0
        %3029 = vmatpush1.xpose.msra.mxu0 0.0
        %3030 = vmatprep.subr.mxu0 0.0
        %3031 = vmatpush1.xpose.msra.mxu0 0.0
        %3032 = vmatprep.subr.mxu0 0.0
        %3033 = vmatpush1.xpose.msra.mxu0 0.0
        %3034 = vmatprep.subr.mxu0 0.0
        %3035 = vmatpush1.xpose.msra.mxu0 0.0
        %3036 = vmatprep.subr.mxu0 0.0
        %3037 = vmatpush1.xpose.msra.mxu0 0.0
        %3038 = vmatprep.subr.mxu0 0.0
        %3039 = vmatpush1.xpose.msra.mxu0 0.0
        %3040 = vmatprep.subr.mxu0 0.0
        %3041 = vmatpush1.xpose.msra.mxu0 0.0
        %3042 = vmatprep.subr.mxu0 0.0
        %3043 = vmatpush1.xpose.msra.mxu0 0.0
        %3044 = vmatprep.subr.mxu0 0.0
        %3045 = vmatpush1.xpose.msra.mxu0 0.0
        %3046 = vmatprep.subr.mxu0 0.0
        %3047 = vmatpush1.xpose.msra.mxu0 0.0
        %3048 = vmatprep.subr.mxu0 0.0
        %3049 = vmatpush1.xpose.msra.mxu0 0.0
        %3050 = vmatprep.subr.mxu0 0.0
        %3051 = vmatpush1.xpose.msra.mxu0 0.0
        %3052 = vmatprep.subr.mxu0 0.0
        %3053 = vmatpush1.xpose.msra.mxu0 0.0
        %3054 = vmatprep.subr.mxu0 0.0
        %3055 = vmatpush1.xpose.msra.mxu0 0.0
        %3056 = vmatprep.subr.mxu0 0.0
        %3057 = vmatpush1.xpose.msra.mxu0 0.0
        %3058 = vmatprep.subr.mxu0 0.0
        %3059 = vmatpush1.xpose.msra.mxu0 0.0
        %3060 = vmatprep.subr.mxu0 0.0
        %3061 = vmatpush1.xpose.msra.mxu0 0.0
        %3062 = vmatprep.subr.mxu0 0.0
        %3063 = vmatpush1.xpose.msra.mxu0 0.0
        %3064 = vmatprep.subr.mxu0 0.0
        %3065 = vmatpush1.xpose.msra.mxu0 0.0
        %3066 = vmatprep.subr.mxu0 0.0
        %3067 = vmatpush1.xpose.msra.mxu0 0.0
        %3068 = vmatprep.subr.mxu0 0.0
        %3069 = vmatpush1.xpose.msra.mxu0 0.0
        %3070 = vmatprep.subr.mxu0 0.0
        %3071 = vmatpush1.xpose.msra.mxu0 0.0
        %3072 = vmatprep.subr.mxu0 0.0
        %3073 = vmatpush1.xpose.msra.mxu0 0.0
        %3074 = vmatprep.mubr.bf16.mxu0 0
        %3075 = vmatmul.mubr.bf16.gmra.mrb[0].mxu0 %v3008
        %v3076 = vpop.f32.mrb[0].mxu0
        %v3077 = vadd.f32 %v3005, %v3076
        %v3078 = vpop.f32.mrb[0].mxu0
        %v3079 = vpop.f32.mrb[0].mxu0
        %v3080 = vpop.f32.mrb[0].mxu0
        %3081 = vdwg.mxu0
        %v3083 = vsel %vm1700, %v2990, 0
        %v3086 = vsel %vm1700, %v2995, 0
        %3088 = vmatprep.subr.mxu0 0.0
        %3089 = vmatpush1.msra.mxu0 %v3077
        %3090 = vmatprep.subr.mxu0 0.0
        %3091 = vmatpush1.msra.mxu0 0.0
        %3092 = vmatprep.subr.mxu0 0.0
        %3093 = vmatpush1.msra.mxu0 0.0
        %3094 = vmatprep.subr.mxu0 0.0
        %3095 = vmatpush1.msra.mxu0 0.0
        %3096 = vmatprep.subr.mxu0 0.0
        %3097 = vmatpush1.msra.mxu0 0.0
        %3098 = vmatprep.subr.mxu0 0.0
        %3099 = vmatpush1.msra.mxu0 0.0
        %3100 = vmatprep.subr.mxu0 0.0
        %3101 = vmatpush1.msra.mxu0 0.0
        %3102 = vmatprep.subr.mxu0 0.0
        %3103 = vmatpush1.msra.mxu0 0.0
        %3104 = vmatprep.subr.mxu0 0.0
        %3105 = vmatpush1.msra.mxu0 0.0
        %3106 = vmatprep.subr.mxu0 0.0
        %3107 = vmatpush1.msra.mxu0 0.0
        %3108 = vmatprep.subr.mxu0 0.0
        %3109 = vmatpush1.msra.mxu0 0.0
        %3110 = vmatprep.subr.mxu0 0.0
        %3111 = vmatpush1.msra.mxu0 0.0
        %3112 = vmatprep.subr.mxu0 0.0
        %3113 = vmatpush1.msra.mxu0 0.0
        %3114 = vmatprep.subr.mxu0 0.0
        %3115 = vmatpush1.msra.mxu0 0.0
        %3116 = vmatprep.subr.mxu0 0.0
        %3117 = vmatpush1.msra.mxu0 0.0
        %3118 = vmatprep.subr.mxu0 0.0
        %3119 = vmatpush1.msra.mxu0 0.0
        %3120 = vmatprep.subr.mxu0 0.0
        %3121 = vmatpush1.msra.mxu0 0.0
        %3122 = vmatprep.subr.mxu0 0.0
        %3123 = vmatpush1.msra.mxu0 0.0
        %3124 = vmatprep.subr.mxu0 0.0
        %3125 = vmatpush1.msra.mxu0 0.0
        %3126 = vmatprep.subr.mxu0 0.0
        %3127 = vmatpush1.msra.mxu0 0.0
        %3128 = vmatprep.subr.mxu0 0.0
        %3129 = vmatpush1.msra.mxu0 0.0
        %3130 = vmatprep.subr.mxu0 0.0
        %3131 = vmatpush1.msra.mxu0 0.0
        %3132 = vmatprep.subr.mxu0 0.0
        %3133 = vmatpush1.msra.mxu0 0.0
        %3134 = vmatprep.subr.mxu0 0.0
        %3135 = vmatpush1.msra.mxu0 0.0
        %3136 = vmatprep.subr.mxu0 0.0
        %3137 = vmatpush1.msra.mxu0 0.0
        %3138 = vmatprep.subr.mxu0 0.0
        %3139 = vmatpush1.msra.mxu0 0.0
        %3140 = vmatprep.subr.mxu0 0.0
        %3141 = vmatpush1.msra.mxu0 0.0
        %3142 = vmatprep.subr.mxu0 0.0
        %3143 = vmatpush1.msra.mxu0 0.0
        %3144 = vmatprep.subr.mxu0 0.0
        %3145 = vmatpush1.msra.mxu0 0.0
        %3146 = vmatprep.subr.mxu0 0.0
        %3147 = vmatpush1.msra.mxu0 0.0
        %3148 = vmatprep.subr.mxu0 0.0
        %3149 = vmatpush1.msra.mxu0 0.0
        %3150 = vmatprep.subr.mxu0 0.0
        %3151 = vmatpush1.msra.mxu0 0.0
        %3152 = vmatprep.mubr.f32.mxu0 0.0
        %3153 = vmatmul.mubr.f32.gmra.mrb[0].mxu0 %v3083
        %v3154 = vpop.f32.mrb[0].mxu0
        %v3155 = vadd.f32 0.0, %v3154
        %v3156 = vpop.f32.mrb[0].mxu0
        %3157 = vmatprep.mubr.f32.mxu0 0.0
        %3158 = vmatmul.mubr.f32.gmra.mrb[0].mxu0 %v3086
        %v3159 = vpop.f32.mrb[0].mxu0
        %v3160 = vadd.f32 0.0, %v3159
        %v3161 = vpop.f32.mrb[0].mxu0
        %3162 = vdwg.mxu0
        %v3163 = vsel %vm1539, %v3155, -1e+30
        %v3164 = vsel %vm1540, %v3160, -1e+30
        %v3165 = vsel %vm1784, %v3163, -inf
        %3166 = vmax.xlane.f32.xlu0 %v3165
        %v3167 = vpop.xlane.xlu0 %3166
        %v3168 = vsel %vm1784, %v3164, -inf
        %3169 = vmax.xlane.f32.xlu0 %v3168
        %v3170 = vpop.xlane.xlu0 %3169
        %v3171 = vsub.f32 %v3163, %v3167
        %v3172 = vsub.f32 %v3164, %v3170
        %v3173 = vmul.f32 %v3171, 1.442695
        %v3174 = vpow.pop %v3173
        %v3175 = vmul.f32 %v3172, 1.442695
        %v3176 = vpow.pop %v3175
        %v3177 = vsel %vm1784, %v3174, 0.0
        %3178 = vadd.xlane.f32.xlu0 %v3177
        %v3179 = vpop.xlane.xlu0 %3178
        %v3180 = vsel %vm1784, %v3176, 0.0
        %3181 = vadd.xlane.f32.xlu0 %v3180
        %v3182 = vpop.xlane.xlu0 %3181
        %v3183 = vrcp.pop %v3179
        %v3184 = vrcp.pop %v3182
        %v3185 = vmul.f32 %v3174, %v3183
        %v3186 = vmul.f32 %v3176, %v3184
        %s3187 = scalar_lea.vmem %s1369, 48
        %v3188 = vld [vmem:[%s3187] sm:$0xf]
        %v3189 = vld [vmem:[%s3187 + $0x4] sm:$0xf]
        %v3190 = vld [vmem:[%s3187 + $0x8] sm:$0xf]
        %v3191 = vld [vmem:[%s3187 + $0xc] sm:$0xf]
        %s3192 = scalar_lea.vmem %s1387, 3
        %v3193 = vld [vmem:[%s3192] sm:$0x1]
        %v3195 = vlaneseq
        %v3196 = vshrl.u32 %v3195, 7
        %v3197 = vsub.s32 0, %v3196
        %v3198 = vrot.slane %v3193, %v3197
        %v3204 = vunpack.c.l.b16 %v3188
        %v3205 = vunpack.c.l.b16 %v3189
        %v3206 = vunpack.c.l.b16 %v3190
        %v3207 = vunpack.c.l.b16 %v3191
        %v3208 = vpack.c.b16 %v3205, %v3204
        %v3209 = vpack.c.b16 %v3207, %v3206
        %3212 = vmatprep.subr.bf16.mxu0 0
        %3213 = vmatpush1.bf16.msra.mxu0 %v3208
        %3214 = vmatprep.subr.bf16.mxu0 0
        %3215 = vmatpush1.bf16.msra.mxu0 %v3209
        %3216 = vmatprep.subr.bf16.mxu0 0
        %3217 = vmatpush1.bf16.msra.mxu0 0
        %3218 = vmatprep.subr.bf16.mxu0 0
        %3219 = vmatpush1.bf16.msra.mxu0 0
        %3220 = vmatprep.subr.bf16.mxu0 0
        %3221 = vmatpush1.bf16.msra.mxu0 0
        %3222 = vmatprep.subr.bf16.mxu0 0
        %3223 = vmatpush1.bf16.msra.mxu0 0
        %3224 = vmatprep.subr.bf16.mxu0 0
        %3225 = vmatpush1.bf16.msra.mxu0 0
        %3226 = vmatprep.subr.bf16.mxu0 0
        %3227 = vmatpush1.bf16.msra.mxu0 0
        %3228 = vmatprep.subr.bf16.mxu0 0
        %3229 = vmatpush1.bf16.msra.mxu0 0
        %3230 = vmatprep.subr.bf16.mxu0 0
        %3231 = vmatpush1.bf16.msra.mxu0 0
        %3232 = vmatprep.subr.bf16.mxu0 0
        %3233 = vmatpush1.bf16.msra.mxu0 0
        %3234 = vmatprep.subr.bf16.mxu0 0
        %3235 = vmatpush1.bf16.msra.mxu0 0
        %3236 = vmatprep.subr.bf16.mxu0 0
        %3237 = vmatpush1.bf16.msra.mxu0 0
        %3238 = vmatprep.subr.bf16.mxu0 0
        %3239 = vmatpush1.bf16.msra.mxu0 0
        %3240 = vmatprep.subr.bf16.mxu0 0
        %3241 = vmatpush1.bf16.msra.mxu0 0
        %3242 = vmatprep.subr.bf16.mxu0 0
        %3243 = vmatpush1.bf16.msra.mxu0 0
        %3244 = vmatprep.mubr.f32.mxu0 0.0
        %3245 = vmatmul.mubr.f32.gmra.mrb[0].mxu0 %v1570
        %v3246 = vpop.f32.mrb[0].mxu0
        %v3247 = vadd.f32 %v3198, %v3246
        %v3248 = vpop.f32.mrb[0].mxu0
        %3249 = vmatprep.mubr.f32.mxu0 0.0
        %3250 = vmatmul.mubr.f32.gmra.mrb[0].mxu0 %v1573
        %v3251 = vpop.f32.mrb[0].mxu0
        %v3252 = vadd.f32 %v3198, %v3251
        %v3253 = vpop.f32.mrb[0].mxu0
        %3254 = vdwg.mxu0
        %v3256 = vsel %vm1784, %v3185, 0
        %v3259 = vsel %vm1784, %v3186, 0
        %3261 = vmatprep.subr.mxu0 0.0
        %3262 = vmatpush1.msra.mxu0 %v3247
        %3263 = vmatprep.subr.mxu0 0.0
        %3264 = vmatpush1.msra.mxu0 %v3252
        %3265 = vmatprep.subr.mxu0 0.0
        %3266 = vmatpush1.msra.mxu0 0.0
        %3267 = vmatprep.subr.mxu0 0.0
        %3268 = vmatpush1.msra.mxu0 0.0
        %3269 = vmatprep.subr.mxu0 0.0
        %3270 = vmatpush1.msra.mxu0 0.0
        %3271 = vmatprep.subr.mxu0 0.0
        %3272 = vmatpush1.msra.mxu0 0.0
        %3273 = vmatprep.subr.mxu0 0.0
        %3274 = vmatpush1.msra.mxu0 0.0
        %3275 = vmatprep.subr.mxu0 0.0
        %3276 = vmatpush1.msra.mxu0 0.0
        %3277 = vmatprep.subr.mxu0 0.0
        %3278 = vmatpush1.msra.mxu0 0.0
        %3279 = vmatprep.subr.mxu0 0.0
        %3280 = vmatpush1.msra.mxu0 0.0
        %3281 = vmatprep.subr.mxu0 0.0
        %3282 = vmatpush1.msra.mxu0 0.0
        %3283 = vmatprep.subr.mxu0 0.0
        %3284 = vmatpush1.msra.mxu0 0.0
        %3285 = vmatprep.subr.mxu0 0.0
        %3286 = vmatpush1.msra.mxu0 0.0
        %3287 = vmatprep.subr.mxu0 0.0
        %3288 = vmatpush1.msra.mxu0 0.0
        %3289 = vmatprep.subr.mxu0 0.0
        %3290 = vmatpush1.msra.mxu0 0.0
        %3291 = vmatprep.subr.mxu0 0.0
        %3292 = vmatpush1.msra.mxu0 0.0
        %3293 = vmatprep.subr.mxu0 0.0
        %3294 = vmatpush1.msra.mxu0 0.0
        %3295 = vmatprep.subr.mxu0 0.0
        %3296 = vmatpush1.msra.mxu0 0.0
        %3297 = vmatprep.subr.mxu0 0.0
        %3298 = vmatpush1.msra.mxu0 0.0
        %3299 = vmatprep.subr.mxu0 0.0
        %3300 = vmatpush1.msra.mxu0 0.0
        %3301 = vmatprep.subr.mxu0 0.0
        %3302 = vmatpush1.msra.mxu0 0.0
        %3303 = vmatprep.subr.mxu0 0.0
        %3304 = vmatpush1.msra.mxu0 0.0
        %3305 = vmatprep.subr.mxu0 0.0
        %3306 = vmatpush1.msra.mxu0 0.0
        %3307 = vmatprep.subr.mxu0 0.0
        %3308 = vmatpush1.msra.mxu0 0.0
        %3309 = vmatprep.subr.mxu0 0.0
        %3310 = vmatpush1.msra.mxu0 0.0
        %3311 = vmatprep.subr.mxu0 0.0
        %3312 = vmatpush1.msra.mxu0 0.0
        %3313 = vmatprep.subr.mxu0 0.0
        %3314 = vmatpush1.msra.mxu0 0.0
        %3315 = vmatprep.subr.mxu0 0.0
        %3316 = vmatpush1.msra.mxu0 0.0
        %3317 = vmatprep.subr.mxu0 0.0
        %3318 = vmatpush1.msra.mxu0 0.0
        %3319 = vmatprep.subr.mxu0 0.0
        %3320 = vmatpush1.msra.mxu0 0.0
        %3321 = vmatprep.subr.mxu0 0.0
        %3322 = vmatpush1.msra.mxu0 0.0
        %3323 = vmatprep.subr.mxu0 0.0
        %3324 = vmatpush1.msra.mxu0 0.0
        %3325 = vmatprep.mubr.f32.mxu0 0.0
        %3326 = vmatmul.mubr.f32.gmra.mrb[0].mxu0 %v3256
        %v3327 = vpop.f32.mrb[0].mxu0
        %v3328 = vadd.f32 0.0, %v3327
        %v3329 = vpop.f32.mrb[0].mxu0
        %3330 = vmatprep.mubr.f32.mxu0 0.0
        %3331 = vmatmul.mubr.f32.gmra.mrb[0].mxu0 %v3259
        %v3332 = vpop.f32.mrb[0].mxu0
        %v3333 = vadd.f32 0.0, %v3332
        %v3334 = vpop.f32.mrb[0].mxu0
        %3335 = vdwg.mxu0
        %s3336 = scalar_lea.vmem %s1374, 12
        %v3337 = vld [vmem:[%s3336] sm:$0xf]
        %v3339 = vsel %vm1700, %v3328, 0
        %v3342 = vsel %vm1700, %v3333, 0
        %v3345 = vsel %vm2369, %v3337, 0
        %3347 = vmatprep.subr.bf16.mxu0 0
        %3348 = vmatpush1.bf16.msra.mxu0 %v3345
        %3349 = vmatprep.subr.bf16.mxu0 0
        %3350 = vmatpush1.bf16.msra.mxu0 0
        %3351 = vmatprep.subr.bf16.mxu0 0
        %3352 = vmatpush1.bf16.msra.mxu0 0
        %3353 = vmatprep.subr.bf16.mxu0 0
        %3354 = vmatpush1.bf16.msra.mxu0 0
        %3355 = vmatprep.subr.bf16.mxu0 0
        %3356 = vmatpush1.bf16.msra.mxu0 0
        %3357 = vmatprep.subr.bf16.mxu0 0
        %3358 = vmatpush1.bf16.msra.mxu0 0
        %3359 = vmatprep.subr.bf16.mxu0 0
        %3360 = vmatpush1.bf16.msra.mxu0 0
        %3361 = vmatprep.subr.bf16.mxu0 0
        %3362 = vmatpush1.bf16.msra.mxu0 0
        %3363 = vmatprep.subr.bf16.mxu0 0
        %3364 = vmatpush1.bf16.msra.mxu0 0
        %3365 = vmatprep.subr.bf16.mxu0 0
        %3366 = vmatpush1.bf16.msra.mxu0 0
        %3367 = vmatprep.subr.bf16.mxu0 0
        %3368 = vmatpush1.bf16.msra.mxu0 0
        %3369 = vmatprep.subr.bf16.mxu0 0
        %3370 = vmatpush1.bf16.msra.mxu0 0
        %3371 = vmatprep.subr.bf16.mxu0 0
        %3372 = vmatpush1.bf16.msra.mxu0 0
        %3373 = vmatprep.subr.bf16.mxu0 0
        %3374 = vmatpush1.bf16.msra.mxu0 0
        %3375 = vmatprep.subr.bf16.mxu0 0
        %3376 = vmatpush1.bf16.msra.mxu0 0
        %3377 = vmatprep.subr.bf16.mxu0 0
        %3378 = vmatpush1.bf16.msra.mxu0 0
        %3379 = vmatprep.mubr.f32.mxu0 0.0
        %3380 = vmatmul.mubr.f32.gmra.mrb[0].mxu0 %v3339
        %v3381 = vpop.f32.mrb[0].mxu0
        %v3382 = vadd.f32 0.0, %v3381
        %v3383 = vpop.f32.mrb[0].mxu0
        %3384 = vmatprep.mubr.f32.mxu0 0.0
        %3385 = vmatmul.mubr.f32.gmra.mrb[0].mxu0 %v3342
        %v3386 = vpop.f32.mrb[0].mxu0
        %v3387 = vadd.f32 0.0, %v3386
        %v3388 = vpop.f32.mrb[0].mxu0
        %3389 = vdwg.mxu0
        %v3390 = vadd.f32 %v2928, %v3382
        %v3391 = vadd.f32 %v2929, %v3387
        %v3392 = vld [vmem:[%s1390] sm:$0x1]
        %v3394 = vlaneseq
        %v3395 = vshrl.u32 %v3394, 7
        %v3396 = vsub.s32 0, %v3395
        %v3397 = vrot.slane %v3392, %v3396
        %v3399 = vadd.f32 %v3390, %v3397
        %v3400 = vadd.f32 %v3391, %v3397
        %v3401 = vadd.f32 %v1541, %v3399
        %v3402 = vadd.f32 %v1542, %v3400
        %v3403 = vld [vmem:[%s1483] sm:$0x1]
        %s3404 = scalar_lea.vmem %s1483, 1
        %v3405 = vld [vmem:[%s3404] sm:$0x1]
        %v3406 = vsel %vm1568, %v3401, 0.0
        %3407 = vadd.xlane.f32.xlu0 %v3406
        %v3408 = vpop.xlane.xlu0 %3407
        %v3409 = vsel %vm1568, %v3402, 0.0
        %3410 = vadd.xlane.f32.xlu0 %v3409
        %v3411 = vpop.xlane.xlu0 %3410
        %v3412 = vrcp.pop 32.0
        %v3413 = vmul.f32 %v3408, %v3412
        %v3414 = vmul.f32 %v3411, %v3412
        %v3415 = vsub.f32 %v3401, %v3413
        %v3416 = vsub.f32 %v3402, %v3414
        %v3417 = vmul.f32 %v3415, %v3415
        %v3418 = vmul.f32 %v3416, %v3416
        %v3419 = vsel %vm1568, %v3417, 0.0
        %3420 = vadd.xlane.f32.xlu0 %v3419
        %v3421 = vpop.xlane.xlu0 %3420
        %v3422 = vsel %vm1568, %v3418, 0.0
        %3423 = vadd.xlane.f32.xlu0 %v3422
        %v3424 = vpop.xlane.xlu0 %3423
        %v3425 = vmul.f32 %v3421, %v3412
        %v3426 = vmul.f32 %v3424, %v3412
        %v3427 = vadd.f32 %v3425, 1e-05
        %v3428 = vadd.f32 %v3426, 1e-05
        %v3429 = vrsqrt.pop %v3427
        %v3430 = vrsqrt.pop %v3428
        %v3431 = vmul.f32 %v3415, %v3429
        %v3432 = vmul.f32 %v3416, %v3430
        %v3434 = vlaneseq
        %v3435 = vshrl.u32 %v3434, 7
        %v3436 = vsub.s32 0, %v3435
        %v3437 = vrot.slane %v3403, %v3436
        %v3439 = vmul.f32 %v3431, %v3437
        %v3440 = vmul.f32 %v3432, %v3437
        %v3442 = vlaneseq
        %v3443 = vshrl.u32 %v3442, 7
        %v3444 = vsub.s32 0, %v3443
        %v3445 = vrot.slane %v3405, %v3444
        %v3447 = vadd.f32 %v3439, %v3445
        %v3448 = vadd.f32 %v3440, %v3445
        %v3449 = vld [vmem:[%s1395] sm:$0xf]
        %v3450 = vld [vmem:[%s1395 + $0x4] sm:$0xf]
        %v3451 = vld [vmem:[%s1395 + $0x8] sm:$0xf]
        %v3452 = vld [vmem:[%s1395 + $0xc] sm:$0xf]
        %v3453 = vld [vmem:[%s1414] sm:$0x1]
        %v3455 = vlaneseq
        %v3456 = vshrl.u32 %v3455, 7
        %v3457 = vsub.s32 0, %v3456
        %v3458 = vrot.slane %v3453, %v3457
        %v3464 = vunpack.c.l.b16 %v3449
        %v3465 = vunpack.c.l.b16 %v3450
        %v3466 = vunpack.c.l.b16 %v3451
        %v3467 = vunpack.c.l.b16 %v3452
        %v3468 = vpack.c.b16 %v3465, %v3464
        %v3469 = vpack.c.b16 %v3467, %v3466
        %v3473 = vsel %vm1568, %v1543, 0
        %v3476 = vsel %vm1568, %v1544, 0
        %3478 = vmatprep.subr.bf16.mxu0 0
        %3479 = vmatpush1.bf16.msra.mxu0 %v3468
        %3480 = vmatprep.subr.bf16.mxu0 0
        %3481 = vmatpush1.bf16.msra.mxu0 %v3469
        %3482 = vmatprep.subr.bf16.mxu0 0
        %3483 = vmatpush1.bf16.msra.mxu0 0
        %3484 = vmatprep.subr.bf16.mxu0 0
        %3485 = vmatpush1.bf16.msra.mxu0 0
        %3486 = vmatprep.subr.bf16.mxu0 0
        %3487 = vmatpush1.bf16.msra.mxu0 0
        %3488 = vmatprep.subr.bf16.mxu0 0
        %3489 = vmatpush1.bf16.msra.mxu0 0
        %3490 = vmatprep.subr.bf16.mxu0 0
        %3491 = vmatpush1.bf16.msra.mxu0 0
        %3492 = vmatprep.subr.bf16.mxu0 0
        %3493 = vmatpush1.bf16.msra.mxu0 0
        %3494 = vmatprep.subr.bf16.mxu0 0
        %3495 = vmatpush1.bf16.msra.mxu0 0
        %3496 = vmatprep.subr.bf16.mxu0 0
        %3497 = vmatpush1.bf16.msra.mxu0 0
        %3498 = vmatprep.subr.bf16.mxu0 0
        %3499 = vmatpush1.bf16.msra.mxu0 0
        %3500 = vmatprep.subr.bf16.mxu0 0
        %3501 = vmatpush1.bf16.msra.mxu0 0
        %3502 = vmatprep.subr.bf16.mxu0 0
        %3503 = vmatpush1.bf16.msra.mxu0 0
        %3504 = vmatprep.subr.bf16.mxu0 0
        %3505 = vmatpush1.bf16.msra.mxu0 0
        %3506 = vmatprep.subr.bf16.mxu0 0
        %3507 = vmatpush1.bf16.msra.mxu0 0
        %3508 = vmatprep.subr.bf16.mxu0 0
        %3509 = vmatpush1.bf16.msra.mxu0 0
        %3510 = vmatprep.mubr.f32.mxu0 0.0
        %3511 = vmatmul.mubr.f32.gmra.mrb[0].mxu0 %v3473
        %v3512 = vpop.f32.mrb[0].mxu0
        %v3513 = vadd.f32 %v3458, %v3512
        %v3514 = vpop.f32.mrb[0].mxu0
        %3515 = vmatprep.mubr.f32.mxu0 0.0
        %3516 = vmatmul.mubr.f32.gmra.mrb[0].mxu0 %v3476
        %v3517 = vpop.f32.mrb[0].mxu0
        %v3518 = vadd.f32 %v3458, %v3517
        %v3519 = vpop.f32.mrb[0].mxu0
        %3520 = vdwg.mxu0
        %v3521 = vld [vmem:[%s1400] sm:$0xf]
        %v3522 = vld [vmem:[%s1419] sm:$0xff]
        %3524 = vset.pattern.permute.xlu0 0
        %3525 = vperm.xlu0 %3524, %v3522
        %v3526 = vpop.permute.xlu0 %3525
        %v3529 = vsel %vm1568, %v3521, 0
        %3531 = vmatprep.subr.mxu0 0.0
        %3532 = vmatpush1.xpose.msra.mxu0 %v3473
        %3533 = vmatprep.subr.mxu0 0.0
        %3534 = vmatpush1.xpose.msra.mxu0 %v3476
        %3535 = vmatprep.subr.mxu0 0.0
        %3536 = vmatpush1.xpose.msra.mxu0 0.0
        %3537 = vmatprep.subr.mxu0 0.0
        %3538 = vmatpush1.xpose.msra.mxu0 0.0
        %3539 = vmatprep.subr.mxu0 0.0
        %3540 = vmatpush1.xpose.msra.mxu0 0.0
        %3541 = vmatprep.subr.mxu0 0.0
        %3542 = vmatpush1.xpose.msra.mxu0 0.0
        %3543 = vmatprep.subr.mxu0 0.0
        %3544 = vmatpush1.xpose.msra.mxu0 0.0
        %3545 = vmatprep.subr.mxu0 0.0
        %3546 = vmatpush1.xpose.msra.mxu0 0.0
        %3547 = vmatprep.subr.mxu0 0.0
        %3548 = vmatpush1.xpose.msra.mxu0 0.0
        %3549 = vmatprep.subr.mxu0 0.0
        %3550 = vmatpush1.xpose.msra.mxu0 0.0
        %3551 = vmatprep.subr.mxu0 0.0
        %3552 = vmatpush1.xpose.msra.mxu0 0.0
        %3553 = vmatprep.subr.mxu0 0.0
        %3554 = vmatpush1.xpose.msra.mxu0 0.0
        %3555 = vmatprep.subr.mxu0 0.0
        %3556 = vmatpush1.xpose.msra.mxu0 0.0
        %3557 = vmatprep.subr.mxu0 0.0
        %3558 = vmatpush1.xpose.msra.mxu0 0.0
        %3559 = vmatprep.subr.mxu0 0.0
        %3560 = vmatpush1.xpose.msra.mxu0 0.0
        %3561 = vmatprep.subr.mxu0 0.0
        %3562 = vmatpush1.xpose.msra.mxu0 0.0
        %3563 = vmatprep.subr.mxu0 0.0
        %3564 = vmatpush1.xpose.msra.mxu0 0.0
        %3565 = vmatprep.subr.mxu0 0.0
        %3566 = vmatpush1.xpose.msra.mxu0 0.0
        %3567 = vmatprep.subr.mxu0 0.0
        %3568 = vmatpush1.xpose.msra.mxu0 0.0
        %3569 = vmatprep.subr.mxu0 0.0
        %3570 = vmatpush1.xpose.msra.mxu0 0.0
        %3571 = vmatprep.subr.mxu0 0.0
        %3572 = vmatpush1.xpose.msra.mxu0 0.0
        %3573 = vmatprep.subr.mxu0 0.0
        %3574 = vmatpush1.xpose.msra.mxu0 0.0
        %3575 = vmatprep.subr.mxu0 0.0
        %3576 = vmatpush1.xpose.msra.mxu0 0.0
        %3577 = vmatprep.subr.mxu0 0.0
        %3578 = vmatpush1.xpose.msra.mxu0 0.0
        %3579 = vmatprep.subr.mxu0 0.0
        %3580 = vmatpush1.xpose.msra.mxu0 0.0
        %3581 = vmatprep.subr.mxu0 0.0
        %3582 = vmatpush1.xpose.msra.mxu0 0.0
        %3583 = vmatprep.subr.mxu0 0.0
        %3584 = vmatpush1.xpose.msra.mxu0 0.0
        %3585 = vmatprep.subr.mxu0 0.0
        %3586 = vmatpush1.xpose.msra.mxu0 0.0
        %3587 = vmatprep.subr.mxu0 0.0
        %3588 = vmatpush1.xpose.msra.mxu0 0.0
        %3589 = vmatprep.subr.mxu0 0.0
        %3590 = vmatpush1.xpose.msra.mxu0 0.0
        %3591 = vmatprep.subr.mxu0 0.0
        %3592 = vmatpush1.xpose.msra.mxu0 0.0
        %3593 = vmatprep.subr.mxu0 0.0
        %3594 = vmatpush1.xpose.msra.mxu0 0.0
        %3595 = vmatprep.mubr.bf16.mxu0 0
        %3596 = vmatmul.mubr.bf16.gmra.mrb[0].mxu0 %v3529
        %v3597 = vpop.f32.mrb[0].mxu0
        %v3598 = vadd.f32 %v3526, %v3597
        %v3599 = vpop.f32.mrb[0].mxu0
        %v3600 = vpop.f32.mrb[0].mxu0
        %v3601 = vpop.f32.mrb[0].mxu0
        %3602 = vdwg.mxu0
        %v3604 = vsel %vm1700, %v3513, 0
        %v3607 = vsel %vm1700, %v3518, 0
        %3609 = vmatprep.subr.mxu0 0.0
        %3610 = vmatpush1.msra.mxu0 %v3598
        %3611 = vmatprep.subr.mxu0 0.0
        %3612 = vmatpush1.msra.mxu0 0.0
        %3613 = vmatprep.subr.mxu0 0.0
        %3614 = vmatpush1.msra.mxu0 0.0
        %3615 = vmatprep.subr.mxu0 0.0
        %3616 = vmatpush1.msra.mxu0 0.0
        %3617 = vmatprep.subr.mxu0 0.0
        %3618 = vmatpush1.msra.mxu0 0.0
        %3619 = vmatprep.subr.mxu0 0.0
        %3620 = vmatpush1.msra.mxu0 0.0
        %3621 = vmatprep.subr.mxu0 0.0
        %3622 = vmatpush1.msra.mxu0 0.0
        %3623 = vmatprep.subr.mxu0 0.0
        %3624 = vmatpush1.msra.mxu0 0.0
        %3625 = vmatprep.subr.mxu0 0.0
        %3626 = vmatpush1.msra.mxu0 0.0
        %3627 = vmatprep.subr.mxu0 0.0
        %3628 = vmatpush1.msra.mxu0 0.0
        %3629 = vmatprep.subr.mxu0 0.0
        %3630 = vmatpush1.msra.mxu0 0.0
        %3631 = vmatprep.subr.mxu0 0.0
        %3632 = vmatpush1.msra.mxu0 0.0
        %3633 = vmatprep.subr.mxu0 0.0
        %3634 = vmatpush1.msra.mxu0 0.0
        %3635 = vmatprep.subr.mxu0 0.0
        %3636 = vmatpush1.msra.mxu0 0.0
        %3637 = vmatprep.subr.mxu0 0.0
        %3638 = vmatpush1.msra.mxu0 0.0
        %3639 = vmatprep.subr.mxu0 0.0
        %3640 = vmatpush1.msra.mxu0 0.0
        %3641 = vmatprep.subr.mxu0 0.0
        %3642 = vmatpush1.msra.mxu0 0.0
        %3643 = vmatprep.subr.mxu0 0.0
        %3644 = vmatpush1.msra.mxu0 0.0
        %3645 = vmatprep.subr.mxu0 0.0
        %3646 = vmatpush1.msra.mxu0 0.0
        %3647 = vmatprep.subr.mxu0 0.0
        %3648 = vmatpush1.msra.mxu0 0.0
        %3649 = vmatprep.subr.mxu0 0.0
        %3650 = vmatpush1.msra.mxu0 0.0
        %3651 = vmatprep.subr.mxu0 0.0
        %3652 = vmatpush1.msra.mxu0 0.0
        %3653 = vmatprep.subr.mxu0 0.0
        %3654 = vmatpush1.msra.mxu0 0.0
        %3655 = vmatprep.subr.mxu0 0.0
        %3656 = vmatpush1.msra.mxu0 0.0
        %3657 = vmatprep.subr.mxu0 0.0
        %3658 = vmatpush1.msra.mxu0 0.0
        %3659 = vmatprep.subr.mxu0 0.0
        %3660 = vmatpush1.msra.mxu0 0.0
        %3661 = vmatprep.subr.mxu0 0.0
        %3662 = vmatpush1.msra.mxu0 0.0
        %3663 = vmatprep.subr.mxu0 0.0
        %3664 = vmatpush1.msra.mxu0 0.0
        %3665 = vmatprep.subr.mxu0 0.0
        %3666 = vmatpush1.msra.mxu0 0.0
        %3667 = vmatprep.subr.mxu0 0.0
        %3668 = vmatpush1.msra.mxu0 0.0
        %3669 = vmatprep.subr.mxu0 0.0
        %3670 = vmatpush1.msra.mxu0 0.0
        %3671 = vmatprep.subr.mxu0 0.0
        %3672 = vmatpush1.msra.mxu0 0.0
        %3673 = vmatprep.mubr.f32.mxu0 0.0
        %3674 = vmatmul.mubr.f32.gmra.mrb[0].mxu0 %v3604
        %v3675 = vpop.f32.mrb[0].mxu0
        %v3676 = vadd.f32 0.0, %v3675
        %v3677 = vpop.f32.mrb[0].mxu0
        %3678 = vmatprep.mubr.f32.mxu0 0.0
        %3679 = vmatmul.mubr.f32.gmra.mrb[0].mxu0 %v3607
        %v3680 = vpop.f32.mrb[0].mxu0
        %v3681 = vadd.f32 0.0, %v3680
        %v3682 = vpop.f32.mrb[0].mxu0
        %3683 = vdwg.mxu0
        %v3684 = vsel %vm1539, %v3676, -1e+30
        %v3685 = vsel %vm1540, %v3681, -1e+30
        %v3686 = vsel %vm1784, %v3684, -inf
        %3687 = vmax.xlane.f32.xlu0 %v3686
        %v3688 = vpop.xlane.xlu0 %3687
        %v3689 = vsel %vm1784, %v3685, -inf
        %3690 = vmax.xlane.f32.xlu0 %v3689
        %v3691 = vpop.xlane.xlu0 %3690
        %v3692 = vsub.f32 %v3684, %v3688
        %v3693 = vsub.f32 %v3685, %v3691
        %v3694 = vmul.f32 %v3692, 1.442695
        %v3695 = vpow.pop %v3694
        %v3696 = vmul.f32 %v3693, 1.442695
        %v3697 = vpow.pop %v3696
        %v3698 = vsel %vm1784, %v3695, 0.0
        %3699 = vadd.xlane.f32.xlu0 %v3698
        %v3700 = vpop.xlane.xlu0 %3699
        %v3701 = vsel %vm1784, %v3697, 0.0
        %3702 = vadd.xlane.f32.xlu0 %v3701
        %v3703 = vpop.xlane.xlu0 %3702
        %v3704 = vrcp.pop %v3700
        %v3705 = vrcp.pop %v3703
        %v3706 = vmul.f32 %v3695, %v3704
        %v3707 = vmul.f32 %v3697, %v3705
        %v3708 = vld [vmem:[%s1405] sm:$0xf]
        %v3709 = vld [vmem:[%s1405 + $0x4] sm:$0xf]
        %v3710 = vld [vmem:[%s1405 + $0x8] sm:$0xf]
        %v3711 = vld [vmem:[%s1405 + $0xc] sm:$0xf]
        %v3712 = vld [vmem:[%s1423] sm:$0x1]
        %v3714 = vlaneseq
        %v3715 = vshrl.u32 %v3714, 7
        %v3716 = vsub.s32 0, %v3715
        %v3717 = vrot.slane %v3712, %v3716
        %v3723 = vunpack.c.l.b16 %v3708
        %v3724 = vunpack.c.l.b16 %v3709
        %v3725 = vunpack.c.l.b16 %v3710
        %v3726 = vunpack.c.l.b16 %v3711
        %v3727 = vpack.c.b16 %v3724, %v3723
        %v3728 = vpack.c.b16 %v3726, %v3725
        %3731 = vmatprep.subr.bf16.mxu0 0
        %3732 = vmatpush1.bf16.msra.mxu0 %v3727
        %3733 = vmatprep.subr.bf16.mxu0 0
        %3734 = vmatpush1.bf16.msra.mxu0 %v3728
        %3735 = vmatprep.subr.bf16.mxu0 0
        %3736 = vmatpush1.bf16.msra.mxu0 0
        %3737 = vmatprep.subr.bf16.mxu0 0
        %3738 = vmatpush1.bf16.msra.mxu0 0
        %3739 = vmatprep.subr.bf16.mxu0 0
        %3740 = vmatpush1.bf16.msra.mxu0 0
        %3741 = vmatprep.subr.bf16.mxu0 0
        %3742 = vmatpush1.bf16.msra.mxu0 0
        %3743 = vmatprep.subr.bf16.mxu0 0
        %3744 = vmatpush1.bf16.msra.mxu0 0
        %3745 = vmatprep.subr.bf16.mxu0 0
        %3746 = vmatpush1.bf16.msra.mxu0 0
        %3747 = vmatprep.subr.bf16.mxu0 0
        %3748 = vmatpush1.bf16.msra.mxu0 0
        %3749 = vmatprep.subr.bf16.mxu0 0
        %3750 = vmatpush1.bf16.msra.mxu0 0
        %3751 = vmatprep.subr.bf16.mxu0 0
        %3752 = vmatpush1.bf16.msra.mxu0 0
        %3753 = vmatprep.subr.bf16.mxu0 0
        %3754 = vmatpush1.bf16.msra.mxu0 0
        %3755 = vmatprep.subr.bf16.mxu0 0
        %3756 = vmatpush1.bf16.msra.mxu0 0
        %3757 = vmatprep.subr.bf16.mxu0 0
        %3758 = vmatpush1.bf16.msra.mxu0 0
        %3759 = vmatprep.subr.bf16.mxu0 0
        %3760 = vmatpush1.bf16.msra.mxu0 0
        %3761 = vmatprep.subr.bf16.mxu0 0
        %3762 = vmatpush1.bf16.msra.mxu0 0
        %3763 = vmatprep.mubr.f32.mxu0 0.0
        %3764 = vmatmul.mubr.f32.gmra.mrb[0].mxu0 %v3473
        %v3765 = vpop.f32.mrb[0].mxu0
        %v3766 = vadd.f32 %v3717, %v3765
        %v3767 = vpop.f32.mrb[0].mxu0
        %3768 = vmatprep.mubr.f32.mxu0 0.0
        %3769 = vmatmul.mubr.f32.gmra.mrb[0].mxu0 %v3476
        %v3770 = vpop.f32.mrb[0].mxu0
        %v3771 = vadd.f32 %v3717, %v3770
        %v3772 = vpop.f32.mrb[0].mxu0
        %3773 = vdwg.mxu0
        %v3775 = vsel %vm1784, %v3706, 0
        %v3778 = vsel %vm1784, %v3707, 0
        %3780 = vmatprep.subr.mxu0 0.0
        %3781 = vmatpush1.msra.mxu0 %v3766
        %3782 = vmatprep.subr.mxu0 0.0
        %3783 = vmatpush1.msra.mxu0 %v3771
        %3784 = vmatprep.subr.mxu0 0.0
        %3785 = vmatpush1.msra.mxu0 0.0
        %3786 = vmatprep.subr.mxu0 0.0
        %3787 = vmatpush1.msra.mxu0 0.0
        %3788 = vmatprep.subr.mxu0 0.0
        %3789 = vmatpush1.msra.mxu0 0.0
        %3790 = vmatprep.subr.mxu0 0.0
        %3791 = vmatpush1.msra.mxu0 0.0
        %3792 = vmatprep.subr.mxu0 0.0
        %3793 = vmatpush1.msra.mxu0 0.0
        %3794 = vmatprep.subr.mxu0 0.0
        %3795 = vmatpush1.msra.mxu0 0.0
        %3796 = vmatprep.subr.mxu0 0.0
        %3797 = vmatpush1.msra.mxu0 0.0
        %3798 = vmatprep.subr.mxu0 0.0
        %3799 = vmatpush1.msra.mxu0 0.0
        %3800 = vmatprep.subr.mxu0 0.0
        %3801 = vmatpush1.msra.mxu0 0.0
        %3802 = vmatprep.subr.mxu0 0.0
        %3803 = vmatpush1.msra.mxu0 0.0
        %3804 = vmatprep.subr.mxu0 0.0
        %3805 = vmatpush1.msra.mxu0 0.0
        %3806 = vmatprep.subr.mxu0 0.0
        %3807 = vmatpush1.msra.mxu0 0.0
        %3808 = vmatprep.subr.mxu0 0.0
        %3809 = vmatpush1.msra.mxu0 0.0
        %3810 = vmatprep.subr.mxu0 0.0
        %3811 = vmatpush1.msra.mxu0 0.0
        %3812 = vmatprep.subr.mxu0 0.0
        %3813 = vmatpush1.msra.mxu0 0.0
        %3814 = vmatprep.subr.mxu0 0.0
        %3815 = vmatpush1.msra.mxu0 0.0
        %3816 = vmatprep.subr.mxu0 0.0
        %3817 = vmatpush1.msra.mxu0 0.0
        %3818 = vmatprep.subr.mxu0 0.0
        %3819 = vmatpush1.msra.mxu0 0.0
        %3820 = vmatprep.subr.mxu0 0.0
        %3821 = vmatpush1.msra.mxu0 0.0
        %3822 = vmatprep.subr.mxu0 0.0
        %3823 = vmatpush1.msra.mxu0 0.0
        %3824 = vmatprep.subr.mxu0 0.0
        %3825 = vmatpush1.msra.mxu0 0.0
        %3826 = vmatprep.subr.mxu0 0.0
        %3827 = vmatpush1.msra.mxu0 0.0
        %3828 = vmatprep.subr.mxu0 0.0
        %3829 = vmatpush1.msra.mxu0 0.0
        %3830 = vmatprep.subr.mxu0 0.0
        %3831 = vmatpush1.msra.mxu0 0.0
        %3832 = vmatprep.subr.mxu0 0.0
        %3833 = vmatpush1.msra.mxu0 0.0
        %3834 = vmatprep.subr.mxu0 0.0
        %3835 = vmatpush1.msra.mxu0 0.0
        %3836 = vmatprep.subr.mxu0 0.0
        %3837 = vmatpush1.msra.mxu0 0.0
        %3838 = vmatprep.subr.mxu0 0.0
        %3839 = vmatpush1.msra.mxu0 0.0
        %3840 = vmatprep.subr.mxu0 0.0
        %3841 = vmatpush1.msra.mxu0 0.0
        %3842 = vmatprep.subr.mxu0 0.0
        %3843 = vmatpush1.msra.mxu0 0.0
        %3844 = vmatprep.mubr.f32.mxu0 0.0
        %3845 = vmatmul.mubr.f32.gmra.mrb[0].mxu0 %v3775
        %v3846 = vpop.f32.mrb[0].mxu0
        %v3847 = vadd.f32 0.0, %v3846
        %v3848 = vpop.f32.mrb[0].mxu0
        %3849 = vmatprep.mubr.f32.mxu0 0.0
        %3850 = vmatmul.mubr.f32.gmra.mrb[0].mxu0 %v3778
        %v3851 = vpop.f32.mrb[0].mxu0
        %v3852 = vadd.f32 0.0, %v3851
        %v3853 = vpop.f32.mrb[0].mxu0
        %3854 = vdwg.mxu0
        %v3855 = vld [vmem:[%s1410] sm:$0xf]
        %s3856 = scalar_lea.vmem %s1395, 16
        %v3857 = vld [vmem:[%s3856] sm:$0xf]
        %v3858 = vld [vmem:[%s3856 + $0x4] sm:$0xf]
        %v3859 = vld [vmem:[%s3856 + $0x8] sm:$0xf]
        %v3860 = vld [vmem:[%s3856 + $0xc] sm:$0xf]
        %s3861 = scalar_lea.vmem %s1414, 1
        %v3862 = vld [vmem:[%s3861] sm:$0x1]
        %v3864 = vlaneseq
        %v3865 = vshrl.u32 %v3864, 7
        %v3866 = vsub.s32 0, %v3865
        %v3867 = vrot.slane %v3862, %v3866
        %v3873 = vunpack.c.l.b16 %v3857
        %v3874 = vunpack.c.l.b16 %v3858
        %v3875 = vunpack.c.l.b16 %v3859
        %v3876 = vunpack.c.l.b16 %v3860
        %v3877 = vpack.c.b16 %v3874, %v3873
        %v3878 = vpack.c.b16 %v3876, %v3875
        %3881 = vmatprep.subr.bf16.mxu0 0
        %3882 = vmatpush1.bf16.msra.mxu0 %v3877
        %3883 = vmatprep.subr.bf16.mxu0 0
        %3884 = vmatpush1.bf16.msra.mxu0 %v3878
        %3885 = vmatprep.subr.bf16.mxu0 0
        %3886 = vmatpush1.bf16.msra.mxu0 0
        %3887 = vmatprep.subr.bf16.mxu0 0
        %3888 = vmatpush1.bf16.msra.mxu0 0
        %3889 = vmatprep.subr.bf16.mxu0 0
        %3890 = vmatpush1.bf16.msra.mxu0 0
        %3891 = vmatprep.subr.bf16.mxu0 0
        %3892 = vmatpush1.bf16.msra.mxu0 0
        %3893 = vmatprep.subr.bf16.mxu0 0
        %3894 = vmatpush1.bf16.msra.mxu0 0
        %3895 = vmatprep.subr.bf16.mxu0 0
        %3896 = vmatpush1.bf16.msra.mxu0 0
        %3897 = vmatprep.subr.bf16.mxu0 0
        %3898 = vmatpush1.bf16.msra.mxu0 0
        %3899 = vmatprep.subr.bf16.mxu0 0
        %3900 = vmatpush1.bf16.msra.mxu0 0
        %3901 = vmatprep.subr.bf16.mxu0 0
        %3902 = vmatpush1.bf16.msra.mxu0 0
        %3903 = vmatprep.subr.bf16.mxu0 0
        %3904 = vmatpush1.bf16.msra.mxu0 0
        %3905 = vmatprep.subr.bf16.mxu0 0
        %3906 = vmatpush1.bf16.msra.mxu0 0
        %3907 = vmatprep.subr.bf16.mxu0 0
        %3908 = vmatpush1.bf16.msra.mxu0 0
        %3909 = vmatprep.subr.bf16.mxu0 0
        %3910 = vmatpush1.bf16.msra.mxu0 0
        %3911 = vmatprep.subr.bf16.mxu0 0
        %3912 = vmatpush1.bf16.msra.mxu0 0
        %3913 = vmatprep.mubr.f32.mxu0 0.0
        %3914 = vmatmul.mubr.f32.gmra.mrb[0].mxu0 %v3473
        %v3915 = vpop.f32.mrb[0].mxu0
        %v3916 = vadd.f32 %v3867, %v3915
        %v3917 = vpop.f32.mrb[0].mxu0
        %3918 = vmatprep.mubr.f32.mxu0 0.0
        %3919 = vmatmul.mubr.f32.gmra.mrb[0].mxu0 %v3476
        %v3920 = vpop.f32.mrb[0].mxu0
        %v3921 = vadd.f32 %v3867, %v3920
        %v3922 = vpop.f32.mrb[0].mxu0
        %3923 = vdwg.mxu0
        %s3924 = scalar_lea.vmem %s1400, 4
        %v3925 = vld [vmem:[%s3924] sm:$0xf]
        %s3926 = scalar_lea.vmem %s1419, 8
        %v3927 = vld [vmem:[%s3926] sm:$0xff]
        %3929 = vset.pattern.permute.xlu0 0
        %3930 = vperm.xlu0 %3929, %v3927
        %v3931 = vpop.permute.xlu0 %3930
        %v3934 = vsel %vm1568, %v3925, 0
        %3936 = vmatprep.subr.mxu0 0.0
        %3937 = vmatpush1.xpose.msra.mxu0 %v3473
        %3938 = vmatprep.subr.mxu0 0.0
        %3939 = vmatpush1.xpose.msra.mxu0 %v3476
        %3940 = vmatprep.subr.mxu0 0.0
        %3941 = vmatpush1.xpose.msra.mxu0 0.0
        %3942 = vmatprep.subr.mxu0 0.0
        %3943 = vmatpush1.xpose.msra.mxu0 0.0
        %3944 = vmatprep.subr.mxu0 0.0
        %3945 = vmatpush1.xpose.msra.mxu0 0.0
        %3946 = vmatprep.subr.mxu0 0.0
        %3947 = vmatpush1.xpose.msra.mxu0 0.0
        %3948 = vmatprep.subr.mxu0 0.0
        %3949 = vmatpush1.xpose.msra.mxu0 0.0
        %3950 = vmatprep.subr.mxu0 0.0
        %3951 = vmatpush1.xpose.msra.mxu0 0.0
        %3952 = vmatprep.subr.mxu0 0.0
        %3953 = vmatpush1.xpose.msra.mxu0 0.0
        %3954 = vmatprep.subr.mxu0 0.0
        %3955 = vmatpush1.xpose.msra.mxu0 0.0
        %3956 = vmatprep.subr.mxu0 0.0
        %3957 = vmatpush1.xpose.msra.mxu0 0.0
        %3958 = vmatprep.subr.mxu0 0.0
        %3959 = vmatpush1.xpose.msra.mxu0 0.0
        %3960 = vmatprep.subr.mxu0 0.0
        %3961 = vmatpush1.xpose.msra.mxu0 0.0
        %3962 = vmatprep.subr.mxu0 0.0
        %3963 = vmatpush1.xpose.msra.mxu0 0.0
        %3964 = vmatprep.subr.mxu0 0.0
        %3965 = vmatpush1.xpose.msra.mxu0 0.0
        %3966 = vmatprep.subr.mxu0 0.0
        %3967 = vmatpush1.xpose.msra.mxu0 0.0
        %3968 = vmatprep.subr.mxu0 0.0
        %3969 = vmatpush1.xpose.msra.mxu0 0.0
        %3970 = vmatprep.subr.mxu0 0.0
        %3971 = vmatpush1.xpose.msra.mxu0 0.0
        %3972 = vmatprep.subr.mxu0 0.0
        %3973 = vmatpush1.xpose.msra.mxu0 0.0
        %3974 = vmatprep.subr.mxu0 0.0
        %3975 = vmatpush1.xpose.msra.mxu0 0.0
        %3976 = vmatprep.subr.mxu0 0.0
        %3977 = vmatpush1.xpose.msra.mxu0 0.0
        %3978 = vmatprep.subr.mxu0 0.0
        %3979 = vmatpush1.xpose.msra.mxu0 0.0
        %3980 = vmatprep.subr.mxu0 0.0
        %3981 = vmatpush1.xpose.msra.mxu0 0.0
        %3982 = vmatprep.subr.mxu0 0.0
        %3983 = vmatpush1.xpose.msra.mxu0 0.0
        %3984 = vmatprep.subr.mxu0 0.0
        %3985 = vmatpush1.xpose.msra.mxu0 0.0
        %3986 = vmatprep.subr.mxu0 0.0
        %3987 = vmatpush1.xpose.msra.mxu0 0.0
        %3988 = vmatprep.subr.mxu0 0.0
        %3989 = vmatpush1.xpose.msra.mxu0 0.0
        %3990 = vmatprep.subr.mxu0 0.0
        %3991 = vmatpush1.xpose.msra.mxu0 0.0
        %3992 = vmatprep.subr.mxu0 0.0
        %3993 = vmatpush1.xpose.msra.mxu0 0.0
        %3994 = vmatprep.subr.mxu0 0.0
        %3995 = vmatpush1.xpose.msra.mxu0 0.0
        %3996 = vmatprep.subr.mxu0 0.0
        %3997 = vmatpush1.xpose.msra.mxu0 0.0
        %3998 = vmatprep.subr.mxu0 0.0
        %3999 = vmatpush1.xpose.msra.mxu0 0.0
        %4000 = vmatprep.mubr.bf16.mxu0 0
        %4001 = vmatmul.mubr.bf16.gmra.mrb[0].mxu0 %v3934
        %v4002 = vpop.f32.mrb[0].mxu0
        %v4003 = vadd.f32 %v3931, %v4002
        %v4004 = vpop.f32.mrb[0].mxu0
        %v4005 = vpop.f32.mrb[0].mxu0
        %v4006 = vpop.f32.mrb[0].mxu0
        %4007 = vdwg.mxu0
        %v4009 = vsel %vm1700, %v3916, 0
        %v4012 = vsel %vm1700, %v3921, 0
        %4014 = vmatprep.subr.mxu0 0.0
        %4015 = vmatpush1.msra.mxu0 %v4003
        %4016 = vmatprep.subr.mxu0 0.0
        %4017 = vmatpush1.msra.mxu0 0.0
        %4018 = vmatprep.subr.mxu0 0.0
        %4019 = vmatpush1.msra.mxu0 0.0
        %4020 = vmatprep.subr.mxu0 0.0
        %4021 = vmatpush1.msra.mxu0 0.0
        %4022 = vmatprep.subr.mxu0 0.0
        %4023 = vmatpush1.msra.mxu0 0.0
        %4024 = vmatprep.subr.mxu0 0.0
        %4025 = vmatpush1.msra.mxu0 0.0
        %4026 = vmatprep.subr.mxu0 0.0
        %4027 = vmatpush1.msra.mxu0 0.0
        %4028 = vmatprep.subr.mxu0 0.0
        %4029 = vmatpush1.msra.mxu0 0.0
        %4030 = vmatprep.subr.mxu0 0.0
        %4031 = vmatpush1.msra.mxu0 0.0
        %4032 = vmatprep.subr.mxu0 0.0
        %4033 = vmatpush1.msra.mxu0 0.0
        %4034 = vmatprep.subr.mxu0 0.0
        %4035 = vmatpush1.msra.mxu0 0.0
        %4036 = vmatprep.subr.mxu0 0.0
        %4037 = vmatpush1.msra.mxu0 0.0
        %4038 = vmatprep.subr.mxu0 0.0
        %4039 = vmatpush1.msra.mxu0 0.0
        %4040 = vmatprep.subr.mxu0 0.0
        %4041 = vmatpush1.msra.mxu0 0.0
        %4042 = vmatprep.subr.mxu0 0.0
        %4043 = vmatpush1.msra.mxu0 0.0
        %4044 = vmatprep.subr.mxu0 0.0
        %4045 = vmatpush1.msra.mxu0 0.0
        %4046 = vmatprep.subr.mxu0 0.0
        %4047 = vmatpush1.msra.mxu0 0.0
        %4048 = vmatprep.subr.mxu0 0.0
        %4049 = vmatpush1.msra.mxu0 0.0
        %4050 = vmatprep.subr.mxu0 0.0
        %4051 = vmatpush1.msra.mxu0 0.0
        %4052 = vmatprep.subr.mxu0 0.0
        %4053 = vmatpush1.msra.mxu0 0.0
        %4054 = vmatprep.subr.mxu0 0.0
        %4055 = vmatpush1.msra.mxu0 0.0
        %4056 = vmatprep.subr.mxu0 0.0
        %4057 = vmatpush1.msra.mxu0 0.0
        %4058 = vmatprep.subr.mxu0 0.0
        %4059 = vmatpush1.msra.mxu0 0.0
        %4060 = vmatprep.subr.mxu0 0.0
        %4061 = vmatpush1.msra.mxu0 0.0
        %4062 = vmatprep.subr.mxu0 0.0
        %4063 = vmatpush1.msra.mxu0 0.0
        %4064 = vmatprep.subr.mxu0 0.0
        %4065 = vmatpush1.msra.mxu0 0.0
        %4066 = vmatprep.subr.mxu0 0.0
        %4067 = vmatpush1.msra.mxu0 0.0
        %4068 = vmatprep.subr.mxu0 0.0
        %4069 = vmatpush1.msra.mxu0 0.0
        %4070 = vmatprep.subr.mxu0 0.0
        %4071 = vmatpush1.msra.mxu0 0.0
        %4072 = vmatprep.subr.mxu0 0.0
        %4073 = vmatpush1.msra.mxu0 0.0
        %4074 = vmatprep.subr.mxu0 0.0
        %4075 = vmatpush1.msra.mxu0 0.0
        %4076 = vmatprep.subr.mxu0 0.0
        %4077 = vmatpush1.msra.mxu0 0.0
        %4078 = vmatprep.mubr.f32.mxu0 0.0
        %4079 = vmatmul.mubr.f32.gmra.mrb[0].mxu0 %v4009
        %v4080 = vpop.f32.mrb[0].mxu0
        %v4081 = vadd.f32 0.0, %v4080
        %v4082 = vpop.f32.mrb[0].mxu0
        %4083 = vmatprep.mubr.f32.mxu0 0.0
        %4084 = vmatmul.mubr.f32.gmra.mrb[0].mxu0 %v4012
        %v4085 = vpop.f32.mrb[0].mxu0
        %v4086 = vadd.f32 0.0, %v4085
        %v4087 = vpop.f32.mrb[0].mxu0
        %4088 = vdwg.mxu0
        %v4089 = vsel %vm1539, %v4081, -1e+30
        %v4090 = vsel %vm1540, %v4086, -1e+30
        %v4091 = vsel %vm1784, %v4089, -inf
        %4092 = vmax.xlane.f32.xlu0 %v4091
        %v4093 = vpop.xlane.xlu0 %4092
        %v4094 = vsel %vm1784, %v4090, -inf
        %4095 = vmax.xlane.f32.xlu0 %v4094
        %v4096 = vpop.xlane.xlu0 %4095
        %v4097 = vsub.f32 %v4089, %v4093
        %v4098 = vsub.f32 %v4090, %v4096
        %v4099 = vmul.f32 %v4097, 1.442695
        %v4100 = vpow.pop %v4099
        %v4101 = vmul.f32 %v4098, 1.442695
        %v4102 = vpow.pop %v4101
        %v4103 = vsel %vm1784, %v4100, 0.0
        %4104 = vadd.xlane.f32.xlu0 %v4103
        %v4105 = vpop.xlane.xlu0 %4104
        %v4106 = vsel %vm1784, %v4102, 0.0
        %4107 = vadd.xlane.f32.xlu0 %v4106
        %v4108 = vpop.xlane.xlu0 %4107
        %v4109 = vrcp.pop %v4105
        %v4110 = vrcp.pop %v4108
        %v4111 = vmul.f32 %v4100, %v4109
        %v4112 = vmul.f32 %v4102, %v4110
        %s4113 = scalar_lea.vmem %s1405, 16
        %v4114 = vld [vmem:[%s4113] sm:$0xf]
        %v4115 = vld [vmem:[%s4113 + $0x4] sm:$0xf]
        %v4116 = vld [vmem:[%s4113 + $0x8] sm:$0xf]
        %v4117 = vld [vmem:[%s4113 + $0xc] sm:$0xf]
        %s4118 = scalar_lea.vmem %s1423, 1
        %v4119 = vld [vmem:[%s4118] sm:$0x1]
        %v4121 = vlaneseq
        %v4122 = vshrl.u32 %v4121, 7
        %v4123 = vsub.s32 0, %v4122
        %v4124 = vrot.slane %v4119, %v4123
        %v4130 = vunpack.c.l.b16 %v4114
        %v4131 = vunpack.c.l.b16 %v4115
        %v4132 = vunpack.c.l.b16 %v4116
        %v4133 = vunpack.c.l.b16 %v4117
        %v4134 = vpack.c.b16 %v4131, %v4130
        %v4135 = vpack.c.b16 %v4133, %v4132
        %4138 = vmatprep.subr.bf16.mxu0 0
        %4139 = vmatpush1.bf16.msra.mxu0 %v4134
        %4140 = vmatprep.subr.bf16.mxu0 0
        %4141 = vmatpush1.bf16.msra.mxu0 %v4135
        %4142 = vmatprep.subr.bf16.mxu0 0
        %4143 = vmatpush1.bf16.msra.mxu0 0
        %4144 = vmatprep.subr.bf16.mxu0 0
        %4145 = vmatpush1.bf16.msra.mxu0 0
        %4146 = vmatprep.subr.bf16.mxu0 0
        %4147 = vmatpush1.bf16.msra.mxu0 0
        %4148 = vmatprep.subr.bf16.mxu0 0
        %4149 = vmatpush1.bf16.msra.mxu0 0
        %4150 = vmatprep.subr.bf16.mxu0 0
        %4151 = vmatpush1.bf16.msra.mxu0 0
        %4152 = vmatprep.subr.bf16.mxu0 0
        %4153 = vmatpush1.bf16.msra.mxu0 0
        %4154 = vmatprep.subr.bf16.mxu0 0
        %4155 = vmatpush1.bf16.msra.mxu0 0
        %4156 = vmatprep.subr.bf16.mxu0 0
        %4157 = vmatpush1.bf16.msra.mxu0 0
        %4158 = vmatprep.subr.bf16.mxu0 0
        %4159 = vmatpush1.bf16.msra.mxu0 0
        %4160 = vmatprep.subr.bf16.mxu0 0
        %4161 = vmatpush1.bf16.msra.mxu0 0
        %4162 = vmatprep.subr.bf16.mxu0 0
        %4163 = vmatpush1.bf16.msra.mxu0 0
        %4164 = vmatprep.subr.bf16.mxu0 0
        %4165 = vmatpush1.bf16.msra.mxu0 0
        %4166 = vmatprep.subr.bf16.mxu0 0
        %4167 = vmatpush1.bf16.msra.mxu0 0
        %4168 = vmatprep.subr.bf16.mxu0 0
        %4169 = vmatpush1.bf16.msra.mxu0 0
        %4170 = vmatprep.mubr.f32.mxu0 0.0
        %4171 = vmatmul.mubr.f32.gmra.mrb[0].mxu0 %v3473
        %v4172 = vpop.f32.mrb[0].mxu0
        %v4173 = vadd.f32 %v4124, %v4172
        %v4174 = vpop.f32.mrb[0].mxu0
        %4175 = vmatprep.mubr.f32.mxu0 0.0
        %4176 = vmatmul.mubr.f32.gmra.mrb[0].mxu0 %v3476
        %v4177 = vpop.f32.mrb[0].mxu0
        %v4178 = vadd.f32 %v4124, %v4177
        %v4179 = vpop.f32.mrb[0].mxu0
        %4180 = vdwg.mxu0
        %v4182 = vsel %vm1784, %v4111, 0
        %v4185 = vsel %vm1784, %v4112, 0
        %4187 = vmatprep.subr.mxu0 0.0
        %4188 = vmatpush1.msra.mxu0 %v4173
        %4189 = vmatprep.subr.mxu0 0.0
        %4190 = vmatpush1.msra.mxu0 %v4178
        %4191 = vmatprep.subr.mxu0 0.0
        %4192 = vmatpush1.msra.mxu0 0.0
        %4193 = vmatprep.subr.mxu0 0.0
        %4194 = vmatpush1.msra.mxu0 0.0
        %4195 = vmatprep.subr.mxu0 0.0
        %4196 = vmatpush1.msra.mxu0 0.0
        %4197 = vmatprep.subr.mxu0 0.0
        %4198 = vmatpush1.msra.mxu0 0.0
        %4199 = vmatprep.subr.mxu0 0.0
        %4200 = vmatpush1.msra.mxu0 0.0
        %4201 = vmatprep.subr.mxu0 0.0
        %4202 = vmatpush1.msra.mxu0 0.0
        %4203 = vmatprep.subr.mxu0 0.0
        %4204 = vmatpush1.msra.mxu0 0.0
        %4205 = vmatprep.subr.mxu0 0.0
        %4206 = vmatpush1.msra.mxu0 0.0
        %4207 = vmatprep.subr.mxu0 0.0
        %4208 = vmatpush1.msra.mxu0 0.0
        %4209 = vmatprep.subr.mxu0 0.0
        %4210 = vmatpush1.msra.mxu0 0.0
        %4211 = vmatprep.subr.mxu0 0.0
        %4212 = vmatpush1.msra.mxu0 0.0
        %4213 = vmatprep.subr.mxu0 0.0
        %4214 = vmatpush1.msra.mxu0 0.0
        %4215 = vmatprep.subr.mxu0 0.0
        %4216 = vmatpush1.msra.mxu0 0.0
        %4217 = vmatprep.subr.mxu0 0.0
        %4218 = vmatpush1.msra.mxu0 0.0
        %4219 = vmatprep.subr.mxu0 0.0
        %4220 = vmatpush1.msra.mxu0 0.0
        %4221 = vmatprep.subr.mxu0 0.0
        %4222 = vmatpush1.msra.mxu0 0.0
        %4223 = vmatprep.subr.mxu0 0.0
        %4224 = vmatpush1.msra.mxu0 0.0
        %4225 = vmatprep.subr.mxu0 0.0
        %4226 = vmatpush1.msra.mxu0 0.0
        %4227 = vmatprep.subr.mxu0 0.0
        %4228 = vmatpush1.msra.mxu0 0.0
        %4229 = vmatprep.subr.mxu0 0.0
        %4230 = vmatpush1.msra.mxu0 0.0
        %4231 = vmatprep.subr.mxu0 0.0
        %4232 = vmatpush1.msra.mxu0 0.0
        %4233 = vmatprep.subr.mxu0 0.0
        %4234 = vmatpush1.msra.mxu0 0.0
        %4235 = vmatprep.subr.mxu0 0.0
        %4236 = vmatpush1.msra.mxu0 0.0
        %4237 = vmatprep.subr.mxu0 0.0
        %4238 = vmatpush1.msra.mxu0 0.0
        %4239 = vmatprep.subr.mxu0 0.0
        %4240 = vmatpush1.msra.mxu0 0.0
        %4241 = vmatprep.subr.mxu0 0.0
        %4242 = vmatpush1.msra.mxu0 0.0
        %4243 = vmatprep.subr.mxu0 0.0
        %4244 = vmatpush1.msra.mxu0 0.0
        %4245 = vmatprep.subr.mxu0 0.0
        %4246 = vmatpush1.msra.mxu0 0.0
        %4247 = vmatprep.subr.mxu0 0.0
        %4248 = vmatpush1.msra.mxu0 0.0
        %4249 = vmatprep.subr.mxu0 0.0
        %4250 = vmatpush1.msra.mxu0 0.0
        %4251 = vmatprep.mubr.f32.mxu0 0.0
        %4252 = vmatmul.mubr.f32.gmra.mrb[0].mxu0 %v4182
        %v4253 = vpop.f32.mrb[0].mxu0
        %v4254 = vadd.f32 0.0, %v4253
        %v4255 = vpop.f32.mrb[0].mxu0
        %4256 = vmatprep.mubr.f32.mxu0 0.0
        %4257 = vmatmul.mubr.f32.gmra.mrb[0].mxu0 %v4185
        %v4258 = vpop.f32.mrb[0].mxu0
        %v4259 = vadd.f32 0.0, %v4258
        %v4260 = vpop.f32.mrb[0].mxu0
        %4261 = vdwg.mxu0
        %s4262 = scalar_lea.vmem %s1410, 4
        %v4263 = vld [vmem:[%s4262] sm:$0xf]
        %v4265 = vsel %vm1700, %v4254, 0
        %v4268 = vsel %vm1700, %v4259, 0
        %v4271 = vsel %vm2369, %v4263, 0
        %4273 = vmatprep.subr.bf16.mxu0 0
        %4274 = vmatpush1.bf16.msra.mxu0 %v4271
        %4275 = vmatprep.subr.bf16.mxu0 0
        %4276 = vmatpush1.bf16.msra.mxu0 0
        %4277 = vmatprep.subr.bf16.mxu0 0
        %4278 = vmatpush1.bf16.msra.mxu0 0
        %4279 = vmatprep.subr.bf16.mxu0 0
        %4280 = vmatpush1.bf16.msra.mxu0 0
        %4281 = vmatprep.subr.bf16.mxu0 0
        %4282 = vmatpush1.bf16.msra.mxu0 0
        %4283 = vmatprep.subr.bf16.mxu0 0
        %4284 = vmatpush1.bf16.msra.mxu0 0
        %4285 = vmatprep.subr.bf16.mxu0 0
        %4286 = vmatpush1.bf16.msra.mxu0 0
        %4287 = vmatprep.subr.bf16.mxu0 0
        %4288 = vmatpush1.bf16.msra.mxu0 0
        %4289 = vmatprep.subr.bf16.mxu0 0
        %4290 = vmatpush1.bf16.msra.mxu0 0
        %4291 = vmatprep.subr.bf16.mxu0 0
        %4292 = vmatpush1.bf16.msra.mxu0 0
        %4293 = vmatprep.subr.bf16.mxu0 0
        %4294 = vmatpush1.bf16.msra.mxu0 0
        %4295 = vmatprep.subr.bf16.mxu0 0
        %4296 = vmatpush1.bf16.msra.mxu0 0
        %4297 = vmatprep.subr.bf16.mxu0 0
        %4298 = vmatpush1.bf16.msra.mxu0 0
        %4299 = vmatprep.subr.bf16.mxu0 0
        %4300 = vmatpush1.bf16.msra.mxu0 0
        %4301 = vmatprep.subr.bf16.mxu0 0
        %4302 = vmatpush1.bf16.msra.mxu0 0
        %4303 = vmatprep.subr.bf16.mxu0 0
        %4304 = vmatpush1.bf16.msra.mxu0 0
        %4305 = vmatprep.mubr.f32.mxu0 0.0
        %4306 = vmatmul.mubr.f32.gmra.mrb[0].mxu0 %v4265
        %v4307 = vpop.f32.mrb[0].mxu0
        %v4308 = vadd.f32 0.0, %v4307
        %v4309 = vpop.f32.mrb[0].mxu0
        %4310 = vmatprep.mubr.f32.mxu0 0.0
        %4311 = vmatmul.mubr.f32.gmra.mrb[0].mxu0 %v4268
        %v4312 = vpop.f32.mrb[0].mxu0
        %v4313 = vadd.f32 0.0, %v4312
        %v4314 = vpop.f32.mrb[0].mxu0
        %4315 = vdwg.mxu0
        %v4317 = vsel %vm1700, %v3847, 0
        %v4320 = vsel %vm1700, %v3852, 0
        %v4323 = vsel %vm2369, %v3855, 0
        %4325 = vmatprep.subr.bf16.mxu0 0
        %4326 = vmatpush1.bf16.msra.mxu0 %v4323
        %4327 = vmatprep.subr.bf16.mxu0 0
        %4328 = vmatpush1.bf16.msra.mxu0 0
        %4329 = vmatprep.subr.bf16.mxu0 0
        %4330 = vmatpush1.bf16.msra.mxu0 0
        %4331 = vmatprep.subr.bf16.mxu0 0
        %4332 = vmatpush1.bf16.msra.mxu0 0
        %4333 = vmatprep.subr.bf16.mxu0 0
        %4334 = vmatpush1.bf16.msra.mxu0 0
        %4335 = vmatprep.subr.bf16.mxu0 0
        %4336 = vmatpush1.bf16.msra.mxu0 0
        %4337 = vmatprep.subr.bf16.mxu0 0
        %4338 = vmatpush1.bf16.msra.mxu0 0
        %4339 = vmatprep.subr.bf16.mxu0 0
        %4340 = vmatpush1.bf16.msra.mxu0 0
        %4341 = vmatprep.subr.bf16.mxu0 0
        %4342 = vmatpush1.bf16.msra.mxu0 0
        %4343 = vmatprep.subr.bf16.mxu0 0
        %4344 = vmatpush1.bf16.msra.mxu0 0
        %4345 = vmatprep.subr.bf16.mxu0 0
        %4346 = vmatpush1.bf16.msra.mxu0 0
        %4347 = vmatprep.subr.bf16.mxu0 0
        %4348 = vmatpush1.bf16.msra.mxu0 0
        %4349 = vmatprep.subr.bf16.mxu0 0
        %4350 = vmatpush1.bf16.msra.mxu0 0
        %4351 = vmatprep.subr.bf16.mxu0 0
        %4352 = vmatpush1.bf16.msra.mxu0 0
        %4353 = vmatprep.subr.bf16.mxu0 0
        %4354 = vmatpush1.bf16.msra.mxu0 0
        %4355 = vmatprep.subr.bf16.mxu0 0
        %4356 = vmatpush1.bf16.msra.mxu0 0
        %4357 = vmatprep.mubr.f32.mxu0 0.0
        %4358 = vmatmul.mubr.f32.gmra.mrb[0].mxu0 %v4317
        %v4359 = vpop.f32.mrb[0].mxu0
        %v4360 = vadd.f32 %v4308, %v4359
        %v4361 = vpop.f32.mrb[0].mxu0
        %4362 = vmatprep.mubr.f32.mxu0 0.0
        %4363 = vmatmul.mubr.f32.gmra.mrb[0].mxu0 %v4320
        %v4364 = vpop.f32.mrb[0].mxu0
        %v4365 = vadd.f32 %v4313, %v4364
        %v4366 = vpop.f32.mrb[0].mxu0
        %4367 = vdwg.mxu0
        %s4368 = scalar_lea.vmem %s1395, 32
        %v4369 = vld [vmem:[%s4368] sm:$0xf]
        %v4370 = vld [vmem:[%s4368 + $0x4] sm:$0xf]
        %v4371 = vld [vmem:[%s4368 + $0x8] sm:$0xf]
        %v4372 = vld [vmem:[%s4368 + $0xc] sm:$0xf]
        %s4373 = scalar_lea.vmem %s1414, 2
        %v4374 = vld [vmem:[%s4373] sm:$0x1]
        %v4376 = vlaneseq
        %v4377 = vshrl.u32 %v4376, 7
        %v4378 = vsub.s32 0, %v4377
        %v4379 = vrot.slane %v4374, %v4378
        %v4385 = vunpack.c.l.b16 %v4369
        %v4386 = vunpack.c.l.b16 %v4370
        %v4387 = vunpack.c.l.b16 %v4371
        %v4388 = vunpack.c.l.b16 %v4372
        %v4389 = vpack.c.b16 %v4386, %v4385
        %v4390 = vpack.c.b16 %v4388, %v4387
        %4393 = vmatprep.subr.bf16.mxu0 0
        %4394 = vmatpush1.bf16.msra.mxu0 %v4389
        %4395 = vmatprep.subr.bf16.mxu0 0
        %4396 = vmatpush1.bf16.msra.mxu0 %v4390
        %4397 = vmatprep.subr.bf16.mxu0 0
        %4398 = vmatpush1.bf16.msra.mxu0 0
        %4399 = vmatprep.subr.bf16.mxu0 0
        %4400 = vmatpush1.bf16.msra.mxu0 0
        %4401 = vmatprep.subr.bf16.mxu0 0
        %4402 = vmatpush1.bf16.msra.mxu0 0
        %4403 = vmatprep.subr.bf16.mxu0 0
        %4404 = vmatpush1.bf16.msra.mxu0 0
        %4405 = vmatprep.subr.bf16.mxu0 0
        %4406 = vmatpush1.bf16.msra.mxu0 0
        %4407 = vmatprep.subr.bf16.mxu0 0
        %4408 = vmatpush1.bf16.msra.mxu0 0
        %4409 = vmatprep.subr.bf16.mxu0 0
        %4410 = vmatpush1.bf16.msra.mxu0 0
        %4411 = vmatprep.subr.bf16.mxu0 0
        %4412 = vmatpush1.bf16.msra.mxu0 0
        %4413 = vmatprep.subr.bf16.mxu0 0
        %4414 = vmatpush1.bf16.msra.mxu0 0
        %4415 = vmatprep.subr.bf16.mxu0 0
        %4416 = vmatpush1.bf16.msra.mxu0 0
        %4417 = vmatprep.subr.bf16.mxu0 0
        %4418 = vmatpush1.bf16.msra.mxu0 0
        %4419 = vmatprep.subr.bf16.mxu0 0
        %4420 = vmatpush1.bf16.msra.mxu0 0
        %4421 = vmatprep.subr.bf16.mxu0 0
        %4422 = vmatpush1.bf16.msra.mxu0 0
        %4423 = vmatprep.subr.bf16.mxu0 0
        %4424 = vmatpush1.bf16.msra.mxu0 0
        %4425 = vmatprep.mubr.f32.mxu0 0.0
        %4426 = vmatmul.mubr.f32.gmra.mrb[0].mxu0 %v3473
        %v4427 = vpop.f32.mrb[0].mxu0
        %v4428 = vadd.f32 %v4379, %v4427
        %v4429 = vpop.f32.mrb[0].mxu0
        %4430 = vmatprep.mubr.f32.mxu0 0.0
        %4431 = vmatmul.mubr.f32.gmra.mrb[0].mxu0 %v3476
        %v4432 = vpop.f32.mrb[0].mxu0
        %v4433 = vadd.f32 %v4379, %v4432
        %v4434 = vpop.f32.mrb[0].mxu0
        %4435 = vdwg.mxu0
        %s4436 = scalar_lea.vmem %s1400, 8
        %v4437 = vld [vmem:[%s4436] sm:$0xf]
        %s4438 = scalar_lea.vmem %s1419, 16
        %v4439 = vld [vmem:[%s4438] sm:$0xff]
        %4441 = vset.pattern.permute.xlu0 0
        %4442 = vperm.xlu0 %4441, %v4439
        %v4443 = vpop.permute.xlu0 %4442
        %v4446 = vsel %vm1568, %v4437, 0
        %4448 = vmatprep.subr.mxu0 0.0
        %4449 = vmatpush1.xpose.msra.mxu0 %v3473
        %4450 = vmatprep.subr.mxu0 0.0
        %4451 = vmatpush1.xpose.msra.mxu0 %v3476
        %4452 = vmatprep.subr.mxu0 0.0
        %4453 = vmatpush1.xpose.msra.mxu0 0.0
        %4454 = vmatprep.subr.mxu0 0.0
        %4455 = vmatpush1.xpose.msra.mxu0 0.0
        %4456 = vmatprep.subr.mxu0 0.0
        %4457 = vmatpush1.xpose.msra.mxu0 0.0
        %4458 = vmatprep.subr.mxu0 0.0
        %4459 = vmatpush1.xpose.msra.mxu0 0.0
        %4460 = vmatprep.subr.mxu0 0.0
        %4461 = vmatpush1.xpose.msra.mxu0 0.0
        %4462 = vmatprep.subr.mxu0 0.0
        %4463 = vmatpush1.xpose.msra.mxu0 0.0
        %4464 = vmatprep.subr.mxu0 0.0
        %4465 = vmatpush1.xpose.msra.mxu0 0.0
        %4466 = vmatprep.subr.mxu0 0.0
        %4467 = vmatpush1.xpose.msra.mxu0 0.0
        %4468 = vmatprep.subr.mxu0 0.0
        %4469 = vmatpush1.xpose.msra.mxu0 0.0
        %4470 = vmatprep.subr.mxu0 0.0
        %4471 = vmatpush1.xpose.msra.mxu0 0.0
        %4472 = vmatprep.subr.mxu0 0.0
        %4473 = vmatpush1.xpose.msra.mxu0 0.0
        %4474 = vmatprep.subr.mxu0 0.0
        %4475 = vmatpush1.xpose.msra.mxu0 0.0
        %4476 = vmatprep.subr.mxu0 0.0
        %4477 = vmatpush1.xpose.msra.mxu0 0.0
        %4478 = vmatprep.subr.mxu0 0.0
        %4479 = vmatpush1.xpose.msra.mxu0 0.0
        %4480 = vmatprep.subr.mxu0 0.0
        %4481 = vmatpush1.xpose.msra.mxu0 0.0
        %4482 = vmatprep.subr.mxu0 0.0
        %4483 = vmatpush1.xpose.msra.mxu0 0.0
        %4484 = vmatprep.subr.mxu0 0.0
        %4485 = vmatpush1.xpose.msra.mxu0 0.0
        %4486 = vmatprep.subr.mxu0 0.0
        %4487 = vmatpush1.xpose.msra.mxu0 0.0
        %4488 = vmatprep.subr.mxu0 0.0
        %4489 = vmatpush1.xpose.msra.mxu0 0.0
        %4490 = vmatprep.subr.mxu0 0.0
        %4491 = vmatpush1.xpose.msra.mxu0 0.0
        %4492 = vmatprep.subr.mxu0 0.0
        %4493 = vmatpush1.xpose.msra.mxu0 0.0
        %4494 = vmatprep.subr.mxu0 0.0
        %4495 = vmatpush1.xpose.msra.mxu0 0.0
        %4496 = vmatprep.subr.mxu0 0.0
        %4497 = vmatpush1.xpose.msra.mxu0 0.0
        %4498 = vmatprep.subr.mxu0 0.0
        %4499 = vmatpush1.xpose.msra.mxu0 0.0
        %4500 = vmatprep.subr.mxu0 0.0
        %4501 = vmatpush1.xpose.msra.mxu0 0.0
        %4502 = vmatprep.subr.mxu0 0.0
        %4503 = vmatpush1.xpose.msra.mxu0 0.0
        %4504 = vmatprep.subr.mxu0 0.0
        %4505 = vmatpush1.xpose.msra.mxu0 0.0
        %4506 = vmatprep.subr.mxu0 0.0
        %4507 = vmatpush1.xpose.msra.mxu0 0.0
        %4508 = vmatprep.subr.mxu0 0.0
        %4509 = vmatpush1.xpose.msra.mxu0 0.0
        %4510 = vmatprep.subr.mxu0 0.0
        %4511 = vmatpush1.xpose.msra.mxu0 0.0
        %4512 = vmatprep.mubr.bf16.mxu0 0
        %4513 = vmatmul.mubr.bf16.gmra.mrb[0].mxu0 %v4446
        %v4514 = vpop.f32.mrb[0].mxu0
        %v4515 = vadd.f32 %v4443, %v4514
        %v4516 = vpop.f32.mrb[0].mxu0
        %v4517 = vpop.f32.mrb[0].mxu0
        %v4518 = vpop.f32.mrb[0].mxu0
        %4519 = vdwg.mxu0
        %v4521 = vsel %vm1700, %v4428, 0
        %v4524 = vsel %vm1700, %v4433, 0
        %4526 = vmatprep.subr.mxu0 0.0
        %4527 = vmatpush1.msra.mxu0 %v4515
        %4528 = vmatprep.subr.mxu0 0.0
        %4529 = vmatpush1.msra.mxu0 0.0
        %4530 = vmatprep.subr.mxu0 0.0
        %4531 = vmatpush1.msra.mxu0 0.0
        %4532 = vmatprep.subr.mxu0 0.0
        %4533 = vmatpush1.msra.mxu0 0.0
        %4534 = vmatprep.subr.mxu0 0.0
        %4535 = vmatpush1.msra.mxu0 0.0
        %4536 = vmatprep.subr.mxu0 0.0
        %4537 = vmatpush1.msra.mxu0 0.0
        %4538 = vmatprep.subr.mxu0 0.0
        %4539 = vmatpush1.msra.mxu0 0.0
        %4540 = vmatprep.subr.mxu0 0.0
        %4541 = vmatpush1.msra.mxu0 0.0
        %4542 = vmatprep.subr.mxu0 0.0
        %4543 = vmatpush1.msra.mxu0 0.0
        %4544 = vmatprep.subr.mxu0 0.0
        %4545 = vmatpush1.msra.mxu0 0.0
        %4546 = vmatprep.subr.mxu0 0.0
        %4547 = vmatpush1.msra.mxu0 0.0
        %4548 = vmatprep.subr.mxu0 0.0
        %4549 = vmatpush1.msra.mxu0 0.0
        %4550 = vmatprep.subr.mxu0 0.0
        %4551 = vmatpush1.msra.mxu0 0.0
        %4552 = vmatprep.subr.mxu0 0.0
        %4553 = vmatpush1.msra.mxu0 0.0
        %4554 = vmatprep.subr.mxu0 0.0
        %4555 = vmatpush1.msra.mxu0 0.0
        %4556 = vmatprep.subr.mxu0 0.0
        %4557 = vmatpush1.msra.mxu0 0.0
        %4558 = vmatprep.subr.mxu0 0.0
        %4559 = vmatpush1.msra.mxu0 0.0
        %4560 = vmatprep.subr.mxu0 0.0
        %4561 = vmatpush1.msra.mxu0 0.0
        %4562 = vmatprep.subr.mxu0 0.0
        %4563 = vmatpush1.msra.mxu0 0.0
        %4564 = vmatprep.subr.mxu0 0.0
        %4565 = vmatpush1.msra.mxu0 0.0
        %4566 = vmatprep.subr.mxu0 0.0
        %4567 = vmatpush1.msra.mxu0 0.0
        %4568 = vmatprep.subr.mxu0 0.0
        %4569 = vmatpush1.msra.mxu0 0.0
        %4570 = vmatprep.subr.mxu0 0.0
        %4571 = vmatpush1.msra.mxu0 0.0
        %4572 = vmatprep.subr.mxu0 0.0
        %4573 = vmatpush1.msra.mxu0 0.0
        %4574 = vmatprep.subr.mxu0 0.0
        %4575 = vmatpush1.msra.mxu0 0.0
        %4576 = vmatprep.subr.mxu0 0.0
        %4577 = vmatpush1.msra.mxu0 0.0
        %4578 = vmatprep.subr.mxu0 0.0
        %4579 = vmatpush1.msra.mxu0 0.0
        %4580 = vmatprep.subr.mxu0 0.0
        %4581 = vmatpush1.msra.mxu0 0.0
        %4582 = vmatprep.subr.mxu0 0.0
        %4583 = vmatpush1.msra.mxu0 0.0
        %4584 = vmatprep.subr.mxu0 0.0
        %4585 = vmatpush1.msra.mxu0 0.0
        %4586 = vmatprep.subr.mxu0 0.0
        %4587 = vmatpush1.msra.mxu0 0.0
        %4588 = vmatprep.subr.mxu0 0.0
        %4589 = vmatpush1.msra.mxu0 0.0
        %4590 = vmatprep.mubr.f32.mxu0 0.0
        %4591 = vmatmul.mubr.f32.gmra.mrb[0].mxu0 %v4521
        %v4592 = vpop.f32.mrb[0].mxu0
        %v4593 = vadd.f32 0.0, %v4592
        %v4594 = vpop.f32.mrb[0].mxu0
        %4595 = vmatprep.mubr.f32.mxu0 0.0
        %4596 = vmatmul.mubr.f32.gmra.mrb[0].mxu0 %v4524
        %v4597 = vpop.f32.mrb[0].mxu0
        %v4598 = vadd.f32 0.0, %v4597
        %v4599 = vpop.f32.mrb[0].mxu0
        %4600 = vdwg.mxu0
        %v4601 = vsel %vm1539, %v4593, -1e+30
        %v4602 = vsel %vm1540, %v4598, -1e+30
        %v4603 = vsel %vm1784, %v4601, -inf
        %4604 = vmax.xlane.f32.xlu0 %v4603
        %v4605 = vpop.xlane.xlu0 %4604
        %v4606 = vsel %vm1784, %v4602, -inf
        %4607 = vmax.xlane.f32.xlu0 %v4606
        %v4608 = vpop.xlane.xlu0 %4607
        %v4609 = vsub.f32 %v4601, %v4605
        %v4610 = vsub.f32 %v4602, %v4608
        %v4611 = vmul.f32 %v4609, 1.442695
        %v4612 = vpow.pop %v4611
        %v4613 = vmul.f32 %v4610, 1.442695
        %v4614 = vpow.pop %v4613
        %v4615 = vsel %vm1784, %v4612, 0.0
        %4616 = vadd.xlane.f32.xlu0 %v4615
        %v4617 = vpop.xlane.xlu0 %4616
        %v4618 = vsel %vm1784, %v4614, 0.0
        %4619 = vadd.xlane.f32.xlu0 %v4618
        %v4620 = vpop.xlane.xlu0 %4619
        %v4621 = vrcp.pop %v4617
        %v4622 = vrcp.pop %v4620
        %v4623 = vmul.f32 %v4612, %v4621
        %v4624 = vmul.f32 %v4614, %v4622
        %s4625 = scalar_lea.vmem %s1405, 32
        %v4626 = vld [vmem:[%s4625] sm:$0xf]
        %v4627 = vld [vmem:[%s4625 + $0x4] sm:$0xf]
        %v4628 = vld [vmem:[%s4625 + $0x8] sm:$0xf]
        %v4629 = vld [vmem:[%s4625 + $0xc] sm:$0xf]
        %s4630 = scalar_lea.vmem %s1423, 2
        %v4631 = vld [vmem:[%s4630] sm:$0x1]
        %v4633 = vlaneseq
        %v4634 = vshrl.u32 %v4633, 7
        %v4635 = vsub.s32 0, %v4634
        %v4636 = vrot.slane %v4631, %v4635
        %v4642 = vunpack.c.l.b16 %v4626
        %v4643 = vunpack.c.l.b16 %v4627
        %v4644 = vunpack.c.l.b16 %v4628
        %v4645 = vunpack.c.l.b16 %v4629
        %v4646 = vpack.c.b16 %v4643, %v4642
        %v4647 = vpack.c.b16 %v4645, %v4644
        %4650 = vmatprep.subr.bf16.mxu0 0
        %4651 = vmatpush1.bf16.msra.mxu0 %v4646
        %4652 = vmatprep.subr.bf16.mxu0 0
        %4653 = vmatpush1.bf16.msra.mxu0 %v4647
        %4654 = vmatprep.subr.bf16.mxu0 0
        %4655 = vmatpush1.bf16.msra.mxu0 0
        %4656 = vmatprep.subr.bf16.mxu0 0
        %4657 = vmatpush1.bf16.msra.mxu0 0
        %4658 = vmatprep.subr.bf16.mxu0 0
        %4659 = vmatpush1.bf16.msra.mxu0 0
        %4660 = vmatprep.subr.bf16.mxu0 0
        %4661 = vmatpush1.bf16.msra.mxu0 0
        %4662 = vmatprep.subr.bf16.mxu0 0
        %4663 = vmatpush1.bf16.msra.mxu0 0
        %4664 = vmatprep.subr.bf16.mxu0 0
        %4665 = vmatpush1.bf16.msra.mxu0 0
        %4666 = vmatprep.subr.bf16.mxu0 0
        %4667 = vmatpush1.bf16.msra.mxu0 0
        %4668 = vmatprep.subr.bf16.mxu0 0
        %4669 = vmatpush1.bf16.msra.mxu0 0
        %4670 = vmatprep.subr.bf16.mxu0 0
        %4671 = vmatpush1.bf16.msra.mxu0 0
        %4672 = vmatprep.subr.bf16.mxu0 0
        %4673 = vmatpush1.bf16.msra.mxu0 0
        %4674 = vmatprep.subr.bf16.mxu0 0
        %4675 = vmatpush1.bf16.msra.mxu0 0
        %4676 = vmatprep.subr.bf16.mxu0 0
        %4677 = vmatpush1.bf16.msra.mxu0 0
        %4678 = vmatprep.subr.bf16.mxu0 0
        %4679 = vmatpush1.bf16.msra.mxu0 0
        %4680 = vmatprep.subr.bf16.mxu0 0
        %4681 = vmatpush1.bf16.msra.mxu0 0
        %4682 = vmatprep.mubr.f32.mxu0 0.0
        %4683 = vmatmul.mubr.f32.gmra.mrb[0].mxu0 %v3473
        %v4684 = vpop.f32.mrb[0].mxu0
        %v4685 = vadd.f32 %v4636, %v4684
        %v4686 = vpop.f32.mrb[0].mxu0
        %4687 = vmatprep.mubr.f32.mxu0 0.0
        %4688 = vmatmul.mubr.f32.gmra.mrb[0].mxu0 %v3476
        %v4689 = vpop.f32.mrb[0].mxu0
        %v4690 = vadd.f32 %v4636, %v4689
        %v4691 = vpop.f32.mrb[0].mxu0
        %4692 = vdwg.mxu0
        %v4694 = vsel %vm1784, %v4623, 0
        %v4697 = vsel %vm1784, %v4624, 0
        %4699 = vmatprep.subr.mxu0 0.0
        %4700 = vmatpush1.msra.mxu0 %v4685
        %4701 = vmatprep.subr.mxu0 0.0
        %4702 = vmatpush1.msra.mxu0 %v4690
        %4703 = vmatprep.subr.mxu0 0.0
        %4704 = vmatpush1.msra.mxu0 0.0
        %4705 = vmatprep.subr.mxu0 0.0
        %4706 = vmatpush1.msra.mxu0 0.0
        %4707 = vmatprep.subr.mxu0 0.0
        %4708 = vmatpush1.msra.mxu0 0.0
        %4709 = vmatprep.subr.mxu0 0.0
        %4710 = vmatpush1.msra.mxu0 0.0
        %4711 = vmatprep.subr.mxu0 0.0
        %4712 = vmatpush1.msra.mxu0 0.0
        %4713 = vmatprep.subr.mxu0 0.0
        %4714 = vmatpush1.msra.mxu0 0.0
        %4715 = vmatprep.subr.mxu0 0.0
        %4716 = vmatpush1.msra.mxu0 0.0
        %4717 = vmatprep.subr.mxu0 0.0
        %4718 = vmatpush1.msra.mxu0 0.0
        %4719 = vmatprep.subr.mxu0 0.0
        %4720 = vmatpush1.msra.mxu0 0.0
        %4721 = vmatprep.subr.mxu0 0.0
        %4722 = vmatpush1.msra.mxu0 0.0
        %4723 = vmatprep.subr.mxu0 0.0
        %4724 = vmatpush1.msra.mxu0 0.0
        %4725 = vmatprep.subr.mxu0 0.0
        %4726 = vmatpush1.msra.mxu0 0.0
        %4727 = vmatprep.subr.mxu0 0.0
        %4728 = vmatpush1.msra.mxu0 0.0
        %4729 = vmatprep.subr.mxu0 0.0
        %4730 = vmatpush1.msra.mxu0 0.0
        %4731 = vmatprep.subr.mxu0 0.0
        %4732 = vmatpush1.msra.mxu0 0.0
        %4733 = vmatprep.subr.mxu0 0.0
        %4734 = vmatpush1.msra.mxu0 0.0
        %4735 = vmatprep.subr.mxu0 0.0
        %4736 = vmatpush1.msra.mxu0 0.0
        %4737 = vmatprep.subr.mxu0 0.0
        %4738 = vmatpush1.msra.mxu0 0.0
        %4739 = vmatprep.subr.mxu0 0.0
        %4740 = vmatpush1.msra.mxu0 0.0
        %4741 = vmatprep.subr.mxu0 0.0
        %4742 = vmatpush1.msra.mxu0 0.0
        %4743 = vmatprep.subr.mxu0 0.0
        %4744 = vmatpush1.msra.mxu0 0.0
        %4745 = vmatprep.subr.mxu0 0.0
        %4746 = vmatpush1.msra.mxu0 0.0
        %4747 = vmatprep.subr.mxu0 0.0
        %4748 = vmatpush1.msra.mxu0 0.0
        %4749 = vmatprep.subr.mxu0 0.0
        %4750 = vmatpush1.msra.mxu0 0.0
        %4751 = vmatprep.subr.mxu0 0.0
        %4752 = vmatpush1.msra.mxu0 0.0
        %4753 = vmatprep.subr.mxu0 0.0
        %4754 = vmatpush1.msra.mxu0 0.0
        %4755 = vmatprep.subr.mxu0 0.0
        %4756 = vmatpush1.msra.mxu0 0.0
        %4757 = vmatprep.subr.mxu0 0.0
        %4758 = vmatpush1.msra.mxu0 0.0
        %4759 = vmatprep.subr.mxu0 0.0
        %4760 = vmatpush1.msra.mxu0 0.0
        %4761 = vmatprep.subr.mxu0 0.0
        %4762 = vmatpush1.msra.mxu0 0.0
        %4763 = vmatprep.mubr.f32.mxu0 0.0
        %4764 = vmatmul.mubr.f32.gmra.mrb[0].mxu0 %v4694
        %v4765 = vpop.f32.mrb[0].mxu0
        %v4766 = vadd.f32 0.0, %v4765
        %v4767 = vpop.f32.mrb[0].mxu0
        %4768 = vmatprep.mubr.f32.mxu0 0.0
        %4769 = vmatmul.mubr.f32.gmra.mrb[0].mxu0 %v4697
        %v4770 = vpop.f32.mrb[0].mxu0
        %v4771 = vadd.f32 0.0, %v4770
        %v4772 = vpop.f32.mrb[0].mxu0
        %4773 = vdwg.mxu0
        %s4774 = scalar_lea.vmem %s1410, 8
        %v4775 = vld [vmem:[%s4774] sm:$0xf]
        %v4777 = vsel %vm1700, %v4766, 0
        %v4780 = vsel %vm1700, %v4771, 0
        %v4783 = vsel %vm2369, %v4775, 0
        %4785 = vmatprep.subr.bf16.mxu0 0
        %4786 = vmatpush1.bf16.msra.mxu0 %v4783
        %4787 = vmatprep.subr.bf16.mxu0 0
        %4788 = vmatpush1.bf16.msra.mxu0 0
        %4789 = vmatprep.subr.bf16.mxu0 0
        %4790 = vmatpush1.bf16.msra.mxu0 0
        %4791 = vmatprep.subr.bf16.mxu0 0
        %4792 = vmatpush1.bf16.msra.mxu0 0
        %4793 = vmatprep.subr.bf16.mxu0 0
        %4794 = vmatpush1.bf16.msra.mxu0 0
        %4795 = vmatprep.subr.bf16.mxu0 0
        %4796 = vmatpush1.bf16.msra.mxu0 0
        %4797 = vmatprep.subr.bf16.mxu0 0
        %4798 = vmatpush1.bf16.msra.mxu0 0
        %4799 = vmatprep.subr.bf16.mxu0 0
        %4800 = vmatpush1.bf16.msra.mxu0 0
        %4801 = vmatprep.subr.bf16.mxu0 0
        %4802 = vmatpush1.bf16.msra.mxu0 0
        %4803 = vmatprep.subr.bf16.mxu0 0
        %4804 = vmatpush1.bf16.msra.mxu0 0
        %4805 = vmatprep.subr.bf16.mxu0 0
        %4806 = vmatpush1.bf16.msra.mxu0 0
        %4807 = vmatprep.subr.bf16.mxu0 0
        %4808 = vmatpush1.bf16.msra.mxu0 0
        %4809 = vmatprep.subr.bf16.mxu0 0
        %4810 = vmatpush1.bf16.msra.mxu0 0
        %4811 = vmatprep.subr.bf16.mxu0 0
        %4812 = vmatpush1.bf16.msra.mxu0 0
        %4813 = vmatprep.subr.bf16.mxu0 0
        %4814 = vmatpush1.bf16.msra.mxu0 0
        %4815 = vmatprep.subr.bf16.mxu0 0
        %4816 = vmatpush1.bf16.msra.mxu0 0
        %4817 = vmatprep.mubr.f32.mxu0 0.0
        %4818 = vmatmul.mubr.f32.gmra.mrb[0].mxu0 %v4777
        %v4819 = vpop.f32.mrb[0].mxu0
        %v4820 = vadd.f32 0.0, %v4819
        %v4821 = vpop.f32.mrb[0].mxu0
        %4822 = vmatprep.mubr.f32.mxu0 0.0
        %4823 = vmatmul.mubr.f32.gmra.mrb[0].mxu0 %v4780
        %v4824 = vpop.f32.mrb[0].mxu0
        %v4825 = vadd.f32 0.0, %v4824
        %v4826 = vpop.f32.mrb[0].mxu0
        %4827 = vdwg.mxu0
        %v4828 = vadd.f32 %v4360, %v4820
        %v4829 = vadd.f32 %v4365, %v4825
        %s4830 = scalar_lea.vmem %s1395, 48
        %v4831 = vld [vmem:[%s4830] sm:$0xf]
        %v4832 = vld [vmem:[%s4830 + $0x4] sm:$0xf]
        %v4833 = vld [vmem:[%s4830 + $0x8] sm:$0xf]
        %v4834 = vld [vmem:[%s4830 + $0xc] sm:$0xf]
        %s4835 = scalar_lea.vmem %s1414, 3
        %v4836 = vld [vmem:[%s4835] sm:$0x1]
        %v4838 = vlaneseq
        %v4839 = vshrl.u32 %v4838, 7
        %v4840 = vsub.s32 0, %v4839
        %v4841 = vrot.slane %v4836, %v4840
        %v4847 = vunpack.c.l.b16 %v4831
        %v4848 = vunpack.c.l.b16 %v4832
        %v4849 = vunpack.c.l.b16 %v4833
        %v4850 = vunpack.c.l.b16 %v4834
        %v4851 = vpack.c.b16 %v4848, %v4847
        %v4852 = vpack.c.b16 %v4850, %v4849
        %4855 = vmatprep.subr.bf16.mxu0 0
        %4856 = vmatpush1.bf16.msra.mxu0 %v4851
        %4857 = vmatprep.subr.bf16.mxu0 0
        %4858 = vmatpush1.bf16.msra.mxu0 %v4852
        %4859 = vmatprep.subr.bf16.mxu0 0
        %4860 = vmatpush1.bf16.msra.mxu0 0
        %4861 = vmatprep.subr.bf16.mxu0 0
        %4862 = vmatpush1.bf16.msra.mxu0 0
        %4863 = vmatprep.subr.bf16.mxu0 0
        %4864 = vmatpush1.bf16.msra.mxu0 0
        %4865 = vmatprep.subr.bf16.mxu0 0
        %4866 = vmatpush1.bf16.msra.mxu0 0
        %4867 = vmatprep.subr.bf16.mxu0 0
        %4868 = vmatpush1.bf16.msra.mxu0 0
        %4869 = vmatprep.subr.bf16.mxu0 0
        %4870 = vmatpush1.bf16.msra.mxu0 0
        %4871 = vmatprep.subr.bf16.mxu0 0
        %4872 = vmatpush1.bf16.msra.mxu0 0
        %4873 = vmatprep.subr.bf16.mxu0 0
        %4874 = vmatpush1.bf16.msra.mxu0 0
        %4875 = vmatprep.subr.bf16.mxu0 0
        %4876 = vmatpush1.bf16.msra.mxu0 0
        %4877 = vmatprep.subr.bf16.mxu0 0
        %4878 = vmatpush1.bf16.msra.mxu0 0
        %4879 = vmatprep.subr.bf16.mxu0 0
        %4880 = vmatpush1.bf16.msra.mxu0 0
        %4881 = vmatprep.subr.bf16.mxu0 0
        %4882 = vmatpush1.bf16.msra.mxu0 0
        %4883 = vmatprep.subr.bf16.mxu0 0
        %4884 = vmatpush1.bf16.msra.mxu0 0
        %4885 = vmatprep.subr.bf16.mxu0 0
        %4886 = vmatpush1.bf16.msra.mxu0 0
        %4887 = vmatprep.mubr.f32.mxu0 0.0
        %4888 = vmatmul.mubr.f32.gmra.mrb[0].mxu0 %v3473
        %v4889 = vpop.f32.mrb[0].mxu0
        %v4890 = vadd.f32 %v4841, %v4889
        %v4891 = vpop.f32.mrb[0].mxu0
        %4892 = vmatprep.mubr.f32.mxu0 0.0
        %4893 = vmatmul.mubr.f32.gmra.mrb[0].mxu0 %v3476
        %v4894 = vpop.f32.mrb[0].mxu0
        %v4895 = vadd.f32 %v4841, %v4894
        %v4896 = vpop.f32.mrb[0].mxu0
        %4897 = vdwg.mxu0
        %s4898 = scalar_lea.vmem %s1400, 12
        %v4899 = vld [vmem:[%s4898] sm:$0xf]
        %s4900 = scalar_lea.vmem %s1419, 24
        %v4901 = vld [vmem:[%s4900] sm:$0xff]
        %4903 = vset.pattern.permute.xlu0 0
        %4904 = vperm.xlu0 %4903, %v4901
        %v4905 = vpop.permute.xlu0 %4904
        %v4908 = vsel %vm1568, %v4899, 0
        %4910 = vmatprep.subr.mxu0 0.0
        %4911 = vmatpush1.xpose.msra.mxu0 %v3473
        %4912 = vmatprep.subr.mxu0 0.0
        %4913 = vmatpush1.xpose.msra.mxu0 %v3476
        %4914 = vmatprep.subr.mxu0 0.0
        %4915 = vmatpush1.xpose.msra.mxu0 0.0
        %4916 = vmatprep.subr.mxu0 0.0
        %4917 = vmatpush1.xpose.msra.mxu0 0.0
        %4918 = vmatprep.subr.mxu0 0.0
        %4919 = vmatpush1.xpose.msra.mxu0 0.0
        %4920 = vmatprep.subr.mxu0 0.0
        %4921 = vmatpush1.xpose.msra.mxu0 0.0
        %4922 = vmatprep.subr.mxu0 0.0
        %4923 = vmatpush1.xpose.msra.mxu0 0.0
        %4924 = vmatprep.subr.mxu0 0.0
        %4925 = vmatpush1.xpose.msra.mxu0 0.0
        %4926 = vmatprep.subr.mxu0 0.0
        %4927 = vmatpush1.xpose.msra.mxu0 0.0
        %4928 = vmatprep.subr.mxu0 0.0
        %4929 = vmatpush1.xpose.msra.mxu0 0.0
        %4930 = vmatprep.subr.mxu0 0.0
        %4931 = vmatpush1.xpose.msra.mxu0 0.0
        %4932 = vmatprep.subr.mxu0 0.0
        %4933 = vmatpush1.xpose.msra.mxu0 0.0
        %4934 = vmatprep.subr.mxu0 0.0
        %4935 = vmatpush1.xpose.msra.mxu0 0.0
        %4936 = vmatprep.subr.mxu0 0.0
        %4937 = vmatpush1.xpose.msra.mxu0 0.0
        %4938 = vmatprep.subr.mxu0 0.0
        %4939 = vmatpush1.xpose.msra.mxu0 0.0
        %4940 = vmatprep.subr.mxu0 0.0
        %4941 = vmatpush1.xpose.msra.mxu0 0.0
        %4942 = vmatprep.subr.mxu0 0.0
        %4943 = vmatpush1.xpose.msra.mxu0 0.0
        %4944 = vmatprep.subr.mxu0 0.0
        %4945 = vmatpush1.xpose.msra.mxu0 0.0
        %4946 = vmatprep.subr.mxu0 0.0
        %4947 = vmatpush1.xpose.msra.mxu0 0.0
        %4948 = vmatprep.subr.mxu0 0.0
        %4949 = vmatpush1.xpose.msra.mxu0 0.0
        %4950 = vmatprep.subr.mxu0 0.0
        %4951 = vmatpush1.xpose.msra.mxu0 0.0
        %4952 = vmatprep.subr.mxu0 0.0
        %4953 = vmatpush1.xpose.msra.mxu0 0.0
        %4954 = vmatprep.subr.mxu0 0.0
        %4955 = vmatpush1.xpose.msra.mxu0 0.0
        %4956 = vmatprep.subr.mxu0 0.0
        %4957 = vmatpush1.xpose.msra.mxu0 0.0
        %4958 = vmatprep.subr.mxu0 0.0
        %4959 = vmatpush1.xpose.msra.mxu0 0.0
        %4960 = vmatprep.subr.mxu0 0.0
        %4961 = vmatpush1.xpose.msra.mxu0 0.0
        %4962 = vmatprep.subr.mxu0 0.0
        %4963 = vmatpush1.xpose.msra.mxu0 0.0
        %4964 = vmatprep.subr.mxu0 0.0
        %4965 = vmatpush1.xpose.msra.mxu0 0.0
        %4966 = vmatprep.subr.mxu0 0.0
        %4967 = vmatpush1.xpose.msra.mxu0 0.0
        %4968 = vmatprep.subr.mxu0 0.0
        %4969 = vmatpush1.xpose.msra.mxu0 0.0
        %4970 = vmatprep.subr.mxu0 0.0
        %4971 = vmatpush1.xpose.msra.mxu0 0.0
        %4972 = vmatprep.subr.mxu0 0.0
        %4973 = vmatpush1.xpose.msra.mxu0 0.0
        %4974 = vmatprep.mubr.bf16.mxu0 0
        %4975 = vmatmul.mubr.bf16.gmra.mrb[0].mxu0 %v4908
        %v4976 = vpop.f32.mrb[0].mxu0
        %v4977 = vadd.f32 %v4905, %v4976
        %v4978 = vpop.f32.mrb[0].mxu0
        %v4979 = vpop.f32.mrb[0].mxu0
        %v4980 = vpop.f32.mrb[0].mxu0
        %4981 = vdwg.mxu0
        %v4983 = vsel %vm1700, %v4890, 0
        %v4986 = vsel %vm1700, %v4895, 0
        %4988 = vmatprep.subr.mxu0 0.0
        %4989 = vmatpush1.msra.mxu0 %v4977
        %4990 = vmatprep.subr.mxu0 0.0
        %4991 = vmatpush1.msra.mxu0 0.0
        %4992 = vmatprep.subr.mxu0 0.0
        %4993 = vmatpush1.msra.mxu0 0.0
        %4994 = vmatprep.subr.mxu0 0.0
        %4995 = vmatpush1.msra.mxu0 0.0
        %4996 = vmatprep.subr.mxu0 0.0
        %4997 = vmatpush1.msra.mxu0 0.0
        %4998 = vmatprep.subr.mxu0 0.0
        %4999 = vmatpush1.msra.mxu0 0.0
        %5000 = vmatprep.subr.mxu0 0.0
        %5001 = vmatpush1.msra.mxu0 0.0
        %5002 = vmatprep.subr.mxu0 0.0
        %5003 = vmatpush1.msra.mxu0 0.0
        %5004 = vmatprep.subr.mxu0 0.0
        %5005 = vmatpush1.msra.mxu0 0.0
        %5006 = vmatprep.subr.mxu0 0.0
        %5007 = vmatpush1.msra.mxu0 0.0
        %5008 = vmatprep.subr.mxu0 0.0
        %5009 = vmatpush1.msra.mxu0 0.0
        %5010 = vmatprep.subr.mxu0 0.0
        %5011 = vmatpush1.msra.mxu0 0.0
        %5012 = vmatprep.subr.mxu0 0.0
        %5013 = vmatpush1.msra.mxu0 0.0
        %5014 = vmatprep.subr.mxu0 0.0
        %5015 = vmatpush1.msra.mxu0 0.0
        %5016 = vmatprep.subr.mxu0 0.0
        %5017 = vmatpush1.msra.mxu0 0.0
        %5018 = vmatprep.subr.mxu0 0.0
        %5019 = vmatpush1.msra.mxu0 0.0
        %5020 = vmatprep.subr.mxu0 0.0
        %5021 = vmatpush1.msra.mxu0 0.0
        %5022 = vmatprep.subr.mxu0 0.0
        %5023 = vmatpush1.msra.mxu0 0.0
        %5024 = vmatprep.subr.mxu0 0.0
        %5025 = vmatpush1.msra.mxu0 0.0
        %5026 = vmatprep.subr.mxu0 0.0
        %5027 = vmatpush1.msra.mxu0 0.0
        %5028 = vmatprep.subr.mxu0 0.0
        %5029 = vmatpush1.msra.mxu0 0.0
        %5030 = vmatprep.subr.mxu0 0.0
        %5031 = vmatpush1.msra.mxu0 0.0
        %5032 = vmatprep.subr.mxu0 0.0
        %5033 = vmatpush1.msra.mxu0 0.0
        %5034 = vmatprep.subr.mxu0 0.0
        %5035 = vmatpush1.msra.mxu0 0.0
        %5036 = vmatprep.subr.mxu0 0.0
        %5037 = vmatpush1.msra.mxu0 0.0
        %5038 = vmatprep.subr.mxu0 0.0
        %5039 = vmatpush1.msra.mxu0 0.0
        %5040 = vmatprep.subr.mxu0 0.0
        %5041 = vmatpush1.msra.mxu0 0.0
        %5042 = vmatprep.subr.mxu0 0.0
        %5043 = vmatpush1.msra.mxu0 0.0
        %5044 = vmatprep.subr.mxu0 0.0
        %5045 = vmatpush1.msra.mxu0 0.0
        %5046 = vmatprep.subr.mxu0 0.0
        %5047 = vmatpush1.msra.mxu0 0.0
        %5048 = vmatprep.subr.mxu0 0.0
        %5049 = vmatpush1.msra.mxu0 0.0
        %5050 = vmatprep.subr.mxu0 0.0
        %5051 = vmatpush1.msra.mxu0 0.0
        %5052 = vmatprep.mubr.f32.mxu0 0.0
        %5053 = vmatmul.mubr.f32.gmra.mrb[0].mxu0 %v4983
        %v5054 = vpop.f32.mrb[0].mxu0
        %v5055 = vadd.f32 0.0, %v5054
        %v5056 = vpop.f32.mrb[0].mxu0
        %5057 = vmatprep.mubr.f32.mxu0 0.0
        %5058 = vmatmul.mubr.f32.gmra.mrb[0].mxu0 %v4986
        %v5059 = vpop.f32.mrb[0].mxu0
        %v5060 = vadd.f32 0.0, %v5059
        %v5061 = vpop.f32.mrb[0].mxu0
        %5062 = vdwg.mxu0
        %v5063 = vsel %vm1539, %v5055, -1e+30
        %v5064 = vsel %vm1540, %v5060, -1e+30
        %v5065 = vsel %vm1784, %v5063, -inf
        %5066 = vmax.xlane.f32.xlu0 %v5065
        %v5067 = vpop.xlane.xlu0 %5066
        %v5068 = vsel %vm1784, %v5064, -inf
        %5069 = vmax.xlane.f32.xlu0 %v5068
        %v5070 = vpop.xlane.xlu0 %5069
        %v5071 = vsub.f32 %v5063, %v5067
        %v5072 = vsub.f32 %v5064, %v5070
        %v5073 = vmul.f32 %v5071, 1.442695
        %v5074 = vpow.pop %v5073
        %v5075 = vmul.f32 %v5072, 1.442695
        %v5076 = vpow.pop %v5075
        %v5077 = vsel %vm1784, %v5074, 0.0
        %5078 = vadd.xlane.f32.xlu0 %v5077
        %v5079 = vpop.xlane.xlu0 %5078
        %v5080 = vsel %vm1784, %v5076, 0.0
        %5081 = vadd.xlane.f32.xlu0 %v5080
        %v5082 = vpop.xlane.xlu0 %5081
        %v5083 = vrcp.pop %v5079
        %v5084 = vrcp.pop %v5082
        %v5085 = vmul.f32 %v5074, %v5083
        %v5086 = vmul.f32 %v5076, %v5084
        %s5087 = scalar_lea.vmem %s1405, 48
        %v5088 = vld [vmem:[%s5087] sm:$0xf]
        %v5089 = vld [vmem:[%s5087 + $0x4] sm:$0xf]
        %v5090 = vld [vmem:[%s5087 + $0x8] sm:$0xf]
        %v5091 = vld [vmem:[%s5087 + $0xc] sm:$0xf]
        %s5092 = scalar_lea.vmem %s1423, 3
        %v5093 = vld [vmem:[%s5092] sm:$0x1]
        %v5095 = vlaneseq
        %v5096 = vshrl.u32 %v5095, 7
        %v5097 = vsub.s32 0, %v5096
        %v5098 = vrot.slane %v5093, %v5097
        %v5104 = vunpack.c.l.b16 %v5088
        %v5105 = vunpack.c.l.b16 %v5089
        %v5106 = vunpack.c.l.b16 %v5090
        %v5107 = vunpack.c.l.b16 %v5091
        %v5108 = vpack.c.b16 %v5105, %v5104
        %v5109 = vpack.c.b16 %v5107, %v5106
        %5112 = vmatprep.subr.bf16.mxu0 0
        %5113 = vmatpush1.bf16.msra.mxu0 %v5108
        %5114 = vmatprep.subr.bf16.mxu0 0
        %5115 = vmatpush1.bf16.msra.mxu0 %v5109
        %5116 = vmatprep.subr.bf16.mxu0 0
        %5117 = vmatpush1.bf16.msra.mxu0 0
        %5118 = vmatprep.subr.bf16.mxu0 0
        %5119 = vmatpush1.bf16.msra.mxu0 0
        %5120 = vmatprep.subr.bf16.mxu0 0
        %5121 = vmatpush1.bf16.msra.mxu0 0
        %5122 = vmatprep.subr.bf16.mxu0 0
        %5123 = vmatpush1.bf16.msra.mxu0 0
        %5124 = vmatprep.subr.bf16.mxu0 0
        %5125 = vmatpush1.bf16.msra.mxu0 0
        %5126 = vmatprep.subr.bf16.mxu0 0
        %5127 = vmatpush1.bf16.msra.mxu0 0
        %5128 = vmatprep.subr.bf16.mxu0 0
        %5129 = vmatpush1.bf16.msra.mxu0 0
        %5130 = vmatprep.subr.bf16.mxu0 0
        %5131 = vmatpush1.bf16.msra.mxu0 0
        %5132 = vmatprep.subr.bf16.mxu0 0
        %5133 = vmatpush1.bf16.msra.mxu0 0
        %5134 = vmatprep.subr.bf16.mxu0 0
        %5135 = vmatpush1.bf16.msra.mxu0 0
        %5136 = vmatprep.subr.bf16.mxu0 0
        %5137 = vmatpush1.bf16.msra.mxu0 0
        %5138 = vmatprep.subr.bf16.mxu0 0
        %5139 = vmatpush1.bf16.msra.mxu0 0
        %5140 = vmatprep.subr.bf16.mxu0 0
        %5141 = vmatpush1.bf16.msra.mxu0 0
        %5142 = vmatprep.subr.bf16.mxu0 0
        %5143 = vmatpush1.bf16.msra.mxu0 0
        %5144 = vmatprep.mubr.f32.mxu0 0.0
        %5145 = vmatmul.mubr.f32.gmra.mrb[0].mxu0 %v3473
        %v5146 = vpop.f32.mrb[0].mxu0
        %v5147 = vadd.f32 %v5098, %v5146
        %v5148 = vpop.f32.mrb[0].mxu0
        %5149 = vmatprep.mubr.f32.mxu0 0.0
        %5150 = vmatmul.mubr.f32.gmra.mrb[0].mxu0 %v3476
        %v5151 = vpop.f32.mrb[0].mxu0
        %v5152 = vadd.f32 %v5098, %v5151
        %v5153 = vpop.f32.mrb[0].mxu0
        %5154 = vdwg.mxu0
        %v5156 = vsel %vm1784, %v5085, 0
        %v5159 = vsel %vm1784, %v5086, 0
        %5161 = vmatprep.subr.mxu0 0.0
        %5162 = vmatpush1.msra.mxu0 %v5147
        %5163 = vmatprep.subr.mxu0 0.0
        %5164 = vmatpush1.msra.mxu0 %v5152
        %5165 = vmatprep.subr.mxu0 0.0
        %5166 = vmatpush1.msra.mxu0 0.0
        %5167 = vmatprep.subr.mxu0 0.0
        %5168 = vmatpush1.msra.mxu0 0.0
        %5169 = vmatprep.subr.mxu0 0.0
        %5170 = vmatpush1.msra.mxu0 0.0
        %5171 = vmatprep.subr.mxu0 0.0
        %5172 = vmatpush1.msra.mxu0 0.0
        %5173 = vmatprep.subr.mxu0 0.0
        %5174 = vmatpush1.msra.mxu0 0.0
        %5175 = vmatprep.subr.mxu0 0.0
        %5176 = vmatpush1.msra.mxu0 0.0
        %5177 = vmatprep.subr.mxu0 0.0
        %5178 = vmatpush1.msra.mxu0 0.0
        %5179 = vmatprep.subr.mxu0 0.0
        %5180 = vmatpush1.msra.mxu0 0.0
        %5181 = vmatprep.subr.mxu0 0.0
        %5182 = vmatpush1.msra.mxu0 0.0
        %5183 = vmatprep.subr.mxu0 0.0
        %5184 = vmatpush1.msra.mxu0 0.0
        %5185 = vmatprep.subr.mxu0 0.0
        %5186 = vmatpush1.msra.mxu0 0.0
        %5187 = vmatprep.subr.mxu0 0.0
        %5188 = vmatpush1.msra.mxu0 0.0
        %5189 = vmatprep.subr.mxu0 0.0
        %5190 = vmatpush1.msra.mxu0 0.0
        %5191 = vmatprep.subr.mxu0 0.0
        %5192 = vmatpush1.msra.mxu0 0.0
        %5193 = vmatprep.subr.mxu0 0.0
        %5194 = vmatpush1.msra.mxu0 0.0
        %5195 = vmatprep.subr.mxu0 0.0
        %5196 = vmatpush1.msra.mxu0 0.0
        %5197 = vmatprep.subr.mxu0 0.0
        %5198 = vmatpush1.msra.mxu0 0.0
        %5199 = vmatprep.subr.mxu0 0.0
        %5200 = vmatpush1.msra.mxu0 0.0
        %5201 = vmatprep.subr.mxu0 0.0
        %5202 = vmatpush1.msra.mxu0 0.0
        %5203 = vmatprep.subr.mxu0 0.0
        %5204 = vmatpush1.msra.mxu0 0.0
        %5205 = vmatprep.subr.mxu0 0.0
        %5206 = vmatpush1.msra.mxu0 0.0
        %5207 = vmatprep.subr.mxu0 0.0
        %5208 = vmatpush1.msra.mxu0 0.0
        %5209 = vmatprep.subr.mxu0 0.0
        %5210 = vmatpush1.msra.mxu0 0.0
        %5211 = vmatprep.subr.mxu0 0.0
        %5212 = vmatpush1.msra.mxu0 0.0
        %5213 = vmatprep.subr.mxu0 0.0
        %5214 = vmatpush1.msra.mxu0 0.0
        %5215 = vmatprep.subr.mxu0 0.0
        %5216 = vmatpush1.msra.mxu0 0.0
        %5217 = vmatprep.subr.mxu0 0.0
        %5218 = vmatpush1.msra.mxu0 0.0
        %5219 = vmatprep.subr.mxu0 0.0
        %5220 = vmatpush1.msra.mxu0 0.0
        %5221 = vmatprep.subr.mxu0 0.0
        %5222 = vmatpush1.msra.mxu0 0.0
        %5223 = vmatprep.subr.mxu0 0.0
        %5224 = vmatpush1.msra.mxu0 0.0
        %5225 = vmatprep.mubr.f32.mxu0 0.0
        %5226 = vmatmul.mubr.f32.gmra.mrb[0].mxu0 %v5156
        %v5227 = vpop.f32.mrb[0].mxu0
        %v5228 = vadd.f32 0.0, %v5227
        %v5229 = vpop.f32.mrb[0].mxu0
        %5230 = vmatprep.mubr.f32.mxu0 0.0
        %5231 = vmatmul.mubr.f32.gmra.mrb[0].mxu0 %v5159
        %v5232 = vpop.f32.mrb[0].mxu0
        %v5233 = vadd.f32 0.0, %v5232
        %v5234 = vpop.f32.mrb[0].mxu0
        %5235 = vdwg.mxu0
        %s5236 = scalar_lea.vmem %s1410, 12
        %v5237 = vld [vmem:[%s5236] sm:$0xf]
        %v5239 = vsel %vm1700, %v5228, 0
        %v5242 = vsel %vm1700, %v5233, 0
        %v5245 = vsel %vm2369, %v5237, 0
        %5247 = vmatprep.subr.bf16.mxu0 0
        %5248 = vmatpush1.bf16.msra.mxu0 %v5245
        %5249 = vmatprep.subr.bf16.mxu0 0
        %5250 = vmatpush1.bf16.msra.mxu0 0
        %5251 = vmatprep.subr.bf16.mxu0 0
        %5252 = vmatpush1.bf16.msra.mxu0 0
        %5253 = vmatprep.subr.bf16.mxu0 0
        %5254 = vmatpush1.bf16.msra.mxu0 0
        %5255 = vmatprep.subr.bf16.mxu0 0
        %5256 = vmatpush1.bf16.msra.mxu0 0
        %5257 = vmatprep.subr.bf16.mxu0 0
        %5258 = vmatpush1.bf16.msra.mxu0 0
        %5259 = vmatprep.subr.bf16.mxu0 0
        %5260 = vmatpush1.bf16.msra.mxu0 0
        %5261 = vmatprep.subr.bf16.mxu0 0
        %5262 = vmatpush1.bf16.msra.mxu0 0
        %5263 = vmatprep.subr.bf16.mxu0 0
        %5264 = vmatpush1.bf16.msra.mxu0 0
        %5265 = vmatprep.subr.bf16.mxu0 0
        %5266 = vmatpush1.bf16.msra.mxu0 0
        %5267 = vmatprep.subr.bf16.mxu0 0
        %5268 = vmatpush1.bf16.msra.mxu0 0
        %5269 = vmatprep.subr.bf16.mxu0 0
        %5270 = vmatpush1.bf16.msra.mxu0 0
        %5271 = vmatprep.subr.bf16.mxu0 0
        %5272 = vmatpush1.bf16.msra.mxu0 0
        %5273 = vmatprep.subr.bf16.mxu0 0
        %5274 = vmatpush1.bf16.msra.mxu0 0
        %5275 = vmatprep.subr.bf16.mxu0 0
        %5276 = vmatpush1.bf16.msra.mxu0 0
        %5277 = vmatprep.subr.bf16.mxu0 0
        %5278 = vmatpush1.bf16.msra.mxu0 0
        %5279 = vmatprep.mubr.f32.mxu0 0.0
        %5280 = vmatmul.mubr.f32.gmra.mrb[0].mxu0 %v5239
        %v5281 = vpop.f32.mrb[0].mxu0
        %v5282 = vadd.f32 0.0, %v5281
        %v5283 = vpop.f32.mrb[0].mxu0
        %5284 = vmatprep.mubr.f32.mxu0 0.0
        %5285 = vmatmul.mubr.f32.gmra.mrb[0].mxu0 %v5242
        %v5286 = vpop.f32.mrb[0].mxu0
        %v5287 = vadd.f32 0.0, %v5286
        %v5288 = vpop.f32.mrb[0].mxu0
        %5289 = vdwg.mxu0
        %v5290 = vadd.f32 %v4828, %v5282
        %v5291 = vadd.f32 %v4829, %v5287
        %v5292 = vld [vmem:[%s1426] sm:$0x1]
        %v5294 = vlaneseq
        %v5295 = vshrl.u32 %v5294, 7
        %v5296 = vsub.s32 0, %v5295
        %v5297 = vrot.slane %v5292, %v5296
        %v5299 = vadd.f32 %v5290, %v5297
        %v5300 = vadd.f32 %v5291, %v5297
        %v5301 = vadd.f32 %v1543, %v5299
        %v5302 = vadd.f32 %v1544, %v5300
        %s5303 = scalar_lea.vmem %s1483, 2
        %v5304 = vld [vmem:[%s5303] sm:$0x1]
        %s5305 = scalar_lea.vmem %s1483, 3
        %v5306 = vld [vmem:[%s5305] sm:$0x1]
        %v5307 = vsel %vm1568, %v5301, 0.0
        %5308 = vadd.xlane.f32.xlu0 %v5307
        %v5309 = vpop.xlane.xlu0 %5308
        %v5310 = vsel %vm1568, %v5302, 0.0
        %5311 = vadd.xlane.f32.xlu0 %v5310
        %v5312 = vpop.xlane.xlu0 %5311
        %v5313 = vmul.f32 %v5309, %v3412
        %v5314 = vmul.f32 %v5312, %v3412
        %v5315 = vsub.f32 %v5301, %v5313
        %v5316 = vsub.f32 %v5302, %v5314
        %v5317 = vmul.f32 %v5315, %v5315
        %v5318 = vmul.f32 %v5316, %v5316
        %v5319 = vsel %vm1568, %v5317, 0.0
        %5320 = vadd.xlane.f32.xlu0 %v5319
        %v5321 = vpop.xlane.xlu0 %5320
        %v5322 = vsel %vm1568, %v5318, 0.0
        %5323 = vadd.xlane.f32.xlu0 %v5322
        %v5324 = vpop.xlane.xlu0 %5323
        %v5325 = vmul.f32 %v5321, %v3412
        %v5326 = vmul.f32 %v5324, %v3412
        %v5327 = vadd.f32 %v5325, 1e-05
        %v5328 = vadd.f32 %v5326, 1e-05
        %v5329 = vrsqrt.pop %v5327
        %v5330 = vrsqrt.pop %v5328
        %v5331 = vmul.f32 %v5315, %v5329
        %v5332 = vmul.f32 %v5316, %v5330
        %v5334 = vlaneseq
        %v5335 = vshrl.u32 %v5334, 7
        %v5336 = vsub.s32 0, %v5335
        %v5337 = vrot.slane %v5304, %v5336
        %v5339 = vmul.f32 %v5331, %v5337
        %v5340 = vmul.f32 %v5332, %v5337
        %v5342 = vlaneseq
        %v5343 = vshrl.u32 %v5342, 7
        %v5344 = vsub.s32 0, %v5343
        %v5345 = vrot.slane %v5306, %v5344
        %v5347 = vadd.f32 %v5339, %v5345
        %v5348 = vadd.f32 %v5340, %v5345
        %v5349 = vld [vmem:[%s1431] sm:$0xf]
        %v5350 = vld [vmem:[%s1431 + $0x4] sm:$0xf]
        %v5351 = vld [vmem:[%s1431 + $0x8] sm:$0xf]
        %v5352 = vld [vmem:[%s1431 + $0xc] sm:$0xf]
        %v5353 = vld [vmem:[%s1450] sm:$0x1]
        %v5355 = vlaneseq
        %v5356 = vshrl.u32 %v5355, 7
        %v5357 = vsub.s32 0, %v5356
        %v5358 = vrot.slane %v5353, %v5357
        %v5364 = vunpack.c.l.b16 %v5349
        %v5365 = vunpack.c.l.b16 %v5350
        %v5366 = vunpack.c.l.b16 %v5351
        %v5367 = vunpack.c.l.b16 %v5352
        %v5368 = vpack.c.b16 %v5365, %v5364
        %v5369 = vpack.c.b16 %v5367, %v5366
        %v5373 = vsel %vm1568, %v5347, 0
        %v5376 = vsel %vm1568, %v5348, 0
        %5378 = vmatprep.subr.bf16.mxu0 0
        %5379 = vmatpush1.bf16.msra.mxu0 %v5368
        %5380 = vmatprep.subr.bf16.mxu0 0
        %5381 = vmatpush1.bf16.msra.mxu0 %v5369
        %5382 = vmatprep.subr.bf16.mxu0 0
        %5383 = vmatpush1.bf16.msra.mxu0 0
        %5384 = vmatprep.subr.bf16.mxu0 0
        %5385 = vmatpush1.bf16.msra.mxu0 0
        %5386 = vmatprep.subr.bf16.mxu0 0
        %5387 = vmatpush1.bf16.msra.mxu0 0
        %5388 = vmatprep.subr.bf16.mxu0 0
        %5389 = vmatpush1.bf16.msra.mxu0 0
        %5390 = vmatprep.subr.bf16.mxu0 0
        %5391 = vmatpush1.bf16.msra.mxu0 0
        %5392 = vmatprep.subr.bf16.mxu0 0
        %5393 = vmatpush1.bf16.msra.mxu0 0
        %5394 = vmatprep.subr.bf16.mxu0 0
        %5395 = vmatpush1.bf16.msra.mxu0 0
        %5396 = vmatprep.subr.bf16.mxu0 0
        %5397 = vmatpush1.bf16.msra.mxu0 0
        %5398 = vmatprep.subr.bf16.mxu0 0
        %5399 = vmatpush1.bf16.msra.mxu0 0
        %5400 = vmatprep.subr.bf16.mxu0 0
        %5401 = vmatpush1.bf16.msra.mxu0 0
        %5402 = vmatprep.subr.bf16.mxu0 0
        %5403 = vmatpush1.bf16.msra.mxu0 0
        %5404 = vmatprep.subr.bf16.mxu0 0
        %5405 = vmatpush1.bf16.msra.mxu0 0
        %5406 = vmatprep.subr.bf16.mxu0 0
        %5407 = vmatpush1.bf16.msra.mxu0 0
        %5408 = vmatprep.subr.bf16.mxu0 0
        %5409 = vmatpush1.bf16.msra.mxu0 0
        %5410 = vmatprep.mubr.f32.mxu0 0.0
        %5411 = vmatmul.mubr.f32.gmra.mrb[0].mxu0 %v5373
        %v5412 = vpop.f32.mrb[0].mxu0
        %v5413 = vadd.f32 %v5358, %v5412
        %v5414 = vpop.f32.mrb[0].mxu0
        %5415 = vmatprep.mubr.f32.mxu0 0.0
        %5416 = vmatmul.mubr.f32.gmra.mrb[0].mxu0 %v5376
        %v5417 = vpop.f32.mrb[0].mxu0
        %v5418 = vadd.f32 %v5358, %v5417
        %v5419 = vpop.f32.mrb[0].mxu0
        %5420 = vdwg.mxu0
        %v5421 = vld [vmem:[%s1436] sm:$0xf]
        %v5422 = vld [vmem:[%s1455] sm:$0xff]
        %5424 = vset.pattern.permute.xlu0 0
        %5425 = vperm.xlu0 %5424, %v5422
        %v5426 = vpop.permute.xlu0 %5425
        %v5429 = vsel %vm1568, %v5421, 0
        %v5432 = vsel %vm1568, %v3447, 0
        %v5435 = vsel %vm1568, %v3448, 0
        %5437 = vmatprep.subr.mxu0 0.0
        %5438 = vmatpush1.xpose.msra.mxu0 %v5432
        %5439 = vmatprep.subr.mxu0 0.0
        %5440 = vmatpush1.xpose.msra.mxu0 %v5435
        %5441 = vmatprep.subr.mxu0 0.0
        %5442 = vmatpush1.xpose.msra.mxu0 0.0
        %5443 = vmatprep.subr.mxu0 0.0
        %5444 = vmatpush1.xpose.msra.mxu0 0.0
        %5445 = vmatprep.subr.mxu0 0.0
        %5446 = vmatpush1.xpose.msra.mxu0 0.0
        %5447 = vmatprep.subr.mxu0 0.0
        %5448 = vmatpush1.xpose.msra.mxu0 0.0
        %5449 = vmatprep.subr.mxu0 0.0
        %5450 = vmatpush1.xpose.msra.mxu0 0.0
        %5451 = vmatprep.subr.mxu0 0.0
        %5452 = vmatpush1.xpose.msra.mxu0 0.0
        %5453 = vmatprep.subr.mxu0 0.0
        %5454 = vmatpush1.xpose.msra.mxu0 0.0
        %5455 = vmatprep.subr.mxu0 0.0
        %5456 = vmatpush1.xpose.msra.mxu0 0.0
        %5457 = vmatprep.subr.mxu0 0.0
        %5458 = vmatpush1.xpose.msra.mxu0 0.0
        %5459 = vmatprep.subr.mxu0 0.0
        %5460 = vmatpush1.xpose.msra.mxu0 0.0
        %5461 = vmatprep.subr.mxu0 0.0
        %5462 = vmatpush1.xpose.msra.mxu0 0.0
        %5463 = vmatprep.subr.mxu0 0.0
        %5464 = vmatpush1.xpose.msra.mxu0 0.0
        %5465 = vmatprep.subr.mxu0 0.0
        %5466 = vmatpush1.xpose.msra.mxu0 0.0
        %5467 = vmatprep.subr.mxu0 0.0
        %5468 = vmatpush1.xpose.msra.mxu0 0.0
        %5469 = vmatprep.subr.mxu0 0.0
        %5470 = vmatpush1.xpose.msra.mxu0 0.0
        %5471 = vmatprep.subr.mxu0 0.0
        %5472 = vmatpush1.xpose.msra.mxu0 0.0
        %5473 = vmatprep.subr.mxu0 0.0
        %5474 = vmatpush1.xpose.msra.mxu0 0.0
        %5475 = vmatprep.subr.mxu0 0.0
        %5476 = vmatpush1.xpose.msra.mxu0 0.0
        %5477 = vmatprep.subr.mxu0 0.0
        %5478 = vmatpush1.xpose.msra.mxu0 0.0
        %5479 = vmatprep.subr.mxu0 0.0
        %5480 = vmatpush1.xpose.msra.mxu0 0.0
        %5481 = vmatprep.subr.mxu0 0.0
        %5482 = vmatpush1.xpose.msra.mxu0 0.0
        %5483 = vmatprep.subr.mxu0 0.0
        %5484 = vmatpush1.xpose.msra.mxu0 0.0
        %5485 = vmatprep.subr.mxu0 0.0
        %5486 = vmatpush1.xpose.msra.mxu0 0.0
        %5487 = vmatprep.subr.mxu0 0.0
        %5488 = vmatpush1.xpose.msra.mxu0 0.0
        %5489 = vmatprep.subr.mxu0 0.0
        %5490 = vmatpush1.xpose.msra.mxu0 0.0
        %5491 = vmatprep.subr.mxu0 0.0
        %5492 = vmatpush1.xpose.msra.mxu0 0.0
        %5493 = vmatprep.subr.mxu0 0.0
        %5494 = vmatpush1.xpose.msra.mxu0 0.0
        %5495 = vmatprep.subr.mxu0 0.0
        %5496 = vmatpush1.xpose.msra.mxu0 0.0
        %5497 = vmatprep.subr.mxu0 0.0
        %5498 = vmatpush1.xpose.msra.mxu0 0.0
        %5499 = vmatprep.subr.mxu0 0.0
        %5500 = vmatpush1.xpose.msra.mxu0 0.0
        %5501 = vmatprep.mubr.bf16.mxu0 0
        %5502 = vmatmul.mubr.bf16.gmra.mrb[0].mxu0 %v5429
        %v5503 = vpop.f32.mrb[0].mxu0
        %v5504 = vadd.f32 %v5426, %v5503
        %v5505 = vpop.f32.mrb[0].mxu0
        %v5506 = vpop.f32.mrb[0].mxu0
        %v5507 = vpop.f32.mrb[0].mxu0
        %5508 = vdwg.mxu0
        %v5510 = vsel %vm1700, %v5413, 0
        %v5513 = vsel %vm1700, %v5418, 0
        %5515 = vmatprep.subr.mxu0 0.0
        %5516 = vmatpush1.msra.mxu0 %v5504
        %5517 = vmatprep.subr.mxu0 0.0
        %5518 = vmatpush1.msra.mxu0 0.0
        %5519 = vmatprep.subr.mxu0 0.0
        %5520 = vmatpush1.msra.mxu0 0.0
        %5521 = vmatprep.subr.mxu0 0.0
        %5522 = vmatpush1.msra.mxu0 0.0
        %5523 = vmatprep.subr.mxu0 0.0
        %5524 = vmatpush1.msra.mxu0 0.0
        %5525 = vmatprep.subr.mxu0 0.0
        %5526 = vmatpush1.msra.mxu0 0.0
        %5527 = vmatprep.subr.mxu0 0.0
        %5528 = vmatpush1.msra.mxu0 0.0
        %5529 = vmatprep.subr.mxu0 0.0
        %5530 = vmatpush1.msra.mxu0 0.0
        %5531 = vmatprep.subr.mxu0 0.0
        %5532 = vmatpush1.msra.mxu0 0.0
        %5533 = vmatprep.subr.mxu0 0.0
        %5534 = vmatpush1.msra.mxu0 0.0
        %5535 = vmatprep.subr.mxu0 0.0
        %5536 = vmatpush1.msra.mxu0 0.0
        %5537 = vmatprep.subr.mxu0 0.0
        %5538 = vmatpush1.msra.mxu0 0.0
        %5539 = vmatprep.subr.mxu0 0.0
        %5540 = vmatpush1.msra.mxu0 0.0
        %5541 = vmatprep.subr.mxu0 0.0
        %5542 = vmatpush1.msra.mxu0 0.0
        %5543 = vmatprep.subr.mxu0 0.0
        %5544 = vmatpush1.msra.mxu0 0.0
        %5545 = vmatprep.subr.mxu0 0.0
        %5546 = vmatpush1.msra.mxu0 0.0
        %5547 = vmatprep.subr.mxu0 0.0
        %5548 = vmatpush1.msra.mxu0 0.0
        %5549 = vmatprep.subr.mxu0 0.0
        %5550 = vmatpush1.msra.mxu0 0.0
        %5551 = vmatprep.subr.mxu0 0.0
        %5552 = vmatpush1.msra.mxu0 0.0
        %5553 = vmatprep.subr.mxu0 0.0
        %5554 = vmatpush1.msra.mxu0 0.0
        %5555 = vmatprep.subr.mxu0 0.0
        %5556 = vmatpush1.msra.mxu0 0.0
        %5557 = vmatprep.subr.mxu0 0.0
        %5558 = vmatpush1.msra.mxu0 0.0
        %5559 = vmatprep.subr.mxu0 0.0
        %5560 = vmatpush1.msra.mxu0 0.0
        %5561 = vmatprep.subr.mxu0 0.0
        %5562 = vmatpush1.msra.mxu0 0.0
        %5563 = vmatprep.subr.mxu0 0.0
        %5564 = vmatpush1.msra.mxu0 0.0
        %5565 = vmatprep.subr.mxu0 0.0
        %5566 = vmatpush1.msra.mxu0 0.0
        %5567 = vmatprep.subr.mxu0 0.0
        %5568 = vmatpush1.msra.mxu0 0.0
        %5569 = vmatprep.subr.mxu0 0.0
        %5570 = vmatpush1.msra.mxu0 0.0
        %5571 = vmatprep.subr.mxu0 0.0
        %5572 = vmatpush1.msra.mxu0 0.0
        %5573 = vmatprep.subr.mxu0 0.0
        %5574 = vmatpush1.msra.mxu0 0.0
        %5575 = vmatprep.subr.mxu0 0.0
        %5576 = vmatpush1.msra.mxu0 0.0
        %5577 = vmatprep.subr.mxu0 0.0
        %5578 = vmatpush1.msra.mxu0 0.0
        %5579 = vmatprep.mubr.f32.mxu0 0.0
        %5580 = vmatmul.mubr.f32.gmra.mrb[0].mxu0 %v5510
        %v5581 = vpop.f32.mrb[0].mxu0
        %v5582 = vadd.f32 0.0, %v5581
        %v5583 = vpop.f32.mrb[0].mxu0
        %5584 = vmatprep.mubr.f32.mxu0 0.0
        %5585 = vmatmul.mubr.f32.gmra.mrb[0].mxu0 %v5513
        %v5586 = vpop.f32.mrb[0].mxu0
        %v5587 = vadd.f32 0.0, %v5586
        %v5588 = vpop.f32.mrb[0].mxu0
        %5589 = vdwg.mxu0
        %v5590 = vsel %vm1539, %v5582, -1e+30
        %v5591 = vsel %vm1540, %v5587, -1e+30
        %v5592 = vsel %vm1784, %v5590, -inf
        %5593 = vmax.xlane.f32.xlu0 %v5592
        %v5594 = vpop.xlane.xlu0 %5593
        %v5595 = vsel %vm1784, %v5591, -inf
        %5596 = vmax.xlane.f32.xlu0 %v5595
        %v5597 = vpop.xlane.xlu0 %5596
        %v5598 = vsub.f32 %v5590, %v5594
        %v5599 = vsub.f32 %v5591, %v5597
        %v5600 = vmul.f32 %v5598, 1.442695
        %v5601 = vpow.pop %v5600
        %v5602 = vmul.f32 %v5599, 1.442695
        %v5603 = vpow.pop %v5602
        %v5604 = vsel %vm1784, %v5601, 0.0
        %5605 = vadd.xlane.f32.xlu0 %v5604
        %v5606 = vpop.xlane.xlu0 %5605
        %v5607 = vsel %vm1784, %v5603, 0.0
        %5608 = vadd.xlane.f32.xlu0 %v5607
        %v5609 = vpop.xlane.xlu0 %5608
        %v5610 = vrcp.pop %v5606
        %v5611 = vrcp.pop %v5609
        %v5612 = vmul.f32 %v5601, %v5610
        %v5613 = vmul.f32 %v5603, %v5611
        %v5614 = vld [vmem:[%s1441] sm:$0xf]
        %v5615 = vld [vmem:[%s1441 + $0x4] sm:$0xf]
        %v5616 = vld [vmem:[%s1441 + $0x8] sm:$0xf]
        %v5617 = vld [vmem:[%s1441 + $0xc] sm:$0xf]
        %v5618 = vld [vmem:[%s1459] sm:$0x1]
        %v5620 = vlaneseq
        %v5621 = vshrl.u32 %v5620, 7
        %v5622 = vsub.s32 0, %v5621
        %v5623 = vrot.slane %v5618, %v5622
        %v5629 = vunpack.c.l.b16 %v5614
        %v5630 = vunpack.c.l.b16 %v5615
        %v5631 = vunpack.c.l.b16 %v5616
        %v5632 = vunpack.c.l.b16 %v5617
        %v5633 = vpack.c.b16 %v5630, %v5629
        %v5634 = vpack.c.b16 %v5632, %v5631
        %5637 = vmatprep.subr.bf16.mxu0 0
        %5638 = vmatpush1.bf16.msra.mxu0 %v5633
        %5639 = vmatprep.subr.bf16.mxu0 0
        %5640 = vmatpush1.bf16.msra.mxu0 %v5634
        %5641 = vmatprep.subr.bf16.mxu0 0
        %5642 = vmatpush1.bf16.msra.mxu0 0
        %5643 = vmatprep.subr.bf16.mxu0 0
        %5644 = vmatpush1.bf16.msra.mxu0 0
        %5645 = vmatprep.subr.bf16.mxu0 0
        %5646 = vmatpush1.bf16.msra.mxu0 0
        %5647 = vmatprep.subr.bf16.mxu0 0
        %5648 = vmatpush1.bf16.msra.mxu0 0
        %5649 = vmatprep.subr.bf16.mxu0 0
        %5650 = vmatpush1.bf16.msra.mxu0 0
        %5651 = vmatprep.subr.bf16.mxu0 0
        %5652 = vmatpush1.bf16.msra.mxu0 0
        %5653 = vmatprep.subr.bf16.mxu0 0
        %5654 = vmatpush1.bf16.msra.mxu0 0
        %5655 = vmatprep.subr.bf16.mxu0 0
        %5656 = vmatpush1.bf16.msra.mxu0 0
        %5657 = vmatprep.subr.bf16.mxu0 0
        %5658 = vmatpush1.bf16.msra.mxu0 0
        %5659 = vmatprep.subr.bf16.mxu0 0
        %5660 = vmatpush1.bf16.msra.mxu0 0
        %5661 = vmatprep.subr.bf16.mxu0 0
        %5662 = vmatpush1.bf16.msra.mxu0 0
        %5663 = vmatprep.subr.bf16.mxu0 0
        %5664 = vmatpush1.bf16.msra.mxu0 0
        %5665 = vmatprep.subr.bf16.mxu0 0
        %5666 = vmatpush1.bf16.msra.mxu0 0
        %5667 = vmatprep.subr.bf16.mxu0 0
        %5668 = vmatpush1.bf16.msra.mxu0 0
        %5669 = vmatprep.mubr.f32.mxu0 0.0
        %5670 = vmatmul.mubr.f32.gmra.mrb[0].mxu0 %v5432
        %v5671 = vpop.f32.mrb[0].mxu0
        %v5672 = vadd.f32 %v5623, %v5671
        %v5673 = vpop.f32.mrb[0].mxu0
        %5674 = vmatprep.mubr.f32.mxu0 0.0
        %5675 = vmatmul.mubr.f32.gmra.mrb[0].mxu0 %v5435
        %v5676 = vpop.f32.mrb[0].mxu0
        %v5677 = vadd.f32 %v5623, %v5676
        %v5678 = vpop.f32.mrb[0].mxu0
        %5679 = vdwg.mxu0
        %v5681 = vsel %vm1784, %v5612, 0
        %v5684 = vsel %vm1784, %v5613, 0
        %5686 = vmatprep.subr.mxu0 0.0
        %5687 = vmatpush1.msra.mxu0 %v5672
        %5688 = vmatprep.subr.mxu0 0.0
        %5689 = vmatpush1.msra.mxu0 %v5677
        %5690 = vmatprep.subr.mxu0 0.0
        %5691 = vmatpush1.msra.mxu0 0.0
        %5692 = vmatprep.subr.mxu0 0.0
        %5693 = vmatpush1.msra.mxu0 0.0
        %5694 = vmatprep.subr.mxu0 0.0
        %5695 = vmatpush1.msra.mxu0 0.0
        %5696 = vmatprep.subr.mxu0 0.0
        %5697 = vmatpush1.msra.mxu0 0.0
        %5698 = vmatprep.subr.mxu0 0.0
        %5699 = vmatpush1.msra.mxu0 0.0
        %5700 = vmatprep.subr.mxu0 0.0
        %5701 = vmatpush1.msra.mxu0 0.0
        %5702 = vmatprep.subr.mxu0 0.0
        %5703 = vmatpush1.msra.mxu0 0.0
        %5704 = vmatprep.subr.mxu0 0.0
        %5705 = vmatpush1.msra.mxu0 0.0
        %5706 = vmatprep.subr.mxu0 0.0
        %5707 = vmatpush1.msra.mxu0 0.0
        %5708 = vmatprep.subr.mxu0 0.0
        %5709 = vmatpush1.msra.mxu0 0.0
        %5710 = vmatprep.subr.mxu0 0.0
        %5711 = vmatpush1.msra.mxu0 0.0
        %5712 = vmatprep.subr.mxu0 0.0
        %5713 = vmatpush1.msra.mxu0 0.0
        %5714 = vmatprep.subr.mxu0 0.0
        %5715 = vmatpush1.msra.mxu0 0.0
        %5716 = vmatprep.subr.mxu0 0.0
        %5717 = vmatpush1.msra.mxu0 0.0
        %5718 = vmatprep.subr.mxu0 0.0
        %5719 = vmatpush1.msra.mxu0 0.0
        %5720 = vmatprep.subr.mxu0 0.0
        %5721 = vmatpush1.msra.mxu0 0.0
        %5722 = vmatprep.subr.mxu0 0.0
        %5723 = vmatpush1.msra.mxu0 0.0
        %5724 = vmatprep.subr.mxu0 0.0
        %5725 = vmatpush1.msra.mxu0 0.0
        %5726 = vmatprep.subr.mxu0 0.0
        %5727 = vmatpush1.msra.mxu0 0.0
        %5728 = vmatprep.subr.mxu0 0.0
        %5729 = vmatpush1.msra.mxu0 0.0
        %5730 = vmatprep.subr.mxu0 0.0
        %5731 = vmatpush1.msra.mxu0 0.0
        %5732 = vmatprep.subr.mxu0 0.0
        %5733 = vmatpush1.msra.mxu0 0.0
        %5734 = vmatprep.subr.mxu0 0.0
        %5735 = vmatpush1.msra.mxu0 0.0
        %5736 = vmatprep.subr.mxu0 0.0
        %5737 = vmatpush1.msra.mxu0 0.0
        %5738 = vmatprep.subr.mxu0 0.0
        %5739 = vmatpush1.msra.mxu0 0.0
        %5740 = vmatprep.subr.mxu0 0.0
        %5741 = vmatpush1.msra.mxu0 0.0
        %5742 = vmatprep.subr.mxu0 0.0
        %5743 = vmatpush1.msra.mxu0 0.0
        %5744 = vmatprep.subr.mxu0 0.0
        %5745 = vmatpush1.msra.mxu0 0.0
        %5746 = vmatprep.subr.mxu0 0.0
        %5747 = vmatpush1.msra.mxu0 0.0
        %5748 = vmatprep.subr.mxu0 0.0
        %5749 = vmatpush1.msra.mxu0 0.0
        %5750 = vmatprep.mubr.f32.mxu0 0.0
        %5751 = vmatmul.mubr.f32.gmra.mrb[0].mxu0 %v5681
        %v5752 = vpop.f32.mrb[0].mxu0
        %v5753 = vadd.f32 0.0, %v5752
        %v5754 = vpop.f32.mrb[0].mxu0
        %5755 = vmatprep.mubr.f32.mxu0 0.0
        %5756 = vmatmul.mubr.f32.gmra.mrb[0].mxu0 %v5684
        %v5757 = vpop.f32.mrb[0].mxu0
        %v5758 = vadd.f32 0.0, %v5757
        %v5759 = vpop.f32.mrb[0].mxu0
        %5760 = vdwg.mxu0
        %v5761 = vld [vmem:[%s1446] sm:$0xf]
        %s5762 = scalar_lea.vmem %s1431, 16
        %v5763 = vld [vmem:[%s5762] sm:$0xf]
        %v5764 = vld [vmem:[%s5762 + $0x4] sm:$0xf]
        %v5765 = vld [vmem:[%s5762 + $0x8] sm:$0xf]
        %v5766 = vld [vmem:[%s5762 + $0xc] sm:$0xf]
        %s5767 = scalar_lea.vmem %s1450, 1
        %v5768 = vld [vmem:[%s5767] sm:$0x1]
        %v5770 = vlaneseq
        %v5771 = vshrl.u32 %v5770, 7
        %v5772 = vsub.s32 0, %v5771
        %v5773 = vrot.slane %v5768, %v5772
        %v5779 = vunpack.c.l.b16 %v5763
        %v5780 = vunpack.c.l.b16 %v5764
        %v5781 = vunpack.c.l.b16 %v5765
        %v5782 = vunpack.c.l.b16 %v5766
        %v5783 = vpack.c.b16 %v5780, %v5779
        %v5784 = vpack.c.b16 %v5782, %v5781
        %5787 = vmatprep.subr.bf16.mxu0 0
        %5788 = vmatpush1.bf16.msra.mxu0 %v5783
        %5789 = vmatprep.subr.bf16.mxu0 0
        %5790 = vmatpush1.bf16.msra.mxu0 %v5784
        %5791 = vmatprep.subr.bf16.mxu0 0
        %5792 = vmatpush1.bf16.msra.mxu0 0
        %5793 = vmatprep.subr.bf16.mxu0 0
        %5794 = vmatpush1.bf16.msra.mxu0 0
        %5795 = vmatprep.subr.bf16.mxu0 0
        %5796 = vmatpush1.bf16.msra.mxu0 0
        %5797 = vmatprep.subr.bf16.mxu0 0
        %5798 = vmatpush1.bf16.msra.mxu0 0
        %5799 = vmatprep.subr.bf16.mxu0 0
        %5800 = vmatpush1.bf16.msra.mxu0 0
        %5801 = vmatprep.subr.bf16.mxu0 0
        %5802 = vmatpush1.bf16.msra.mxu0 0
        %5803 = vmatprep.subr.bf16.mxu0 0
        %5804 = vmatpush1.bf16.msra.mxu0 0
        %5805 = vmatprep.subr.bf16.mxu0 0
        %5806 = vmatpush1.bf16.msra.mxu0 0
        %5807 = vmatprep.subr.bf16.mxu0 0
        %5808 = vmatpush1.bf16.msra.mxu0 0
        %5809 = vmatprep.subr.bf16.mxu0 0
        %5810 = vmatpush1.bf16.msra.mxu0 0
        %5811 = vmatprep.subr.bf16.mxu0 0
        %5812 = vmatpush1.bf16.msra.mxu0 0
        %5813 = vmatprep.subr.bf16.mxu0 0
        %5814 = vmatpush1.bf16.msra.mxu0 0
        %5815 = vmatprep.subr.bf16.mxu0 0
        %5816 = vmatpush1.bf16.msra.mxu0 0
        %5817 = vmatprep.subr.bf16.mxu0 0
        %5818 = vmatpush1.bf16.msra.mxu0 0
        %5819 = vmatprep.mubr.f32.mxu0 0.0
        %5820 = vmatmul.mubr.f32.gmra.mrb[0].mxu0 %v5373
        %v5821 = vpop.f32.mrb[0].mxu0
        %v5822 = vadd.f32 %v5773, %v5821
        %v5823 = vpop.f32.mrb[0].mxu0
        %5824 = vmatprep.mubr.f32.mxu0 0.0
        %5825 = vmatmul.mubr.f32.gmra.mrb[0].mxu0 %v5376
        %v5826 = vpop.f32.mrb[0].mxu0
        %v5827 = vadd.f32 %v5773, %v5826
        %v5828 = vpop.f32.mrb[0].mxu0
        %5829 = vdwg.mxu0
        %s5830 = scalar_lea.vmem %s1436, 4
        %v5831 = vld [vmem:[%s5830] sm:$0xf]
        %s5832 = scalar_lea.vmem %s1455, 8
        %v5833 = vld [vmem:[%s5832] sm:$0xff]
        %5835 = vset.pattern.permute.xlu0 0
        %5836 = vperm.xlu0 %5835, %v5833
        %v5837 = vpop.permute.xlu0 %5836
        %v5840 = vsel %vm1568, %v5831, 0
        %5842 = vmatprep.subr.mxu0 0.0
        %5843 = vmatpush1.xpose.msra.mxu0 %v5432
        %5844 = vmatprep.subr.mxu0 0.0
        %5845 = vmatpush1.xpose.msra.mxu0 %v5435
        %5846 = vmatprep.subr.mxu0 0.0
        %5847 = vmatpush1.xpose.msra.mxu0 0.0
        %5848 = vmatprep.subr.mxu0 0.0
        %5849 = vmatpush1.xpose.msra.mxu0 0.0
        %5850 = vmatprep.subr.mxu0 0.0
        %5851 = vmatpush1.xpose.msra.mxu0 0.0
        %5852 = vmatprep.subr.mxu0 0.0
        %5853 = vmatpush1.xpose.msra.mxu0 0.0
        %5854 = vmatprep.subr.mxu0 0.0
        %5855 = vmatpush1.xpose.msra.mxu0 0.0
        %5856 = vmatprep.subr.mxu0 0.0
        %5857 = vmatpush1.xpose.msra.mxu0 0.0
        %5858 = vmatprep.subr.mxu0 0.0
        %5859 = vmatpush1.xpose.msra.mxu0 0.0
        %5860 = vmatprep.subr.mxu0 0.0
        %5861 = vmatpush1.xpose.msra.mxu0 0.0
        %5862 = vmatprep.subr.mxu0 0.0
        %5863 = vmatpush1.xpose.msra.mxu0 0.0
        %5864 = vmatprep.subr.mxu0 0.0
        %5865 = vmatpush1.xpose.msra.mxu0 0.0
        %5866 = vmatprep.subr.mxu0 0.0
        %5867 = vmatpush1.xpose.msra.mxu0 0.0
        %5868 = vmatprep.subr.mxu0 0.0
        %5869 = vmatpush1.xpose.msra.mxu0 0.0
        %5870 = vmatprep.subr.mxu0 0.0
        %5871 = vmatpush1.xpose.msra.mxu0 0.0
        %5872 = vmatprep.subr.mxu0 0.0
        %5873 = vmatpush1.xpose.msra.mxu0 0.0
        %5874 = vmatprep.subr.mxu0 0.0
        %5875 = vmatpush1.xpose.msra.mxu0 0.0
        %5876 = vmatprep.subr.mxu0 0.0
        %5877 = vmatpush1.xpose.msra.mxu0 0.0
        %5878 = vmatprep.subr.mxu0 0.0
        %5879 = vmatpush1.xpose.msra.mxu0 0.0
        %5880 = vmatprep.subr.mxu0 0.0
        %5881 = vmatpush1.xpose.msra.mxu0 0.0
        %5882 = vmatprep.subr.mxu0 0.0
        %5883 = vmatpush1.xpose.msra.mxu0 0.0
        %5884 = vmatprep.subr.mxu0 0.0
        %5885 = vmatpush1.xpose.msra.mxu0 0.0
        %5886 = vmatprep.subr.mxu0 0.0
        %5887 = vmatpush1.xpose.msra.mxu0 0.0
        %5888 = vmatprep.subr.mxu0 0.0
        %5889 = vmatpush1.xpose.msra.mxu0 0.0
        %5890 = vmatprep.subr.mxu0 0.0
        %5891 = vmatpush1.xpose.msra.mxu0 0.0
        %5892 = vmatprep.subr.mxu0 0.0
        %5893 = vmatpush1.xpose.msra.mxu0 0.0
        %5894 = vmatprep.subr.mxu0 0.0
        %5895 = vmatpush1.xpose.msra.mxu0 0.0
        %5896 = vmatprep.subr.mxu0 0.0
        %5897 = vmatpush1.xpose.msra.mxu0 0.0
        %5898 = vmatprep.subr.mxu0 0.0
        %5899 = vmatpush1.xpose.msra.mxu0 0.0
        %5900 = vmatprep.subr.mxu0 0.0
        %5901 = vmatpush1.xpose.msra.mxu0 0.0
        %5902 = vmatprep.subr.mxu0 0.0
        %5903 = vmatpush1.xpose.msra.mxu0 0.0
        %5904 = vmatprep.subr.mxu0 0.0
        %5905 = vmatpush1.xpose.msra.mxu0 0.0
        %5906 = vmatprep.mubr.bf16.mxu0 0
        %5907 = vmatmul.mubr.bf16.gmra.mrb[0].mxu0 %v5840
        %v5908 = vpop.f32.mrb[0].mxu0
        %v5909 = vadd.f32 %v5837, %v5908
        %v5910 = vpop.f32.mrb[0].mxu0
        %v5911 = vpop.f32.mrb[0].mxu0
        %v5912 = vpop.f32.mrb[0].mxu0
        %5913 = vdwg.mxu0
        %v5915 = vsel %vm1700, %v5822, 0
        %v5918 = vsel %vm1700, %v5827, 0
        %5920 = vmatprep.subr.mxu0 0.0
        %5921 = vmatpush1.msra.mxu0 %v5909
        %5922 = vmatprep.subr.mxu0 0.0
        %5923 = vmatpush1.msra.mxu0 0.0
        %5924 = vmatprep.subr.mxu0 0.0
        %5925 = vmatpush1.msra.mxu0 0.0
        %5926 = vmatprep.subr.mxu0 0.0
        %5927 = vmatpush1.msra.mxu0 0.0
        %5928 = vmatprep.subr.mxu0 0.0
        %5929 = vmatpush1.msra.mxu0 0.0
        %5930 = vmatprep.subr.mxu0 0.0
        %5931 = vmatpush1.msra.mxu0 0.0
        %5932 = vmatprep.subr.mxu0 0.0
        %5933 = vmatpush1.msra.mxu0 0.0
        %5934 = vmatprep.subr.mxu0 0.0
        %5935 = vmatpush1.msra.mxu0 0.0
        %5936 = vmatprep.subr.mxu0 0.0
        %5937 = vmatpush1.msra.mxu0 0.0
        %5938 = vmatprep.subr.mxu0 0.0
        %5939 = vmatpush1.msra.mxu0 0.0
        %5940 = vmatprep.subr.mxu0 0.0
        %5941 = vmatpush1.msra.mxu0 0.0
        %5942 = vmatprep.subr.mxu0 0.0
        %5943 = vmatpush1.msra.mxu0 0.0
        %5944 = vmatprep.subr.mxu0 0.0
        %5945 = vmatpush1.msra.mxu0 0.0
        %5946 = vmatprep.subr.mxu0 0.0
        %5947 = vmatpush1.msra.mxu0 0.0
        %5948 = vmatprep.subr.mxu0 0.0
        %5949 = vmatpush1.msra.mxu0 0.0
        %5950 = vmatprep.subr.mxu0 0.0
        %5951 = vmatpush1.msra.mxu0 0.0
        %5952 = vmatprep.subr.mxu0 0.0
        %5953 = vmatpush1.msra.mxu0 0.0
        %5954 = vmatprep.subr.mxu0 0.0
        %5955 = vmatpush1.msra.mxu0 0.0
        %5956 = vmatprep.subr.mxu0 0.0
        %5957 = vmatpush1.msra.mxu0 0.0
        %5958 = vmatprep.subr.mxu0 0.0
        %5959 = vmatpush1.msra.mxu0 0.0
        %5960 = vmatprep.subr.mxu0 0.0
        %5961 = vmatpush1.msra.mxu0 0.0
        %5962 = vmatprep.subr.mxu0 0.0
        %5963 = vmatpush1.msra.mxu0 0.0
        %5964 = vmatprep.subr.mxu0 0.0
        %5965 = vmatpush1.msra.mxu0 0.0
        %5966 = vmatprep.subr.mxu0 0.0
        %5967 = vmatpush1.msra.mxu0 0.0
        %5968 = vmatprep.subr.mxu0 0.0
        %5969 = vmatpush1.msra.mxu0 0.0
        %5970 = vmatprep.subr.mxu0 0.0
        %5971 = vmatpush1.msra.mxu0 0.0
        %5972 = vmatprep.subr.mxu0 0.0
        %5973 = vmatpush1.msra.mxu0 0.0
        %5974 = vmatprep.subr.mxu0 0.0
        %5975 = vmatpush1.msra.mxu0 0.0
        %5976 = vmatprep.subr.mxu0 0.0
        %5977 = vmatpush1.msra.mxu0 0.0
        %5978 = vmatprep.subr.mxu0 0.0
        %5979 = vmatpush1.msra.mxu0 0.0
        %5980 = vmatprep.subr.mxu0 0.0
        %5981 = vmatpush1.msra.mxu0 0.0
        %5982 = vmatprep.subr.mxu0 0.0
        %5983 = vmatpush1.msra.mxu0 0.0
        %5984 = vmatprep.mubr.f32.mxu0 0.0
        %5985 = vmatmul.mubr.f32.gmra.mrb[0].mxu0 %v5915
        %v5986 = vpop.f32.mrb[0].mxu0
        %v5987 = vadd.f32 0.0, %v5986
        %v5988 = vpop.f32.mrb[0].mxu0
        %5989 = vmatprep.mubr.f32.mxu0 0.0
        %5990 = vmatmul.mubr.f32.gmra.mrb[0].mxu0 %v5918
        %v5991 = vpop.f32.mrb[0].mxu0
        %v5992 = vadd.f32 0.0, %v5991
        %v5993 = vpop.f32.mrb[0].mxu0
        %5994 = vdwg.mxu0
        %v5995 = vsel %vm1539, %v5987, -1e+30
        %v5996 = vsel %vm1540, %v5992, -1e+30
        %v5997 = vsel %vm1784, %v5995, -inf
        %5998 = vmax.xlane.f32.xlu0 %v5997
        %v5999 = vpop.xlane.xlu0 %5998
        %v6000 = vsel %vm1784, %v5996, -inf
        %6001 = vmax.xlane.f32.xlu0 %v6000
        %v6002 = vpop.xlane.xlu0 %6001
        %v6003 = vsub.f32 %v5995, %v5999
        %v6004 = vsub.f32 %v5996, %v6002
        %v6005 = vmul.f32 %v6003, 1.442695
        %v6006 = vpow.pop %v6005
        %v6007 = vmul.f32 %v6004, 1.442695
        %v6008 = vpow.pop %v6007
        %v6009 = vsel %vm1784, %v6006, 0.0
        %6010 = vadd.xlane.f32.xlu0 %v6009
        %v6011 = vpop.xlane.xlu0 %6010
        %v6012 = vsel %vm1784, %v6008, 0.0
        %6013 = vadd.xlane.f32.xlu0 %v6012
        %v6014 = vpop.xlane.xlu0 %6013
        %v6015 = vrcp.pop %v6011
        %v6016 = vrcp.pop %v6014
        %v6017 = vmul.f32 %v6006, %v6015
        %v6018 = vmul.f32 %v6008, %v6016
        %s6019 = scalar_lea.vmem %s1441, 16
        %v6020 = vld [vmem:[%s6019] sm:$0xf]
        %v6021 = vld [vmem:[%s6019 + $0x4] sm:$0xf]
        %v6022 = vld [vmem:[%s6019 + $0x8] sm:$0xf]
        %v6023 = vld [vmem:[%s6019 + $0xc] sm:$0xf]
        %s6024 = scalar_lea.vmem %s1459, 1
        %v6025 = vld [vmem:[%s6024] sm:$0x1]
        %v6027 = vlaneseq
        %v6028 = vshrl.u32 %v6027, 7
        %v6029 = vsub.s32 0, %v6028
        %v6030 = vrot.slane %v6025, %v6029
        %v6036 = vunpack.c.l.b16 %v6020
        %v6037 = vunpack.c.l.b16 %v6021
        %v6038 = vunpack.c.l.b16 %v6022
        %v6039 = vunpack.c.l.b16 %v6023
        %v6040 = vpack.c.b16 %v6037, %v6036
        %v6041 = vpack.c.b16 %v6039, %v6038
        %6044 = vmatprep.subr.bf16.mxu0 0
        %6045 = vmatpush1.bf16.msra.mxu0 %v6040
        %6046 = vmatprep.subr.bf16.mxu0 0
        %6047 = vmatpush1.bf16.msra.mxu0 %v6041
        %6048 = vmatprep.subr.bf16.mxu0 0
        %6049 = vmatpush1.bf16.msra.mxu0 0
        %6050 = vmatprep.subr.bf16.mxu0 0
        %6051 = vmatpush1.bf16.msra.mxu0 0
        %6052 = vmatprep.subr.bf16.mxu0 0
        %6053 = vmatpush1.bf16.msra.mxu0 0
        %6054 = vmatprep.subr.bf16.mxu0 0
        %6055 = vmatpush1.bf16.msra.mxu0 0
        %6056 = vmatprep.subr.bf16.mxu0 0
        %6057 = vmatpush1.bf16.msra.mxu0 0
        %6058 = vmatprep.subr.bf16.mxu0 0
        %6059 = vmatpush1.bf16.msra.mxu0 0
        %6060 = vmatprep.subr.bf16.mxu0 0
        %6061 = vmatpush1.bf16.msra.mxu0 0
        %6062 = vmatprep.subr.bf16.mxu0 0
        %6063 = vmatpush1.bf16.msra.mxu0 0
        %6064 = vmatprep.subr.bf16.mxu0 0
        %6065 = vmatpush1.bf16.msra.mxu0 0
        %6066 = vmatprep.subr.bf16.mxu0 0
        %6067 = vmatpush1.bf16.msra.mxu0 0
        %6068 = vmatprep.subr.bf16.mxu0 0
        %6069 = vmatpush1.bf16.msra.mxu0 0
        %6070 = vmatprep.subr.bf16.mxu0 0
        %6071 = vmatpush1.bf16.msra.mxu0 0
        %6072 = vmatprep.subr.bf16.mxu0 0
        %6073 = vmatpush1.bf16.msra.mxu0 0
        %6074 = vmatprep.subr.bf16.mxu0 0
        %6075 = vmatpush1.bf16.msra.mxu0 0
        %6076 = vmatprep.mubr.f32.mxu0 0.0
        %6077 = vmatmul.mubr.f32.gmra.mrb[0].mxu0 %v5432
        %v6078 = vpop.f32.mrb[0].mxu0
        %v6079 = vadd.f32 %v6030, %v6078
        %v6080 = vpop.f32.mrb[0].mxu0
        %6081 = vmatprep.mubr.f32.mxu0 0.0
        %6082 = vmatmul.mubr.f32.gmra.mrb[0].mxu0 %v5435
        %v6083 = vpop.f32.mrb[0].mxu0
        %v6084 = vadd.f32 %v6030, %v6083
        %v6085 = vpop.f32.mrb[0].mxu0
        %6086 = vdwg.mxu0
        %v6088 = vsel %vm1784, %v6017, 0
        %v6091 = vsel %vm1784, %v6018, 0
        %6093 = vmatprep.subr.mxu0 0.0
        %6094 = vmatpush1.msra.mxu0 %v6079
        %6095 = vmatprep.subr.mxu0 0.0
        %6096 = vmatpush1.msra.mxu0 %v6084
        %6097 = vmatprep.subr.mxu0 0.0
        %6098 = vmatpush1.msra.mxu0 0.0
        %6099 = vmatprep.subr.mxu0 0.0
        %6100 = vmatpush1.msra.mxu0 0.0
        %6101 = vmatprep.subr.mxu0 0.0
        %6102 = vmatpush1.msra.mxu0 0.0
        %6103 = vmatprep.subr.mxu0 0.0
        %6104 = vmatpush1.msra.mxu0 0.0
        %6105 = vmatprep.subr.mxu0 0.0
        %6106 = vmatpush1.msra.mxu0 0.0
        %6107 = vmatprep.subr.mxu0 0.0
        %6108 = vmatpush1.msra.mxu0 0.0
        %6109 = vmatprep.subr.mxu0 0.0
        %6110 = vmatpush1.msra.mxu0 0.0
        %6111 = vmatprep.subr.mxu0 0.0
        %6112 = vmatpush1.msra.mxu0 0.0
        %6113 = vmatprep.subr.mxu0 0.0
        %6114 = vmatpush1.msra.mxu0 0.0
        %6115 = vmatprep.subr.mxu0 0.0
        %6116 = vmatpush1.msra.mxu0 0.0
        %6117 = vmatprep.subr.mxu0 0.0
        %6118 = vmatpush1.msra.mxu0 0.0
        %6119 = vmatprep.subr.mxu0 0.0
        %6120 = vmatpush1.msra.mxu0 0.0
        %6121 = vmatprep.subr.mxu0 0.0
        %6122 = vmatpush1.msra.mxu0 0.0
        %6123 = vmatprep.subr.mxu0 0.0
        %6124 = vmatpush1.msra.mxu0 0.0
        %6125 = vmatprep.subr.mxu0 0.0
        %6126 = vmatpush1.msra.mxu0 0.0
        %6127 = vmatprep.subr.mxu0 0.0
        %6128 = vmatpush1.msra.mxu0 0.0
        %6129 = vmatprep.subr.mxu0 0.0
        %6130 = vmatpush1.msra.mxu0 0.0
        %6131 = vmatprep.subr.mxu0 0.0
        %6132 = vmatpush1.msra.mxu0 0.0
        %6133 = vmatprep.subr.mxu0 0.0
        %6134 = vmatpush1.msra.mxu0 0.0
        %6135 = vmatprep.subr.mxu0 0.0
        %6136 = vmatpush1.msra.mxu0 0.0
        %6137 = vmatprep.subr.mxu0 0.0
        %6138 = vmatpush1.msra.mxu0 0.0
        %6139 = vmatprep.subr.mxu0 0.0
        %6140 = vmatpush1.msra.mxu0 0.0
        %6141 = vmatprep.subr.mxu0 0.0
        %6142 = vmatpush1.msra.mxu0 0.0
        %6143 = vmatprep.subr.mxu0 0.0
        %6144 = vmatpush1.msra.mxu0 0.0
        %6145 = vmatprep.subr.mxu0 0.0
        %6146 = vmatpush1.msra.mxu0 0.0
        %6147 = vmatprep.subr.mxu0 0.0
        %6148 = vmatpush1.msra.mxu0 0.0
        %6149 = vmatprep.subr.mxu0 0.0
        %6150 = vmatpush1.msra.mxu0 0.0
        %6151 = vmatprep.subr.mxu0 0.0
        %6152 = vmatpush1.msra.mxu0 0.0
        %6153 = vmatprep.subr.mxu0 0.0
        %6154 = vmatpush1.msra.mxu0 0.0
        %6155 = vmatprep.subr.mxu0 0.0
        %6156 = vmatpush1.msra.mxu0 0.0
        %6157 = vmatprep.mubr.f32.mxu0 0.0
        %6158 = vmatmul.mubr.f32.gmra.mrb[0].mxu0 %v6088
        %v6159 = vpop.f32.mrb[0].mxu0
        %v6160 = vadd.f32 0.0, %v6159
        %v6161 = vpop.f32.mrb[0].mxu0
        %6162 = vmatprep.mubr.f32.mxu0 0.0
        %6163 = vmatmul.mubr.f32.gmra.mrb[0].mxu0 %v6091
        %v6164 = vpop.f32.mrb[0].mxu0
        %v6165 = vadd.f32 0.0, %v6164
        %v6166 = vpop.f32.mrb[0].mxu0
        %6167 = vdwg.mxu0
        %s6168 = scalar_lea.vmem %s1446, 4
        %v6169 = vld [vmem:[%s6168] sm:$0xf]
        %v6171 = vsel %vm1700, %v6160, 0
        %v6174 = vsel %vm1700, %v6165, 0
        %v6177 = vsel %vm2369, %v6169, 0
        %6179 = vmatprep.subr.bf16.mxu0 0
        %6180 = vmatpush1.bf16.msra.mxu0 %v6177
        %6181 = vmatprep.subr.bf16.mxu0 0
        %6182 = vmatpush1.bf16.msra.mxu0 0
        %6183 = vmatprep.subr.bf16.mxu0 0
        %6184 = vmatpush1.bf16.msra.mxu0 0
        %6185 = vmatprep.subr.bf16.mxu0 0
        %6186 = vmatpush1.bf16.msra.mxu0 0
        %6187 = vmatprep.subr.bf16.mxu0 0
        %6188 = vmatpush1.bf16.msra.mxu0 0
        %6189 = vmatprep.subr.bf16.mxu0 0
        %6190 = vmatpush1.bf16.msra.mxu0 0
        %6191 = vmatprep.subr.bf16.mxu0 0
        %6192 = vmatpush1.bf16.msra.mxu0 0
        %6193 = vmatprep.subr.bf16.mxu0 0
        %6194 = vmatpush1.bf16.msra.mxu0 0
        %6195 = vmatprep.subr.bf16.mxu0 0
        %6196 = vmatpush1.bf16.msra.mxu0 0
        %6197 = vmatprep.subr.bf16.mxu0 0
        %6198 = vmatpush1.bf16.msra.mxu0 0
        %6199 = vmatprep.subr.bf16.mxu0 0
        %6200 = vmatpush1.bf16.msra.mxu0 0
        %6201 = vmatprep.subr.bf16.mxu0 0
        %6202 = vmatpush1.bf16.msra.mxu0 0
        %6203 = vmatprep.subr.bf16.mxu0 0
        %6204 = vmatpush1.bf16.msra.mxu0 0
        %6205 = vmatprep.subr.bf16.mxu0 0
        %6206 = vmatpush1.bf16.msra.mxu0 0
        %6207 = vmatprep.subr.bf16.mxu0 0
        %6208 = vmatpush1.bf16.msra.mxu0 0
        %6209 = vmatprep.subr.bf16.mxu0 0
        %6210 = vmatpush1.bf16.msra.mxu0 0
        %6211 = vmatprep.mubr.f32.mxu0 0.0
        %6212 = vmatmul.mubr.f32.gmra.mrb[0].mxu0 %v6171
        %v6213 = vpop.f32.mrb[0].mxu0
        %v6214 = vadd.f32 0.0, %v6213
        %v6215 = vpop.f32.mrb[0].mxu0
        %6216 = vmatprep.mubr.f32.mxu0 0.0
        %6217 = vmatmul.mubr.f32.gmra.mrb[0].mxu0 %v6174
        %v6218 = vpop.f32.mrb[0].mxu0
        %v6219 = vadd.f32 0.0, %v6218
        %v6220 = vpop.f32.mrb[0].mxu0
        %6221 = vdwg.mxu0
        %v6223 = vsel %vm1700, %v5753, 0
        %v6226 = vsel %vm1700, %v5758, 0
        %v6229 = vsel %vm2369, %v5761, 0
        %6231 = vmatprep.subr.bf16.mxu0 0
        %6232 = vmatpush1.bf16.msra.mxu0 %v6229
        %6233 = vmatprep.subr.bf16.mxu0 0
        %6234 = vmatpush1.bf16.msra.mxu0 0
        %6235 = vmatprep.subr.bf16.mxu0 0
        %6236 = vmatpush1.bf16.msra.mxu0 0
        %6237 = vmatprep.subr.bf16.mxu0 0
        %6238 = vmatpush1.bf16.msra.mxu0 0
        %6239 = vmatprep.subr.bf16.mxu0 0
        %6240 = vmatpush1.bf16.msra.mxu0 0
        %6241 = vmatprep.subr.bf16.mxu0 0
        %6242 = vmatpush1.bf16.msra.mxu0 0
        %6243 = vmatprep.subr.bf16.mxu0 0
        %6244 = vmatpush1.bf16.msra.mxu0 0
        %6245 = vmatprep.subr.bf16.mxu0 0
        %6246 = vmatpush1.bf16.msra.mxu0 0
        %6247 = vmatprep.subr.bf16.mxu0 0
        %6248 = vmatpush1.bf16.msra.mxu0 0
        %6249 = vmatprep.subr.bf16.mxu0 0
        %6250 = vmatpush1.bf16.msra.mxu0 0
        %6251 = vmatprep.subr.bf16.mxu0 0
        %6252 = vmatpush1.bf16.msra.mxu0 0
        %6253 = vmatprep.subr.bf16.mxu0 0
        %6254 = vmatpush1.bf16.msra.mxu0 0
        %6255 = vmatprep.subr.bf16.mxu0 0
        %6256 = vmatpush1.bf16.msra.mxu0 0
        %6257 = vmatprep.subr.bf16.mxu0 0
        %6258 = vmatpush1.bf16.msra.mxu0 0
        %6259 = vmatprep.subr.bf16.mxu0 0
        %6260 = vmatpush1.bf16.msra.mxu0 0
        %6261 = vmatprep.subr.bf16.mxu0 0
        %6262 = vmatpush1.bf16.msra.mxu0 0
        %6263 = vmatprep.mubr.f32.mxu0 0.0
        %6264 = vmatmul.mubr.f32.gmra.mrb[0].mxu0 %v6223
        %v6265 = vpop.f32.mrb[0].mxu0
        %v6266 = vadd.f32 %v6214, %v6265
        %v6267 = vpop.f32.mrb[0].mxu0
        %6268 = vmatprep.mubr.f32.mxu0 0.0
        %6269 = vmatmul.mubr.f32.gmra.mrb[0].mxu0 %v6226
        %v6270 = vpop.f32.mrb[0].mxu0
        %v6271 = vadd.f32 %v6219, %v6270
        %v6272 = vpop.f32.mrb[0].mxu0
        %6273 = vdwg.mxu0
        %s6274 = scalar_lea.vmem %s1431, 32
        %v6275 = vld [vmem:[%s6274] sm:$0xf]
        %v6276 = vld [vmem:[%s6274 + $0x4] sm:$0xf]
        %v6277 = vld [vmem:[%s6274 + $0x8] sm:$0xf]
        %v6278 = vld [vmem:[%s6274 + $0xc] sm:$0xf]
        %s6279 = scalar_lea.vmem %s1450, 2
        %v6280 = vld [vmem:[%s6279] sm:$0x1]
        %v6282 = vlaneseq
        %v6283 = vshrl.u32 %v6282, 7
        %v6284 = vsub.s32 0, %v6283
        %v6285 = vrot.slane %v6280, %v6284
        %v6291 = vunpack.c.l.b16 %v6275
        %v6292 = vunpack.c.l.b16 %v6276
        %v6293 = vunpack.c.l.b16 %v6277
        %v6294 = vunpack.c.l.b16 %v6278
        %v6295 = vpack.c.b16 %v6292, %v6291
        %v6296 = vpack.c.b16 %v6294, %v6293
        %6299 = vmatprep.subr.bf16.mxu0 0
        %6300 = vmatpush1.bf16.msra.mxu0 %v6295
        %6301 = vmatprep.subr.bf16.mxu0 0
        %6302 = vmatpush1.bf16.msra.mxu0 %v6296
        %6303 = vmatprep.subr.bf16.mxu0 0
        %6304 = vmatpush1.bf16.msra.mxu0 0
        %6305 = vmatprep.subr.bf16.mxu0 0
        %6306 = vmatpush1.bf16.msra.mxu0 0
        %6307 = vmatprep.subr.bf16.mxu0 0
        %6308 = vmatpush1.bf16.msra.mxu0 0
        %6309 = vmatprep.subr.bf16.mxu0 0
        %6310 = vmatpush1.bf16.msra.mxu0 0
        %6311 = vmatprep.subr.bf16.mxu0 0
        %6312 = vmatpush1.bf16.msra.mxu0 0
        %6313 = vmatprep.subr.bf16.mxu0 0
        %6314 = vmatpush1.bf16.msra.mxu0 0
        %6315 = vmatprep.subr.bf16.mxu0 0
        %6316 = vmatpush1.bf16.msra.mxu0 0
        %6317 = vmatprep.subr.bf16.mxu0 0
        %6318 = vmatpush1.bf16.msra.mxu0 0
        %6319 = vmatprep.subr.bf16.mxu0 0
        %6320 = vmatpush1.bf16.msra.mxu0 0
        %6321 = vmatprep.subr.bf16.mxu0 0
        %6322 = vmatpush1.bf16.msra.mxu0 0
        %6323 = vmatprep.subr.bf16.mxu0 0
        %6324 = vmatpush1.bf16.msra.mxu0 0
        %6325 = vmatprep.subr.bf16.mxu0 0
        %6326 = vmatpush1.bf16.msra.mxu0 0
        %6327 = vmatprep.subr.bf16.mxu0 0
        %6328 = vmatpush1.bf16.msra.mxu0 0
        %6329 = vmatprep.subr.bf16.mxu0 0
        %6330 = vmatpush1.bf16.msra.mxu0 0
        %6331 = vmatprep.mubr.f32.mxu0 0.0
        %6332 = vmatmul.mubr.f32.gmra.mrb[0].mxu0 %v5373
        %v6333 = vpop.f32.mrb[0].mxu0
        %v6334 = vadd.f32 %v6285, %v6333
        %v6335 = vpop.f32.mrb[0].mxu0
        %6336 = vmatprep.mubr.f32.mxu0 0.0
        %6337 = vmatmul.mubr.f32.gmra.mrb[0].mxu0 %v5376
        %v6338 = vpop.f32.mrb[0].mxu0
        %v6339 = vadd.f32 %v6285, %v6338
        %v6340 = vpop.f32.mrb[0].mxu0
        %6341 = vdwg.mxu0
        %s6342 = scalar_lea.vmem %s1436, 8
        %v6343 = vld [vmem:[%s6342] sm:$0xf]
        %s6344 = scalar_lea.vmem %s1455, 16
        %v6345 = vld [vmem:[%s6344] sm:$0xff]
        %6347 = vset.pattern.permute.xlu0 0
        %6348 = vperm.xlu0 %6347, %v6345
        %v6349 = vpop.permute.xlu0 %6348
        %v6352 = vsel %vm1568, %v6343, 0
        %6354 = vmatprep.subr.mxu0 0.0
        %6355 = vmatpush1.xpose.msra.mxu0 %v5432
        %6356 = vmatprep.subr.mxu0 0.0
        %6357 = vmatpush1.xpose.msra.mxu0 %v5435
        %6358 = vmatprep.subr.mxu0 0.0
        %6359 = vmatpush1.xpose.msra.mxu0 0.0
        %6360 = vmatprep.subr.mxu0 0.0
        %6361 = vmatpush1.xpose.msra.mxu0 0.0
        %6362 = vmatprep.subr.mxu0 0.0
        %6363 = vmatpush1.xpose.msra.mxu0 0.0
        %6364 = vmatprep.subr.mxu0 0.0
        %6365 = vmatpush1.xpose.msra.mxu0 0.0
        %6366 = vmatprep.subr.mxu0 0.0
        %6367 = vmatpush1.xpose.msra.mxu0 0.0
        %6368 = vmatprep.subr.mxu0 0.0
        %6369 = vmatpush1.xpose.msra.mxu0 0.0
        %6370 = vmatprep.subr.mxu0 0.0
        %6371 = vmatpush1.xpose.msra.mxu0 0.0
        %6372 = vmatprep.subr.mxu0 0.0
        %6373 = vmatpush1.xpose.msra.mxu0 0.0
        %6374 = vmatprep.subr.mxu0 0.0
        %6375 = vmatpush1.xpose.msra.mxu0 0.0
        %6376 = vmatprep.subr.mxu0 0.0
        %6377 = vmatpush1.xpose.msra.mxu0 0.0
        %6378 = vmatprep.subr.mxu0 0.0
        %6379 = vmatpush1.xpose.msra.mxu0 0.0
        %6380 = vmatprep.subr.mxu0 0.0
        %6381 = vmatpush1.xpose.msra.mxu0 0.0
        %6382 = vmatprep.subr.mxu0 0.0
        %6383 = vmatpush1.xpose.msra.mxu0 0.0
        %6384 = vmatprep.subr.mxu0 0.0
        %6385 = vmatpush1.xpose.msra.mxu0 0.0
        %6386 = vmatprep.subr.mxu0 0.0
        %6387 = vmatpush1.xpose.msra.mxu0 0.0
        %6388 = vmatprep.subr.mxu0 0.0
        %6389 = vmatpush1.xpose.msra.mxu0 0.0
        %6390 = vmatprep.subr.mxu0 0.0
        %6391 = vmatpush1.xpose.msra.mxu0 0.0
        %6392 = vmatprep.subr.mxu0 0.0
        %6393 = vmatpush1.xpose.msra.mxu0 0.0
        %6394 = vmatprep.subr.mxu0 0.0
        %6395 = vmatpush1.xpose.msra.mxu0 0.0
        %6396 = vmatprep.subr.mxu0 0.0
        %6397 = vmatpush1.xpose.msra.mxu0 0.0
        %6398 = vmatprep.subr.mxu0 0.0
        %6399 = vmatpush1.xpose.msra.mxu0 0.0
        %6400 = vmatprep.subr.mxu0 0.0
        %6401 = vmatpush1.xpose.msra.mxu0 0.0
        %6402 = vmatprep.subr.mxu0 0.0
        %6403 = vmatpush1.xpose.msra.mxu0 0.0
        %6404 = vmatprep.subr.mxu0 0.0
        %6405 = vmatpush1.xpose.msra.mxu0 0.0
        %6406 = vmatprep.subr.mxu0 0.0
        %6407 = vmatpush1.xpose.msra.mxu0 0.0
        %6408 = vmatprep.subr.mxu0 0.0
        %6409 = vmatpush1.xpose.msra.mxu0 0.0
        %6410 = vmatprep.subr.mxu0 0.0
        %6411 = vmatpush1.xpose.msra.mxu0 0.0
        %6412 = vmatprep.subr.mxu0 0.0
        %6413 = vmatpush1.xpose.msra.mxu0 0.0
        %6414 = vmatprep.subr.mxu0 0.0
        %6415 = vmatpush1.xpose.msra.mxu0 0.0
        %6416 = vmatprep.subr.mxu0 0.0
        %6417 = vmatpush1.xpose.msra.mxu0 0.0
        %6418 = vmatprep.mubr.bf16.mxu0 0
        %6419 = vmatmul.mubr.bf16.gmra.mrb[0].mxu0 %v6352
        %v6420 = vpop.f32.mrb[0].mxu0
        %v6421 = vadd.f32 %v6349, %v6420
        %v6422 = vpop.f32.mrb[0].mxu0
        %v6423 = vpop.f32.mrb[0].mxu0
        %v6424 = vpop.f32.mrb[0].mxu0
        %6425 = vdwg.mxu0
        %v6427 = vsel %vm1700, %v6334, 0
        %v6430 = vsel %vm1700, %v6339, 0
        %6432 = vmatprep.subr.mxu0 0.0
        %6433 = vmatpush1.msra.mxu0 %v6421
        %6434 = vmatprep.subr.mxu0 0.0
        %6435 = vmatpush1.msra.mxu0 0.0
        %6436 = vmatprep.subr.mxu0 0.0
        %6437 = vmatpush1.msra.mxu0 0.0
        %6438 = vmatprep.subr.mxu0 0.0
        %6439 = vmatpush1.msra.mxu0 0.0
        %6440 = vmatprep.subr.mxu0 0.0
        %6441 = vmatpush1.msra.mxu0 0.0
        %6442 = vmatprep.subr.mxu0 0.0
        %6443 = vmatpush1.msra.mxu0 0.0
        %6444 = vmatprep.subr.mxu0 0.0
        %6445 = vmatpush1.msra.mxu0 0.0
        %6446 = vmatprep.subr.mxu0 0.0
        %6447 = vmatpush1.msra.mxu0 0.0
        %6448 = vmatprep.subr.mxu0 0.0
        %6449 = vmatpush1.msra.mxu0 0.0
        %6450 = vmatprep.subr.mxu0 0.0
        %6451 = vmatpush1.msra.mxu0 0.0
        %6452 = vmatprep.subr.mxu0 0.0
        %6453 = vmatpush1.msra.mxu0 0.0
        %6454 = vmatprep.subr.mxu0 0.0
        %6455 = vmatpush1.msra.mxu0 0.0
        %6456 = vmatprep.subr.mxu0 0.0
        %6457 = vmatpush1.msra.mxu0 0.0
        %6458 = vmatprep.subr.mxu0 0.0
        %6459 = vmatpush1.msra.mxu0 0.0
        %6460 = vmatprep.subr.mxu0 0.0
        %6461 = vmatpush1.msra.mxu0 0.0
        %6462 = vmatprep.subr.mxu0 0.0
        %6463 = vmatpush1.msra.mxu0 0.0
        %6464 = vmatprep.subr.mxu0 0.0
        %6465 = vmatpush1.msra.mxu0 0.0
        %6466 = vmatprep.subr.mxu0 0.0
        %6467 = vmatpush1.msra.mxu0 0.0
        %6468 = vmatprep.subr.mxu0 0.0
        %6469 = vmatpush1.msra.mxu0 0.0
        %6470 = vmatprep.subr.mxu0 0.0
        %6471 = vmatpush1.msra.mxu0 0.0
        %6472 = vmatprep.subr.mxu0 0.0
        %6473 = vmatpush1.msra.mxu0 0.0
        %6474 = vmatprep.subr.mxu0 0.0
        %6475 = vmatpush1.msra.mxu0 0.0
        %6476 = vmatprep.subr.mxu0 0.0
        %6477 = vmatpush1.msra.mxu0 0.0
        %6478 = vmatprep.subr.mxu0 0.0
        %6479 = vmatpush1.msra.mxu0 0.0
        %6480 = vmatprep.subr.mxu0 0.0
        %6481 = vmatpush1.msra.mxu0 0.0
        %6482 = vmatprep.subr.mxu0 0.0
        %6483 = vmatpush1.msra.mxu0 0.0
        %6484 = vmatprep.subr.mxu0 0.0
        %6485 = vmatpush1.msra.mxu0 0.0
        %6486 = vmatprep.subr.mxu0 0.0
        %6487 = vmatpush1.msra.mxu0 0.0
        %6488 = vmatprep.subr.mxu0 0.0
        %6489 = vmatpush1.msra.mxu0 0.0
        %6490 = vmatprep.subr.mxu0 0.0
        %6491 = vmatpush1.msra.mxu0 0.0
        %6492 = vmatprep.subr.mxu0 0.0
        %6493 = vmatpush1.msra.mxu0 0.0
        %6494 = vmatprep.subr.mxu0 0.0
        %6495 = vmatpush1.msra.mxu0 0.0
        %6496 = vmatprep.mubr.f32.mxu0 0.0
        %6497 = vmatmul.mubr.f32.gmra.mrb[0].mxu0 %v6427
        %v6498 = vpop.f32.mrb[0].mxu0
        %v6499 = vadd.f32 0.0, %v6498
        %v6500 = vpop.f32.mrb[0].mxu0
        %6501 = vmatprep.mubr.f32.mxu0 0.0
        %6502 = vmatmul.mubr.f32.gmra.mrb[0].mxu0 %v6430
        %v6503 = vpop.f32.mrb[0].mxu0
        %v6504 = vadd.f32 0.0, %v6503
        %v6505 = vpop.f32.mrb[0].mxu0
        %6506 = vdwg.mxu0
        %v6507 = vsel %vm1539, %v6499, -1e+30
        %v6508 = vsel %vm1540, %v6504, -1e+30
        %v6509 = vsel %vm1784, %v6507, -inf
        %6510 = vmax.xlane.f32.xlu0 %v6509
        %v6511 = vpop.xlane.xlu0 %6510
        %v6512 = vsel %vm1784, %v6508, -inf
        %6513 = vmax.xlane.f32.xlu0 %v6512
        %v6514 = vpop.xlane.xlu0 %6513
        %v6515 = vsub.f32 %v6507, %v6511
        %v6516 = vsub.f32 %v6508, %v6514
        %v6517 = vmul.f32 %v6515, 1.442695
        %v6518 = vpow.pop %v6517
        %v6519 = vmul.f32 %v6516, 1.442695
        %v6520 = vpow.pop %v6519
        %v6521 = vsel %vm1784, %v6518, 0.0
        %6522 = vadd.xlane.f32.xlu0 %v6521
        %v6523 = vpop.xlane.xlu0 %6522
        %v6524 = vsel %vm1784, %v6520, 0.0
        %6525 = vadd.xlane.f32.xlu0 %v6524
        %v6526 = vpop.xlane.xlu0 %6525
        %v6527 = vrcp.pop %v6523
        %v6528 = vrcp.pop %v6526
        %v6529 = vmul.f32 %v6518, %v6527
        %v6530 = vmul.f32 %v6520, %v6528
        %s6531 = scalar_lea.vmem %s1441, 32
        %v6532 = vld [vmem:[%s6531] sm:$0xf]
        %v6533 = vld [vmem:[%s6531 + $0x4] sm:$0xf]
        %v6534 = vld [vmem:[%s6531 + $0x8] sm:$0xf]
        %v6535 = vld [vmem:[%s6531 + $0xc] sm:$0xf]
        %s6536 = scalar_lea.vmem %s1459, 2
        %v6537 = vld [vmem:[%s6536] sm:$0x1]
        %v6539 = vlaneseq
        %v6540 = vshrl.u32 %v6539, 7
        %v6541 = vsub.s32 0, %v6540
        %v6542 = vrot.slane %v6537, %v6541
        %v6548 = vunpack.c.l.b16 %v6532
        %v6549 = vunpack.c.l.b16 %v6533
        %v6550 = vunpack.c.l.b16 %v6534
        %v6551 = vunpack.c.l.b16 %v6535
        %v6552 = vpack.c.b16 %v6549, %v6548
        %v6553 = vpack.c.b16 %v6551, %v6550
        %6556 = vmatprep.subr.bf16.mxu0 0
        %6557 = vmatpush1.bf16.msra.mxu0 %v6552
        %6558 = vmatprep.subr.bf16.mxu0 0
        %6559 = vmatpush1.bf16.msra.mxu0 %v6553
        %6560 = vmatprep.subr.bf16.mxu0 0
        %6561 = vmatpush1.bf16.msra.mxu0 0
        %6562 = vmatprep.subr.bf16.mxu0 0
        %6563 = vmatpush1.bf16.msra.mxu0 0
        %6564 = vmatprep.subr.bf16.mxu0 0
        %6565 = vmatpush1.bf16.msra.mxu0 0
        %6566 = vmatprep.subr.bf16.mxu0 0
        %6567 = vmatpush1.bf16.msra.mxu0 0
        %6568 = vmatprep.subr.bf16.mxu0 0
        %6569 = vmatpush1.bf16.msra.mxu0 0
        %6570 = vmatprep.subr.bf16.mxu0 0
        %6571 = vmatpush1.bf16.msra.mxu0 0
        %6572 = vmatprep.subr.bf16.mxu0 0
        %6573 = vmatpush1.bf16.msra.mxu0 0
        %6574 = vmatprep.subr.bf16.mxu0 0
        %6575 = vmatpush1.bf16.msra.mxu0 0
        %6576 = vmatprep.subr.bf16.mxu0 0
        %6577 = vmatpush1.bf16.msra.mxu0 0
        %6578 = vmatprep.subr.bf16.mxu0 0
        %6579 = vmatpush1.bf16.msra.mxu0 0
        %6580 = vmatprep.subr.bf16.mxu0 0
        %6581 = vmatpush1.bf16.msra.mxu0 0
        %6582 = vmatprep.subr.bf16.mxu0 0
        %6583 = vmatpush1.bf16.msra.mxu0 0
        %6584 = vmatprep.subr.bf16.mxu0 0
        %6585 = vmatpush1.bf16.msra.mxu0 0
        %6586 = vmatprep.subr.bf16.mxu0 0
        %6587 = vmatpush1.bf16.msra.mxu0 0
        %6588 = vmatprep.mubr.f32.mxu0 0.0
        %6589 = vmatmul.mubr.f32.gmra.mrb[0].mxu0 %v5432
        %v6590 = vpop.f32.mrb[0].mxu0
        %v6591 = vadd.f32 %v6542, %v6590
        %v6592 = vpop.f32.mrb[0].mxu0
        %6593 = vmatprep.mubr.f32.mxu0 0.0
        %6594 = vmatmul.mubr.f32.gmra.mrb[0].mxu0 %v5435
        %v6595 = vpop.f32.mrb[0].mxu0
        %v6596 = vadd.f32 %v6542, %v6595
        %v6597 = vpop.f32.mrb[0].mxu0
        %6598 = vdwg.mxu0
        %v6600 = vsel %vm1784, %v6529, 0
        %v6603 = vsel %vm1784, %v6530, 0
        %6605 = vmatprep.subr.mxu0 0.0
        %6606 = vmatpush1.msra.mxu0 %v6591
        %6607 = vmatprep.subr.mxu0 0.0
        %6608 = vmatpush1.msra.mxu0 %v6596
        %6609 = vmatprep.subr.mxu0 0.0
        %6610 = vmatpush1.msra.mxu0 0.0
        %6611 = vmatprep.subr.mxu0 0.0
        %6612 = vmatpush1.msra.mxu0 0.0
        %6613 = vmatprep.subr.mxu0 0.0
        %6614 = vmatpush1.msra.mxu0 0.0
        %6615 = vmatprep.subr.mxu0 0.0
        %6616 = vmatpush1.msra.mxu0 0.0
        %6617 = vmatprep.subr.mxu0 0.0
        %6618 = vmatpush1.msra.mxu0 0.0
        %6619 = vmatprep.subr.mxu0 0.0
        %6620 = vmatpush1.msra.mxu0 0.0
        %6621 = vmatprep.subr.mxu0 0.0
        %6622 = vmatpush1.msra.mxu0 0.0
        %6623 = vmatprep.subr.mxu0 0.0
        %6624 = vmatpush1.msra.mxu0 0.0
        %6625 = vmatprep.subr.mxu0 0.0
        %6626 = vmatpush1.msra.mxu0 0.0
        %6627 = vmatprep.subr.mxu0 0.0
        %6628 = vmatpush1.msra.mxu0 0.0
        %6629 = vmatprep.subr.mxu0 0.0
        %6630 = vmatpush1.msra.mxu0 0.0
        %6631 = vmatprep.subr.mxu0 0.0
        %6632 = vmatpush1.msra.mxu0 0.0
        %6633 = vmatprep.subr.mxu0 0.0
        %6634 = vmatpush1.msra.mxu0 0.0
        %6635 = vmatprep.subr.mxu0 0.0
        %6636 = vmatpush1.msra.mxu0 0.0
        %6637 = vmatprep.subr.mxu0 0.0
        %6638 = vmatpush1.msra.mxu0 0.0
        %6639 = vmatprep.subr.mxu0 0.0
        %6640 = vmatpush1.msra.mxu0 0.0
        %6641 = vmatprep.subr.mxu0 0.0
        %6642 = vmatpush1.msra.mxu0 0.0
        %6643 = vmatprep.subr.mxu0 0.0
        %6644 = vmatpush1.msra.mxu0 0.0
        %6645 = vmatprep.subr.mxu0 0.0
        %6646 = vmatpush1.msra.mxu0 0.0
        %6647 = vmatprep.subr.mxu0 0.0
        %6648 = vmatpush1.msra.mxu0 0.0
        %6649 = vmatprep.subr.mxu0 0.0
        %6650 = vmatpush1.msra.mxu0 0.0
        %6651 = vmatprep.subr.mxu0 0.0
        %6652 = vmatpush1.msra.mxu0 0.0
        %6653 = vmatprep.subr.mxu0 0.0
        %6654 = vmatpush1.msra.mxu0 0.0
        %6655 = vmatprep.subr.mxu0 0.0
        %6656 = vmatpush1.msra.mxu0 0.0
        %6657 = vmatprep.subr.mxu0 0.0
        %6658 = vmatpush1.msra.mxu0 0.0
        %6659 = vmatprep.subr.mxu0 0.0
        %6660 = vmatpush1.msra.mxu0 0.0
        %6661 = vmatprep.subr.mxu0 0.0
        %6662 = vmatpush1.msra.mxu0 0.0
        %6663 = vmatprep.subr.mxu0 0.0
        %6664 = vmatpush1.msra.mxu0 0.0
        %6665 = vmatprep.subr.mxu0 0.0
        %6666 = vmatpush1.msra.mxu0 0.0
        %6667 = vmatprep.subr.mxu0 0.0
        %6668 = vmatpush1.msra.mxu0 0.0
        %6669 = vmatprep.mubr.f32.mxu0 0.0
        %6670 = vmatmul.mubr.f32.gmra.mrb[0].mxu0 %v6600
        %v6671 = vpop.f32.mrb[0].mxu0
        %v6672 = vadd.f32 0.0, %v6671
        %v6673 = vpop.f32.mrb[0].mxu0
        %6674 = vmatprep.mubr.f32.mxu0 0.0
        %6675 = vmatmul.mubr.f32.gmra.mrb[0].mxu0 %v6603
        %v6676 = vpop.f32.mrb[0].mxu0
        %v6677 = vadd.f32 0.0, %v6676
        %v6678 = vpop.f32.mrb[0].mxu0
        %6679 = vdwg.mxu0
        %s6680 = scalar_lea.vmem %s1446, 8
        %v6681 = vld [vmem:[%s6680] sm:$0xf]
        %v6683 = vsel %vm1700, %v6672, 0
        %v6686 = vsel %vm1700, %v6677, 0
        %v6689 = vsel %vm2369, %v6681, 0
        %6691 = vmatprep.subr.bf16.mxu0 0
        %6692 = vmatpush1.bf16.msra.mxu0 %v6689
        %6693 = vmatprep.subr.bf16.mxu0 0
        %6694 = vmatpush1.bf16.msra.mxu0 0
        %6695 = vmatprep.subr.bf16.mxu0 0
        %6696 = vmatpush1.bf16.msra.mxu0 0
        %6697 = vmatprep.subr.bf16.mxu0 0
        %6698 = vmatpush1.bf16.msra.mxu0 0
        %6699 = vmatprep.subr.bf16.mxu0 0
        %6700 = vmatpush1.bf16.msra.mxu0 0
        %6701 = vmatprep.subr.bf16.mxu0 0
        %6702 = vmatpush1.bf16.msra.mxu0 0
        %6703 = vmatprep.subr.bf16.mxu0 0
        %6704 = vmatpush1.bf16.msra.mxu0 0
        %6705 = vmatprep.subr.bf16.mxu0 0
        %6706 = vmatpush1.bf16.msra.mxu0 0
        %6707 = vmatprep.subr.bf16.mxu0 0
        %6708 = vmatpush1.bf16.msra.mxu0 0
        %6709 = vmatprep.subr.bf16.mxu0 0
        %6710 = vmatpush1.bf16.msra.mxu0 0
        %6711 = vmatprep.subr.bf16.mxu0 0
        %6712 = vmatpush1.bf16.msra.mxu0 0
        %6713 = vmatprep.subr.bf16.mxu0 0
        %6714 = vmatpush1.bf16.msra.mxu0 0
        %6715 = vmatprep.subr.bf16.mxu0 0
        %6716 = vmatpush1.bf16.msra.mxu0 0
        %6717 = vmatprep.subr.bf16.mxu0 0
        %6718 = vmatpush1.bf16.msra.mxu0 0
        %6719 = vmatprep.subr.bf16.mxu0 0
        %6720 = vmatpush1.bf16.msra.mxu0 0
        %6721 = vmatprep.subr.bf16.mxu0 0
        %6722 = vmatpush1.bf16.msra.mxu0 0
        %6723 = vmatprep.mubr.f32.mxu0 0.0
        %6724 = vmatmul.mubr.f32.gmra.mrb[0].mxu0 %v6683
        %v6725 = vpop.f32.mrb[0].mxu0
        %v6726 = vadd.f32 0.0, %v6725
        %v6727 = vpop.f32.mrb[0].mxu0
        %6728 = vmatprep.mubr.f32.mxu0 0.0
        %6729 = vmatmul.mubr.f32.gmra.mrb[0].mxu0 %v6686
        %v6730 = vpop.f32.mrb[0].mxu0
        %v6731 = vadd.f32 0.0, %v6730
        %v6732 = vpop.f32.mrb[0].mxu0
        %6733 = vdwg.mxu0
        %v6734 = vadd.f32 %v6266, %v6726
        %v6735 = vadd.f32 %v6271, %v6731
        %s6736 = scalar_lea.vmem %s1431, 48
        %v6737 = vld [vmem:[%s6736] sm:$0xf]
        %v6738 = vld [vmem:[%s6736 + $0x4] sm:$0xf]
        %v6739 = vld [vmem:[%s6736 + $0x8] sm:$0xf]
        %v6740 = vld [vmem:[%s6736 + $0xc] sm:$0xf]
        %s6741 = scalar_lea.vmem %s1450, 3
        %v6742 = vld [vmem:[%s6741] sm:$0x1]
        %v6744 = vlaneseq
        %v6745 = vshrl.u32 %v6744, 7
        %v6746 = vsub.s32 0, %v6745
        %v6747 = vrot.slane %v6742, %v6746
        %v6753 = vunpack.c.l.b16 %v6737
        %v6754 = vunpack.c.l.b16 %v6738
        %v6755 = vunpack.c.l.b16 %v6739
        %v6756 = vunpack.c.l.b16 %v6740
        %v6757 = vpack.c.b16 %v6754, %v6753
        %v6758 = vpack.c.b16 %v6756, %v6755
        %6761 = vmatprep.subr.bf16.mxu0 0
        %6762 = vmatpush1.bf16.msra.mxu0 %v6757
        %6763 = vmatprep.subr.bf16.mxu0 0
        %6764 = vmatpush1.bf16.msra.mxu0 %v6758
        %6765 = vmatprep.subr.bf16.mxu0 0
        %6766 = vmatpush1.bf16.msra.mxu0 0
        %6767 = vmatprep.subr.bf16.mxu0 0
        %6768 = vmatpush1.bf16.msra.mxu0 0
        %6769 = vmatprep.subr.bf16.mxu0 0
        %6770 = vmatpush1.bf16.msra.mxu0 0
        %6771 = vmatprep.subr.bf16.mxu0 0
        %6772 = vmatpush1.bf16.msra.mxu0 0
        %6773 = vmatprep.subr.bf16.mxu0 0
        %6774 = vmatpush1.bf16.msra.mxu0 0
        %6775 = vmatprep.subr.bf16.mxu0 0
        %6776 = vmatpush1.bf16.msra.mxu0 0
        %6777 = vmatprep.subr.bf16.mxu0 0
        %6778 = vmatpush1.bf16.msra.mxu0 0
        %6779 = vmatprep.subr.bf16.mxu0 0
        %6780 = vmatpush1.bf16.msra.mxu0 0
        %6781 = vmatprep.subr.bf16.mxu0 0
        %6782 = vmatpush1.bf16.msra.mxu0 0
        %6783 = vmatprep.subr.bf16.mxu0 0
        %6784 = vmatpush1.bf16.msra.mxu0 0
        %6785 = vmatprep.subr.bf16.mxu0 0
        %6786 = vmatpush1.bf16.msra.mxu0 0
        %6787 = vmatprep.subr.bf16.mxu0 0
        %6788 = vmatpush1.bf16.msra.mxu0 0
        %6789 = vmatprep.subr.bf16.mxu0 0
        %6790 = vmatpush1.bf16.msra.mxu0 0
        %6791 = vmatprep.subr.bf16.mxu0 0
        %6792 = vmatpush1.bf16.msra.mxu0 0
        %6793 = vmatprep.mubr.f32.mxu0 0.0
        %6794 = vmatmul.mubr.f32.gmra.mrb[0].mxu0 %v5373
        %v6795 = vpop.f32.mrb[0].mxu0
        %v6796 = vadd.f32 %v6747, %v6795
        %v6797 = vpop.f32.mrb[0].mxu0
        %6798 = vmatprep.mubr.f32.mxu0 0.0
        %6799 = vmatmul.mubr.f32.gmra.mrb[0].mxu0 %v5376
        %v6800 = vpop.f32.mrb[0].mxu0
        %v6801 = vadd.f32 %v6747, %v6800
        %v6802 = vpop.f32.mrb[0].mxu0
        %6803 = vdwg.mxu0
        %s6804 = scalar_lea.vmem %s1436, 12
        %v6805 = vld [vmem:[%s6804] sm:$0xf]
        %s6806 = scalar_lea.vmem %s1455, 24
        %v6807 = vld [vmem:[%s6806] sm:$0xff]
        %6809 = vset.pattern.permute.xlu0 0
        %6810 = vperm.xlu0 %6809, %v6807
        %v6811 = vpop.permute.xlu0 %6810
        %v6814 = vsel %vm1568, %v6805, 0
        %6816 = vmatprep.subr.mxu0 0.0
        %6817 = vmatpush1.xpose.msra.mxu0 %v5432
        %6818 = vmatprep.subr.mxu0 0.0
        %6819 = vmatpush1.xpose.msra.mxu0 %v5435
        %6820 = vmatprep.subr.mxu0 0.0
        %6821 = vmatpush1.xpose.msra.mxu0 0.0
        %6822 = vmatprep.subr.mxu0 0.0
        %6823 = vmatpush1.xpose.msra.mxu0 0.0
        %6824 = vmatprep.subr.mxu0 0.0
        %6825 = vmatpush1.xpose.msra.mxu0 0.0
        %6826 = vmatprep.subr.mxu0 0.0
        %6827 = vmatpush1.xpose.msra.mxu0 0.0
        %6828 = vmatprep.subr.mxu0 0.0
        %6829 = vmatpush1.xpose.msra.mxu0 0.0
        %6830 = vmatprep.subr.mxu0 0.0
        %6831 = vmatpush1.xpose.msra.mxu0 0.0
        %6832 = vmatprep.subr.mxu0 0.0
        %6833 = vmatpush1.xpose.msra.mxu0 0.0
        %6834 = vmatprep.subr.mxu0 0.0
        %6835 = vmatpush1.xpose.msra.mxu0 0.0
        %6836 = vmatprep.subr.mxu0 0.0
        %6837 = vmatpush1.xpose.msra.mxu0 0.0
        %6838 = vmatprep.subr.mxu0 0.0
        %6839 = vmatpush1.xpose.msra.mxu0 0.0
        %6840 = vmatprep.subr.mxu0 0.0
        %6841 = vmatpush1.xpose.msra.mxu0 0.0
        %6842 = vmatprep.subr.mxu0 0.0
        %6843 = vmatpush1.xpose.msra.mxu0 0.0
        %6844 = vmatprep.subr.mxu0 0.0
        %6845 = vmatpush1.xpose.msra.mxu0 0.0
        %6846 = vmatprep.subr.mxu0 0.0
        %6847 = vmatpush1.xpose.msra.mxu0 0.0
        %6848 = vmatprep.subr.mxu0 0.0
        %6849 = vmatpush1.xpose.msra.mxu0 0.0
        %6850 = vmatprep.subr.mxu0 0.0
        %6851 = vmatpush1.xpose.msra.mxu0 0.0
        %6852 = vmatprep.subr.mxu0 0.0
        %6853 = vmatpush1.xpose.msra.mxu0 0.0
        %6854 = vmatprep.subr.mxu0 0.0
        %6855 = vmatpush1.xpose.msra.mxu0 0.0
        %6856 = vmatprep.subr.mxu0 0.0
        %6857 = vmatpush1.xpose.msra.mxu0 0.0
        %6858 = vmatprep.subr.mxu0 0.0
        %6859 = vmatpush1.xpose.msra.mxu0 0.0
        %6860 = vmatprep.subr.mxu0 0.0
        %6861 = vmatpush1.xpose.msra.mxu0 0.0
        %6862 = vmatprep.subr.mxu0 0.0
        %6863 = vmatpush1.xpose.msra.mxu0 0.0
        %6864 = vmatprep.subr.mxu0 0.0
        %6865 = vmatpush1.xpose.msra.mxu0 0.0
        %6866 = vmatprep.subr.mxu0 0.0
        %6867 = vmatpush1.xpose.msra.mxu0 0.0
        %6868 = vmatprep.subr.mxu0 0.0
        %6869 = vmatpush1.xpose.msra.mxu0 0.0
        %6870 = vmatprep.subr.mxu0 0.0
        %6871 = vmatpush1.xpose.msra.mxu0 0.0
        %6872 = vmatprep.subr.mxu0 0.0
        %6873 = vmatpush1.xpose.msra.mxu0 0.0
        %6874 = vmatprep.subr.mxu0 0.0
        %6875 = vmatpush1.xpose.msra.mxu0 0.0
        %6876 = vmatprep.subr.mxu0 0.0
        %6877 = vmatpush1.xpose.msra.mxu0 0.0
        %6878 = vmatprep.subr.mxu0 0.0
        %6879 = vmatpush1.xpose.msra.mxu0 0.0
        %6880 = vmatprep.mubr.bf16.mxu0 0
        %6881 = vmatmul.mubr.bf16.gmra.mrb[0].mxu0 %v6814
        %v6882 = vpop.f32.mrb[0].mxu0
        %v6883 = vadd.f32 %v6811, %v6882
        %v6884 = vpop.f32.mrb[0].mxu0
        %v6885 = vpop.f32.mrb[0].mxu0
        %v6886 = vpop.f32.mrb[0].mxu0
        %6887 = vdwg.mxu0
        %v6889 = vsel %vm1700, %v6796, 0
        %v6892 = vsel %vm1700, %v6801, 0
        %6894 = vmatprep.subr.mxu0 0.0
        %6895 = vmatpush1.msra.mxu0 %v6883
        %6896 = vmatprep.subr.mxu0 0.0
        %6897 = vmatpush1.msra.mxu0 0.0
        %6898 = vmatprep.subr.mxu0 0.0
        %6899 = vmatpush1.msra.mxu0 0.0
        %6900 = vmatprep.subr.mxu0 0.0
        %6901 = vmatpush1.msra.mxu0 0.0
        %6902 = vmatprep.subr.mxu0 0.0
        %6903 = vmatpush1.msra.mxu0 0.0
        %6904 = vmatprep.subr.mxu0 0.0
        %6905 = vmatpush1.msra.mxu0 0.0
        %6906 = vmatprep.subr.mxu0 0.0
        %6907 = vmatpush1.msra.mxu0 0.0
        %6908 = vmatprep.subr.mxu0 0.0
        %6909 = vmatpush1.msra.mxu0 0.0
        %6910 = vmatprep.subr.mxu0 0.0
        %6911 = vmatpush1.msra.mxu0 0.0
        %6912 = vmatprep.subr.mxu0 0.0
        %6913 = vmatpush1.msra.mxu0 0.0
        %6914 = vmatprep.subr.mxu0 0.0
        %6915 = vmatpush1.msra.mxu0 0.0
        %6916 = vmatprep.subr.mxu0 0.0
        %6917 = vmatpush1.msra.mxu0 0.0
        %6918 = vmatprep.subr.mxu0 0.0
        %6919 = vmatpush1.msra.mxu0 0.0
        %6920 = vmatprep.subr.mxu0 0.0
        %6921 = vmatpush1.msra.mxu0 0.0
        %6922 = vmatprep.subr.mxu0 0.0
        %6923 = vmatpush1.msra.mxu0 0.0
        %6924 = vmatprep.subr.mxu0 0.0
        %6925 = vmatpush1.msra.mxu0 0.0
        %6926 = vmatprep.subr.mxu0 0.0
        %6927 = vmatpush1.msra.mxu0 0.0
        %6928 = vmatprep.subr.mxu0 0.0
        %6929 = vmatpush1.msra.mxu0 0.0
        %6930 = vmatprep.subr.mxu0 0.0
        %6931 = vmatpush1.msra.mxu0 0.0
        %6932 = vmatprep.subr.mxu0 0.0
        %6933 = vmatpush1.msra.mxu0 0.0
        %6934 = vmatprep.subr.mxu0 0.0
        %6935 = vmatpush1.msra.mxu0 0.0
        %6936 = vmatprep.subr.mxu0 0.0
        %6937 = vmatpush1.msra.mxu0 0.0
        %6938 = vmatprep.subr.mxu0 0.0
        %6939 = vmatpush1.msra.mxu0 0.0
        %6940 = vmatprep.subr.mxu0 0.0
        %6941 = vmatpush1.msra.mxu0 0.0
        %6942 = vmatprep.subr.mxu0 0.0
        %6943 = vmatpush1.msra.mxu0 0.0
        %6944 = vmatprep.subr.mxu0 0.0
        %6945 = vmatpush1.msra.mxu0 0.0
        %6946 = vmatprep.subr.mxu0 0.0
        %6947 = vmatpush1.msra.mxu0 0.0
        %6948 = vmatprep.subr.mxu0 0.0
        %6949 = vmatpush1.msra.mxu0 0.0
        %6950 = vmatprep.subr.mxu0 0.0
        %6951 = vmatpush1.msra.mxu0 0.0
        %6952 = vmatprep.subr.mxu0 0.0
        %6953 = vmatpush1.msra.mxu0 0.0
        %6954 = vmatprep.subr.mxu0 0.0
        %6955 = vmatpush1.msra.mxu0 0.0
        %6956 = vmatprep.subr.mxu0 0.0
        %6957 = vmatpush1.msra.mxu0 0.0
        %6958 = vmatprep.mubr.f32.mxu0 0.0
        %6959 = vmatmul.mubr.f32.gmra.mrb[0].mxu0 %v6889
        %v6960 = vpop.f32.mrb[0].mxu0
        %v6961 = vadd.f32 0.0, %v6960
        %v6962 = vpop.f32.mrb[0].mxu0
        %6963 = vmatprep.mubr.f32.mxu0 0.0
        %6964 = vmatmul.mubr.f32.gmra.mrb[0].mxu0 %v6892
        %v6965 = vpop.f32.mrb[0].mxu0
        %v6966 = vadd.f32 0.0, %v6965
        %v6967 = vpop.f32.mrb[0].mxu0
        %6968 = vdwg.mxu0
        %v6969 = vsel %vm1539, %v6961, -1e+30
        %v6970 = vsel %vm1540, %v6966, -1e+30
        %v6971 = vsel %vm1784, %v6969, -inf
        %6972 = vmax.xlane.f32.xlu0 %v6971
        %v6973 = vpop.xlane.xlu0 %6972
        %v6974 = vsel %vm1784, %v6970, -inf
        %6975 = vmax.xlane.f32.xlu0 %v6974
        %v6976 = vpop.xlane.xlu0 %6975
        %v6977 = vsub.f32 %v6969, %v6973
        %v6978 = vsub.f32 %v6970, %v6976
        %v6979 = vmul.f32 %v6977, 1.442695
        %v6980 = vpow.pop %v6979
        %v6981 = vmul.f32 %v6978, 1.442695
        %v6982 = vpow.pop %v6981
        %v6983 = vsel %vm1784, %v6980, 0.0
        %6984 = vadd.xlane.f32.xlu0 %v6983
        %v6985 = vpop.xlane.xlu0 %6984
        %v6986 = vsel %vm1784, %v6982, 0.0
        %6987 = vadd.xlane.f32.xlu0 %v6986
        %v6988 = vpop.xlane.xlu0 %6987
        %v6989 = vrcp.pop %v6985
        %v6990 = vrcp.pop %v6988
        %v6991 = vmul.f32 %v6980, %v6989
        %v6992 = vmul.f32 %v6982, %v6990
        %s6993 = scalar_lea.vmem %s1441, 48
        %v6994 = vld [vmem:[%s6993] sm:$0xf]
        %v6995 = vld [vmem:[%s6993 + $0x4] sm:$0xf]
        %v6996 = vld [vmem:[%s6993 + $0x8] sm:$0xf]
        %v6997 = vld [vmem:[%s6993 + $0xc] sm:$0xf]
        %s6998 = scalar_lea.vmem %s1459, 3
        %v6999 = vld [vmem:[%s6998] sm:$0x1]
        %v7001 = vlaneseq
        %v7002 = vshrl.u32 %v7001, 7
        %v7003 = vsub.s32 0, %v7002
        %v7004 = vrot.slane %v6999, %v7003
        %v7010 = vunpack.c.l.b16 %v6994
        %v7011 = vunpack.c.l.b16 %v6995
        %v7012 = vunpack.c.l.b16 %v6996
        %v7013 = vunpack.c.l.b16 %v6997
        %v7014 = vpack.c.b16 %v7011, %v7010
        %v7015 = vpack.c.b16 %v7013, %v7012
        %7018 = vmatprep.subr.bf16.mxu0 0
        %7019 = vmatpush1.bf16.msra.mxu0 %v7014
        %7020 = vmatprep.subr.bf16.mxu0 0
        %7021 = vmatpush1.bf16.msra.mxu0 %v7015
        %7022 = vmatprep.subr.bf16.mxu0 0
        %7023 = vmatpush1.bf16.msra.mxu0 0
        %7024 = vmatprep.subr.bf16.mxu0 0
        %7025 = vmatpush1.bf16.msra.mxu0 0
        %7026 = vmatprep.subr.bf16.mxu0 0
        %7027 = vmatpush1.bf16.msra.mxu0 0
        %7028 = vmatprep.subr.bf16.mxu0 0
        %7029 = vmatpush1.bf16.msra.mxu0 0
        %7030 = vmatprep.subr.bf16.mxu0 0
        %7031 = vmatpush1.bf16.msra.mxu0 0
        %7032 = vmatprep.subr.bf16.mxu0 0
        %7033 = vmatpush1.bf16.msra.mxu0 0
        %7034 = vmatprep.subr.bf16.mxu0 0
        %7035 = vmatpush1.bf16.msra.mxu0 0
        %7036 = vmatprep.subr.bf16.mxu0 0
        %7037 = vmatpush1.bf16.msra.mxu0 0
        %7038 = vmatprep.subr.bf16.mxu0 0
        %7039 = vmatpush1.bf16.msra.mxu0 0
        %7040 = vmatprep.subr.bf16.mxu0 0
        %7041 = vmatpush1.bf16.msra.mxu0 0
        %7042 = vmatprep.subr.bf16.mxu0 0
        %7043 = vmatpush1.bf16.msra.mxu0 0
        %7044 = vmatprep.subr.bf16.mxu0 0
        %7045 = vmatpush1.bf16.msra.mxu0 0
        %7046 = vmatprep.subr.bf16.mxu0 0
        %7047 = vmatpush1.bf16.msra.mxu0 0
        %7048 = vmatprep.subr.bf16.mxu0 0
        %7049 = vmatpush1.bf16.msra.mxu0 0
        %7050 = vmatprep.mubr.f32.mxu0 0.0
        %7051 = vmatmul.mubr.f32.gmra.mrb[0].mxu0 %v5432
        %v7052 = vpop.f32.mrb[0].mxu0
        %v7053 = vadd.f32 %v7004, %v7052
        %v7054 = vpop.f32.mrb[0].mxu0
        %7055 = vmatprep.mubr.f32.mxu0 0.0
        %7056 = vmatmul.mubr.f32.gmra.mrb[0].mxu0 %v5435
        %v7057 = vpop.f32.mrb[0].mxu0
        %v7058 = vadd.f32 %v7004, %v7057
        %v7059 = vpop.f32.mrb[0].mxu0
        %7060 = vdwg.mxu0
        %v7062 = vsel %vm1784, %v6991, 0
        %v7065 = vsel %vm1784, %v6992, 0
        %7067 = vmatprep.subr.mxu0 0.0
        %7068 = vmatpush1.msra.mxu0 %v7053
        %7069 = vmatprep.subr.mxu0 0.0
        %7070 = vmatpush1.msra.mxu0 %v7058
        %7071 = vmatprep.subr.mxu0 0.0
        %7072 = vmatpush1.msra.mxu0 0.0
        %7073 = vmatprep.subr.mxu0 0.0
        %7074 = vmatpush1.msra.mxu0 0.0
        %7075 = vmatprep.subr.mxu0 0.0
        %7076 = vmatpush1.msra.mxu0 0.0
        %7077 = vmatprep.subr.mxu0 0.0
        %7078 = vmatpush1.msra.mxu0 0.0
        %7079 = vmatprep.subr.mxu0 0.0
        %7080 = vmatpush1.msra.mxu0 0.0
        %7081 = vmatprep.subr.mxu0 0.0
        %7082 = vmatpush1.msra.mxu0 0.0
        %7083 = vmatprep.subr.mxu0 0.0
        %7084 = vmatpush1.msra.mxu0 0.0
        %7085 = vmatprep.subr.mxu0 0.0
        %7086 = vmatpush1.msra.mxu0 0.0
        %7087 = vmatprep.subr.mxu0 0.0
        %7088 = vmatpush1.msra.mxu0 0.0
        %7089 = vmatprep.subr.mxu0 0.0
        %7090 = vmatpush1.msra.mxu0 0.0
        %7091 = vmatprep.subr.mxu0 0.0
        %7092 = vmatpush1.msra.mxu0 0.0
        %7093 = vmatprep.subr.mxu0 0.0
        %7094 = vmatpush1.msra.mxu0 0.0
        %7095 = vmatprep.subr.mxu0 0.0
        %7096 = vmatpush1.msra.mxu0 0.0
        %7097 = vmatprep.subr.mxu0 0.0
        %7098 = vmatpush1.msra.mxu0 0.0
        %7099 = vmatprep.subr.mxu0 0.0
        %7100 = vmatpush1.msra.mxu0 0.0
        %7101 = vmatprep.subr.mxu0 0.0
        %7102 = vmatpush1.msra.mxu0 0.0
        %7103 = vmatprep.subr.mxu0 0.0
        %7104 = vmatpush1.msra.mxu0 0.0
        %7105 = vmatprep.subr.mxu0 0.0
        %7106 = vmatpush1.msra.mxu0 0.0
        %7107 = vmatprep.subr.mxu0 0.0
        %7108 = vmatpush1.msra.mxu0 0.0
        %7109 = vmatprep.subr.mxu0 0.0
        %7110 = vmatpush1.msra.mxu0 0.0
        %7111 = vmatprep.subr.mxu0 0.0
        %7112 = vmatpush1.msra.mxu0 0.0
        %7113 = vmatprep.subr.mxu0 0.0
        %7114 = vmatpush1.msra.mxu0 0.0
        %7115 = vmatprep.subr.mxu0 0.0
        %7116 = vmatpush1.msra.mxu0 0.0
        %7117 = vmatprep.subr.mxu0 0.0
        %7118 = vmatpush1.msra.mxu0 0.0
        %7119 = vmatprep.subr.mxu0 0.0
        %7120 = vmatpush1.msra.mxu0 0.0
        %7121 = vmatprep.subr.mxu0 0.0
        %7122 = vmatpush1.msra.mxu0 0.0
        %7123 = vmatprep.subr.mxu0 0.0
        %7124 = vmatpush1.msra.mxu0 0.0
        %7125 = vmatprep.subr.mxu0 0.0
        %7126 = vmatpush1.msra.mxu0 0.0
        %7127 = vmatprep.subr.mxu0 0.0
        %7128 = vmatpush1.msra.mxu0 0.0
        %7129 = vmatprep.subr.mxu0 0.0
        %7130 = vmatpush1.msra.mxu0 0.0
        %7131 = vmatprep.mubr.f32.mxu0 0.0
        %7132 = vmatmul.mubr.f32.gmra.mrb[0].mxu0 %v7062
        %v7133 = vpop.f32.mrb[0].mxu0
        %v7134 = vadd.f32 0.0, %v7133
        %v7135 = vpop.f32.mrb[0].mxu0
        %7136 = vmatprep.mubr.f32.mxu0 0.0
        %7137 = vmatmul.mubr.f32.gmra.mrb[0].mxu0 %v7065
        %v7138 = vpop.f32.mrb[0].mxu0
        %v7139 = vadd.f32 0.0, %v7138
        %v7140 = vpop.f32.mrb[0].mxu0
        %7141 = vdwg.mxu0
        %s7142 = scalar_lea.vmem %s1446, 12
        %v7143 = vld [vmem:[%s7142] sm:$0xf]
        %v7145 = vsel %vm1700, %v7134, 0
        %v7148 = vsel %vm1700, %v7139, 0
        %v7151 = vsel %vm2369, %v7143, 0
        %7153 = vmatprep.subr.bf16.mxu0 0
        %7154 = vmatpush1.bf16.msra.mxu0 %v7151
        %7155 = vmatprep.subr.bf16.mxu0 0
        %7156 = vmatpush1.bf16.msra.mxu0 0
        %7157 = vmatprep.subr.bf16.mxu0 0
        %7158 = vmatpush1.bf16.msra.mxu0 0
        %7159 = vmatprep.subr.bf16.mxu0 0
        %7160 = vmatpush1.bf16.msra.mxu0 0
        %7161 = vmatprep.subr.bf16.mxu0 0
        %7162 = vmatpush1.bf16.msra.mxu0 0
        %7163 = vmatprep.subr.bf16.mxu0 0
        %7164 = vmatpush1.bf16.msra.mxu0 0
        %7165 = vmatprep.subr.bf16.mxu0 0
        %7166 = vmatpush1.bf16.msra.mxu0 0
        %7167 = vmatprep.subr.bf16.mxu0 0
        %7168 = vmatpush1.bf16.msra.mxu0 0
        %7169 = vmatprep.subr.bf16.mxu0 0
        %7170 = vmatpush1.bf16.msra.mxu0 0
        %7171 = vmatprep.subr.bf16.mxu0 0
        %7172 = vmatpush1.bf16.msra.mxu0 0
        %7173 = vmatprep.subr.bf16.mxu0 0
        %7174 = vmatpush1.bf16.msra.mxu0 0
        %7175 = vmatprep.subr.bf16.mxu0 0
        %7176 = vmatpush1.bf16.msra.mxu0 0
        %7177 = vmatprep.subr.bf16.mxu0 0
        %7178 = vmatpush1.bf16.msra.mxu0 0
        %7179 = vmatprep.subr.bf16.mxu0 0
        %7180 = vmatpush1.bf16.msra.mxu0 0
        %7181 = vmatprep.subr.bf16.mxu0 0
        %7182 = vmatpush1.bf16.msra.mxu0 0
        %7183 = vmatprep.subr.bf16.mxu0 0
        %7184 = vmatpush1.bf16.msra.mxu0 0
        %7185 = vmatprep.mubr.f32.mxu0 0.0
        %7186 = vmatmul.mubr.f32.gmra.mrb[0].mxu0 %v7145
        %v7187 = vpop.f32.mrb[0].mxu0
        %v7188 = vadd.f32 0.0, %v7187
        %v7189 = vpop.f32.mrb[0].mxu0
        %7190 = vmatprep.mubr.f32.mxu0 0.0
        %7191 = vmatmul.mubr.f32.gmra.mrb[0].mxu0 %v7148
        %v7192 = vpop.f32.mrb[0].mxu0
        %v7193 = vadd.f32 0.0, %v7192
        %v7194 = vpop.f32.mrb[0].mxu0
        %7195 = vdwg.mxu0
        %v7196 = vadd.f32 %v6734, %v7188
        %v7197 = vadd.f32 %v6735, %v7193
        %v7198 = vld [vmem:[%s1462] sm:$0x1]
        %v7200 = vlaneseq
        %v7201 = vshrl.u32 %v7200, 7
        %v7202 = vsub.s32 0, %v7201
        %v7203 = vrot.slane %v7198, %v7202
        %v7205 = vadd.f32 %v7196, %v7203
        %v7206 = vadd.f32 %v7197, %v7203
        %v7207 = vadd.f32 %v5347, %v7205
        %v7208 = vadd.f32 %v5348, %v7206
        %s7209 = scalar_lea.vmem %s1483, 4
        %v7210 = vld [vmem:[%s7209] sm:$0x1]
        %s7211 = scalar_lea.vmem %s1483, 5
        %v7212 = vld [vmem:[%s7211] sm:$0x1]
        %v7213 = vsel %vm1568, %v7207, 0.0
        %7214 = vadd.xlane.f32.xlu0 %v7213
        %v7215 = vpop.xlane.xlu0 %7214
        %v7216 = vsel %vm1568, %v7208, 0.0
        %7217 = vadd.xlane.f32.xlu0 %v7216
        %v7218 = vpop.xlane.xlu0 %7217
        %v7219 = vmul.f32 %v7215, %v3412
        %v7220 = vmul.f32 %v7218, %v3412
        %v7221 = vsub.f32 %v7207, %v7219
        %v7222 = vsub.f32 %v7208, %v7220
        %v7223 = vmul.f32 %v7221, %v7221
        %v7224 = vmul.f32 %v7222, %v7222
        %v7225 = vsel %vm1568, %v7223, 0.0
        %7226 = vadd.xlane.f32.xlu0 %v7225
        %v7227 = vpop.xlane.xlu0 %7226
        %v7228 = vsel %vm1568, %v7224, 0.0
        %7229 = vadd.xlane.f32.xlu0 %v7228
        %v7230 = vpop.xlane.xlu0 %7229
        %v7231 = vmul.f32 %v7227, %v3412
        %v7232 = vmul.f32 %v7230, %v3412
        %v7233 = vadd.f32 %v7231, 1e-05
        %v7234 = vadd.f32 %v7232, 1e-05
        %v7235 = vrsqrt.pop %v7233
        %v7236 = vrsqrt.pop %v7234
        %v7237 = vmul.f32 %v7221, %v7235
        %v7238 = vmul.f32 %v7222, %v7236
        %v7240 = vlaneseq
        %v7241 = vshrl.u32 %v7240, 7
        %v7242 = vsub.s32 0, %v7241
        %v7243 = vrot.slane %v7210, %v7242
        %v7245 = vmul.f32 %v7237, %v7243
        %v7246 = vmul.f32 %v7238, %v7243
        %v7248 = vlaneseq
        %v7249 = vshrl.u32 %v7248, 7
        %v7250 = vsub.s32 0, %v7249
        %v7251 = vrot.slane %v7212, %v7250
        %v7253 = vadd.f32 %v7245, %v7251
        %v7254 = vadd.f32 %v7246, %v7251
        %v7255 = vld [vmem:[%s1467] sm:$0xff]
        %v7256 = vld [vmem:[%s1467 + $0x8] sm:$0xff]
        %v7257 = vld [vmem:[%s1467 + $0x10] sm:$0xff]
        %v7258 = vld [vmem:[%s1467 + $0x18] sm:$0xff]
        %v7259 = vld [vmem:[%s1467 + $0x20] sm:$0xff]
        %v7260 = vld [vmem:[%s1467 + $0x28] sm:$0xff]
        %v7261 = vld [vmem:[%s1467 + $0x30] sm:$0xff]
        %v7262 = vld [vmem:[%s1467 + $0x38] sm:$0xff]
        %v7263 = vld [vmem:[%s1467 + $0x40] sm:$0xff]
        %v7264 = vld [vmem:[%s1467 + $0x48] sm:$0xff]
        %v7265 = vld [vmem:[%s1467 + $0x50] sm:$0xff]
        %v7266 = vld [vmem:[%s1467 + $0x58] sm:$0xff]
        %v7267 = vld [vmem:[%s1467 + $0x60] sm:$0xff]
        %v7268 = vld [vmem:[%s1467 + $0x68] sm:$0xff]
        %v7269 = vld [vmem:[%s1467 + $0x70] sm:$0xff]
        %v7270 = vld [vmem:[%s1467 + $0x78] sm:$0xff]
        %v7271 = vld [vmem:[%s1467 + $0x80] sm:$0xff]
        %v7272 = vld [vmem:[%s1467 + $0x88] sm:$0xff]
        %v7273 = vld [vmem:[%s1467 + $0x90] sm:$0xff]
        %v7274 = vld [vmem:[%s1467 + $0x98] sm:$0xff]
        %v7275 = vld [vmem:[%s1467 + $0xa0] sm:$0xff]
        %v7276 = vld [vmem:[%s1467 + $0xa8] sm:$0xff]
        %v7277 = vld [vmem:[%s1467 + $0xb0] sm:$0xff]
        %v7278 = vld [vmem:[%s1467 + $0xb8] sm:$0xff]
        %v7279 = vld [vmem:[%s1467 + $0xc0] sm:$0xff]
        %v7280 = vld [vmem:[%s1467 + $0xc8] sm:$0xff]
        %v7281 = vld [vmem:[%s1467 + $0xd0] sm:$0xff]
        %v7282 = vld [vmem:[%s1467 + $0xd8] sm:$0xff]
        %v7283 = vld [vmem:[%s1467 + $0xe0] sm:$0xff]
        %v7284 = vld [vmem:[%s1467 + $0xe8] sm:$0xff]
        %v7285 = vld [vmem:[%s1467 + $0xf0] sm:$0xff]
        %v7286 = vld [vmem:[%s1467 + $0xf8] sm:$0xff]
        %v7287 = vld [vmem:[%s1471] sm:$0xff]
        %v7288 = vld [vmem:[%s1471 + $0x8] sm:$0xff]
        %v7291 = vlaneseq
        %v7292 = vshrl.u32 %v7291, 7
        %v7293 = vsub.s32 0, %v7292
        %v7294 = vrot.slane %v7287, %v7293
        %v7295 = vlaneseq
        %v7296 = vshrl.u32 %v7295, 7
        %v7297 = vsub.s32 1, %v7296
        %v7298 = vrot.slane %v7287, %v7297
        %v7299 = vlaneseq
        %v7300 = vshrl.u32 %v7299, 7
        %v7301 = vsub.s32 2, %v7300
        %v7302 = vrot.slane %v7287, %v7301
        %v7303 = vlaneseq
        %v7304 = vshrl.u32 %v7303, 7
        %v7305 = vsub.s32 3, %v7304
        %v7306 = vrot.slane %v7287, %v7305
        %v7307 = vlaneseq
        %v7308 = vshrl.u32 %v7307, 7
        %v7309 = vsub.s32 4, %v7308
        %v7310 = vrot.slane %v7287, %v7309
        %v7311 = vlaneseq
        %v7312 = vshrl.u32 %v7311, 7
        %v7313 = vsub.s32 5, %v7312
        %v7314 = vrot.slane %v7287, %v7313
        %v7315 = vlaneseq
        %v7316 = vshrl.u32 %v7315, 7
        %v7317 = vsub.s32 6, %v7316
        %v7318 = vrot.slane %v7287, %v7317
        %v7319 = vlaneseq
        %v7320 = vshrl.u32 %v7319, 7
        %v7321 = vsub.s32 7, %v7320
        %v7322 = vrot.slane %v7287, %v7321
        %v7323 = vlaneseq
        %v7324 = vshrl.u32 %v7323, 7
        %v7325 = vsub.s32 0, %v7324
        %v7326 = vrot.slane %v7288, %v7325
        %v7327 = vlaneseq
        %v7328 = vshrl.u32 %v7327, 7
        %v7329 = vsub.s32 1, %v7328
        %v7330 = vrot.slane %v7288, %v7329
        %v7331 = vlaneseq
        %v7332 = vshrl.u32 %v7331, 7
        %v7333 = vsub.s32 2, %v7332
        %v7334 = vrot.slane %v7288, %v7333
        %v7335 = vlaneseq
        %v7336 = vshrl.u32 %v7335, 7
        %v7337 = vsub.s32 3, %v7336
        %v7338 = vrot.slane %v7288, %v7337
        %v7339 = vlaneseq
        %v7340 = vshrl.u32 %v7339, 7
        %v7341 = vsub.s32 4, %v7340
        %v7342 = vrot.slane %v7288, %v7341
        %v7343 = vlaneseq
        %v7344 = vshrl.u32 %v7343, 7
        %v7345 = vsub.s32 5, %v7344
        %v7346 = vrot.slane %v7288, %v7345
        %v7347 = vlaneseq
        %v7348 = vshrl.u32 %v7347, 7
        %v7349 = vsub.s32 6, %v7348
        %v7350 = vrot.slane %v7288, %v7349
        %v7351 = vlaneseq
        %v7352 = vshrl.u32 %v7351, 7
        %v7353 = vsub.s32 7, %v7352
        %v7354 = vrot.slane %v7288, %v7353
        %v7403 = vunpack.c.l.b16 %v7255
        %v7404 = vunpack.c.h.b16 %v7255
        %v7405 = vunpack.c.l.b16 %v7256
        %v7406 = vunpack.c.h.b16 %v7256
        %v7407 = vunpack.c.l.b16 %v7257
        %v7408 = vunpack.c.h.b16 %v7257
        %v7409 = vunpack.c.l.b16 %v7258
        %v7410 = vunpack.c.h.b16 %v7258
        %v7411 = vunpack.c.l.b16 %v7259
        %v7412 = vunpack.c.h.b16 %v7259
        %v7413 = vunpack.c.l.b16 %v7260
        %v7414 = vunpack.c.h.b16 %v7260
        %v7415 = vunpack.c.l.b16 %v7261
        %v7416 = vunpack.c.h.b16 %v7261
        %v7417 = vunpack.c.l.b16 %v7262
        %v7418 = vunpack.c.h.b16 %v7262
        %v7419 = vunpack.c.l.b16 %v7263
        %v7420 = vunpack.c.h.b16 %v7263
        %v7421 = vunpack.c.l.b16 %v7264
        %v7422 = vunpack.c.h.b16 %v7264
        %v7423 = vunpack.c.l.b16 %v7265
        %v7424 = vunpack.c.h.b16 %v7265
        %v7425 = vunpack.c.l.b16 %v7266
        %v7426 = vunpack.c.h.b16 %v7266
        %v7427 = vunpack.c.l.b16 %v7267
        %v7428 = vunpack.c.h.b16 %v7267
        %v7429 = vunpack.c.l.b16 %v7268
        %v7430 = vunpack.c.h.b16 %v7268
        %v7431 = vunpack.c.l.b16 %v7269
        %v7432 = vunpack.c.h.b16 %v7269
        %v7433 = vunpack.c.l.b16 %v7270
        %v7434 = vunpack.c.h.b16 %v7270
        %v7435 = vunpack.c.l.b16 %v7271
        %v7436 = vunpack.c.h.b16 %v7271
        %v7437 = vunpack.c.l.b16 %v7272
        %v7438 = vunpack.c.h.b16 %v7272
        %v7439 = vunpack.c.l.b16 %v7273
        %v7440 = vunpack.c.h.b16 %v7273
        %v7441 = vunpack.c.l.b16 %v7274
        %v7442 = vunpack.c.h.b16 %v7274
        %v7443 = vunpack.c.l.b16 %v7275
        %v7444 = vunpack.c.h.b16 %v7275
        %v7445 = vunpack.c.l.b16 %v7276
        %v7446 = vunpack.c.h.b16 %v7276
        %v7447 = vunpack.c.l.b16 %v7277
        %v7448 = vunpack.c.h.b16 %v7277
        %v7449 = vunpack.c.l.b16 %v7278
        %v7450 = vunpack.c.h.b16 %v7278
        %v7451 = vunpack.c.l.b16 %v7279
        %v7452 = vunpack.c.h.b16 %v7279
        %v7453 = vunpack.c.l.b16 %v7280
        %v7454 = vunpack.c.h.b16 %v7280
        %v7455 = vunpack.c.l.b16 %v7281
        %v7456 = vunpack.c.h.b16 %v7281
        %v7457 = vunpack.c.l.b16 %v7282
        %v7458 = vunpack.c.h.b16 %v7282
        %v7459 = vunpack.c.l.b16 %v7283
        %v7460 = vunpack.c.h.b16 %v7283
        %v7461 = vunpack.c.l.b16 %v7284
        %v7462 = vunpack.c.h.b16 %v7284
        %v7463 = vunpack.c.l.b16 %v7285
        %v7464 = vunpack.c.h.b16 %v7285
        %v7465 = vunpack.c.l.b16 %v7286
        %v7466 = vunpack.c.h.b16 %v7286
        %v7467 = vpack.c.b16 %v7419, %v7403
        %v7468 = vpack.c.b16 %v7420, %v7404
        %v7469 = vpack.c.b16 %v7421, %v7405
        %v7470 = vpack.c.b16 %v7422, %v7406
        %v7471 = vpack.c.b16 %v7423, %v7407
        %v7472 = vpack.c.b16 %v7424, %v7408
        %v7473 = vpack.c.b16 %v7425, %v7409
        %v7474 = vpack.c.b16 %v7426, %v7410
        %v7475 = vpack.c.b16 %v7427, %v7411
        %v7476 = vpack.c.b16 %v7428, %v7412
        %v7477 = vpack.c.b16 %v7429, %v7413
        %v7478 = vpack.c.b16 %v7430, %v7414
        %v7479 = vpack.c.b16 %v7431, %v7415
        %v7480 = vpack.c.b16 %v7432, %v7416
        %v7481 = vpack.c.b16 %v7433, %v7417
        %v7482 = vpack.c.b16 %v7434, %v7418
        %v7483 = vpack.c.b16 %v7451, %v7435
        %v7484 = vpack.c.b16 %v7452, %v7436
        %v7485 = vpack.c.b16 %v7453, %v7437
        %v7486 = vpack.c.b16 %v7454, %v7438
        %v7487 = vpack.c.b16 %v7455, %v7439
        %v7488 = vpack.c.b16 %v7456, %v7440
        %v7489 = vpack.c.b16 %v7457, %v7441
        %v7490 = vpack.c.b16 %v7458, %v7442
        %v7491 = vpack.c.b16 %v7459, %v7443
        %v7492 = vpack.c.b16 %v7460, %v7444
        %v7493 = vpack.c.b16 %v7461, %v7445
        %v7494 = vpack.c.b16 %v7462, %v7446
        %v7495 = vpack.c.b16 %v7463, %v7447
        %v7496 = vpack.c.b16 %v7464, %v7448
        %v7497 = vpack.c.b16 %v7465, %v7449
        %v7498 = vpack.c.b16 %v7466, %v7450
        %v7532 = vsel %vm1568, %v7253, 0
        %v7535 = vsel %vm1568, %v7254, 0
        %7537 = vmatprep.subr.bf16.mxu0 %v7468
        %7538 = vmatpush1.bf16.msra.mxu0 %v7467
        %7539 = vmatprep.subr.bf16.mxu0 %v7484
        %7540 = vmatpush1.bf16.msra.mxu0 %v7483
        %7541 = vmatprep.subr.bf16.mxu0 0
        %7542 = vmatpush1.bf16.msra.mxu0 0
        %7543 = vmatprep.subr.bf16.mxu0 0
        %7544 = vmatpush1.bf16.msra.mxu0 0
        %7545 = vmatprep.subr.bf16.mxu0 0
        %7546 = vmatpush1.bf16.msra.mxu0 0
        %7547 = vmatprep.subr.bf16.mxu0 0
        %7548 = vmatpush1.bf16.msra.mxu0 0
        %7549 = vmatprep.subr.bf16.mxu0 0
        %7550 = vmatpush1.bf16.msra.mxu0 0
        %7551 = vmatprep.subr.bf16.mxu0 0
        %7552 = vmatpush1.bf16.msra.mxu0 0
        %7553 = vmatprep.subr.bf16.mxu0 0
        %7554 = vmatpush1.bf16.msra.mxu0 0
        %7555 = vmatprep.subr.bf16.mxu0 0
        %7556 = vmatpush1.bf16.msra.mxu0 0
        %7557 = vmatprep.subr.bf16.mxu0 0
        %7558 = vmatpush1.bf16.msra.mxu0 0
        %7559 = vmatprep.subr.bf16.mxu0 0
        %7560 = vmatpush1.bf16.msra.mxu0 0
        %7561 = vmatprep.subr.bf16.mxu0 0
        %7562 = vmatpush1.bf16.msra.mxu0 0
        %7563 = vmatprep.subr.bf16.mxu0 0
        %7564 = vmatpush1.bf16.msra.mxu0 0
        %7565 = vmatprep.subr.bf16.mxu0 0
        %7566 = vmatpush1.bf16.msra.mxu0 0
        %7567 = vmatprep.subr.bf16.mxu0 0
        %7568 = vmatpush1.bf16.msra.mxu0 0
        %7569 = vmatprep.mubr.f32.mxu0 0.0
        %7570 = vmatmul.mubr.f32.gmra.mrb[0].mxu0 %v7532
        %v7571 = vpop.f32.mrb[0].mxu0
        %v7572 = vadd.f32 %v7294, %v7571
        %v7573 = vpop.f32.mrb[0].mxu0
        %v7574 = vadd.f32 %v7298, %v7573
        %7575 = vmatprep.mubr.f32.mxu0 0.0
        %7576 = vmatmul.mubr.f32.gmra.mrb[0].mxu0 %v7535
        %v7577 = vpop.f32.mrb[0].mxu0
        %v7578 = vadd.f32 %v7294, %v7577
        %v7579 = vpop.f32.mrb[0].mxu0
        %v7580 = vadd.f32 %v7298, %v7579
        %7581 = vdwg.mxu0
        %7582 = vmatprep.subr.bf16.mxu0 %v7470
        %7583 = vmatpush1.bf16.msra.mxu0 %v7469
        %7584 = vmatprep.subr.bf16.mxu0 %v7486
        %7585 = vmatpush1.bf16.msra.mxu0 %v7485
        %7586 = vmatprep.subr.bf16.mxu0 0
        %7587 = vmatpush1.bf16.msra.mxu0 0
        %7588 = vmatprep.subr.bf16.mxu0 0
        %7589 = vmatpush1.bf16.msra.mxu0 0
        %7590 = vmatprep.subr.bf16.mxu0 0
        %7591 = vmatpush1.bf16.msra.mxu0 0
        %7592 = vmatprep.subr.bf16.mxu0 0
        %7593 = vmatpush1.bf16.msra.mxu0 0
        %7594 = vmatprep.subr.bf16.mxu0 0
        %7595 = vmatpush1.bf16.msra.mxu0 0
        %7596 = vmatprep.subr.bf16.mxu0 0
        %7597 = vmatpush1.bf16.msra.mxu0 0
        %7598 = vmatprep.subr.bf16.mxu0 0
        %7599 = vmatpush1.bf16.msra.mxu0 0
        %7600 = vmatprep.subr.bf16.mxu0 0
        %7601 = vmatpush1.bf16.msra.mxu0 0
        %7602 = vmatprep.subr.bf16.mxu0 0
        %7603 = vmatpush1.bf16.msra.mxu0 0
        %7604 = vmatprep.subr.bf16.mxu0 0
        %7605 = vmatpush1.bf16.msra.mxu0 0
        %7606 = vmatprep.subr.bf16.mxu0 0
        %7607 = vmatpush1.bf16.msra.mxu0 0
        %7608 = vmatprep.subr.bf16.mxu0 0
        %7609 = vmatpush1.bf16.msra.mxu0 0
        %7610 = vmatprep.subr.bf16.mxu0 0
        %7611 = vmatpush1.bf16.msra.mxu0 0
        %7612 = vmatprep.subr.bf16.mxu0 0
        %7613 = vmatpush1.bf16.msra.mxu0 0
        %7614 = vmatprep.mubr.f32.mxu0 0.0
        %7615 = vmatmul.mubr.f32.gmra.mrb[0].mxu0 %v7532
        %v7616 = vpop.f32.mrb[0].mxu0
        %v7617 = vadd.f32 %v7302, %v7616
        %v7618 = vpop.f32.mrb[0].mxu0
        %v7619 = vadd.f32 %v7306, %v7618
        %7620 = vmatprep.mubr.f32.mxu0 0.0
        %7621 = vmatmul.mubr.f32.gmra.mrb[0].mxu0 %v7535
        %v7622 = vpop.f32.mrb[0].mxu0
        %v7623 = vadd.f32 %v7302, %v7622
        %v7624 = vpop.f32.mrb[0].mxu0
        %v7625 = vadd.f32 %v7306, %v7624
        %7626 = vdwg.mxu0
        %7627 = vmatprep.subr.bf16.mxu0 %v7472
        %7628 = vmatpush1.bf16.msra.mxu0 %v7471
        %7629 = vmatprep.subr.bf16.mxu0 %v7488
        %7630 = vmatpush1.bf16.msra.mxu0 %v7487
        %7631 = vmatprep.subr.bf16.mxu0 0
        %7632 = vmatpush1.bf16.msra.mxu0 0
        %7633 = vmatprep.subr.bf16.mxu0 0
        %7634 = vmatpush1.bf16.msra.mxu0 0
        %7635 = vmatprep.subr.bf16.mxu0 0
        %7636 = vmatpush1.bf16.msra.mxu0 0
        %7637 = vmatprep.subr.bf16.mxu0 0
        %7638 = vmatpush1.bf16.msra.mxu0 0
        %7639 = vmatprep.subr.bf16.mxu0 0
        %7640 = vmatpush1.bf16.msra.mxu0 0
        %7641 = vmatprep.subr.bf16.mxu0 0
        %7642 = vmatpush1.bf16.msra.mxu0 0
        %7643 = vmatprep.subr.bf16.mxu0 0
        %7644 = vmatpush1.bf16.msra.mxu0 0
        %7645 = vmatprep.subr.bf16.mxu0 0
        %7646 = vmatpush1.bf16.msra.mxu0 0
        %7647 = vmatprep.subr.bf16.mxu0 0
        %7648 = vmatpush1.bf16.msra.mxu0 0
        %7649 = vmatprep.subr.bf16.mxu0 0
        %7650 = vmatpush1.bf16.msra.mxu0 0
        %7651 = vmatprep.subr.bf16.mxu0 0
        %7652 = vmatpush1.bf16.msra.mxu0 0
        %7653 = vmatprep.subr.bf16.mxu0 0
        %7654 = vmatpush1.bf16.msra.mxu0 0
        %7655 = vmatprep.subr.bf16.mxu0 0
        %7656 = vmatpush1.bf16.msra.mxu0 0
        %7657 = vmatprep.subr.bf16.mxu0 0
        %7658 = vmatpush1.bf16.msra.mxu0 0
        %7659 = vmatprep.mubr.f32.mxu0 0.0
        %7660 = vmatmul.mubr.f32.gmra.mrb[0].mxu0 %v7532
        %v7661 = vpop.f32.mrb[0].mxu0
        %v7662 = vadd.f32 %v7310, %v7661
        %v7663 = vpop.f32.mrb[0].mxu0
        %v7664 = vadd.f32 %v7314, %v7663
        %7665 = vmatprep.mubr.f32.mxu0 0.0
        %7666 = vmatmul.mubr.f32.gmra.mrb[0].mxu0 %v7535
        %v7667 = vpop.f32.mrb[0].mxu0
        %v7668 = vadd.f32 %v7310, %v7667
        %v7669 = vpop.f32.mrb[0].mxu0
        %v7670 = vadd.f32 %v7314, %v7669
        %7671 = vdwg.mxu0
        %7672 = vmatprep.subr.bf16.mxu0 %v7474
        %7673 = vmatpush1.bf16.msra.mxu0 %v7473
        %7674 = vmatprep.subr.bf16.mxu0 %v7490
        %7675 = vmatpush1.bf16.msra.mxu0 %v7489
        %7676 = vmatprep.subr.bf16.mxu0 0
        %7677 = vmatpush1.bf16.msra.mxu0 0
        %7678 = vmatprep.subr.bf16.mxu0 0
        %7679 = vmatpush1.bf16.msra.mxu0 0
        %7680 = vmatprep.subr.bf16.mxu0 0
        %7681 = vmatpush1.bf16.msra.mxu0 0
        %7682 = vmatprep.subr.bf16.mxu0 0
        %7683 = vmatpush1.bf16.msra.mxu0 0
        %7684 = vmatprep.subr.bf16.mxu0 0
        %7685 = vmatpush1.bf16.msra.mxu0 0
        %7686 = vmatprep.subr.bf16.mxu0 0
        %7687 = vmatpush1.bf16.msra.mxu0 0
        %7688 = vmatprep.subr.bf16.mxu0 0
        %7689 = vmatpush1.bf16.msra.mxu0 0
        %7690 = vmatprep.subr.bf16.mxu0 0
        %7691 = vmatpush1.bf16.msra.mxu0 0
        %7692 = vmatprep.subr.bf16.mxu0 0
        %7693 = vmatpush1.bf16.msra.mxu0 0
        %7694 = vmatprep.subr.bf16.mxu0 0
        %7695 = vmatpush1.bf16.msra.mxu0 0
        %7696 = vmatprep.subr.bf16.mxu0 0
        %7697 = vmatpush1.bf16.msra.mxu0 0
        %7698 = vmatprep.subr.bf16.mxu0 0
        %7699 = vmatpush1.bf16.msra.mxu0 0
        %7700 = vmatprep.subr.bf16.mxu0 0
        %7701 = vmatpush1.bf16.msra.mxu0 0
        %7702 = vmatprep.subr.bf16.mxu0 0
        %7703 = vmatpush1.bf16.msra.mxu0 0
        %7704 = vmatprep.mubr.f32.mxu0 0.0
        %7705 = vmatmul.mubr.f32.gmra.mrb[0].mxu0 %v7532
        %v7706 = vpop.f32.mrb[0].mxu0
        %v7707 = vadd.f32 %v7318, %v7706
        %v7708 = vpop.f32.mrb[0].mxu0
        %v7709 = vadd.f32 %v7322, %v7708
        %7710 = vmatprep.mubr.f32.mxu0 0.0
        %7711 = vmatmul.mubr.f32.gmra.mrb[0].mxu0 %v7535
        %v7712 = vpop.f32.mrb[0].mxu0
        %v7713 = vadd.f32 %v7318, %v7712
        %v7714 = vpop.f32.mrb[0].mxu0
        %v7715 = vadd.f32 %v7322, %v7714
        %7716 = vdwg.mxu0
        %7717 = vmatprep.subr.bf16.mxu0 %v7476
        %7718 = vmatpush1.bf16.msra.mxu0 %v7475
        %7719 = vmatprep.subr.bf16.mxu0 %v7492
        %7720 = vmatpush1.bf16.msra.mxu0 %v7491
        %7721 = vmatprep.subr.bf16.mxu0 0
        %7722 = vmatpush1.bf16.msra.mxu0 0
        %7723 = vmatprep.subr.bf16.mxu0 0
        %7724 = vmatpush1.bf16.msra.mxu0 0
        %7725 = vmatprep.subr.bf16.mxu0 0
        %7726 = vmatpush1.bf16.msra.mxu0 0
        %7727 = vmatprep.subr.bf16.mxu0 0
        %7728 = vmatpush1.bf16.msra.mxu0 0
        %7729 = vmatprep.subr.bf16.mxu0 0
        %7730 = vmatpush1.bf16.msra.mxu0 0
        %7731 = vmatprep.subr.bf16.mxu0 0
        %7732 = vmatpush1.bf16.msra.mxu0 0
        %7733 = vmatprep.subr.bf16.mxu0 0
        %7734 = vmatpush1.bf16.msra.mxu0 0
        %7735 = vmatprep.subr.bf16.mxu0 0
        %7736 = vmatpush1.bf16.msra.mxu0 0
        %7737 = vmatprep.subr.bf16.mxu0 0
        %7738 = vmatpush1.bf16.msra.mxu0 0
        %7739 = vmatprep.subr.bf16.mxu0 0
        %7740 = vmatpush1.bf16.msra.mxu0 0
        %7741 = vmatprep.subr.bf16.mxu0 0
        %7742 = vmatpush1.bf16.msra.mxu0 0
        %7743 = vmatprep.subr.bf16.mxu0 0
        %7744 = vmatpush1.bf16.msra.mxu0 0
        %7745 = vmatprep.subr.bf16.mxu0 0
        %7746 = vmatpush1.bf16.msra.mxu0 0
        %7747 = vmatprep.subr.bf16.mxu0 0
        %7748 = vmatpush1.bf16.msra.mxu0 0
        %7749 = vmatprep.mubr.f32.mxu0 0.0
        %7750 = vmatmul.mubr.f32.gmra.mrb[0].mxu0 %v7532
        %v7751 = vpop.f32.mrb[0].mxu0
        %v7752 = vadd.f32 %v7326, %v7751
        %v7753 = vpop.f32.mrb[0].mxu0
        %v7754 = vadd.f32 %v7330, %v7753
        %7755 = vmatprep.mubr.f32.mxu0 0.0
        %7756 = vmatmul.mubr.f32.gmra.mrb[0].mxu0 %v7535
        %v7757 = vpop.f32.mrb[0].mxu0
        %v7758 = vadd.f32 %v7326, %v7757
        %v7759 = vpop.f32.mrb[0].mxu0
        %v7760 = vadd.f32 %v7330, %v7759
        %7761 = vdwg.mxu0
        %7762 = vmatprep.subr.bf16.mxu0 %v7478
        %7763 = vmatpush1.bf16.msra.mxu0 %v7477
        %7764 = vmatprep.subr.bf16.mxu0 %v7494
        %7765 = vmatpush1.bf16.msra.mxu0 %v7493
        %7766 = vmatprep.subr.bf16.mxu0 0
        %7767 = vmatpush1.bf16.msra.mxu0 0
        %7768 = vmatprep.subr.bf16.mxu0 0
        %7769 = vmatpush1.bf16.msra.mxu0 0
        %7770 = vmatprep.subr.bf16.mxu0 0
        %7771 = vmatpush1.bf16.msra.mxu0 0
        %7772 = vmatprep.subr.bf16.mxu0 0
        %7773 = vmatpush1.bf16.msra.mxu0 0
        %7774 = vmatprep.subr.bf16.mxu0 0
        %7775 = vmatpush1.bf16.msra.mxu0 0
        %7776 = vmatprep.subr.bf16.mxu0 0
        %7777 = vmatpush1.bf16.msra.mxu0 0
        %7778 = vmatprep.subr.bf16.mxu0 0
        %7779 = vmatpush1.bf16.msra.mxu0 0
        %7780 = vmatprep.subr.bf16.mxu0 0
        %7781 = vmatpush1.bf16.msra.mxu0 0
        %7782 = vmatprep.subr.bf16.mxu0 0
        %7783 = vmatpush1.bf16.msra.mxu0 0
        %7784 = vmatprep.subr.bf16.mxu0 0
        %7785 = vmatpush1.bf16.msra.mxu0 0
        %7786 = vmatprep.subr.bf16.mxu0 0
        %7787 = vmatpush1.bf16.msra.mxu0 0
        %7788 = vmatprep.subr.bf16.mxu0 0
        %7789 = vmatpush1.bf16.msra.mxu0 0
        %7790 = vmatprep.subr.bf16.mxu0 0
        %7791 = vmatpush1.bf16.msra.mxu0 0
        %7792 = vmatprep.subr.bf16.mxu0 0
        %7793 = vmatpush1.bf16.msra.mxu0 0
        %7794 = vmatprep.mubr.f32.mxu0 0.0
        %7795 = vmatmul.mubr.f32.gmra.mrb[0].mxu0 %v7532
        %v7796 = vpop.f32.mrb[0].mxu0
        %v7797 = vadd.f32 %v7334, %v7796
        %v7798 = vpop.f32.mrb[0].mxu0
        %v7799 = vadd.f32 %v7338, %v7798
        %7800 = vmatprep.mubr.f32.mxu0 0.0
        %7801 = vmatmul.mubr.f32.gmra.mrb[0].mxu0 %v7535
        %v7802 = vpop.f32.mrb[0].mxu0
        %v7803 = vadd.f32 %v7334, %v7802
        %v7804 = vpop.f32.mrb[0].mxu0
        %v7805 = vadd.f32 %v7338, %v7804
        %7806 = vdwg.mxu0
        %7807 = vmatprep.subr.bf16.mxu0 %v7480
        %7808 = vmatpush1.bf16.msra.mxu0 %v7479
        %7809 = vmatprep.subr.bf16.mxu0 %v7496
        %7810 = vmatpush1.bf16.msra.mxu0 %v7495
        %7811 = vmatprep.subr.bf16.mxu0 0
        %7812 = vmatpush1.bf16.msra.mxu0 0
        %7813 = vmatprep.subr.bf16.mxu0 0
        %7814 = vmatpush1.bf16.msra.mxu0 0
        %7815 = vmatprep.subr.bf16.mxu0 0
        %7816 = vmatpush1.bf16.msra.mxu0 0
        %7817 = vmatprep.subr.bf16.mxu0 0
        %7818 = vmatpush1.bf16.msra.mxu0 0
        %7819 = vmatprep.subr.bf16.mxu0 0
        %7820 = vmatpush1.bf16.msra.mxu0 0
        %7821 = vmatprep.subr.bf16.mxu0 0
        %7822 = vmatpush1.bf16.msra.mxu0 0
        %7823 = vmatprep.subr.bf16.mxu0 0
        %7824 = vmatpush1.bf16.msra.mxu0 0
        %7825 = vmatprep.subr.bf16.mxu0 0
        %7826 = vmatpush1.bf16.msra.mxu0 0
        %7827 = vmatprep.subr.bf16.mxu0 0
        %7828 = vmatpush1.bf16.msra.mxu0 0
        %7829 = vmatprep.subr.bf16.mxu0 0
        %7830 = vmatpush1.bf16.msra.mxu0 0
        %7831 = vmatprep.subr.bf16.mxu0 0
        %7832 = vmatpush1.bf16.msra.mxu0 0
        %7833 = vmatprep.subr.bf16.mxu0 0
        %7834 = vmatpush1.bf16.msra.mxu0 0
        %7835 = vmatprep.subr.bf16.mxu0 0
        %7836 = vmatpush1.bf16.msra.mxu0 0
        %7837 = vmatprep.subr.bf16.mxu0 0
        %7838 = vmatpush1.bf16.msra.mxu0 0
        %7839 = vmatprep.mubr.f32.mxu0 0.0
        %7840 = vmatmul.mubr.f32.gmra.mrb[0].mxu0 %v7532
        %v7841 = vpop.f32.mrb[0].mxu0
        %v7842 = vadd.f32 %v7342, %v7841
        %v7843 = vpop.f32.mrb[0].mxu0
        %v7844 = vadd.f32 %v7346, %v7843
        %7845 = vmatprep.mubr.f32.mxu0 0.0
        %7846 = vmatmul.mubr.f32.gmra.mrb[0].mxu0 %v7535
        %v7847 = vpop.f32.mrb[0].mxu0
        %v7848 = vadd.f32 %v7342, %v7847
        %v7849 = vpop.f32.mrb[0].mxu0
        %v7850 = vadd.f32 %v7346, %v7849
        %7851 = vdwg.mxu0
        %7852 = vmatprep.subr.bf16.mxu0 %v7482
        %7853 = vmatpush1.bf16.msra.mxu0 %v7481
        %7854 = vmatprep.subr.bf16.mxu0 %v7498
        %7855 = vmatpush1.bf16.msra.mxu0 %v7497
        %7856 = vmatprep.subr.bf16.mxu0 0
        %7857 = vmatpush1.bf16.msra.mxu0 0
        %7858 = vmatprep.subr.bf16.mxu0 0
        %7859 = vmatpush1.bf16.msra.mxu0 0
        %7860 = vmatprep.subr.bf16.mxu0 0
        %7861 = vmatpush1.bf16.msra.mxu0 0
        %7862 = vmatprep.subr.bf16.mxu0 0
        %7863 = vmatpush1.bf16.msra.mxu0 0
        %7864 = vmatprep.subr.bf16.mxu0 0
        %7865 = vmatpush1.bf16.msra.mxu0 0
        %7866 = vmatprep.subr.bf16.mxu0 0
        %7867 = vmatpush1.bf16.msra.mxu0 0
        %7868 = vmatprep.subr.bf16.mxu0 0
        %7869 = vmatpush1.bf16.msra.mxu0 0
        %7870 = vmatprep.subr.bf16.mxu0 0
        %7871 = vmatpush1.bf16.msra.mxu0 0
        %7872 = vmatprep.subr.bf16.mxu0 0
        %7873 = vmatpush1.bf16.msra.mxu0 0
        %7874 = vmatprep.subr.bf16.mxu0 0
        %7875 = vmatpush1.bf16.msra.mxu0 0
        %7876 = vmatprep.subr.bf16.mxu0 0
        %7877 = vmatpush1.bf16.msra.mxu0 0
        %7878 = vmatprep.subr.bf16.mxu0 0
        %7879 = vmatpush1.bf16.msra.mxu0 0
        %7880 = vmatprep.subr.bf16.mxu0 0
        %7881 = vmatpush1.bf16.msra.mxu0 0
        %7882 = vmatprep.subr.bf16.mxu0 0
        %7883 = vmatpush1.bf16.msra.mxu0 0
        %7884 = vmatprep.mubr.f32.mxu0 0.0
        %7885 = vmatmul.mubr.f32.gmra.mrb[0].mxu0 %v7532
        %v7886 = vpop.f32.mrb[0].mxu0
        %v7887 = vadd.f32 %v7350, %v7886
        %v7888 = vpop.f32.mrb[0].mxu0
        %v7889 = vadd.f32 %v7354, %v7888
        %7890 = vmatprep.mubr.f32.mxu0 0.0
        %7891 = vmatmul.mubr.f32.gmra.mrb[0].mxu0 %v7535
        %v7892 = vpop.f32.mrb[0].mxu0
        %v7893 = vadd.f32 %v7350, %v7892
        %v7894 = vpop.f32.mrb[0].mxu0
        %v7895 = vadd.f32 %v7354, %v7894
        %7896 = vdwg.mxu0
        %v7897 = vmax.f32 %v7572, 0.0
        %v7898 = vmax.f32 %v7574, 0.0
        %v7899 = vmax.f32 %v7617, 0.0
        %v7900 = vmax.f32 %v7619, 0.0
        %v7901 = vmax.f32 %v7662, 0.0
        %v7902 = vmax.f32 %v7664, 0.0
        %v7903 = vmax.f32 %v7707, 0.0
        %v7904 = vmax.f32 %v7709, 0.0
        %v7905 = vmax.f32 %v7752, 0.0
        %v7906 = vmax.f32 %v7754, 0.0
        %v7907 = vmax.f32 %v7797, 0.0
        %v7908 = vmax.f32 %v7799, 0.0
        %v7909 = vmax.f32 %v7842, 0.0
        %v7910 = vmax.f32 %v7844, 0.0
        %v7911 = vmax.f32 %v7887, 0.0
        %v7912 = vmax.f32 %v7889, 0.0
        %v7913 = vmax.f32 %v7578, 0.0
        %v7914 = vmax.f32 %v7580, 0.0
        %v7915 = vmax.f32 %v7623, 0.0
        %v7916 = vmax.f32 %v7625, 0.0
        %v7917 = vmax.f32 %v7668, 0.0
        %v7918 = vmax.f32 %v7670, 0.0
        %v7919 = vmax.f32 %v7713, 0.0
        %v7920 = vmax.f32 %v7715, 0.0
        %v7921 = vmax.f32 %v7758, 0.0
        %v7922 = vmax.f32 %v7760, 0.0
        %v7923 = vmax.f32 %v7803, 0.0
        %v7924 = vmax.f32 %v7805, 0.0
        %v7925 = vmax.f32 %v7848, 0.0
        %v7926 = vmax.f32 %v7850, 0.0
        %v7927 = vmax.f32 %v7893, 0.0
        %v7928 = vmax.f32 %v7895, 0.0
        %v7929 = vld [vmem:[%s1476] sm:$0xf]
        %v7930 = vld [vmem:[%s1476 + $0x4] sm:$0xf]
        %v7931 = vld [vmem:[%s1476 + $0x8] sm:$0xf]
        %v7932 = vld [vmem:[%s1476 + $0xc] sm:$0xf]
        %v7933 = vld [vmem:[%s1476 + $0x10] sm:$0xf]
        %v7934 = vld [vmem:[%s1476 + $0x14] sm:$0xf]
        %v7935 = vld [vmem:[%s1476 + $0x18] sm:$0xf]
        %v7936 = vld [vmem:[%s1476 + $0x1c] sm:$0xf]
        %v7937 = vld [vmem:[%s1476 + $0x20] sm:$0xf]
        %v7938 = vld [vmem:[%s1476 + $0x24] sm:$0xf]
        %v7939 = vld [vmem:[%s1476 + $0x28] sm:$0xf]
        %v7940 = vld [vmem:[%s1476 + $0x2c] sm:$0xf]
        %v7941 = vld [vmem:[%s1476 + $0x30] sm:$0xf]
        %v7942 = vld [vmem:[%s1476 + $0x34] sm:$0xf]
        %v7943 = vld [vmem:[%s1476 + $0x38] sm:$0xf]
        %v7944 = vld [vmem:[%s1476 + $0x3c] sm:$0xf]
        %v7945 = vld [vmem:[%s1476 + $0x40] sm:$0xf]
        %v7946 = vld [vmem:[%s1476 + $0x44] sm:$0xf]
        %v7947 = vld [vmem:[%s1476 + $0x48] sm:$0xf]
        %v7948 = vld [vmem:[%s1476 + $0x4c] sm:$0xf]
        %v7949 = vld [vmem:[%s1476 + $0x50] sm:$0xf]
        %v7950 = vld [vmem:[%s1476 + $0x54] sm:$0xf]
        %v7951 = vld [vmem:[%s1476 + $0x58] sm:$0xf]
        %v7952 = vld [vmem:[%s1476 + $0x5c] sm:$0xf]
        %v7953 = vld [vmem:[%s1476 + $0x60] sm:$0xf]
        %v7954 = vld [vmem:[%s1476 + $0x64] sm:$0xf]
        %v7955 = vld [vmem:[%s1476 + $0x68] sm:$0xf]
        %v7956 = vld [vmem:[%s1476 + $0x6c] sm:$0xf]
        %v7957 = vld [vmem:[%s1476 + $0x70] sm:$0xf]
        %v7958 = vld [vmem:[%s1476 + $0x74] sm:$0xf]
        %v7959 = vld [vmem:[%s1476 + $0x78] sm:$0xf]
        %v7960 = vld [vmem:[%s1476 + $0x7c] sm:$0xf]
        %v7961 = vld [vmem:[%s1476 + $0x80] sm:$0xf]
        %v7962 = vld [vmem:[%s1476 + $0x84] sm:$0xf]
        %v7963 = vld [vmem:[%s1476 + $0x88] sm:$0xf]
        %v7964 = vld [vmem:[%s1476 + $0x8c] sm:$0xf]
        %v7965 = vld [vmem:[%s1476 + $0x90] sm:$0xf]
        %v7966 = vld [vmem:[%s1476 + $0x94] sm:$0xf]
        %v7967 = vld [vmem:[%s1476 + $0x98] sm:$0xf]
        %v7968 = vld [vmem:[%s1476 + $0x9c] sm:$0xf]
        %v7969 = vld [vmem:[%s1476 + $0xa0] sm:$0xf]
        %v7970 = vld [vmem:[%s1476 + $0xa4] sm:$0xf]
        %v7971 = vld [vmem:[%s1476 + $0xa8] sm:$0xf]
        %v7972 = vld [vmem:[%s1476 + $0xac] sm:$0xf]
        %v7973 = vld [vmem:[%s1476 + $0xb0] sm:$0xf]
        %v7974 = vld [vmem:[%s1476 + $0xb4] sm:$0xf]
        %v7975 = vld [vmem:[%s1476 + $0xb8] sm:$0xf]
        %v7976 = vld [vmem:[%s1476 + $0xbc] sm:$0xf]
        %v7977 = vld [vmem:[%s1476 + $0xc0] sm:$0xf]
        %v7978 = vld [vmem:[%s1476 + $0xc4] sm:$0xf]
        %v7979 = vld [vmem:[%s1476 + $0xc8] sm:$0xf]
        %v7980 = vld [vmem:[%s1476 + $0xcc] sm:$0xf]
        %v7981 = vld [vmem:[%s1476 + $0xd0] sm:$0xf]
        %v7982 = vld [vmem:[%s1476 + $0xd4] sm:$0xf]
        %v7983 = vld [vmem:[%s1476 + $0xd8] sm:$0xf]
        %v7984 = vld [vmem:[%s1476 + $0xdc] sm:$0xf]
        %v7985 = vld [vmem:[%s1476 + $0xe0] sm:$0xf]
        %v7986 = vld [vmem:[%s1476 + $0xe4] sm:$0xf]
        %v7987 = vld [vmem:[%s1476 + $0xe8] sm:$0xf]
        %v7988 = vld [vmem:[%s1476 + $0xec] sm:$0xf]
        %v7989 = vld [vmem:[%s1476 + $0xf0] sm:$0xf]
        %v7990 = vld [vmem:[%s1476 + $0xf4] sm:$0xf]
        %v7991 = vld [vmem:[%s1476 + $0xf8] sm:$0xf]
        %v7992 = vld [vmem:[%s1476 + $0xfc] sm:$0xf]
        %v7993 = vld [vmem:[%s1476 + $0x100] sm:$0xf]
        %v7994 = vld [vmem:[%s1476 + $0x104] sm:$0xf]
        %v7995 = vld [vmem:[%s1476 + $0x108] sm:$0xf]
        %v7996 = vld [vmem:[%s1476 + $0x10c] sm:$0xf]
        %v7997 = vld [vmem:[%s1476 + $0x110] sm:$0xf]
        %v7998 = vld [vmem:[%s1476 + $0x114] sm:$0xf]
        %v7999 = vld [vmem:[%s1476 + $0x118] sm:$0xf]
        %v8000 = vld [vmem:[%s1476 + $0x11c] sm:$0xf]
        %v8001 = vld [vmem:[%s1476 + $0x120] sm:$0xf]
        %v8002 = vld [vmem:[%s1476 + $0x124] sm:$0xf]
        %v8003 = vld [vmem:[%s1476 + $0x128] sm:$0xf]
        %v8004 = vld [vmem:[%s1476 + $0x12c] sm:$0xf]
        %v8005 = vld [vmem:[%s1476 + $0x130] sm:$0xf]
        %v8006 = vld [vmem:[%s1476 + $0x134] sm:$0xf]
        %v8007 = vld [vmem:[%s1476 + $0x138] sm:$0xf]
        %v8008 = vld [vmem:[%s1476 + $0x13c] sm:$0xf]
        %v8009 = vld [vmem:[%s1476 + $0x140] sm:$0xf]
        %v8010 = vld [vmem:[%s1476 + $0x144] sm:$0xf]
        %v8011 = vld [vmem:[%s1476 + $0x148] sm:$0xf]
        %v8012 = vld [vmem:[%s1476 + $0x14c] sm:$0xf]
        %v8013 = vld [vmem:[%s1476 + $0x150] sm:$0xf]
        %v8014 = vld [vmem:[%s1476 + $0x154] sm:$0xf]
        %v8015 = vld [vmem:[%s1476 + $0x158] sm:$0xf]
        %v8016 = vld [vmem:[%s1476 + $0x15c] sm:$0xf]
        %v8017 = vld [vmem:[%s1476 + $0x160] sm:$0xf]
        %v8018 = vld [vmem:[%s1476 + $0x164] sm:$0xf]
        %v8019 = vld [vmem:[%s1476 + $0x168] sm:$0xf]
        %v8020 = vld [vmem:[%s1476 + $0x16c] sm:$0xf]
        %v8021 = vld [vmem:[%s1476 + $0x170] sm:$0xf]
        %v8022 = vld [vmem:[%s1476 + $0x174] sm:$0xf]
        %v8023 = vld [vmem:[%s1476 + $0x178] sm:$0xf]
        %v8024 = vld [vmem:[%s1476 + $0x17c] sm:$0xf]
        %v8025 = vld [vmem:[%s1476 + $0x180] sm:$0xf]
        %v8026 = vld [vmem:[%s1476 + $0x184] sm:$0xf]
        %v8027 = vld [vmem:[%s1476 + $0x188] sm:$0xf]
        %v8028 = vld [vmem:[%s1476 + $0x18c] sm:$0xf]
        %v8029 = vld [vmem:[%s1476 + $0x190] sm:$0xf]
        %v8030 = vld [vmem:[%s1476 + $0x194] sm:$0xf]
        %v8031 = vld [vmem:[%s1476 + $0x198] sm:$0xf]
        %v8032 = vld [vmem:[%s1476 + $0x19c] sm:$0xf]
        %v8033 = vld [vmem:[%s1476 + $0x1a0] sm:$0xf]
        %v8034 = vld [vmem:[%s1476 + $0x1a4] sm:$0xf]
        %v8035 = vld [vmem:[%s1476 + $0x1a8] sm:$0xf]
        %v8036 = vld [vmem:[%s1476 + $0x1ac] sm:$0xf]
        %v8037 = vld [vmem:[%s1476 + $0x1b0] sm:$0xf]
        %v8038 = vld [vmem:[%s1476 + $0x1b4] sm:$0xf]
        %v8039 = vld [vmem:[%s1476 + $0x1b8] sm:$0xf]
        %v8040 = vld [vmem:[%s1476 + $0x1bc] sm:$0xf]
        %v8041 = vld [vmem:[%s1476 + $0x1c0] sm:$0xf]
        %v8042 = vld [vmem:[%s1476 + $0x1c4] sm:$0xf]
        %v8043 = vld [vmem:[%s1476 + $0x1c8] sm:$0xf]
        %v8044 = vld [vmem:[%s1476 + $0x1cc] sm:$0xf]
        %v8045 = vld [vmem:[%s1476 + $0x1d0] sm:$0xf]
        %v8046 = vld [vmem:[%s1476 + $0x1d4] sm:$0xf]
        %v8047 = vld [vmem:[%s1476 + $0x1d8] sm:$0xf]
        %v8048 = vld [vmem:[%s1476 + $0x1dc] sm:$0xf]
        %v8049 = vld [vmem:[%s1476 + $0x1e0] sm:$0xf]
        %v8050 = vld [vmem:[%s1476 + $0x1e4] sm:$0xf]
        %v8051 = vld [vmem:[%s1476 + $0x1e8] sm:$0xf]
        %v8052 = vld [vmem:[%s1476 + $0x1ec] sm:$0xf]
        %v8053 = vld [vmem:[%s1476 + $0x1f0] sm:$0xf]
        %v8054 = vld [vmem:[%s1476 + $0x1f4] sm:$0xf]
        %v8055 = vld [vmem:[%s1476 + $0x1f8] sm:$0xf]
        %v8056 = vld [vmem:[%s1476 + $0x1fc] sm:$0xf]
        %v8057 = vld [vmem:[%s1476 + $0x200] sm:$0xf]
        %v8058 = vld [vmem:[%s1476 + $0x204] sm:$0xf]
        %v8059 = vld [vmem:[%s1476 + $0x208] sm:$0xf]
        %v8060 = vld [vmem:[%s1476 + $0x20c] sm:$0xf]
        %v8061 = vld [vmem:[%s1476 + $0x210] sm:$0xf]
        %v8062 = vld [vmem:[%s1476 + $0x214] sm:$0xf]
        %v8063 = vld [vmem:[%s1476 + $0x218] sm:$0xf]
        %v8064 = vld [vmem:[%s1476 + $0x21c] sm:$0xf]
        %v8065 = vld [vmem:[%s1476 + $0x220] sm:$0xf]
        %v8066 = vld [vmem:[%s1476 + $0x224] sm:$0xf]
        %v8067 = vld [vmem:[%s1476 + $0x228] sm:$0xf]
        %v8068 = vld [vmem:[%s1476 + $0x22c] sm:$0xf]
        %v8069 = vld [vmem:[%s1476 + $0x230] sm:$0xf]
        %v8070 = vld [vmem:[%s1476 + $0x234] sm:$0xf]
        %v8071 = vld [vmem:[%s1476 + $0x238] sm:$0xf]
        %v8072 = vld [vmem:[%s1476 + $0x23c] sm:$0xf]
        %v8073 = vld [vmem:[%s1476 + $0x240] sm:$0xf]
        %v8074 = vld [vmem:[%s1476 + $0x244] sm:$0xf]
        %v8075 = vld [vmem:[%s1476 + $0x248] sm:$0xf]
        %v8076 = vld [vmem:[%s1476 + $0x24c] sm:$0xf]
        %v8077 = vld [vmem:[%s1476 + $0x250] sm:$0xf]
        %v8078 = vld [vmem:[%s1476 + $0x254] sm:$0xf]
        %v8079 = vld [vmem:[%s1476 + $0x258] sm:$0xf]
        %v8080 = vld [vmem:[%s1476 + $0x25c] sm:$0xf]
        %v8081 = vld [vmem:[%s1476 + $0x260] sm:$0xf]
        %v8082 = vld [vmem:[%s1476 + $0x264] sm:$0xf]
        %v8083 = vld [vmem:[%s1476 + $0x268] sm:$0xf]
        %v8084 = vld [vmem:[%s1476 + $0x26c] sm:$0xf]
        %v8085 = vld [vmem:[%s1476 + $0x270] sm:$0xf]
        %v8086 = vld [vmem:[%s1476 + $0x274] sm:$0xf]
        %v8087 = vld [vmem:[%s1476 + $0x278] sm:$0xf]
        %v8088 = vld [vmem:[%s1476 + $0x27c] sm:$0xf]
        %v8089 = vld [vmem:[%s1476 + $0x280] sm:$0xf]
        %v8090 = vld [vmem:[%s1476 + $0x284] sm:$0xf]
        %v8091 = vld [vmem:[%s1476 + $0x288] sm:$0xf]
        %v8092 = vld [vmem:[%s1476 + $0x28c] sm:$0xf]
        %v8093 = vld [vmem:[%s1476 + $0x290] sm:$0xf]
        %v8094 = vld [vmem:[%s1476 + $0x294] sm:$0xf]
        %v8095 = vld [vmem:[%s1476 + $0x298] sm:$0xf]
        %v8096 = vld [vmem:[%s1476 + $0x29c] sm:$0xf]
        %v8097 = vld [vmem:[%s1476 + $0x2a0] sm:$0xf]
        %v8098 = vld [vmem:[%s1476 + $0x2a4] sm:$0xf]
        %v8099 = vld [vmem:[%s1476 + $0x2a8] sm:$0xf]
        %v8100 = vld [vmem:[%s1476 + $0x2ac] sm:$0xf]
        %v8101 = vld [vmem:[%s1476 + $0x2b0] sm:$0xf]
        %v8102 = vld [vmem:[%s1476 + $0x2b4] sm:$0xf]
        %v8103 = vld [vmem:[%s1476 + $0x2b8] sm:$0xf]
        %v8104 = vld [vmem:[%s1476 + $0x2bc] sm:$0xf]
        %v8105 = vld [vmem:[%s1476 + $0x2c0] sm:$0xf]
        %v8106 = vld [vmem:[%s1476 + $0x2c4] sm:$0xf]
        %v8107 = vld [vmem:[%s1476 + $0x2c8] sm:$0xf]
        %v8108 = vld [vmem:[%s1476 + $0x2cc] sm:$0xf]
        %v8109 = vld [vmem:[%s1476 + $0x2d0] sm:$0xf]
        %v8110 = vld [vmem:[%s1476 + $0x2d4] sm:$0xf]
        %v8111 = vld [vmem:[%s1476 + $0x2d8] sm:$0xf]
        %v8112 = vld [vmem:[%s1476 + $0x2dc] sm:$0xf]
        %v8113 = vld [vmem:[%s1476 + $0x2e0] sm:$0xf]
        %v8114 = vld [vmem:[%s1476 + $0x2e4] sm:$0xf]
        %v8115 = vld [vmem:[%s1476 + $0x2e8] sm:$0xf]
        %v8116 = vld [vmem:[%s1476 + $0x2ec] sm:$0xf]
        %v8117 = vld [vmem:[%s1476 + $0x2f0] sm:$0xf]
        %v8118 = vld [vmem:[%s1476 + $0x2f4] sm:$0xf]
        %v8119 = vld [vmem:[%s1476 + $0x2f8] sm:$0xf]
        %v8120 = vld [vmem:[%s1476 + $0x2fc] sm:$0xf]
        %v8121 = vld [vmem:[%s1476 + $0x300] sm:$0xf]
        %v8122 = vld [vmem:[%s1476 + $0x304] sm:$0xf]
        %v8123 = vld [vmem:[%s1476 + $0x308] sm:$0xf]
        %v8124 = vld [vmem:[%s1476 + $0x30c] sm:$0xf]
        %v8125 = vld [vmem:[%s1476 + $0x310] sm:$0xf]
        %v8126 = vld [vmem:[%s1476 + $0x314] sm:$0xf]
        %v8127 = vld [vmem:[%s1476 + $0x318] sm:$0xf]
        %v8128 = vld [vmem:[%s1476 + $0x31c] sm:$0xf]
        %v8129 = vld [vmem:[%s1476 + $0x320] sm:$0xf]
        %v8130 = vld [vmem:[%s1476 + $0x324] sm:$0xf]
        %v8131 = vld [vmem:[%s1476 + $0x328] sm:$0xf]
        %v8132 = vld [vmem:[%s1476 + $0x32c] sm:$0xf]
        %v8133 = vld [vmem:[%s1476 + $0x330] sm:$0xf]
        %v8134 = vld [vmem:[%s1476 + $0x334] sm:$0xf]
        %v8135 = vld [vmem:[%s1476 + $0x338] sm:$0xf]
        %v8136 = vld [vmem:[%s1476 + $0x33c] sm:$0xf]
        %v8137 = vld [vmem:[%s1476 + $0x340] sm:$0xf]
        %v8138 = vld [vmem:[%s1476 + $0x344] sm:$0xf]
        %v8139 = vld [vmem:[%s1476 + $0x348] sm:$0xf]
        %v8140 = vld [vmem:[%s1476 + $0x34c] sm:$0xf]
        %v8141 = vld [vmem:[%s1476 + $0x350] sm:$0xf]
        %v8142 = vld [vmem:[%s1476 + $0x354] sm:$0xf]
        %v8143 = vld [vmem:[%s1476 + $0x358] sm:$0xf]
        %v8144 = vld [vmem:[%s1476 + $0x35c] sm:$0xf]
        %v8145 = vld [vmem:[%s1476 + $0x360] sm:$0xf]
        %v8146 = vld [vmem:[%s1476 + $0x364] sm:$0xf]
        %v8147 = vld [vmem:[%s1476 + $0x368] sm:$0xf]
        %v8148 = vld [vmem:[%s1476 + $0x36c] sm:$0xf]
        %v8149 = vld [vmem:[%s1476 + $0x370] sm:$0xf]
        %v8150 = vld [vmem:[%s1476 + $0x374] sm:$0xf]
        %v8151 = vld [vmem:[%s1476 + $0x378] sm:$0xf]
        %v8152 = vld [vmem:[%s1476 + $0x37c] sm:$0xf]
        %v8153 = vld [vmem:[%s1476 + $0x380] sm:$0xf]
        %v8154 = vld [vmem:[%s1476 + $0x384] sm:$0xf]
        %v8155 = vld [vmem:[%s1476 + $0x388] sm:$0xf]
        %v8156 = vld [vmem:[%s1476 + $0x38c] sm:$0xf]
        %v8157 = vld [vmem:[%s1476 + $0x390] sm:$0xf]
        %v8158 = vld [vmem:[%s1476 + $0x394] sm:$0xf]
        %v8159 = vld [vmem:[%s1476 + $0x398] sm:$0xf]
        %v8160 = vld [vmem:[%s1476 + $0x39c] sm:$0xf]
        %v8161 = vld [vmem:[%s1476 + $0x3a0] sm:$0xf]
        %v8162 = vld [vmem:[%s1476 + $0x3a4] sm:$0xf]
        %v8163 = vld [vmem:[%s1476 + $0x3a8] sm:$0xf]
        %v8164 = vld [vmem:[%s1476 + $0x3ac] sm:$0xf]
        %v8165 = vld [vmem:[%s1476 + $0x3b0] sm:$0xf]
        %v8166 = vld [vmem:[%s1476 + $0x3b4] sm:$0xf]
        %v8167 = vld [vmem:[%s1476 + $0x3b8] sm:$0xf]
        %v8168 = vld [vmem:[%s1476 + $0x3bc] sm:$0xf]
        %v8169 = vld [vmem:[%s1476 + $0x3c0] sm:$0xf]
        %v8170 = vld [vmem:[%s1476 + $0x3c4] sm:$0xf]
        %v8171 = vld [vmem:[%s1476 + $0x3c8] sm:$0xf]
        %v8172 = vld [vmem:[%s1476 + $0x3cc] sm:$0xf]
        %v8173 = vld [vmem:[%s1476 + $0x3d0] sm:$0xf]
        %v8174 = vld [vmem:[%s1476 + $0x3d4] sm:$0xf]
        %v8175 = vld [vmem:[%s1476 + $0x3d8] sm:$0xf]
        %v8176 = vld [vmem:[%s1476 + $0x3dc] sm:$0xf]
        %v8177 = vld [vmem:[%s1476 + $0x3e0] sm:$0xf]
        %v8178 = vld [vmem:[%s1476 + $0x3e4] sm:$0xf]
        %v8179 = vld [vmem:[%s1476 + $0x3e8] sm:$0xf]
        %v8180 = vld [vmem:[%s1476 + $0x3ec] sm:$0xf]
        %v8181 = vld [vmem:[%s1476 + $0x3f0] sm:$0xf]
        %v8182 = vld [vmem:[%s1476 + $0x3f4] sm:$0xf]
        %v8183 = vld [vmem:[%s1476 + $0x3f8] sm:$0xf]
        %v8184 = vld [vmem:[%s1476 + $0x3fc] sm:$0xf]
        %v8185 = vld [vmem:[%s1479] sm:$0x1]
        %v8187 = vlaneseq
        %v8188 = vshrl.u32 %v8187, 7
        %v8189 = vsub.s32 0, %v8188
        %v8190 = vrot.slane %v8185, %v8189
        %v8448 = vunpack.c.l.b16 %v7929
        %v8449 = vunpack.c.l.b16 %v7930
        %v8450 = vunpack.c.l.b16 %v7931
        %v8451 = vunpack.c.l.b16 %v7932
        %v8452 = vunpack.c.l.b16 %v7933
        %v8453 = vunpack.c.l.b16 %v7934
        %v8454 = vunpack.c.l.b16 %v7935
        %v8455 = vunpack.c.l.b16 %v7936
        %v8456 = vunpack.c.l.b16 %v7937
        %v8457 = vunpack.c.l.b16 %v7938
        %v8458 = vunpack.c.l.b16 %v7939
        %v8459 = vunpack.c.l.b16 %v7940
        %v8460 = vunpack.c.l.b16 %v7941
        %v8461 = vunpack.c.l.b16 %v7942
        %v8462 = vunpack.c.l.b16 %v7943
        %v8463 = vunpack.c.l.b16 %v7944
        %v8464 = vunpack.c.l.b16 %v7945
        %v8465 = vunpack.c.l.b16 %v7946
        %v8466 = vunpack.c.l.b16 %v7947
        %v8467 = vunpack.c.l.b16 %v7948
        %v8468 = vunpack.c.l.b16 %v7949
        %v8469 = vunpack.c.l.b16 %v7950
        %v8470 = vunpack.c.l.b16 %v7951
        %v8471 = vunpack.c.l.b16 %v7952
        %v8472 = vunpack.c.l.b16 %v7953
        %v8473 = vunpack.c.l.b16 %v7954
        %v8474 = vunpack.c.l.b16 %v7955
        %v8475 = vunpack.c.l.b16 %v7956
        %v8476 = vunpack.c.l.b16 %v7957
        %v8477 = vunpack.c.l.b16 %v7958
        %v8478 = vunpack.c.l.b16 %v7959
        %v8479 = vunpack.c.l.b16 %v7960
        %v8480 = vunpack.c.l.b16 %v7961
        %v8481 = vunpack.c.l.b16 %v7962
        %v8482 = vunpack.c.l.b16 %v7963
        %v8483 = vunpack.c.l.b16 %v7964
        %v8484 = vunpack.c.l.b16 %v7965
        %v8485 = vunpack.c.l.b16 %v7966
        %v8486 = vunpack.c.l.b16 %v7967
        %v8487 = vunpack.c.l.b16 %v7968
        %v8488 = vunpack.c.l.b16 %v7969
        %v8489 = vunpack.c.l.b16 %v7970
        %v8490 = vunpack.c.l.b16 %v7971
        %v8491 = vunpack.c.l.b16 %v7972
        %v8492 = vunpack.c.l.b16 %v7973
        %v8493 = vunpack.c.l.b16 %v7974
        %v8494 = vunpack.c.l.b16 %v7975
        %v8495 = vunpack.c.l.b16 %v7976
        %v8496 = vunpack.c.l.b16 %v7977
        %v8497 = vunpack.c.l.b16 %v7978
        %v8498 = vunpack.c.l.b16 %v7979
        %v8499 = vunpack.c.l.b16 %v7980
        %v8500 = vunpack.c.l.b16 %v7981
        %v8501 = vunpack.c.l.b16 %v7982
        %v8502 = vunpack.c.l.b16 %v7983
        %v8503 = vunpack.c.l.b16 %v7984
        %v8504 = vunpack.c.l.b16 %v7985
        %v8505 = vunpack.c.l.b16 %v7986
        %v8506 = vunpack.c.l.b16 %v7987
        %v8507 = vunpack.c.l.b16 %v7988
        %v8508 = vunpack.c.l.b16 %v7989
        %v8509 = vunpack.c.l.b16 %v7990
        %v8510 = vunpack.c.l.b16 %v7991
        %v8511 = vunpack.c.l.b16 %v7992
        %v8512 = vunpack.c.l.b16 %v7993
        %v8513 = vunpack.c.l.b16 %v7994
        %v8514 = vunpack.c.l.b16 %v7995
        %v8515 = vunpack.c.l.b16 %v7996
        %v8516 = vunpack.c.l.b16 %v7997
        %v8517 = vunpack.c.l.b16 %v7998
        %v8518 = vunpack.c.l.b16 %v7999
        %v8519 = vunpack.c.l.b16 %v8000
        %v8520 = vunpack.c.l.b16 %v8001
        %v8521 = vunpack.c.l.b16 %v8002
        %v8522 = vunpack.c.l.b16 %v8003
        %v8523 = vunpack.c.l.b16 %v8004
        %v8524 = vunpack.c.l.b16 %v8005
        %v8525 = vunpack.c.l.b16 %v8006
        %v8526 = vunpack.c.l.b16 %v8007
        %v8527 = vunpack.c.l.b16 %v8008
        %v8528 = vunpack.c.l.b16 %v8009
        %v8529 = vunpack.c.l.b16 %v8010
        %v8530 = vunpack.c.l.b16 %v8011
        %v8531 = vunpack.c.l.b16 %v8012
        %v8532 = vunpack.c.l.b16 %v8013
        %v8533 = vunpack.c.l.b16 %v8014
        %v8534 = vunpack.c.l.b16 %v8015
        %v8535 = vunpack.c.l.b16 %v8016
        %v8536 = vunpack.c.l.b16 %v8017
        %v8537 = vunpack.c.l.b16 %v8018
        %v8538 = vunpack.c.l.b16 %v8019
        %v8539 = vunpack.c.l.b16 %v8020
        %v8540 = vunpack.c.l.b16 %v8021
        %v8541 = vunpack.c.l.b16 %v8022
        %v8542 = vunpack.c.l.b16 %v8023
        %v8543 = vunpack.c.l.b16 %v8024
        %v8544 = vunpack.c.l.b16 %v8025
        %v8545 = vunpack.c.l.b16 %v8026
        %v8546 = vunpack.c.l.b16 %v8027
        %v8547 = vunpack.c.l.b16 %v8028
        %v8548 = vunpack.c.l.b16 %v8029
        %v8549 = vunpack.c.l.b16 %v8030
        %v8550 = vunpack.c.l.b16 %v8031
        %v8551 = vunpack.c.l.b16 %v8032
        %v8552 = vunpack.c.l.b16 %v8033
        %v8553 = vunpack.c.l.b16 %v8034
        %v8554 = vunpack.c.l.b16 %v8035
        %v8555 = vunpack.c.l.b16 %v8036
        %v8556 = vunpack.c.l.b16 %v8037
        %v8557 = vunpack.c.l.b16 %v8038
        %v8558 = vunpack.c.l.b16 %v8039
        %v8559 = vunpack.c.l.b16 %v8040
        %v8560 = vunpack.c.l.b16 %v8041
        %v8561 = vunpack.c.l.b16 %v8042
        %v8562 = vunpack.c.l.b16 %v8043
        %v8563 = vunpack.c.l.b16 %v8044
        %v8564 = vunpack.c.l.b16 %v8045
        %v8565 = vunpack.c.l.b16 %v8046
        %v8566 = vunpack.c.l.b16 %v8047
        %v8567 = vunpack.c.l.b16 %v8048
        %v8568 = vunpack.c.l.b16 %v8049
        %v8569 = vunpack.c.l.b16 %v8050
        %v8570 = vunpack.c.l.b16 %v8051
        %v8571 = vunpack.c.l.b16 %v8052
        %v8572 = vunpack.c.l.b16 %v8053
        %v8573 = vunpack.c.l.b16 %v8054
        %v8574 = vunpack.c.l.b16 %v8055
        %v8575 = vunpack.c.l.b16 %v8056
        %v8576 = vunpack.c.l.b16 %v8057
        %v8577 = vunpack.c.l.b16 %v8058
        %v8578 = vunpack.c.l.b16 %v8059
        %v8579 = vunpack.c.l.b16 %v8060
        %v8580 = vunpack.c.l.b16 %v8061
        %v8581 = vunpack.c.l.b16 %v8062
        %v8582 = vunpack.c.l.b16 %v8063
        %v8583 = vunpack.c.l.b16 %v8064
        %v8584 = vunpack.c.l.b16 %v8065
        %v8585 = vunpack.c.l.b16 %v8066
        %v8586 = vunpack.c.l.b16 %v8067
        %v8587 = vunpack.c.l.b16 %v8068
        %v8588 = vunpack.c.l.b16 %v8069
        %v8589 = vunpack.c.l.b16 %v8070
        %v8590 = vunpack.c.l.b16 %v8071
        %v8591 = vunpack.c.l.b16 %v8072
        %v8592 = vunpack.c.l.b16 %v8073
        %v8593 = vunpack.c.l.b16 %v8074
        %v8594 = vunpack.c.l.b16 %v8075
        %v8595 = vunpack.c.l.b16 %v8076
        %v8596 = vunpack.c.l.b16 %v8077
        %v8597 = vunpack.c.l.b16 %v8078
        %v8598 = vunpack.c.l.b16 %v8079
        %v8599 = vunpack.c.l.b16 %v8080
        %v8600 = vunpack.c.l.b16 %v8081
        %v8601 = vunpack.c.l.b16 %v8082
        %v8602 = vunpack.c.l.b16 %v8083
        %v8603 = vunpack.c.l.b16 %v8084
        %v8604 = vunpack.c.l.b16 %v8085
        %v8605 = vunpack.c.l.b16 %v8086
        %v8606 = vunpack.c.l.b16 %v8087
        %v8607 = vunpack.c.l.b16 %v8088
        %v8608 = vunpack.c.l.b16 %v8089
        %v8609 = vunpack.c.l.b16 %v8090
        %v8610 = vunpack.c.l.b16 %v8091
        %v8611 = vunpack.c.l.b16 %v8092
        %v8612 = vunpack.c.l.b16 %v8093
        %v8613 = vunpack.c.l.b16 %v8094
        %v8614 = vunpack.c.l.b16 %v8095
        %v8615 = vunpack.c.l.b16 %v8096
        %v8616 = vunpack.c.l.b16 %v8097
        %v8617 = vunpack.c.l.b16 %v8098
        %v8618 = vunpack.c.l.b16 %v8099
        %v8619 = vunpack.c.l.b16 %v8100
        %v8620 = vunpack.c.l.b16 %v8101
        %v8621 = vunpack.c.l.b16 %v8102
        %v8622 = vunpack.c.l.b16 %v8103
        %v8623 = vunpack.c.l.b16 %v8104
        %v8624 = vunpack.c.l.b16 %v8105
        %v8625 = vunpack.c.l.b16 %v8106
        %v8626 = vunpack.c.l.b16 %v8107
        %v8627 = vunpack.c.l.b16 %v8108
        %v8628 = vunpack.c.l.b16 %v8109
        %v8629 = vunpack.c.l.b16 %v8110
        %v8630 = vunpack.c.l.b16 %v8111
        %v8631 = vunpack.c.l.b16 %v8112
        %v8632 = vunpack.c.l.b16 %v8113
        %v8633 = vunpack.c.l.b16 %v8114
        %v8634 = vunpack.c.l.b16 %v8115
        %v8635 = vunpack.c.l.b16 %v8116
        %v8636 = vunpack.c.l.b16 %v8117
        %v8637 = vunpack.c.l.b16 %v8118
        %v8638 = vunpack.c.l.b16 %v8119
        %v8639 = vunpack.c.l.b16 %v8120
        %v8640 = vunpack.c.l.b16 %v8121
        %v8641 = vunpack.c.l.b16 %v8122
        %v8642 = vunpack.c.l.b16 %v8123
        %v8643 = vunpack.c.l.b16 %v8124
        %v8644 = vunpack.c.l.b16 %v8125
        %v8645 = vunpack.c.l.b16 %v8126
        %v8646 = vunpack.c.l.b16 %v8127
        %v8647 = vunpack.c.l.b16 %v8128
        %v8648 = vunpack.c.l.b16 %v8129
        %v8649 = vunpack.c.l.b16 %v8130
        %v8650 = vunpack.c.l.b16 %v8131
        %v8651 = vunpack.c.l.b16 %v8132
        %v8652 = vunpack.c.l.b16 %v8133
        %v8653 = vunpack.c.l.b16 %v8134
        %v8654 = vunpack.c.l.b16 %v8135
        %v8655 = vunpack.c.l.b16 %v8136
        %v8656 = vunpack.c.l.b16 %v8137
        %v8657 = vunpack.c.l.b16 %v8138
        %v8658 = vunpack.c.l.b16 %v8139
        %v8659 = vunpack.c.l.b16 %v8140
        %v8660 = vunpack.c.l.b16 %v8141
        %v8661 = vunpack.c.l.b16 %v8142
        %v8662 = vunpack.c.l.b16 %v8143
        %v8663 = vunpack.c.l.b16 %v8144
        %v8664 = vunpack.c.l.b16 %v8145
        %v8665 = vunpack.c.l.b16 %v8146
        %v8666 = vunpack.c.l.b16 %v8147
        %v8667 = vunpack.c.l.b16 %v8148
        %v8668 = vunpack.c.l.b16 %v8149
        %v8669 = vunpack.c.l.b16 %v8150
        %v8670 = vunpack.c.l.b16 %v8151
        %v8671 = vunpack.c.l.b16 %v8152
        %v8672 = vunpack.c.l.b16 %v8153
        %v8673 = vunpack.c.l.b16 %v8154
        %v8674 = vunpack.c.l.b16 %v8155
        %v8675 = vunpack.c.l.b16 %v8156
        %v8676 = vunpack.c.l.b16 %v8157
        %v8677 = vunpack.c.l.b16 %v8158
        %v8678 = vunpack.c.l.b16 %v8159
        %v8679 = vunpack.c.l.b16 %v8160
        %v8680 = vunpack.c.l.b16 %v8161
        %v8681 = vunpack.c.l.b16 %v8162
        %v8682 = vunpack.c.l.b16 %v8163
        %v8683 = vunpack.c.l.b16 %v8164
        %v8684 = vunpack.c.l.b16 %v8165
        %v8685 = vunpack.c.l.b16 %v8166
        %v8686 = vunpack.c.l.b16 %v8167
        %v8687 = vunpack.c.l.b16 %v8168
        %v8688 = vunpack.c.l.b16 %v8169
        %v8689 = vunpack.c.l.b16 %v8170
        %v8690 = vunpack.c.l.b16 %v8171
        %v8691 = vunpack.c.l.b16 %v8172
        %v8692 = vunpack.c.l.b16 %v8173
        %v8693 = vunpack.c.l.b16 %v8174
        %v8694 = vunpack.c.l.b16 %v8175
        %v8695 = vunpack.c.l.b16 %v8176
        %v8696 = vunpack.c.l.b16 %v8177
        %v8697 = vunpack.c.l.b16 %v8178
        %v8698 = vunpack.c.l.b16 %v8179
        %v8699 = vunpack.c.l.b16 %v8180
        %v8700 = vunpack.c.l.b16 %v8181
        %v8701 = vunpack.c.l.b16 %v8182
        %v8702 = vunpack.c.l.b16 %v8183
        %v8703 = vunpack.c.l.b16 %v8184
        %v8704 = vpack.c.b16 %v8449, %v8448
        %v8705 = vpack.c.b16 %v8451, %v8450
        %v8706 = vpack.c.b16 %v8453, %v8452
        %v8707 = vpack.c.b16 %v8455, %v8454
        %v8708 = vpack.c.b16 %v8457, %v8456
        %v8709 = vpack.c.b16 %v8459, %v8458
        %v8710 = vpack.c.b16 %v8461, %v8460
        %v8711 = vpack.c.b16 %v8463, %v8462
        %v8712 = vpack.c.b16 %v8465, %v8464
        %v8713 = vpack.c.b16 %v8467, %v8466
        %v8714 = vpack.c.b16 %v8469, %v8468
        %v8715 = vpack.c.b16 %v8471, %v8470
        %v8716 = vpack.c.b16 %v8473, %v8472
        %v8717 = vpack.c.b16 %v8475, %v8474
        %v8718 = vpack.c.b16 %v8477, %v8476
        %v8719 = vpack.c.b16 %v8479, %v8478
        %v8720 = vpack.c.b16 %v8481, %v8480
        %v8721 = vpack.c.b16 %v8483, %v8482
        %v8722 = vpack.c.b16 %v8485, %v8484
        %v8723 = vpack.c.b16 %v8487, %v8486
        %v8724 = vpack.c.b16 %v8489, %v8488
        %v8725 = vpack.c.b16 %v8491, %v8490
        %v8726 = vpack.c.b16 %v8493, %v8492
        %v8727 = vpack.c.b16 %v8495, %v8494
        %v8728 = vpack.c.b16 %v8497, %v8496
        %v8729 = vpack.c.b16 %v8499, %v8498
        %v8730 = vpack.c.b16 %v8501, %v8500
        %v8731 = vpack.c.b16 %v8503, %v8502
        %v8732 = vpack.c.b16 %v8505, %v8504
        %v8733 = vpack.c.b16 %v8507, %v8506
        %v8734 = vpack.c.b16 %v8509, %v8508
        %v8735 = vpack.c.b16 %v8511, %v8510
        %v8736 = vpack.c.b16 %v8513, %v8512
        %v8737 = vpack.c.b16 %v8515, %v8514
        %v8738 = vpack.c.b16 %v8517, %v8516
        %v8739 = vpack.c.b16 %v8519, %v8518
        %v8740 = vpack.c.b16 %v8521, %v8520
        %v8741 = vpack.c.b16 %v8523, %v8522
        %v8742 = vpack.c.b16 %v8525, %v8524
        %v8743 = vpack.c.b16 %v8527, %v8526
        %v8744 = vpack.c.b16 %v8529, %v8528
        %v8745 = vpack.c.b16 %v8531, %v8530
        %v8746 = vpack.c.b16 %v8533, %v8532
        %v8747 = vpack.c.b16 %v8535, %v8534
        %v8748 = vpack.c.b16 %v8537, %v8536
        %v8749 = vpack.c.b16 %v8539, %v8538
        %v8750 = vpack.c.b16 %v8541, %v8540
        %v8751 = vpack.c.b16 %v8543, %v8542
        %v8752 = vpack.c.b16 %v8545, %v8544
        %v8753 = vpack.c.b16 %v8547, %v8546
        %v8754 = vpack.c.b16 %v8549, %v8548
        %v8755 = vpack.c.b16 %v8551, %v8550
        %v8756 = vpack.c.b16 %v8553, %v8552
        %v8757 = vpack.c.b16 %v8555, %v8554
        %v8758 = vpack.c.b16 %v8557, %v8556
        %v8759 = vpack.c.b16 %v8559, %v8558
        %v8760 = vpack.c.b16 %v8561, %v8560
        %v8761 = vpack.c.b16 %v8563, %v8562
        %v8762 = vpack.c.b16 %v8565, %v8564
        %v8763 = vpack.c.b16 %v8567, %v8566
        %v8764 = vpack.c.b16 %v8569, %v8568
        %v8765 = vpack.c.b16 %v8571, %v8570
        %v8766 = vpack.c.b16 %v8573, %v8572
        %v8767 = vpack.c.b16 %v8575, %v8574
        %v8768 = vpack.c.b16 %v8577, %v8576
        %v8769 = vpack.c.b16 %v8579, %v8578
        %v8770 = vpack.c.b16 %v8581, %v8580
        %v8771 = vpack.c.b16 %v8583, %v8582
        %v8772 = vpack.c.b16 %v8585, %v8584
        %v8773 = vpack.c.b16 %v8587, %v8586
        %v8774 = vpack.c.b16 %v8589, %v8588
        %v8775 = vpack.c.b16 %v8591, %v8590
        %v8776 = vpack.c.b16 %v8593, %v8592
        %v8777 = vpack.c.b16 %v8595, %v8594
        %v8778 = vpack.c.b16 %v8597, %v8596
        %v8779 = vpack.c.b16 %v8599, %v8598
        %v8780 = vpack.c.b16 %v8601, %v8600
        %v8781 = vpack.c.b16 %v8603, %v8602
        %v8782 = vpack.c.b16 %v8605, %v8604
        %v8783 = vpack.c.b16 %v8607, %v8606
        %v8784 = vpack.c.b16 %v8609, %v8608
        %v8785 = vpack.c.b16 %v8611, %v8610
        %v8786 = vpack.c.b16 %v8613, %v8612
        %v8787 = vpack.c.b16 %v8615, %v8614
        %v8788 = vpack.c.b16 %v8617, %v8616
        %v8789 = vpack.c.b16 %v8619, %v8618
        %v8790 = vpack.c.b16 %v8621, %v8620
        %v8791 = vpack.c.b16 %v8623, %v8622
        %v8792 = vpack.c.b16 %v8625, %v8624
        %v8793 = vpack.c.b16 %v8627, %v8626
        %v8794 = vpack.c.b16 %v8629, %v8628
        %v8795 = vpack.c.b16 %v8631, %v8630
        %v8796 = vpack.c.b16 %v8633, %v8632
        %v8797 = vpack.c.b16 %v8635, %v8634
        %v8798 = vpack.c.b16 %v8637, %v8636
        %v8799 = vpack.c.b16 %v8639, %v8638
        %v8800 = vpack.c.b16 %v8641, %v8640
        %v8801 = vpack.c.b16 %v8643, %v8642
        %v8802 = vpack.c.b16 %v8645, %v8644
        %v8803 = vpack.c.b16 %v8647, %v8646
        %v8804 = vpack.c.b16 %v8649, %v8648
        %v8805 = vpack.c.b16 %v8651, %v8650
        %v8806 = vpack.c.b16 %v8653, %v8652
        %v8807 = vpack.c.b16 %v8655, %v8654
        %v8808 = vpack.c.b16 %v8657, %v8656
        %v8809 = vpack.c.b16 %v8659, %v8658
        %v8810 = vpack.c.b16 %v8661, %v8660
        %v8811 = vpack.c.b16 %v8663, %v8662
        %v8812 = vpack.c.b16 %v8665, %v8664
        %v8813 = vpack.c.b16 %v8667, %v8666
        %v8814 = vpack.c.b16 %v8669, %v8668
        %v8815 = vpack.c.b16 %v8671, %v8670
        %v8816 = vpack.c.b16 %v8673, %v8672
        %v8817 = vpack.c.b16 %v8675, %v8674
        %v8818 = vpack.c.b16 %v8677, %v8676
        %v8819 = vpack.c.b16 %v8679, %v8678
        %v8820 = vpack.c.b16 %v8681, %v8680
        %v8821 = vpack.c.b16 %v8683, %v8682
        %v8822 = vpack.c.b16 %v8685, %v8684
        %v8823 = vpack.c.b16 %v8687, %v8686
        %v8824 = vpack.c.b16 %v8689, %v8688
        %v8825 = vpack.c.b16 %v8691, %v8690
        %v8826 = vpack.c.b16 %v8693, %v8692
        %v8827 = vpack.c.b16 %v8695, %v8694
        %v8828 = vpack.c.b16 %v8697, %v8696
        %v8829 = vpack.c.b16 %v8699, %v8698
        %v8830 = vpack.c.b16 %v8701, %v8700
        %v8831 = vpack.c.b16 %v8703, %v8702
        %8960 = vmatprep.subr.bf16.mxu0 0
        %8961 = vmatpush1.bf16.msra.mxu0 %v8704
        %8962 = vmatprep.subr.bf16.mxu0 0
        %8963 = vmatpush1.bf16.msra.mxu0 %v8705
        %8964 = vmatprep.subr.bf16.mxu0 0
        %8965 = vmatpush1.bf16.msra.mxu0 %v8706
        %8966 = vmatprep.subr.bf16.mxu0 0
        %8967 = vmatpush1.bf16.msra.mxu0 %v8707
        %8968 = vmatprep.subr.bf16.mxu0 0
        %8969 = vmatpush1.bf16.msra.mxu0 %v8708
        %8970 = vmatprep.subr.bf16.mxu0 0
        %8971 = vmatpush1.bf16.msra.mxu0 %v8709
        %8972 = vmatprep.subr.bf16.mxu0 0
        %8973 = vmatpush1.bf16.msra.mxu0 %v8710
        %8974 = vmatprep.subr.bf16.mxu0 0
        %8975 = vmatpush1.bf16.msra.mxu0 %v8711
        %8976 = vmatprep.subr.bf16.mxu0 0
        %8977 = vmatpush1.bf16.msra.mxu0 %v8712
        %8978 = vmatprep.subr.bf16.mxu0 0
        %8979 = vmatpush1.bf16.msra.mxu0 %v8713
        %8980 = vmatprep.subr.bf16.mxu0 0
        %8981 = vmatpush1.bf16.msra.mxu0 %v8714
        %8982 = vmatprep.subr.bf16.mxu0 0
        %8983 = vmatpush1.bf16.msra.mxu0 %v8715
        %8984 = vmatprep.subr.bf16.mxu0 0
        %8985 = vmatpush1.bf16.msra.mxu0 %v8716
        %8986 = vmatprep.subr.bf16.mxu0 0
        %8987 = vmatpush1.bf16.msra.mxu0 %v8717
        %8988 = vmatprep.subr.bf16.mxu0 0
        %8989 = vmatpush1.bf16.msra.mxu0 %v8718
        %8990 = vmatprep.subr.bf16.mxu0 0
        %8991 = vmatpush1.bf16.msra.mxu0 %v8719
        %8992 = vmatprep.mubr.f32.mxu0 %v7898
        %8993 = vmatmul.mubr.f32.gmra.mrb[0].mxu0 %v7897
        %v8994 = vpop.f32.mrb[0].mxu0
        %v8995 = vadd.f32 %v8190, %v8994
        %v8996 = vpop.f32.mrb[0].mxu0
        %8997 = vmatprep.mubr.f32.mxu0 %v7914
        %8998 = vmatmul.mubr.f32.gmra.mrb[0].mxu0 %v7913
        %v8999 = vpop.f32.mrb[0].mxu0
        %v9000 = vadd.f32 %v8190, %v8999
        %v9001 = vpop.f32.mrb[0].mxu0
        %9002 = vdwg.mxu0
        %9003 = vmatprep.subr.bf16.mxu0 0
        %9004 = vmatpush1.bf16.msra.mxu0 %v8720
        %9005 = vmatprep.subr.bf16.mxu0 0
        %9006 = vmatpush1.bf16.msra.mxu0 %v8721
        %9007 = vmatprep.subr.bf16.mxu0 0
        %9008 = vmatpush1.bf16.msra.mxu0 %v8722
        %9009 = vmatprep.subr.bf16.mxu0 0
        %9010 = vmatpush1.bf16.msra.mxu0 %v8723
        %9011 = vmatprep.subr.bf16.mxu0 0
        %9012 = vmatpush1.bf16.msra.mxu0 %v8724
        %9013 = vmatprep.subr.bf16.mxu0 0
        %9014 = vmatpush1.bf16.msra.mxu0 %v8725
        %9015 = vmatprep.subr.bf16.mxu0 0
        %9016 = vmatpush1.bf16.msra.mxu0 %v8726
        %9017 = vmatprep.subr.bf16.mxu0 0
        %9018 = vmatpush1.bf16.msra.mxu0 %v8727
        %9019 = vmatprep.subr.bf16.mxu0 0
        %9020 = vmatpush1.bf16.msra.mxu0 %v8728
        %9021 = vmatprep.subr.bf16.mxu0 0
        %9022 = vmatpush1.bf16.msra.mxu0 %v8729
        %9023 = vmatprep.subr.bf16.mxu0 0
        %9024 = vmatpush1.bf16.msra.mxu0 %v8730
        %9025 = vmatprep.subr.bf16.mxu0 0
        %9026 = vmatpush1.bf16.msra.mxu0 %v8731
        %9027 = vmatprep.subr.bf16.mxu0 0
        %9028 = vmatpush1.bf16.msra.mxu0 %v8732
        %9029 = vmatprep.subr.bf16.mxu0 0
        %9030 = vmatpush1.bf16.msra.mxu0 %v8733
        %9031 = vmatprep.subr.bf16.mxu0 0
        %9032 = vmatpush1.bf16.msra.mxu0 %v8734
        %9033 = vmatprep.subr.bf16.mxu0 0
        %9034 = vmatpush1.bf16.msra.mxu0 %v8735
        %9035 = vmatprep.mubr.f32.mxu0 %v7900
        %9036 = vmatmul.mubr.f32.gmra.mrb[0].mxu0 %v7899
        %v9037 = vpop.f32.mrb[0].mxu0
        %v9038 = vadd.f32 %v8995, %v9037
        %v9039 = vpop.f32.mrb[0].mxu0
        %9040 = vmatprep.mubr.f32.mxu0 %v7916
        %9041 = vmatmul.mubr.f32.gmra.mrb[0].mxu0 %v7915
        %v9042 = vpop.f32.mrb[0].mxu0
        %v9043 = vadd.f32 %v9000, %v9042
        %v9044 = vpop.f32.mrb[0].mxu0
        %9045 = vdwg.mxu0
        %9046 = vmatprep.subr.bf16.mxu0 0
        %9047 = vmatpush1.bf16.msra.mxu0 %v8736
        %9048 = vmatprep.subr.bf16.mxu0 0
        %9049 = vmatpush1.bf16.msra.mxu0 %v8737
        %9050 = vmatprep.subr.bf16.mxu0 0
        %9051 = vmatpush1.bf16.msra.mxu0 %v8738
        %9052 = vmatprep.subr.bf16.mxu0 0
        %9053 = vmatpush1.bf16.msra.mxu0 %v8739
        %9054 = vmatprep.subr.bf16.mxu0 0
        %9055 = vmatpush1.bf16.msra.mxu0 %v8740
        %9056 = vmatprep.subr.bf16.mxu0 0
        %9057 = vmatpush1.bf16.msra.mxu0 %v8741
        %9058 = vmatprep.subr.bf16.mxu0 0
        %9059 = vmatpush1.bf16.msra.mxu0 %v8742
        %9060 = vmatprep.subr.bf16.mxu0 0
        %9061 = vmatpush1.bf16.msra.mxu0 %v8743
        %9062 = vmatprep.subr.bf16.mxu0 0
        %9063 = vmatpush1.bf16.msra.mxu0 %v8744
        %9064 = vmatprep.subr.bf16.mxu0 0
        %9065 = vmatpush1.bf16.msra.mxu0 %v8745
        %9066 = vmatprep.subr.bf16.mxu0 0
        %9067 = vmatpush1.bf16.msra.mxu0 %v8746
        %9068 = vmatprep.subr.bf16.mxu0 0
        %9069 = vmatpush1.bf16.msra.mxu0 %v8747
        %9070 = vmatprep.subr.bf16.mxu0 0
        %9071 = vmatpush1.bf16.msra.mxu0 %v8748
        %9072 = vmatprep.subr.bf16.mxu0 0
        %9073 = vmatpush1.bf16.msra.mxu0 %v8749
        %9074 = vmatprep.subr.bf16.mxu0 0
        %9075 = vmatpush1.bf16.msra.mxu0 %v8750
        %9076 = vmatprep.subr.bf16.mxu0 0
        %9077 = vmatpush1.bf16.msra.mxu0 %v8751
        %9078 = vmatprep.mubr.f32.mxu0 %v7902
        %9079 = vmatmul.mubr.f32.gmra.mrb[0].mxu0 %v7901
        %v9080 = vpop.f32.mrb[0].mxu0
        %v9081 = vadd.f32 %v9038, %v9080
        %v9082 = vpop.f32.mrb[0].mxu0
        %9083 = vmatprep.mubr.f32.mxu0 %v7918
        %9084 = vmatmul.mubr.f32.gmra.mrb[0].mxu0 %v7917
        %v9085 = vpop.f32.mrb[0].mxu0
        %v9086 = vadd.f32 %v9043, %v9085
        %v9087 = vpop.f32.mrb[0].mxu0
        %9088 = vdwg.mxu0
        %9089 = vmatprep.subr.bf16.mxu0 0
        %9090 = vmatpush1.bf16.msra.mxu0 %v8752
        %9091 = vmatprep.subr.bf16.mxu0 0
        %9092 = vmatpush1.bf16.msra.mxu0 %v8753
        %9093 = vmatprep.subr.bf16.mxu0 0
        %9094 = vmatpush1.bf16.msra.mxu0 %v8754
        %9095 = vmatprep.subr.bf16.mxu0 0
        %9096 = vmatpush1.bf16.msra.mxu0 %v8755
        %9097 = vmatprep.subr.bf16.mxu0 0
        %9098 = vmatpush1.bf16.msra.mxu0 %v8756
        %9099 = vmatprep.subr.bf16.mxu0 0
        %9100 = vmatpush1.bf16.msra.mxu0 %v8757
        %9101 = vmatprep.subr.bf16.mxu0 0
        %9102 = vmatpush1.bf16.msra.mxu0 %v8758
        %9103 = vmatprep.subr.bf16.mxu0 0
        %9104 = vmatpush1.bf16.msra.mxu0 %v8759
        %9105 = vmatprep.subr.bf16.mxu0 0
        %9106 = vmatpush1.bf16.msra.mxu0 %v8760
        %9107 = vmatprep.subr.bf16.mxu0 0
        %9108 = vmatpush1.bf16.msra.mxu0 %v8761
        %9109 = vmatprep.subr.bf16.mxu0 0
        %9110 = vmatpush1.bf16.msra.mxu0 %v8762
        %9111 = vmatprep.subr.bf16.mxu0 0
        %9112 = vmatpush1.bf16.msra.mxu0 %v8763
        %9113 = vmatprep.subr.bf16.mxu0 0
        %9114 = vmatpush1.bf16.msra.mxu0 %v8764
        %9115 = vmatprep.subr.bf16.mxu0 0
        %9116 = vmatpush1.bf16.msra.mxu0 %v8765
        %9117 = vmatprep.subr.bf16.mxu0 0
        %9118 = vmatpush1.bf16.msra.mxu0 %v8766
        %9119 = vmatprep.subr.bf16.mxu0 0
        %9120 = vmatpush1.bf16.msra.mxu0 %v8767
        %9121 = vmatprep.mubr.f32.mxu0 %v7904
        %9122 = vmatmul.mubr.f32.gmra.mrb[0].mxu0 %v7903
        %v9123 = vpop.f32.mrb[0].mxu0
        %v9124 = vadd.f32 %v9081, %v9123
        %v9125 = vpop.f32.mrb[0].mxu0
        %9126 = vmatprep.mubr.f32.mxu0 %v7920
        %9127 = vmatmul.mubr.f32.gmra.mrb[0].mxu0 %v7919
        %v9128 = vpop.f32.mrb[0].mxu0
        %v9129 = vadd.f32 %v9086, %v9128
        %v9130 = vpop.f32.mrb[0].mxu0
        %9131 = vdwg.mxu0
        %9132 = vmatprep.subr.bf16.mxu0 0
        %9133 = vmatpush1.bf16.msra.mxu0 %v8768
        %9134 = vmatprep.subr.bf16.mxu0 0
        %9135 = vmatpush1.bf16.msra.mxu0 %v8769
        %9136 = vmatprep.subr.bf16.mxu0 0
        %9137 = vmatpush1.bf16.msra.mxu0 %v8770
        %9138 = vmatprep.subr.bf16.mxu0 0
        %9139 = vmatpush1.bf16.msra.mxu0 %v8771
        %9140 = vmatprep.subr.bf16.mxu0 0
        %9141 = vmatpush1.bf16.msra.mxu0 %v8772
        %9142 = vmatprep.subr.bf16.mxu0 0
        %9143 = vmatpush1.bf16.msra.mxu0 %v8773
        %9144 = vmatprep.subr.bf16.mxu0 0
        %9145 = vmatpush1.bf16.msra.mxu0 %v8774
        %9146 = vmatprep.subr.bf16.mxu0 0
        %9147 = vmatpush1.bf16.msra.mxu0 %v8775
        %9148 = vmatprep.subr.bf16.mxu0 0
        %9149 = vmatpush1.bf16.msra.mxu0 %v8776
        %9150 = vmatprep.subr.bf16.mxu0 0
        %9151 = vmatpush1.bf16.msra.mxu0 %v8777
        %9152 = vmatprep.subr.bf16.mxu0 0
        %9153 = vmatpush1.bf16.msra.mxu0 %v8778
        %9154 = vmatprep.subr.bf16.mxu0 0
        %9155 = vmatpush1.bf16.msra.mxu0 %v8779
        %9156 = vmatprep.subr.bf16.mxu0 0
        %9157 = vmatpush1.bf16.msra.mxu0 %v8780
        %9158 = vmatprep.subr.bf16.mxu0 0
        %9159 = vmatpush1.bf16.msra.mxu0 %v8781
        %9160 = vmatprep.subr.bf16.mxu0 0
        %9161 = vmatpush1.bf16.msra.mxu0 %v8782
        %9162 = vmatprep.subr.bf16.mxu0 0
        %9163 = vmatpush1.bf16.msra.mxu0 %v8783
        %9164 = vmatprep.mubr.f32.mxu0 %v7906
        %9165 = vmatmul.mubr.f32.gmra.mrb[0].mxu0 %v7905
        %v9166 = vpop.f32.mrb[0].mxu0
        %v9167 = vadd.f32 %v9124, %v9166
        %v9168 = vpop.f32.mrb[0].mxu0
        %9169 = vmatprep.mubr.f32.mxu0 %v7922
        %9170 = vmatmul.mubr.f32.gmra.mrb[0].mxu0 %v7921
        %v9171 = vpop.f32.mrb[0].mxu0
        %v9172 = vadd.f32 %v9129, %v9171
        %v9173 = vpop.f32.mrb[0].mxu0
        %9174 = vdwg.mxu0
        %9175 = vmatprep.subr.bf16.mxu0 0
        %9176 = vmatpush1.bf16.msra.mxu0 %v8784
        %9177 = vmatprep.subr.bf16.mxu0 0
        %9178 = vmatpush1.bf16.msra.mxu0 %v8785
        %9179 = vmatprep.subr.bf16.mxu0 0
        %9180 = vmatpush1.bf16.msra.mxu0 %v8786
        %9181 = vmatprep.subr.bf16.mxu0 0
        %9182 = vmatpush1.bf16.msra.mxu0 %v8787
        %9183 = vmatprep.subr.bf16.mxu0 0
        %9184 = vmatpush1.bf16.msra.mxu0 %v8788
        %9185 = vmatprep.subr.bf16.mxu0 0
        %9186 = vmatpush1.bf16.msra.mxu0 %v8789
        %9187 = vmatprep.subr.bf16.mxu0 0
        %9188 = vmatpush1.bf16.msra.mxu0 %v8790
        %9189 = vmatprep.subr.bf16.mxu0 0
        %9190 = vmatpush1.bf16.msra.mxu0 %v8791
        %9191 = vmatprep.subr.bf16.mxu0 0
        %9192 = vmatpush1.bf16.msra.mxu0 %v8792
        %9193 = vmatprep.subr.bf16.mxu0 0
        %9194 = vmatpush1.bf16.msra.mxu0 %v8793
        %9195 = vmatprep.subr.bf16.mxu0 0
        %9196 = vmatpush1.bf16.msra.mxu0 %v8794
        %9197 = vmatprep.subr.bf16.mxu0 0
        %9198 = vmatpush1.bf16.msra.mxu0 %v8795
        %9199 = vmatprep.subr.bf16.mxu0 0
        %9200 = vmatpush1.bf16.msra.mxu0 %v8796
        %9201 = vmatprep.subr.bf16.mxu0 0
        %9202 = vmatpush1.bf16.msra.mxu0 %v8797
        %9203 = vmatprep.subr.bf16.mxu0 0
        %9204 = vmatpush1.bf16.msra.mxu0 %v8798
        %9205 = vmatprep.subr.bf16.mxu0 0
        %9206 = vmatpush1.bf16.msra.mxu0 %v8799
        %9207 = vmatprep.mubr.f32.mxu0 %v7908
        %9208 = vmatmul.mubr.f32.gmra.mrb[0].mxu0 %v7907
        %v9209 = vpop.f32.mrb[0].mxu0
        %v9210 = vadd.f32 %v9167, %v9209
        %v9211 = vpop.f32.mrb[0].mxu0
        %9212 = vmatprep.mubr.f32.mxu0 %v7924
        %9213 = vmatmul.mubr.f32.gmra.mrb[0].mxu0 %v7923
        %v9214 = vpop.f32.mrb[0].mxu0
        %v9215 = vadd.f32 %v9172, %v9214
        %v9216 = vpop.f32.mrb[0].mxu0
        %9217 = vdwg.mxu0
        %9218 = vmatprep.subr.bf16.mxu0 0
        %9219 = vmatpush1.bf16.msra.mxu0 %v8800
        %9220 = vmatprep.subr.bf16.mxu0 0
        %9221 = vmatpush1.bf16.msra.mxu0 %v8801
        %9222 = vmatprep.subr.bf16.mxu0 0
        %9223 = vmatpush1.bf16.msra.mxu0 %v8802
        %9224 = vmatprep.subr.bf16.mxu0 0
        %9225 = vmatpush1.bf16.msra.mxu0 %v8803
        %9226 = vmatprep.subr.bf16.mxu0 0
        %9227 = vmatpush1.bf16.msra.mxu0 %v8804
        %9228 = vmatprep.subr.bf16.mxu0 0
        %9229 = vmatpush1.bf16.msra.mxu0 %v8805
        %9230 = vmatprep.subr.bf16.mxu0 0
        %9231 = vmatpush1.bf16.msra.mxu0 %v8806
        %9232 = vmatprep.subr.bf16.mxu0 0
        %9233 = vmatpush1.bf16.msra.mxu0 %v8807
        %9234 = vmatprep.subr.bf16.mxu0 0
        %9235 = vmatpush1.bf16.msra.mxu0 %v8808
        %9236 = vmatprep.subr.bf16.mxu0 0
        %9237 = vmatpush1.bf16.msra.mxu0 %v8809
        %9238 = vmatprep.subr.bf16.mxu0 0
        %9239 = vmatpush1.bf16.msra.mxu0 %v8810
        %9240 = vmatprep.subr.bf16.mxu0 0
        %9241 = vmatpush1.bf16.msra.mxu0 %v8811
        %9242 = vmatprep.subr.bf16.mxu0 0
        %9243 = vmatpush1.bf16.msra.mxu0 %v8812
        %9244 = vmatprep.subr.bf16.mxu0 0
        %9245 = vmatpush1.bf16.msra.mxu0 %v8813
        %9246 = vmatprep.subr.bf16.mxu0 0
        %9247 = vmatpush1.bf16.msra.mxu0 %v8814
        %9248 = vmatprep.subr.bf16.mxu0 0
        %9249 = vmatpush1.bf16.msra.mxu0 %v8815
        %9250 = vmatprep.mubr.f32.mxu0 %v7910
        %9251 = vmatmul.mubr.f32.gmra.mrb[0].mxu0 %v7909
        %v9252 = vpop.f32.mrb[0].mxu0
        %v9253 = vadd.f32 %v9210, %v9252
        %v9254 = vpop.f32.mrb[0].mxu0
        %9255 = vmatprep.mubr.f32.mxu0 %v7926
        %9256 = vmatmul.mubr.f32.gmra.mrb[0].mxu0 %v7925
        %v9257 = vpop.f32.mrb[0].mxu0
        %v9258 = vadd.f32 %v9215, %v9257
        %v9259 = vpop.f32.mrb[0].mxu0
        %9260 = vdwg.mxu0
        %9261 = vmatprep.subr.bf16.mxu0 0
        %9262 = vmatpush1.bf16.msra.mxu0 %v8816
        %9263 = vmatprep.subr.bf16.mxu0 0
        %9264 = vmatpush1.bf16.msra.mxu0 %v8817
        %9265 = vmatprep.subr.bf16.mxu0 0
        %9266 = vmatpush1.bf16.msra.mxu0 %v8818
        %9267 = vmatprep.subr.bf16.mxu0 0
        %9268 = vmatpush1.bf16.msra.mxu0 %v8819
        %9269 = vmatprep.subr.bf16.mxu0 0
        %9270 = vmatpush1.bf16.msra.mxu0 %v8820
        %9271 = vmatprep.subr.bf16.mxu0 0
        %9272 = vmatpush1.bf16.msra.mxu0 %v8821
        %9273 = vmatprep.subr.bf16.mxu0 0
        %9274 = vmatpush1.bf16.msra.mxu0 %v8822
        %9275 = vmatprep.subr.bf16.mxu0 0
        %9276 = vmatpush1.bf16.msra.mxu0 %v8823
        %9277 = vmatprep.subr.bf16.mxu0 0
        %9278 = vmatpush1.bf16.msra.mxu0 %v8824
        %9279 = vmatprep.subr.bf16.mxu0 0
        %9280 = vmatpush1.bf16.msra.mxu0 %v8825
        %9281 = vmatprep.subr.bf16.mxu0 0
        %9282 = vmatpush1.bf16.msra.mxu0 %v8826
        %9283 = vmatprep.subr.bf16.mxu0 0
        %9284 = vmatpush1.bf16.msra.mxu0 %v8827
        %9285 = vmatprep.subr.bf16.mxu0 0
        %9286 = vmatpush1.bf16.msra.mxu0 %v8828
        %9287 = vmatprep.subr.bf16.mxu0 0
        %9288 = vmatpush1.bf16.msra.mxu0 %v8829
        %9289 = vmatprep.subr.bf16.mxu0 0
        %9290 = vmatpush1.bf16.msra.mxu0 %v8830
        %9291 = vmatprep.subr.bf16.mxu0 0
        %9292 = vmatpush1.bf16.msra.mxu0 %v8831
        %9293 = vmatprep.mubr.f32.mxu0 %v7912
        %9294 = vmatmul.mubr.f32.gmra.mrb[0].mxu0 %v7911
        %v9295 = vpop.f32.mrb[0].mxu0
        %v9296 = vadd.f32 %v9253, %v9295
        %v9297 = vpop.f32.mrb[0].mxu0
        %9298 = vmatprep.mubr.f32.mxu0 %v7928
        %9299 = vmatmul.mubr.f32.gmra.mrb[0].mxu0 %v7927
        %v9300 = vpop.f32.mrb[0].mxu0
        %v9301 = vadd.f32 %v9258, %v9300
        %v9302 = vpop.f32.mrb[0].mxu0
        %9303 = vdwg.mxu0
        %v9304 = vadd.f32 %v7253, %v9296
        %v9305 = vadd.f32 %v7254, %v9301
        %s9306 = scalar_lea.vmem %s1483, 6
        %v9307 = vld [vmem:[%s9306] sm:$0x1]
        %s9308 = scalar_lea.vmem %s1483, 7
        %v9309 = vld [vmem:[%s9308] sm:$0x1]
        %v9310 = vsel %vm1568, %v9304, 0.0
        %9311 = vadd.xlane.f32.xlu0 %v9310
        %v9312 = vpop.xlane.xlu0 %9311
        %v9313 = vsel %vm1568, %v9305, 0.0
        %9314 = vadd.xlane.f32.xlu0 %v9313
        %v9315 = vpop.xlane.xlu0 %9314
        %v9316 = vmul.f32 %v9312, %v3412
        %v9317 = vmul.f32 %v9315, %v3412
        %v9318 = vsub.f32 %v9304, %v9316
        %v9319 = vsub.f32 %v9305, %v9317
        %v9320 = vmul.f32 %v9318, %v9318
        %v9321 = vmul.f32 %v9319, %v9319
        %v9322 = vsel %vm1568, %v9320, 0.0
        %9323 = vadd.xlane.f32.xlu0 %v9322
        %v9324 = vpop.xlane.xlu0 %9323
        %v9325 = vsel %vm1568, %v9321, 0.0
        %9326 = vadd.xlane.f32.xlu0 %v9325
        %v9327 = vpop.xlane.xlu0 %9326
        %v9328 = vmul.f32 %v9324, %v3412
        %v9329 = vmul.f32 %v9327, %v3412
        %v9330 = vadd.f32 %v9328, 1e-05
        %v9331 = vadd.f32 %v9329, 1e-05
        %v9332 = vrsqrt.pop %v9330
        %v9333 = vrsqrt.pop %v9331
        %v9334 = vmul.f32 %v9318, %v9332
        %v9335 = vmul.f32 %v9319, %v9333
        %v9337 = vlaneseq
        %v9338 = vshrl.u32 %v9337, 7
        %v9339 = vsub.s32 0, %v9338
        %v9340 = vrot.slane %v9307, %v9339
        %v9342 = vmul.f32 %v9334, %v9340
        %v9343 = vmul.f32 %v9335, %v9340
        %v9345 = vlaneseq
        %v9346 = vshrl.u32 %v9345, 7
        %v9347 = vsub.s32 0, %v9346
        %v9348 = vrot.slane %v9309, %v9347
        %v9350 = vadd.f32 %v9342, %v9348
        %v9351 = vadd.f32 %v9343, %v9348
        %v9352 = vadd.f32 %v3447, %v9350
        %v9353 = vadd.f32 %v3448, %v9351
        %s9354 = scalar_lea.vmem %s1483, 8
        %v9355 = vld [vmem:[%s9354] sm:$0x1]
        %s9356 = scalar_lea.vmem %s1483, 9
        %v9357 = vld [vmem:[%s9356] sm:$0x1]
        %v9358 = vsel %vm1568, %v9352, 0.0
        %9359 = vadd.xlane.f32.xlu0 %v9358
        %v9360 = vpop.xlane.xlu0 %9359
        %v9361 = vsel %vm1568, %v9353, 0.0
        %9362 = vadd.xlane.f32.xlu0 %v9361
        %v9363 = vpop.xlane.xlu0 %9362
        %v9364 = vmul.f32 %v9360, %v3412
        %v9365 = vmul.f32 %v9363, %v3412
        %v9366 = vsub.f32 %v9352, %v9364
        %v9367 = vsub.f32 %v9353, %v9365
        %v9368 = vmul.f32 %v9366, %v9366
        %v9369 = vmul.f32 %v9367, %v9367
        %v9370 = vsel %vm1568, %v9368, 0.0
        %9371 = vadd.xlane.f32.xlu0 %v9370
        %v9372 = vpop.xlane.xlu0 %9371
        %v9373 = vsel %vm1568, %v9369, 0.0
        %9374 = vadd.xlane.f32.xlu0 %v9373
        %v9375 = vpop.xlane.xlu0 %9374
        %v9376 = vmul.f32 %v9372, %v3412
        %v9377 = vmul.f32 %v9375, %v3412
        %v9378 = vadd.f32 %v9376, 1e-05
        %v9379 = vadd.f32 %v9377, 1e-05
        %v9380 = vrsqrt.pop %v9378
        %v9381 = vrsqrt.pop %v9379
        %v9382 = vmul.f32 %v9366, %v9380
        %v9383 = vmul.f32 %v9367, %v9381
        %v9385 = vlaneseq
        %v9386 = vshrl.u32 %v9385, 7
        %v9387 = vsub.s32 0, %v9386
        %v9388 = vrot.slane %v9355, %v9387
        %v9390 = vmul.f32 %v9382, %v9388
        %v9391 = vmul.f32 %v9383, %v9388
        %v9393 = vlaneseq
        %v9394 = vshrl.u32 %v9393, 7
        %v9395 = vsub.s32 0, %v9394
        %v9396 = vrot.slane %v9357, %v9395
        %v9398 = vadd.f32 %v9390, %v9396
        %v9399 = vadd.f32 %v9391, %v9396
        %9400 = vst.msk [vmem:[#allocation2] sm:$0xff] %vm1568, %v9398
        %9401 = vst.msk [vmem:[#allocation2 + $0x8] sm:$0xff] %vm1568, %v9399
        %9402 = vst.msk [vmem:[#allocation4] sm:$0xff] %vm1568, %v9350
        %9403 = vst.msk [vmem:[#allocation4 + $0x8] sm:$0xff] %vm1568, %v9351
        // Predicated region
        $region149: #{tpu_custom_call.1} parent=143 // pred_check
          %p9404 = pneg %p888
        $region150: #{tpu_custom_call.1} parent=143 // pred_check_branch
          %9406 = sbr.rel (%p9404) target = $region152
        $region151: #{tpu_custom_call.1} parent=143 // pred_region
          %s9408 = ssub.s32 256, 256
          %9409 = vsyncadd [#allocation3], %s9408
          %s9410 = sshll.u32 [#allocation2], 4
          %s9411 = int_to_ptr.vmem [resolvable:$true] %s9410
          %9416 = dma.vmem_to_hbm [thread:$0]  %s9411, 256, %s63, [#allocation3], 128, 128, 8
        $region152: #{tpu_custom_call.1} parent=143 // pred_fallthru
          _
        // Predicated region
        $region153: #{tpu_custom_call.1} parent=143 // pred_check
          %p9417 = pneg %p909
        $region154: #{tpu_custom_call.1} parent=143 // pred_check_branch
          %9419 = sbr.rel (%p9417) target = $region156
        $region155: #{tpu_custom_call.1} parent=143 // pred_region
          %s9421 = ssub.s32 256, 256
          %9422 = vsyncadd [#allocation5], %s9421
          %s9423 = sshll.u32 [#allocation4], 4
          %s9424 = int_to_ptr.vmem [resolvable:$true] %s9423
          %9429 = dma.vmem_to_hbm [thread:$0]  %s9424, 256, %s65, [#allocation5], 128, 128, 8
        $region156: #{tpu_custom_call.1} parent=143 // pred_fallthru
          _
        // Predicated region
        $region157: #{tpu_custom_call.1} parent=143 // pred_check
          %p9430 = pneg %p888
        $region158: #{tpu_custom_call.1} parent=143 // pred_check_branch
          %9432 = sbr.rel (%p9430) target = $region160
        $region159: #{tpu_custom_call.1} parent=143 // pred_region
          %9433 = dma.done [#allocation3], 256
        $region160: #{tpu_custom_call.1} parent=143 // pred_fallthru
          _
        // Predicated region
        $region161: #{tpu_custom_call.1} parent=143 // pred_check
          %p9434 = pneg %p909
        $region162: #{tpu_custom_call.1} parent=143 // pred_check_branch
          %9436 = sbr.rel (%p9434) target = $region164
        $region163: #{tpu_custom_call.1} parent=143 // pred_region
          %9437 = dma.done [#allocation5], 256
        $region164: #{tpu_custom_call.1} parent=143 // pred_fallthru
          _
      $region144: #{tpu_custom_call.1} parent=5 // pred_fallthru
        _
      %p9438 = scmp.le.s32.totalorder 2, %s74
      // Predicated region
      $region165: #{tpu_custom_call.1} parent=5 // pred_check
        %p9439 = pneg %p9438
      $region166: #{tpu_custom_call.1} parent=5 // pred_check_branch
        %9441 = sbr.rel (%p9439) target = $region168
      $region167: #{tpu_custom_call.1} parent=5 // pred_region
        %s9442 = ssub.s32 %s74, 2
      $region168: #{tpu_custom_call.1} parent=5 // pred_fallthru
        _
    $region6: #{tpu_custom_call.1} parent=1 // loop_footer
      %s78 = sadd.s32 1, %s74
    $region7: #{tpu_custom_call.1} parent=1 // loop_footer_branch
      %73 = sbr.rel target = $region3
    $region8: #{tpu_custom_call.1} parent=1 // loop_exit
      _
    %9443 = vsyncpa [#allocation3], 1
    %s9444 = scalar_lea.sflag [#allocation3], 1
    %9445 = vsyncpa %s9444, 1
    %9446 = vsyncpa [#allocation5], 1

</llo_original>
